<compile_context>
chip_gen: v7x
topology: tpu7x:2x2x1
jax: 0.10.0
libtpu: 0.0.40
codegen_flags: <defaults>
</compile_context>

<pallas_src>
import functools

import jax
import jax.numpy as jnp
from jax import lax
from jax.experimental import pallas as pl
from jax.experimental.pallas import tpu as pltpu

BN_EPS = 1e-5


# ------------------------------- Pallas kernel ------------------------------ #

def _fused_forward_kernel(p1_ref,
                          w1_ref, b1_ref, g1_ref, be1_ref,
                          w2_ref, b2_ref, g2_ref, be2_ref,
                          w3_ref, b3_ref, g3_ref, be3_ref,
                          fw1_ref, fb1_ref, fw2_ref, fb2_ref, fw3_ref, fb3_ref,
                          o_ref, *, N, H, W, CIN2, CIN3, COUT3):
    """One Siamese branch per grid step: 3 conv+ReLU+BN layers (im2col on MXU) + 3-layer FC."""
    HW = H * W
    NHW = N * HW

    def bias_relu_bn(y, b, g, be):
        # y: (NHW, cout) for THIS branch; b/g/be: (1, cout).
        y = jnp.maximum(y + b, 0.0)                       # conv bias + ReLU
        mean = jnp.mean(y, axis=0, keepdims=True)         # BN batch stats over (N,H,W)
        var = jnp.mean((y - mean) ** 2, axis=0, keepdims=True)
        return g * (y - mean) * lax.rsqrt(var + BN_EPS) + be

    def conv_layer(a, w_ref, b_ref, g_ref, be_ref):
        # a: (N, H, W, cin) channels-last activation (minor dim = channels).
        # ReflectionPad2d(1): mirror row/col 1 and H-2 / W-2 (non-minor concats only).
        a = jnp.concatenate([a[:, 1:2], a, a[:, H - 2:H - 1]], axis=1)          # pad H
        a = jnp.concatenate([a[:, :, 1:2], a, a[:, :, W - 2:W - 1]], axis=2)    # pad W
        # im2col: 9 shifted views concatenated along the channel (lane) axis.
        taps = [a[:, kh:kh + H, kw:kw + W, :]
                for kh in range(3) for kw in range(3)]
        patches = jnp.concatenate(taps, axis=3)            # (N, H, W, 9*cin)
        patches = patches.reshape(NHW, patches.shape[-1])  # leading-dim merge only
        y = jnp.dot(patches, w_ref[...], preferred_element_type=jnp.float32)
        return bias_relu_bn(y, b_ref[...], g_ref[...], be_ref[...])  # (NHW, cout)

    # ---- conv1 (cin=1): im2col prepared in the wrapper, matmul + ReLU + BN here ----
    y = jnp.dot(p1_ref[0], w1_ref[...], preferred_element_type=jnp.float32)  # (NHW, 4)
    y = bias_relu_bn(y, b1_ref[...], g1_ref[...], be1_ref[...])

    # ---- conv2 / conv3 fully in-kernel ----
    y = conv_layer(y.reshape(N, H, W, CIN2), w2_ref, b2_ref, g2_ref, be2_ref)  # (NHW, 8)
    y = conv_layer(y.reshape(N, H, W, CIN3), w3_ref, b3_ref, g3_ref, be3_ref)  # (NHW, 8)

    # ---- FC stack.  output.view(n, -1) uses (c, h, w) ordering; realise FC1 as a
    #      per-channel sum of (N, HW) x (HW, hid) matmuls so no lane-merging reshape
    #      is ever required inside the kernel. ----
    hid = fw1_ref.shape[1]
    yT = jnp.transpose(y)                                  # (COUT3, NHW)
    h = jnp.zeros((N, hid), jnp.float32)
    for c in range(COUT3):
        yc = jnp.concatenate(
            [yT[c:c + 1, n * HW:(n + 1) * HW] for n in range(N)], axis=0)  # (N, HW)
        h = h + jnp.dot(yc, fw1_ref[pl.ds(c * HW, HW), :],
                        preferred_element_type=jnp.float32)
    h = jnp.maximum(h + fb1_ref[...], 0.0)
    h = jnp.maximum(jnp.dot(h, fw2_ref[...], preferred_element_type=jnp.float32)
                    + fb2_ref[...], 0.0)
    o_ref[0] = (jnp.dot(h, fw3_ref[...], preferred_element_type=jnp.float32)
                + fb3_ref[...])                            # (N, 128) lane-dense store


# ------------------------------ Pallas wrapper ------------------------------ #

def _conv_w(w):
    """(O, I, 3, 3) OIHW conv weight -> (9*I, O) im2col matrix, row = (kh*3+kw)*I + c."""
    O, I = w.shape[0], w.shape[1]
    return jnp.transpose(w, (2, 3, 1, 0)).reshape(9 * I, O)


def siamese_pallas(x1, x2, p):
    N, _, H, W = x1.shape
    HW = H * W
    NHW = N * HW
    HID = p["fw1"].shape[1]
    OUT = p["fw3"].shape[1]
    OUT_PAD = 128

    # Both branches stacked on a leading "branch" axis; one grid step per branch keeps
    # BatchNorm batch statistics per forward_once() call (PyTorch training-mode semantics).
    x = jnp.stack([x1[:, 0], x2[:, 0]], axis=0)                        # (2, N, H, W)
    # layer-1 ReflectionPad + im2col on the raw 4 KB input (everything downstream is fused)
    xp = jnp.pad(x, ((0, 0), (0, 0), (1, 1), (1, 1)), mode="reflect")  # (2, N, H+2, W+2)
    taps = [xp[:, :, kh:kh + H, kw:kw + W] for kh in range(3) for kw in range(3)]
    p1 = jnp.stack(taps, axis=-1).reshape(2, NHW, 9)                   # (2, NHW, 9)

    w1 = _conv_w(p["cw1"])
    w2 = _conv_w(p["cw2"])
    w3 = _conv_w(p["cw3"])
    row = lambda v: v.reshape(1, -1)
    # pad the 5-wide FC head to 128 lanes (unmasked store); sliced back below.
    fw3p = jnp.zeros((HID, OUT_PAD), jnp.float32).at[:, :OUT].set(p["fw3"])
    fb3p = jnp.zeros((1, OUT_PAD), jnp.float32).at[:, :OUT].set(p["fb3"][None, :])

    inputs = (p1,
              w1, row(p["cb1"]), row(p["g1"]), row(p["be1"]),
              w2, row(p["cb2"]), row(p["g2"]), row(p["be2"]),
              w3, row(p["cb3"]), row(p["g3"]), row(p["be3"]),
              p["fw1"], row(p["fb1"]), p["fw2"], row(p["fb2"]), fw3p, fb3p)

    def bcast_spec(shape):  # same block every grid step -> weights are not re-DMA'd
        nd = len(shape)
        return pl.BlockSpec(shape, lambda i, nd=nd: (0,) * nd)

    in_specs = [pl.BlockSpec((1, NHW, 9), lambda i: (i, 0, 0))]
    in_specs += [bcast_spec(a.shape) for a in inputs[1:]]

    kern = functools.partial(_fused_forward_kernel, N=N, H=H, W=W,
                             CIN2=p["cw2"].shape[1], CIN3=p["cw3"].shape[1],
                             COUT3=p["cw3"].shape[0])

    out = pl.pallas_call(
        kern,
        out_shape=jax.ShapeDtypeStruct((2, N, OUT_PAD), jnp.float32),
        grid=(2,),
        in_specs=in_specs,
        out_specs=pl.BlockSpec((1, N, OUT_PAD), lambda i: (i, 0, 0)),
        compiler_params=pltpu.CompilerParams(
            dimension_semantics=("parallel",)),  # 2nd TensorCore on v7x
    )(*inputs)
    return out[0, :, :OUT], out[1, :, :OUT]


@jax.jit
def siamese_forward(x1, x2, params):
    return siamese_pallas(x1, x2, params)


# ---------------------------- pure-JAX reference ---------------------------- #

def _ref_forward_once(x, p):
    def conv_bn(x, w, b, g, bt):
        xp = jnp.pad(x, ((0, 0), (0, 0), (1, 1), (1, 1)), mode="reflect")
        y = lax.conv_general_dilated(xp, w, (1, 1), "VALID",
                                     dimension_numbers=("NCHW", "OIHW", "NCHW"))
        y = y + b[None, :, None, None]
        y = jnp.maximum(y, 0.0)
        m = jnp.mean(y, axis=(0, 2, 3), keepdims=True)
        v = jnp.mean((y - m) ** 2, axis=(0, 2, 3), keepdims=True)
        return (g[None, :, None, None] * (y - m) * lax.rsqrt(v + BN_EPS)
                + bt[None, :, None, None])

    x = conv_bn(x, p["cw1"], p["cb1"], p["g1"], p["be1"])
    x = conv_bn(x, p["cw2"], p["cb2"], p["g2"], p["be2"])
    x = conv_bn(x, p["cw3"], p["cb3"], p["g3"], p["be3"])
    x = x.reshape(x.shape[0], -1)
    h = jnp.maximum(x @ p["fw1"] + p["fb1"], 0.0)
    h = jnp.maximum(h @ p["fw2"] + p["fb2"], 0.0)
    return h @ p["fw3"] + p["fb3"]


# ----------------------------------- main ----------------------------------- #

def make_params(key, hid=128, out=5, H=16, W=16):
    ks = jax.random.split(key, 12)

    def conv_w(k, cout, cin):
        return (jax.random.normal(k, (cout, cin, 3, 3), jnp.float32)
                / jnp.sqrt(cin * 9.0))

    def lin_w(k, din, dout):
        return jax.random.normal(k, (din, dout), jnp.float32) / jnp.sqrt(float(din))

    d_in = 8 * H * W
    return {
        "cw1": conv_w(ks[0], 4, 1),
        "cb1": 0.05 * jax.random.normal(ks[1], (4,), jnp.float32),
        "g1": jnp.ones((4,), jnp.float32), "be1": jnp.zeros((4,), jnp.float32),
        "cw2": conv_w(ks[2], 8, 4),
        "cb2": 0.05 * jax.random.normal(ks[3], (8,), jnp.float32),
        "g2": jnp.ones((8,), jnp.float32), "be2": jnp.zeros((8,), jnp.float32),
        "cw3": conv_w(ks[4], 8, 8),
        "cb3": 0.05 * jax.random.normal(ks[5], (8,), jnp.float32),
        "g3": jnp.ones((8,), jnp.float32), "be3": jnp.zeros((8,), jnp.float32),
        "fw1": lin_w(ks[6], d_in, hid),
        "fb1": 0.05 * jax.random.normal(ks[7], (hid,), jnp.float32),
        "fw2": lin_w(ks[8], hid, hid),
        "fb2": 0.05 * jax.random.normal(ks[9], (hid,), jnp.float32),
        "fw3": lin_w(ks[10], hid, out),
        "fb3": 0.05 * jax.random.normal(ks[11], (out,), jnp.float32),
    }


if __name__ == "__main__":
    N, C, H, W = 2, 1, 16, 16
    key = jax.random.PRNGKey(0)
    k1, k2, kp = jax.random.split(key, 3)
    x1 = jax.random.normal(k1, (N, C, H, W), jnp.float32)
    x2 = jax.random.normal(k2, (N, C, H, W), jnp.float32)
    params = make_params(kp, H=H, W=W)

    o1, o2 = siamese_forward(x1, x2, params)
    jax.block_until_ready((o1, o2))

    assert o1.shape == (N, 5) and o2.shape == (N, 5)
    r1 = _ref_forward_once(x1, params)
    r2 = _ref_forward_once(x2, params)
    assert jnp.allclose(o1, r1, atol=1e-2, rtol=1e-2), "output1 mismatch vs reference"
    assert jnp.allclose(o2, r2, atol=1e-2, rtol=1e-2), "output2 mismatch vs reference"

    print("KERNEL_OK")
</pallas_src>

<mosaic_0001>
module attributes {stable_mosaic.version = 11 : i64} {
  func.func @_fused_forward_kernel(%arg0: i32, %arg1: memref<1x512x9xf32, #tpu.memory_space<vmem>>, %arg2: memref<9x4xf32, #tpu.memory_space<vmem>>, %arg3: memref<1x4xf32, #tpu.memory_space<vmem>>, %arg4: memref<1x4xf32, #tpu.memory_space<vmem>>, %arg5: memref<1x4xf32, #tpu.memory_space<vmem>>, %arg6: memref<36x8xf32, #tpu.memory_space<vmem>>, %arg7: memref<1x8xf32, #tpu.memory_space<vmem>>, %arg8: memref<1x8xf32, #tpu.memory_space<vmem>>, %arg9: memref<1x8xf32, #tpu.memory_space<vmem>>, %arg10: memref<72x8xf32, #tpu.memory_space<vmem>>, %arg11: memref<1x8xf32, #tpu.memory_space<vmem>>, %arg12: memref<1x8xf32, #tpu.memory_space<vmem>>, %arg13: memref<1x8xf32, #tpu.memory_space<vmem>>, %arg14: memref<2048x128xf32, #tpu.memory_space<vmem>>, %arg15: memref<1x128xf32, #tpu.memory_space<vmem>>, %arg16: memref<128x128xf32, #tpu.memory_space<vmem>>, %arg17: memref<1x128xf32, #tpu.memory_space<vmem>>, %arg18: memref<128x128xf32, #tpu.memory_space<vmem>>, %arg19: memref<1x128xf32, #tpu.memory_space<vmem>>, %arg20: memref<1x2x128xf32, #tpu.memory_space<vmem>>) attributes {dimension_semantics = [#tpu.dimension_semantics<parallel>], iteration_bounds = array<i64: 2>, scalar_prefetch = 0 : i64, scratch_operands = 0 : i64, tpu.core_type = #tpu.core_type<tc>, window_params = [{transform_indices = @transform_0, window_bounds = array<i64: 1, 512, 9>}, {pipeline_mode = #tpu.pipeline_mode<synchronous>, transform_indices = @transform_1, window_bounds = array<i64: 9, 4>}, {pipeline_mode = #tpu.pipeline_mode<synchronous>, transform_indices = @transform_2, window_bounds = array<i64: 1, 4>}, {pipeline_mode = #tpu.pipeline_mode<synchronous>, transform_indices = @transform_3, window_bounds = array<i64: 1, 4>}, {pipeline_mode = #tpu.pipeline_mode<synchronous>, transform_indices = @transform_4, window_bounds = array<i64: 1, 4>}, {pipeline_mode = #tpu.pipeline_mode<synchronous>, transform_indices = @transform_5, window_bounds = array<i64: 36, 8>}, {pipeline_mode = #tpu.pipeline_mode<synchronous>, transform_indices = @transform_6, window_bounds = array<i64: 1, 8>}, {pipeline_mode = #tpu.pipeline_mode<synchronous>, transform_indices = @transform_7, window_bounds = array<i64: 1, 8>}, {pipeline_mode = #tpu.pipeline_mode<synchronous>, transform_indices = @transform_8, window_bounds = array<i64: 1, 8>}, {pipeline_mode = #tpu.pipeline_mode<synchronous>, transform_indices = @transform_9, window_bounds = array<i64: 72, 8>}, {pipeline_mode = #tpu.pipeline_mode<synchronous>, transform_indices = @transform_10, window_bounds = array<i64: 1, 8>}, {pipeline_mode = #tpu.pipeline_mode<synchronous>, transform_indices = @transform_11, window_bounds = array<i64: 1, 8>}, {pipeline_mode = #tpu.pipeline_mode<synchronous>, transform_indices = @transform_12, window_bounds = array<i64: 1, 8>}, {pipeline_mode = #tpu.pipeline_mode<synchronous>, transform_indices = @transform_13, window_bounds = array<i64: 2048, 128>}, {pipeline_mode = #tpu.pipeline_mode<synchronous>, transform_indices = @transform_14, window_bounds = array<i64: 1, 128>}, {pipeline_mode = #tpu.pipeline_mode<synchronous>, transform_indices = @transform_15, window_bounds = array<i64: 128, 128>}, {pipeline_mode = #tpu.pipeline_mode<synchronous>, transform_indices = @transform_16, window_bounds = array<i64: 1, 128>}, {pipeline_mode = #tpu.pipeline_mode<synchronous>, transform_indices = @transform_17, window_bounds = array<i64: 128, 128>}, {pipeline_mode = #tpu.pipeline_mode<synchronous>, transform_indices = @transform_18, window_bounds = array<i64: 1, 128>}, {transform_indices = @transform_19, window_bounds = array<i64: 1, 2, 128>}]} {
    %c0 = arith.constant 0 : index
    %c0_0 = arith.constant 0 : index
    %c0_1 = arith.constant 0 : index
    %0 = vector.load %arg1[%c0, %c0_0, %c0_1] : memref<1x512x9xf32, #tpu.memory_space<vmem>>, vector<1x512x9xf32>
    %1 = vector.shape_cast %0 : vector<1x512x9xf32> to vector<512x9xf32>
    %c0_2 = arith.constant 0 : index
    %c0_3 = arith.constant 0 : index
    %2 = vector.load %arg2[%c0_2, %c0_3] : memref<9x4xf32, #tpu.memory_space<vmem>>, vector<9x4xf32>
    %cst = arith.constant dense<0.000000e+00> : vector<512x4xf32>
    %3 = tpu.matmul %1, %2, %cst {dimension_numbers = #tpu.dot_dimension_numbers<[1], [0], [0], [1], [0, 0, 1, 1], [], []>} : vector<512x9xf32>, vector<9x4xf32>, vector<512x4xf32> -> vector<512x4xf32>
    %c0_4 = arith.constant 0 : index
    %c0_5 = arith.constant 0 : index
    %4 = vector.load %arg3[%c0_4, %c0_5] : memref<1x4xf32, #tpu.memory_space<vmem>>, vector<1x4xf32>
    %c0_6 = arith.constant 0 : index
    %c0_7 = arith.constant 0 : index
    %5 = vector.load %arg4[%c0_6, %c0_7] : memref<1x4xf32, #tpu.memory_space<vmem>>, vector<1x4xf32>
    %c0_8 = arith.constant 0 : index
    %c0_9 = arith.constant 0 : index
    %6 = vector.load %arg5[%c0_8, %c0_9] : memref<1x4xf32, #tpu.memory_space<vmem>>, vector<1x4xf32>
    %7 = vector.broadcast %4 : vector<1x4xf32> to vector<512x4xf32>
    %8 = arith.addf %3, %7 : vector<512x4xf32>
    %cst_10 = arith.constant 0.000000e+00 : f32
    %9 = vector.broadcast %cst_10 : f32 to vector<512x4xf32>
    %10 = arith.maximumf %8, %9 : vector<512x4xf32>
    %cst_11 = arith.constant dense<0.000000e+00> : vector<4xf32>
    %11 = vector.multi_reduction <add>, %10, %cst_11 [0] : vector<512x4xf32> to vector<4xf32>
    %12 = vector.shape_cast %11 : vector<4xf32> to vector<1x4xf32>
    %cst_12 = arith.constant 5.120000e+02 : f32
    %13 = vector.broadcast %cst_12 : f32 to vector<1x4xf32>
    %14 = arith.divf %12, %13 : vector<1x4xf32>
    %15 = vector.broadcast %14 : vector<1x4xf32> to vector<512x4xf32>
    %16 = arith.subf %10, %15 : vector<512x4xf32>
    %17 = arith.mulf %16, %16 : vector<512x4xf32>
    %cst_13 = arith.constant dense<0.000000e+00> : vector<4xf32>
    %18 = vector.multi_reduction <add>, %17, %cst_13 [0] : vector<512x4xf32> to vector<4xf32>
    %19 = vector.shape_cast %18 : vector<4xf32> to vector<1x4xf32>
    %cst_14 = arith.constant 5.120000e+02 : f32
    %20 = vector.broadcast %cst_14 : f32 to vector<1x4xf32>
    %21 = arith.divf %19, %20 : vector<1x4xf32>
    %22 = vector.broadcast %14 : vector<1x4xf32> to vector<512x4xf32>
    %23 = arith.subf %10, %22 : vector<512x4xf32>
    %24 = vector.broadcast %5 : vector<1x4xf32> to vector<512x4xf32>
    %25 = arith.mulf %24, %23 : vector<512x4xf32>
    %cst_15 = arith.constant 9.99999974E-6 : f32
    %26 = vector.broadcast %cst_15 : f32 to vector<1x4xf32>
    %27 = arith.addf %21, %26 : vector<1x4xf32>
    %28 = math.rsqrt %27 : vector<1x4xf32>
    %29 = vector.broadcast %28 : vector<1x4xf32> to vector<512x4xf32>
    %30 = arith.mulf %25, %29 : vector<512x4xf32>
    %31 = vector.broadcast %6 : vector<1x4xf32> to vector<512x4xf32>
    %32 = arith.addf %30, %31 : vector<512x4xf32>
    %33 = vector.shape_cast %32 : vector<512x4xf32> to vector<2x16x16x4xf32>
    %34 = vector.extract_strided_slice %33 {offsets = [0, 1, 0, 0], sizes = [2, 1, 16, 4], strides = [1, 1, 1, 1]} : vector<2x16x16x4xf32> to vector<2x1x16x4xf32>
    %35 = vector.extract_strided_slice %33 {offsets = [0, 14, 0, 0], sizes = [2, 1, 16, 4], strides = [1, 1, 1, 1]} : vector<2x16x16x4xf32> to vector<2x1x16x4xf32>
    %36 = tpu.concatenate %34, %33, %35 in 1 : vector<2x1x16x4xf32>, vector<2x16x16x4xf32>, vector<2x1x16x4xf32> -> vector<2x18x16x4xf32>
    %37 = vector.extract_strided_slice %36 {offsets = [0, 0, 1, 0], sizes = [2, 18, 1, 4], strides = [1, 1, 1, 1]} : vector<2x18x16x4xf32> to vector<2x18x1x4xf32>
    %38 = vector.extract_strided_slice %36 {offsets = [0, 0, 14, 0], sizes = [2, 18, 1, 4], strides = [1, 1, 1, 1]} : vector<2x18x16x4xf32> to vector<2x18x1x4xf32>
    %39 = tpu.concatenate %37, %36, %38 in 2 : vector<2x18x1x4xf32>, vector<2x18x16x4xf32>, vector<2x18x1x4xf32> -> vector<2x18x18x4xf32>
    %40 = vector.extract_strided_slice %39 {offsets = [0, 0, 0, 0], sizes = [2, 16, 16, 4], strides = [1, 1, 1, 1]} : vector<2x18x18x4xf32> to vector<2x16x16x4xf32>
    %41 = vector.extract_strided_slice %39 {offsets = [0, 0, 1, 0], sizes = [2, 16, 16, 4], strides = [1, 1, 1, 1]} : vector<2x18x18x4xf32> to vector<2x16x16x4xf32>
    %42 = vector.extract_strided_slice %39 {offsets = [0, 0, 2, 0], sizes = [2, 16, 16, 4], strides = [1, 1, 1, 1]} : vector<2x18x18x4xf32> to vector<2x16x16x4xf32>
    %43 = vector.extract_strided_slice %39 {offsets = [0, 1, 0, 0], sizes = [2, 16, 16, 4], strides = [1, 1, 1, 1]} : vector<2x18x18x4xf32> to vector<2x16x16x4xf32>
    %44 = vector.extract_strided_slice %39 {offsets = [0, 1, 1, 0], sizes = [2, 16, 16, 4], strides = [1, 1, 1, 1]} : vector<2x18x18x4xf32> to vector<2x16x16x4xf32>
    %45 = vector.extract_strided_slice %39 {offsets = [0, 1, 2, 0], sizes = [2, 16, 16, 4], strides = [1, 1, 1, 1]} : vector<2x18x18x4xf32> to vector<2x16x16x4xf32>
    %46 = vector.extract_strided_slice %39 {offsets = [0, 2, 0, 0], sizes = [2, 16, 16, 4], strides = [1, 1, 1, 1]} : vector<2x18x18x4xf32> to vector<2x16x16x4xf32>
    %47 = vector.extract_strided_slice %39 {offsets = [0, 2, 1, 0], sizes = [2, 16, 16, 4], strides = [1, 1, 1, 1]} : vector<2x18x18x4xf32> to vector<2x16x16x4xf32>
    %48 = vector.extract_strided_slice %39 {offsets = [0, 2, 2, 0], sizes = [2, 16, 16, 4], strides = [1, 1, 1, 1]} : vector<2x18x18x4xf32> to vector<2x16x16x4xf32>
    %49 = tpu.concatenate %40, %41, %42, %43, %44, %45, %46, %47, %48 in 3 : vector<2x16x16x4xf32>, vector<2x16x16x4xf32>, vector<2x16x16x4xf32>, vector<2x16x16x4xf32>, vector<2x16x16x4xf32>, vector<2x16x16x4xf32>, vector<2x16x16x4xf32>, vector<2x16x16x4xf32>, vector<2x16x16x4xf32> -> vector<2x16x16x36xf32>
    %50 = vector.shape_cast %49 : vector<2x16x16x36xf32> to vector<512x36xf32>
    %c0_16 = arith.constant 0 : index
    %c0_17 = arith.constant 0 : index
    %51 = vector.load %arg6[%c0_16, %c0_17] : memref<36x8xf32, #tpu.memory_space<vmem>>, vector<36x8xf32>
    %cst_18 = arith.constant dense<0.000000e+00> : vector<512x8xf32>
    %52 = tpu.matmul %50, %51, %cst_18 {dimension_numbers = #tpu.dot_dimension_numbers<[1], [0], [0], [1], [0, 0, 1, 1], [], []>} : vector<512x36xf32>, vector<36x8xf32>, vector<512x8xf32> -> vector<512x8xf32>
    %c0_19 = arith.constant 0 : index
    %c0_20 = arith.constant 0 : index
    %53 = vector.load %arg7[%c0_19, %c0_20] : memref<1x8xf32, #tpu.memory_space<vmem>>, vector<1x8xf32>
    %c0_21 = arith.constant 0 : index
    %c0_22 = arith.constant 0 : index
    %54 = vector.load %arg8[%c0_21, %c0_22] : memref<1x8xf32, #tpu.memory_space<vmem>>, vector<1x8xf32>
    %c0_23 = arith.constant 0 : index
    %c0_24 = arith.constant 0 : index
    %55 = vector.load %arg9[%c0_23, %c0_24] : memref<1x8xf32, #tpu.memory_space<vmem>>, vector<1x8xf32>
    %56 = vector.broadcast %53 : vector<1x8xf32> to vector<512x8xf32>
    %57 = arith.addf %52, %56 : vector<512x8xf32>
    %cst_25 = arith.constant 0.000000e+00 : f32
    %58 = vector.broadcast %cst_25 : f32 to vector<512x8xf32>
    %59 = arith.maximumf %57, %58 : vector<512x8xf32>
    %cst_26 = arith.constant dense<0.000000e+00> : vector<8xf32>
    %60 = vector.multi_reduction <add>, %59, %cst_26 [0] : vector<512x8xf32> to vector<8xf32>
    %61 = vector.shape_cast %60 : vector<8xf32> to vector<1x8xf32>
    %cst_27 = arith.constant 5.120000e+02 : f32
    %62 = vector.broadcast %cst_27 : f32 to vector<1x8xf32>
    %63 = arith.divf %61, %62 : vector<1x8xf32>
    %64 = vector.broadcast %63 : vector<1x8xf32> to vector<512x8xf32>
    %65 = arith.subf %59, %64 : vector<512x8xf32>
    %66 = arith.mulf %65, %65 : vector<512x8xf32>
    %cst_28 = arith.constant dense<0.000000e+00> : vector<8xf32>
    %67 = vector.multi_reduction <add>, %66, %cst_28 [0] : vector<512x8xf32> to vector<8xf32>
    %68 = vector.shape_cast %67 : vector<8xf32> to vector<1x8xf32>
    %cst_29 = arith.constant 5.120000e+02 : f32
    %69 = vector.broadcast %cst_29 : f32 to vector<1x8xf32>
    %70 = arith.divf %68, %69 : vector<1x8xf32>
    %71 = vector.broadcast %63 : vector<1x8xf32> to vector<512x8xf32>
    %72 = arith.subf %59, %71 : vector<512x8xf32>
    %73 = vector.broadcast %54 : vector<1x8xf32> to vector<512x8xf32>
    %74 = arith.mulf %73, %72 : vector<512x8xf32>
    %cst_30 = arith.constant 9.99999974E-6 : f32
    %75 = vector.broadcast %cst_30 : f32 to vector<1x8xf32>
    %76 = arith.addf %70, %75 : vector<1x8xf32>
    %77 = math.rsqrt %76 : vector<1x8xf32>
    %78 = vector.broadcast %77 : vector<1x8xf32> to vector<512x8xf32>
    %79 = arith.mulf %74, %78 : vector<512x8xf32>
    %80 = vector.broadcast %55 : vector<1x8xf32> to vector<512x8xf32>
    %81 = arith.addf %79, %80 : vector<512x8xf32>
    %82 = vector.shape_cast %81 : vector<512x8xf32> to vector<2x16x16x8xf32>
    %83 = vector.extract_strided_slice %82 {offsets = [0, 1, 0, 0], sizes = [2, 1, 16, 8], strides = [1, 1, 1, 1]} : vector<2x16x16x8xf32> to vector<2x1x16x8xf32>
    %84 = vector.extract_strided_slice %82 {offsets = [0, 14, 0, 0], sizes = [2, 1, 16, 8], strides = [1, 1, 1, 1]} : vector<2x16x16x8xf32> to vector<2x1x16x8xf32>
    %85 = tpu.concatenate %83, %82, %84 in 1 : vector<2x1x16x8xf32>, vector<2x16x16x8xf32>, vector<2x1x16x8xf32> -> vector<2x18x16x8xf32>
    %86 = vector.extract_strided_slice %85 {offsets = [0, 0, 1, 0], sizes = [2, 18, 1, 8], strides = [1, 1, 1, 1]} : vector<2x18x16x8xf32> to vector<2x18x1x8xf32>
    %87 = vector.extract_strided_slice %85 {offsets = [0, 0, 14, 0], sizes = [2, 18, 1, 8], strides = [1, 1, 1, 1]} : vector<2x18x16x8xf32> to vector<2x18x1x8xf32>
    %88 = tpu.concatenate %86, %85, %87 in 2 : vector<2x18x1x8xf32>, vector<2x18x16x8xf32>, vector<2x18x1x8xf32> -> vector<2x18x18x8xf32>
    %89 = vector.extract_strided_slice %88 {offsets = [0, 0, 0, 0], sizes = [2, 16, 16, 8], strides = [1, 1, 1, 1]} : vector<2x18x18x8xf32> to vector<2x16x16x8xf32>
    %90 = vector.extract_strided_slice %88 {offsets = [0, 0, 1, 0], sizes = [2, 16, 16, 8], strides = [1, 1, 1, 1]} : vector<2x18x18x8xf32> to vector<2x16x16x8xf32>
    %91 = vector.extract_strided_slice %88 {offsets = [0, 0, 2, 0], sizes = [2, 16, 16, 8], strides = [1, 1, 1, 1]} : vector<2x18x18x8xf32> to vector<2x16x16x8xf32>
    %92 = vector.extract_strided_slice %88 {offsets = [0, 1, 0, 0], sizes = [2, 16, 16, 8], strides = [1, 1, 1, 1]} : vector<2x18x18x8xf32> to vector<2x16x16x8xf32>
    %93 = vector.extract_strided_slice %88 {offsets = [0, 1, 1, 0], sizes = [2, 16, 16, 8], strides = [1, 1, 1, 1]} : vector<2x18x18x8xf32> to vector<2x16x16x8xf32>
    %94 = vector.extract_strided_slice %88 {offsets = [0, 1, 2, 0], sizes = [2, 16, 16, 8], strides = [1, 1, 1, 1]} : vector<2x18x18x8xf32> to vector<2x16x16x8xf32>
    %95 = vector.extract_strided_slice %88 {offsets = [0, 2, 0, 0], sizes = [2, 16, 16, 8], strides = [1, 1, 1, 1]} : vector<2x18x18x8xf32> to vector<2x16x16x8xf32>
    %96 = vector.extract_strided_slice %88 {offsets = [0, 2, 1, 0], sizes = [2, 16, 16, 8], strides = [1, 1, 1, 1]} : vector<2x18x18x8xf32> to vector<2x16x16x8xf32>
    %97 = vector.extract_strided_slice %88 {offsets = [0, 2, 2, 0], sizes = [2, 16, 16, 8], strides = [1, 1, 1, 1]} : vector<2x18x18x8xf32> to vector<2x16x16x8xf32>
    %98 = tpu.concatenate %89, %90, %91, %92, %93, %94, %95, %96, %97 in 3 : vector<2x16x16x8xf32>, vector<2x16x16x8xf32>, vector<2x16x16x8xf32>, vector<2x16x16x8xf32>, vector<2x16x16x8xf32>, vector<2x16x16x8xf32>, vector<2x16x16x8xf32>, vector<2x16x16x8xf32>, vector<2x16x16x8xf32> -> vector<2x16x16x72xf32>
    %99 = vector.shape_cast %98 : vector<2x16x16x72xf32> to vector<512x72xf32>
    %c0_31 = arith.constant 0 : index
    %c0_32 = arith.constant 0 : index
    %100 = vector.load %arg10[%c0_31, %c0_32] : memref<72x8xf32, #tpu.memory_space<vmem>>, vector<72x8xf32>
    %cst_33 = arith.constant dense<0.000000e+00> : vector<512x8xf32>
    %101 = tpu.matmul %99, %100, %cst_33 {dimension_numbers = #tpu.dot_dimension_numbers<[1], [0], [0], [1], [0, 0, 1, 1], [], []>} : vector<512x72xf32>, vector<72x8xf32>, vector<512x8xf32> -> vector<512x8xf32>
    %c0_34 = arith.constant 0 : index
    %c0_35 = arith.constant 0 : index
    %102 = vector.load %arg11[%c0_34, %c0_35] : memref<1x8xf32, #tpu.memory_space<vmem>>, vector<1x8xf32>
    %c0_36 = arith.constant 0 : index
    %c0_37 = arith.constant 0 : index
    %103 = vector.load %arg12[%c0_36, %c0_37] : memref<1x8xf32, #tpu.memory_space<vmem>>, vector<1x8xf32>
    %c0_38 = arith.constant 0 : index
    %c0_39 = arith.constant 0 : index
    %104 = vector.load %arg13[%c0_38, %c0_39] : memref<1x8xf32, #tpu.memory_space<vmem>>, vector<1x8xf32>
    %105 = vector.broadcast %102 : vector<1x8xf32> to vector<512x8xf32>
    %106 = arith.addf %101, %105 : vector<512x8xf32>
    %cst_40 = arith.constant 0.000000e+00 : f32
    %107 = vector.broadcast %cst_40 : f32 to vector<512x8xf32>
    %108 = arith.maximumf %106, %107 : vector<512x8xf32>
    %cst_41 = arith.constant dense<0.000000e+00> : vector<8xf32>
    %109 = vector.multi_reduction <add>, %108, %cst_41 [0] : vector<512x8xf32> to vector<8xf32>
    %110 = vector.shape_cast %109 : vector<8xf32> to vector<1x8xf32>
    %cst_42 = arith.constant 5.120000e+02 : f32
    %111 = vector.broadcast %cst_42 : f32 to vector<1x8xf32>
    %112 = arith.divf %110, %111 : vector<1x8xf32>
    %113 = vector.broadcast %112 : vector<1x8xf32> to vector<512x8xf32>
    %114 = arith.subf %108, %113 : vector<512x8xf32>
    %115 = arith.mulf %114, %114 : vector<512x8xf32>
    %cst_43 = arith.constant dense<0.000000e+00> : vector<8xf32>
    %116 = vector.multi_reduction <add>, %115, %cst_43 [0] : vector<512x8xf32> to vector<8xf32>
    %117 = vector.shape_cast %116 : vector<8xf32> to vector<1x8xf32>
    %cst_44 = arith.constant 5.120000e+02 : f32
    %118 = vector.broadcast %cst_44 : f32 to vector<1x8xf32>
    %119 = arith.divf %117, %118 : vector<1x8xf32>
    %120 = vector.broadcast %112 : vector<1x8xf32> to vector<512x8xf32>
    %121 = arith.subf %108, %120 : vector<512x8xf32>
    %122 = vector.broadcast %103 : vector<1x8xf32> to vector<512x8xf32>
    %123 = arith.mulf %122, %121 : vector<512x8xf32>
    %cst_45 = arith.constant 9.99999974E-6 : f32
    %124 = vector.broadcast %cst_45 : f32 to vector<1x8xf32>
    %125 = arith.addf %119, %124 : vector<1x8xf32>
    %126 = math.rsqrt %125 : vector<1x8xf32>
    %127 = vector.broadcast %126 : vector<1x8xf32> to vector<512x8xf32>
    %128 = arith.mulf %123, %127 : vector<512x8xf32>
    %129 = vector.broadcast %104 : vector<1x8xf32> to vector<512x8xf32>
    %130 = arith.addf %128, %129 : vector<512x8xf32>
    %131 = tpu.transpose %130, [1, 0] : vector<512x8xf32> -> vector<8x512xf32>
    %cst_46 = arith.constant 0.000000e+00 : f32
    %132 = vector.broadcast %cst_46 : f32 to vector<2x128xf32>
    %133 = vector.extract_strided_slice %131 {offsets = [0, 0], sizes = [1, 256], strides = [1, 1]} : vector<8x512xf32> to vector<1x256xf32>
    %134 = vector.extract_strided_slice %131 {offsets = [0, 256], sizes = [1, 256], strides = [1, 1]} : vector<8x512xf32> to vector<1x256xf32>
    %135 = tpu.concatenate %133, %134 in 0 : vector<1x256xf32>, vector<1x256xf32> -> vector<2x256xf32>
    %c0_47 = arith.constant 0 : index
    %c0_48 = arith.constant 0 : index
    %136 = vector.load %arg14[%c0_47, %c0_48] : memref<2048x128xf32, #tpu.memory_space<vmem>>, vector<256x128xf32>
    %cst_49 = arith.constant dense<0.000000e+00> : vector<2x128xf32>
    %137 = tpu.matmul %135, %136, %cst_49 {dimension_numbers = #tpu.dot_dimension_numbers<[1], [0], [0], [1], [0, 0, 1, 1], [], []>} : vector<2x256xf32>, vector<256x128xf32>, vector<2x128xf32> -> vector<2x128xf32>
    %138 = arith.addf %132, %137 : vector<2x128xf32>
    %139 = vector.extract_strided_slice %131 {offsets = [1, 0], sizes = [1, 256], strides = [1, 1]} : vector<8x512xf32> to vector<1x256xf32>
    %140 = vector.extract_strided_slice %131 {offsets = [1, 256], sizes = [1, 256], strides = [1, 1]} : vector<8x512xf32> to vector<1x256xf32>
    %141 = tpu.concatenate %139, %140 in 0 : vector<1x256xf32>, vector<1x256xf32> -> vector<2x256xf32>
    %c256 = arith.constant 256 : index
    %c0_50 = arith.constant 0 : index
    %142 = vector.load %arg14[%c256, %c0_50] : memref<2048x128xf32, #tpu.memory_space<vmem>>, vector<256x128xf32>
    %cst_51 = arith.constant dense<0.000000e+00> : vector<2x128xf32>
    %143 = tpu.matmul %141, %142, %cst_51 {dimension_numbers = #tpu.dot_dimension_numbers<[1], [0], [0], [1], [0, 0, 1, 1], [], []>} : vector<2x256xf32>, vector<256x128xf32>, vector<2x128xf32> -> vector<2x128xf32>
    %144 = arith.addf %138, %143 : vector<2x128xf32>
    %145 = vector.extract_strided_slice %131 {offsets = [2, 0], sizes = [1, 256], strides = [1, 1]} : vector<8x512xf32> to vector<1x256xf32>
    %146 = vector.extract_strided_slice %131 {offsets = [2, 256], sizes = [1, 256], strides = [1, 1]} : vector<8x512xf32> to vector<1x256xf32>
    %147 = tpu.concatenate %145, %146 in 0 : vector<1x256xf32>, vector<1x256xf32> -> vector<2x256xf32>
    %c512 = arith.constant 512 : index
    %c0_52 = arith.constant 0 : index
    %148 = vector.load %arg14[%c512, %c0_52] : memref<2048x128xf32, #tpu.memory_space<vmem>>, vector<256x128xf32>
    %cst_53 = arith.constant dense<0.000000e+00> : vector<2x128xf32>
    %149 = tpu.matmul %147, %148, %cst_53 {dimension_numbers = #tpu.dot_dimension_numbers<[1], [0], [0], [1], [0, 0, 1, 1], [], []>} : vector<2x256xf32>, vector<256x128xf32>, vector<2x128xf32> -> vector<2x128xf32>
    %150 = arith.addf %144, %149 : vector<2x128xf32>
    %151 = vector.extract_strided_slice %131 {offsets = [3, 0], sizes = [1, 256], strides = [1, 1]} : vector<8x512xf32> to vector<1x256xf32>
    %152 = vector.extract_strided_slice %131 {offsets = [3, 256], sizes = [1, 256], strides = [1, 1]} : vector<8x512xf32> to vector<1x256xf32>
    %153 = tpu.concatenate %151, %152 in 0 : vector<1x256xf32>, vector<1x256xf32> -> vector<2x256xf32>
    %c768 = arith.constant 768 : index
    %c0_54 = arith.constant 0 : index
    %154 = vector.load %arg14[%c768, %c0_54] : memref<2048x128xf32, #tpu.memory_space<vmem>>, vector<256x128xf32>
    %cst_55 = arith.constant dense<0.000000e+00> : vector<2x128xf32>
    %155 = tpu.matmul %153, %154, %cst_55 {dimension_numbers = #tpu.dot_dimension_numbers<[1], [0], [0], [1], [0, 0, 1, 1], [], []>} : vector<2x256xf32>, vector<256x128xf32>, vector<2x128xf32> -> vector<2x128xf32>
    %156 = arith.addf %150, %155 : vector<2x128xf32>
    %157 = vector.extract_strided_slice %131 {offsets = [4, 0], sizes = [1, 256], strides = [1, 1]} : vector<8x512xf32> to vector<1x256xf32>
    %158 = vector.extract_strided_slice %131 {offsets = [4, 256], sizes = [1, 256], strides = [1, 1]} : vector<8x512xf32> to vector<1x256xf32>
    %159 = tpu.concatenate %157, %158 in 0 : vector<1x256xf32>, vector<1x256xf32> -> vector<2x256xf32>
    %c1024 = arith.constant 1024 : index
    %c0_56 = arith.constant 0 : index
    %160 = vector.load %arg14[%c1024, %c0_56] : memref<2048x128xf32, #tpu.memory_space<vmem>>, vector<256x128xf32>
    %cst_57 = arith.constant dense<0.000000e+00> : vector<2x128xf32>
    %161 = tpu.matmul %159, %160, %cst_57 {dimension_numbers = #tpu.dot_dimension_numbers<[1], [0], [0], [1], [0, 0, 1, 1], [], []>} : vector<2x256xf32>, vector<256x128xf32>, vector<2x128xf32> -> vector<2x128xf32>
    %162 = arith.addf %156, %161 : vector<2x128xf32>
    %163 = vector.extract_strided_slice %131 {offsets = [5, 0], sizes = [1, 256], strides = [1, 1]} : vector<8x512xf32> to vector<1x256xf32>
    %164 = vector.extract_strided_slice %131 {offsets = [5, 256], sizes = [1, 256], strides = [1, 1]} : vector<8x512xf32> to vector<1x256xf32>
    %165 = tpu.concatenate %163, %164 in 0 : vector<1x256xf32>, vector<1x256xf32> -> vector<2x256xf32>
    %c1280 = arith.constant 1280 : index
    %c0_58 = arith.constant 0 : index
    %166 = vector.load %arg14[%c1280, %c0_58] : memref<2048x128xf32, #tpu.memory_space<vmem>>, vector<256x128xf32>
    %cst_59 = arith.constant dense<0.000000e+00> : vector<2x128xf32>
    %167 = tpu.matmul %165, %166, %cst_59 {dimension_numbers = #tpu.dot_dimension_numbers<[1], [0], [0], [1], [0, 0, 1, 1], [], []>} : vector<2x256xf32>, vector<256x128xf32>, vector<2x128xf32> -> vector<2x128xf32>
    %168 = arith.addf %162, %167 : vector<2x128xf32>
    %169 = vector.extract_strided_slice %131 {offsets = [6, 0], sizes = [1, 256], strides = [1, 1]} : vector<8x512xf32> to vector<1x256xf32>
    %170 = vector.extract_strided_slice %131 {offsets = [6, 256], sizes = [1, 256], strides = [1, 1]} : vector<8x512xf32> to vector<1x256xf32>
    %171 = tpu.concatenate %169, %170 in 0 : vector<1x256xf32>, vector<1x256xf32> -> vector<2x256xf32>
    %c1536 = arith.constant 1536 : index
    %c0_60 = arith.constant 0 : index
    %172 = vector.load %arg14[%c1536, %c0_60] : memref<2048x128xf32, #tpu.memory_space<vmem>>, vector<256x128xf32>
    %cst_61 = arith.constant dense<0.000000e+00> : vector<2x128xf32>
    %173 = tpu.matmul %171, %172, %cst_61 {dimension_numbers = #tpu.dot_dimension_numbers<[1], [0], [0], [1], [0, 0, 1, 1], [], []>} : vector<2x256xf32>, vector<256x128xf32>, vector<2x128xf32> -> vector<2x128xf32>
    %174 = arith.addf %168, %173 : vector<2x128xf32>
    %175 = vector.extract_strided_slice %131 {offsets = [7, 0], sizes = [1, 256], strides = [1, 1]} : vector<8x512xf32> to vector<1x256xf32>
    %176 = vector.extract_strided_slice %131 {offsets = [7, 256], sizes = [1, 256], strides = [1, 1]} : vector<8x512xf32> to vector<1x256xf32>
    %177 = tpu.concatenate %175, %176 in 0 : vector<1x256xf32>, vector<1x256xf32> -> vector<2x256xf32>
    %c1792 = arith.constant 1792 : index
    %c0_62 = arith.constant 0 : index
    %178 = vector.load %arg14[%c1792, %c0_62] : memref<2048x128xf32, #tpu.memory_space<vmem>>, vector<256x128xf32>
    %cst_63 = arith.constant dense<0.000000e+00> : vector<2x128xf32>
    %179 = tpu.matmul %177, %178, %cst_63 {dimension_numbers = #tpu.dot_dimension_numbers<[1], [0], [0], [1], [0, 0, 1, 1], [], []>} : vector<2x256xf32>, vector<256x128xf32>, vector<2x128xf32> -> vector<2x128xf32>
    %180 = arith.addf %174, %179 : vector<2x128xf32>
    %c0_64 = arith.constant 0 : index
    %c0_65 = arith.constant 0 : index
    %181 = vector.load %arg15[%c0_64, %c0_65] : memref<1x128xf32, #tpu.memory_space<vmem>>, vector<1x128xf32>
    %182 = vector.broadcast %181 : vector<1x128xf32> to vector<2x128xf32>
    %183 = arith.addf %180, %182 : vector<2x128xf32>
    %cst_66 = arith.constant 0.000000e+00 : f32
    %184 = vector.broadcast %cst_66 : f32 to vector<2x128xf32>
    %185 = arith.maximumf %183, %184 : vector<2x128xf32>
    %c0_67 = arith.constant 0 : index
    %c0_68 = arith.constant 0 : index
    %186 = vector.load %arg16[%c0_67, %c0_68] : memref<128x128xf32, #tpu.memory_space<vmem>>, vector<128x128xf32>
    %cst_69 = arith.constant dense<0.000000e+00> : vector<2x128xf32>
    %187 = tpu.matmul %185, %186, %cst_69 {dimension_numbers = #tpu.dot_dimension_numbers<[1], [0], [0], [1], [0, 0, 1, 1], [], []>} : vector<2x128xf32>, vector<128x128xf32>, vector<2x128xf32> -> vector<2x128xf32>
    %c0_70 = arith.constant 0 : index
    %c0_71 = arith.constant 0 : index
    %188 = vector.load %arg17[%c0_70, %c0_71] : memref<1x128xf32, #tpu.memory_space<vmem>>, vector<1x128xf32>
    %189 = vector.broadcast %188 : vector<1x128xf32> to vector<2x128xf32>
    %190 = arith.addf %187, %189 : vector<2x128xf32>
    %cst_72 = arith.constant 0.000000e+00 : f32
    %191 = vector.broadcast %cst_72 : f32 to vector<2x128xf32>
    %192 = arith.maximumf %190, %191 : vector<2x128xf32>
    %c0_73 = arith.constant 0 : index
    %c0_74 = arith.constant 0 : index
    %193 = vector.load %arg18[%c0_73, %c0_74] : memref<128x128xf32, #tpu.memory_space<vmem>>, vector<128x128xf32>
    %cst_75 = arith.constant dense<0.000000e+00> : vector<2x128xf32>
    %194 = tpu.matmul %192, %193, %cst_75 {dimension_numbers = #tpu.dot_dimension_numbers<[1], [0], [0], [1], [0, 0, 1, 1], [], []>} : vector<2x128xf32>, vector<128x128xf32>, vector<2x128xf32> -> vector<2x128xf32>
    %c0_76 = arith.constant 0 : index
    %c0_77 = arith.constant 0 : index
    %195 = vector.load %arg19[%c0_76, %c0_77] : memref<1x128xf32, #tpu.memory_space<vmem>>, vector<1x128xf32>
    %196 = vector.broadcast %195 : vector<1x128xf32> to vector<2x128xf32>
    %197 = arith.addf %194, %196 : vector<2x128xf32>
    %c0_78 = arith.constant 0 : index
    %c0_79 = arith.constant 0 : index
    %c0_80 = arith.constant 0 : index
    %198 = vector.load %arg20[%c0_78, %c0_79, %c0_80] : memref<1x2x128xf32, #tpu.memory_space<vmem>>, vector<1x2x128xf32>
    %199 = vector.shape_cast %198 : vector<1x2x128xf32> to vector<2x128xf32>
    %200 = vector.shape_cast %197 : vector<2x128xf32> to vector<1x2x128xf32>
    tpu.vector_store %arg20[%c0_78, %c0_79, %c0_80], %200 {strides = array<i32>} : memref<1x2x128xf32, #tpu.memory_space<vmem>>, vector<1x2x128xf32>,
    return
  }
  func.func @transform_0(%arg0: i32) -> (i32, i32, i32) {
    %c0_i32 = arith.constant 0 : i32
    %c0_i32_0 = arith.constant 0 : i32
    %c0_i32_1 = arith.constant 0 : i32
    return %arg0, %c0_i32, %c0_i32_0 : i32, i32, i32
  }
  func.func @transform_1(%arg0: i32) -> (i32, i32) {
    %c0_i32 = arith.constant 0 : i32
    %c0_i32_0 = arith.constant 0 : i32
    %c0_i32_1 = arith.constant 0 : i32
    return %c0_i32, %c0_i32_0 : i32, i32
  }
  func.func @transform_2(%arg0: i32) -> (i32, i32) {
    %c0_i32 = arith.constant 0 : i32
    %c0_i32_0 = arith.constant 0 : i32
    %c0_i32_1 = arith.constant 0 : i32
    return %c0_i32, %c0_i32_0 : i32, i32
  }
  func.func @transform_3(%arg0: i32) -> (i32, i32) {
    %c0_i32 = arith.constant 0 : i32
    %c0_i32_0 = arith.constant 0 : i32
    %c0_i32_1 = arith.constant 0 : i32
    return %c0_i32, %c0_i32_0 : i32, i32
  }
  func.func @transform_4(%arg0: i32) -> (i32, i32) {
    %c0_i32 = arith.constant 0 : i32
    %c0_i32_0 = arith.constant 0 : i32
    %c0_i32_1 = arith.constant 0 : i32
    return %c0_i32, %c0_i32_0 : i32, i32
  }
  func.func @transform_5(%arg0: i32) -> (i32, i32) {
    %c0_i32 = arith.constant 0 : i32
    %c0_i32_0 = arith.constant 0 : i32
    %c0_i32_1 = arith.constant 0 : i32
    return %c0_i32, %c0_i32_0 : i32, i32
  }
  func.func @transform_6(%arg0: i32) -> (i32, i32) {
    %c0_i32 = arith.constant 0 : i32
    %c0_i32_0 = arith.constant 0 : i32
    %c0_i32_1 = arith.constant 0 : i32
    return %c0_i32, %c0_i32_0 : i32, i32
  }
  func.func @transform_7(%arg0: i32) -> (i32, i32) {
    %c0_i32 = arith.constant 0 : i32
    %c0_i32_0 = arith.constant 0 : i32
    %c0_i32_1 = arith.constant 0 : i32
    return %c0_i32, %c0_i32_0 : i32, i32
  }
  func.func @transform_8(%arg0: i32) -> (i32, i32) {
    %c0_i32 = arith.constant 0 : i32
    %c0_i32_0 = arith.constant 0 : i32
    %c0_i32_1 = arith.constant 0 : i32
    return %c0_i32, %c0_i32_0 : i32, i32
  }
  func.func @transform_9(%arg0: i32) -> (i32, i32) {
    %c0_i32 = arith.constant 0 : i32
    %c0_i32_0 = arith.constant 0 : i32
    %c0_i32_1 = arith.constant 0 : i32
    return %c0_i32, %c0_i32_0 : i32, i32
  }
  func.func @transform_10(%arg0: i32) -> (i32, i32) {
    %c0_i32 = arith.constant 0 : i32
    %c0_i32_0 = arith.constant 0 : i32
    %c0_i32_1 = arith.constant 0 : i32
    return %c0_i32, %c0_i32_0 : i32, i32
  }
  func.func @transform_11(%arg0: i32) -> (i32, i32) {
    %c0_i32 = arith.constant 0 : i32
    %c0_i32_0 = arith.constant 0 : i32
    %c0_i32_1 = arith.constant 0 : i32
    return %c0_i32, %c0_i32_0 : i32, i32
  }
  func.func @transform_12(%arg0: i32) -> (i32, i32) {
    %c0_i32 = arith.constant 0 : i32
    %c0_i32_0 = arith.constant 0 : i32
    %c0_i32_1 = arith.constant 0 : i32
    return %c0_i32, %c0_i32_0 : i32, i32
  }
  func.func @transform_13(%arg0: i32) -> (i32, i32) {
    %c0_i32 = arith.constant 0 : i32
    %c0_i32_0 = arith.constant 0 : i32
    %c0_i32_1 = arith.constant 0 : i32
    return %c0_i32, %c0_i32_0 : i32, i32
  }
  func.func @transform_14(%arg0: i32) -> (i32, i32) {
    %c0_i32 = arith.constant 0 : i32
    %c0_i32_0 = arith.constant 0 : i32
    %c0_i32_1 = arith.constant 0 : i32
    return %c0_i32, %c0_i32_0 : i32, i32
  }
  func.func @transform_15(%arg0: i32) -> (i32, i32) {
    %c0_i32 = arith.constant 0 : i32
    %c0_i32_0 = arith.constant 0 : i32
    %c0_i32_1 = arith.constant 0 : i32
    return %c0_i32, %c0_i32_0 : i32, i32
  }
  func.func @transform_16(%arg0: i32) -> (i32, i32) {
    %c0_i32 = arith.constant 0 : i32
    %c0_i32_0 = arith.constant 0 : i32
    %c0_i32_1 = arith.constant 0 : i32
    return %c0_i32, %c0_i32_0 : i32, i32
  }
  func.func @transform_17(%arg0: i32) -> (i32, i32) {
    %c0_i32 = arith.constant 0 : i32
    %c0_i32_0 = arith.constant 0 : i32
    %c0_i32_1 = arith.constant 0 : i32
    return %c0_i32, %c0_i32_0 : i32, i32
  }
  func.func @transform_18(%arg0: i32) -> (i32, i32) {
    %c0_i32 = arith.constant 0 : i32
    %c0_i32_0 = arith.constant 0 : i32
    %c0_i32_1 = arith.constant 0 : i32
    return %c0_i32, %c0_i32_0 : i32, i32
  }
  func.func @transform_19(%arg0: i32) -> (i32, i32, i32) {
    %c0_i32 = arith.constant 0 : i32
    %c0_i32_0 = arith.constant 0 : i32
    %c0_i32_1 = arith.constant 0 : i32
    return %arg0, %c0_i32, %c0_i32_0 : i32, i32, i32
  }
}

</mosaic_0001>

<llo_original>
// kernel: siamese_forward.1
$region0: #{siamese_forward.1}
  #allocation0 [shape = 'u32[]', space=smem, size = 0x4, offset = 0x4, fixed_abs, tag = 'smem constant byte address 0x4 - core index']
  #allocation1 [shape = 'u32[144,128]{1,0:T(1,128)}', space=vmem, size = 0x12000, scoped, tag = 'internal scratch']
  %s0 = inlined_call_operand.vmem [shape: f32[2,512,9], index: 0, kind: input, shape index: {}]
  %s1 = inlined_call_operand.vmem [shape: f32[9,4], index: 1, kind: input, shape index: {}]
  %s2 = inlined_call_operand.vmem [shape: f32[1,4], index: 2, kind: input, shape index: {}]
  %s3 = inlined_call_operand.vmem [shape: f32[1,4], index: 3, kind: input, shape index: {}]
  %s4 = inlined_call_operand.vmem [shape: f32[1,4], index: 4, kind: input, shape index: {}]
  %s5 = inlined_call_operand.vmem [shape: f32[36,8], index: 5, kind: input, shape index: {}]
  %s6 = inlined_call_operand.vmem [shape: f32[1,8], index: 6, kind: input, shape index: {}]
  %s7 = inlined_call_operand.vmem [shape: f32[1,8], index: 7, kind: input, shape index: {}]
  %s8 = inlined_call_operand.vmem [shape: f32[1,8], index: 8, kind: input, shape index: {}]
  %s9 = inlined_call_operand.vmem [shape: f32[72,8], index: 9, kind: input, shape index: {}]
  %s10 = inlined_call_operand.vmem [shape: f32[1,8], index: 10, kind: input, shape index: {}]
  %s11 = inlined_call_operand.vmem [shape: f32[1,8], index: 11, kind: input, shape index: {}]
  %s12 = inlined_call_operand.vmem [shape: f32[1,8], index: 12, kind: input, shape index: {}]
  %s13 = inlined_call_operand.vmem [shape: f32[2048,128], index: 13, kind: input, shape index: {}]
  %s14 = inlined_call_operand.vmem [shape: f32[1,128], index: 14, kind: input, shape index: {}]
  %s15 = inlined_call_operand.vmem [shape: f32[128,128], index: 15, kind: input, shape index: {}]
  %s16 = inlined_call_operand.vmem [shape: f32[1,128], index: 16, kind: input, shape index: {}]
  %s17 = inlined_call_operand.vmem [shape: f32[128,128], index: 17, kind: input, shape index: {}]
  %s18 = inlined_call_operand.vmem [shape: f32[1,128], index: 18, kind: input, shape index: {}]
  %s19 = inlined_call_operand.vmem [shape: f32[2,2,128], index: 19, kind: output, shape index: {}]
  %s20 = sld [smem:[#allocation0]]
  $region109: #{siamese_forward.1} parent=0
    _
  %s22 = ssub.s32 1, %s20
  %s23 = scalar_select 0, %s22, %s20
  loop: start=0, step=1, limit=4
  $region2: #{siamese_forward.1} parent=0 // loop_pre_header
    _
  $region3: #{siamese_forward.1} parent=0 // loop_header
    %s25 = sphi 0, %s29
    %p26 = scmp.ge.s32.totalorder %s25, 4
    %s35 = sphi 0, %s37
    %s38 = sphi 0, %s35
    %s39 = sphi 0, %s38
    %s55 = sphi 0, %s39
    %s59 = sphi 0, %s59
    %s61 = sphi 0, %s59
    %s62 = sphi 0, %s61
    %s76 = sphi 0, %s62
    %s80 = sphi 0, %s80
    %s82 = sphi 0, %s80
    %s83 = sphi 0, %s82
    %s97 = sphi 0, %s83
    %s101 = sphi 0, %s101
    %s103 = sphi 0, %s101
    %s104 = sphi 0, %s103
    %s118 = sphi 0, %s104
    %s122 = sphi 0, %s122
    %s124 = sphi 0, %s122
    %s125 = sphi 0, %s124
    %s139 = sphi 0, %s125
    %s143 = sphi 0, %s143
    %s145 = sphi 0, %s143
    %s146 = sphi 0, %s145
    %s160 = sphi 0, %s146
    %s164 = sphi 0, %s164
    %s166 = sphi 0, %s164
    %s167 = sphi 0, %s166
    %s181 = sphi 0, %s167
    %s185 = sphi 0, %s185
    %s187 = sphi 0, %s185
    %s188 = sphi 0, %s187
    %s202 = sphi 0, %s188
    %s206 = sphi 0, %s206
    %s208 = sphi 0, %s206
    %s209 = sphi 0, %s208
    %s223 = sphi 0, %s209
    %s227 = sphi 0, %s227
    %s229 = sphi 0, %s227
    %s230 = sphi 0, %s229
    %s244 = sphi 0, %s230
    %s248 = sphi 0, %s248
    %s250 = sphi 0, %s248
    %s251 = sphi 0, %s250
    %s265 = sphi 0, %s251
    %s269 = sphi 0, %s269
    %s271 = sphi 0, %s269
    %s272 = sphi 0, %s271
    %s286 = sphi 0, %s272
    %s290 = sphi 0, %s290
    %s292 = sphi 0, %s290
    %s293 = sphi 0, %s292
    %s307 = sphi 0, %s293
    %s311 = sphi 0, %s311
    %s313 = sphi 0, %s311
    %s314 = sphi 0, %s313
    %s328 = sphi 0, %s314
    %s332 = sphi 0, %s332
    %s334 = sphi 0, %s332
    %s335 = sphi 0, %s334
    %s349 = sphi 0, %s335
    %s353 = sphi 0, %s353
    %s355 = sphi 0, %s353
    %s356 = sphi 0, %s355
    %s370 = sphi 0, %s356
    %s374 = sphi 0, %s374
    %s376 = sphi 0, %s374
    %s377 = sphi 0, %s376
    %s391 = sphi 0, %s377
    %s395 = sphi 0, %s395
    %s397 = sphi 0, %s395
    %s398 = sphi 0, %s397
    %s412 = sphi 0, %s398
    %s416 = sphi 0, %s416
    %s418 = sphi 0, %s416
    %s419 = sphi 0, %s418
    %s433 = sphi 0, %s419
    %s439 = sphi 0, %s441
    %s442 = sphi 0, %s439
    %s443 = sphi 0, %s442
    %s459 = sphi 0, %s443
  $region4: #{siamese_forward.1} parent=0 // loop_header_branch
    %28 = sbr.rel (%p26) target = $region8
  $region5: #{siamese_forward.1} parent=0 // loop_body
    %s30 = ssub.s32 %s25, 1
    %s31 = ssub.s32 %s25, 2
    %s32 = sadd.s32 %s25, 1
    %s33 = ssub.s32 %s25, %s32
    %p34 = scmp.eq.s32.totalorder %s33, 0
    %s36 = sadd.s32 %s35, 1
    %s37 = scalar_select %p34, %s35, %s36
    %p40 = pneg %p34
    %p41 = scmp.eq.s32.totalorder %s25, 1
    %p42 = por %p40, %p41
    %p43 = scmp.ne.s32.totalorder %s35, %s38
    %p44 = scmp.eq.s32.totalorder %s25, 0
    %p45 = por %p43, %p44
    %p46 = scmp.ne.s32.totalorder %s35, %s38
    %p47 = scmp.eq.s32.totalorder %s30, 1
    %p48 = por %p46, %p47
    %p49 = scmp.ne.s32.totalorder %s38, %s39
    %p50 = scmp.eq.s32.totalorder %s30, 0
    %p51 = por %p49, %p50
    %p52 = scmp.ne.s32.totalorder %s38, %s39
    %p53 = scmp.eq.s32.totalorder %s31, 1
    %p54 = por %p52, %p53
    %p56 = scmp.ne.s32.totalorder %s39, %s55
    %p57 = scmp.eq.s32.totalorder %s31, 0
    %p58 = por %p56, %p57
    %s60 = sadd.s32 %s59, 1
    %p63 = scmp.eq.s32.totalorder %s25, 1
    %p64 = scmp.ne.s32.totalorder %s59, %s61
    %p65 = scmp.eq.s32.totalorder %s25, 0
    %p66 = por %p64, %p65
    %p67 = scmp.ne.s32.totalorder %s59, %s61
    %p68 = scmp.eq.s32.totalorder %s30, 1
    %p69 = por %p67, %p68
    %p70 = scmp.ne.s32.totalorder %s61, %s62
    %p71 = scmp.eq.s32.totalorder %s30, 0
    %p72 = por %p70, %p71
    %p73 = scmp.ne.s32.totalorder %s61, %s62
    %p74 = scmp.eq.s32.totalorder %s31, 1
    %p75 = por %p73, %p74
    %p77 = scmp.ne.s32.totalorder %s62, %s76
    %p78 = scmp.eq.s32.totalorder %s31, 0
    %p79 = por %p77, %p78
    %s81 = sadd.s32 %s80, 1
    %p84 = scmp.eq.s32.totalorder %s25, 1
    %p85 = scmp.ne.s32.totalorder %s80, %s82
    %p86 = scmp.eq.s32.totalorder %s25, 0
    %p87 = por %p85, %p86
    %p88 = scmp.ne.s32.totalorder %s80, %s82
    %p89 = scmp.eq.s32.totalorder %s30, 1
    %p90 = por %p88, %p89
    %p91 = scmp.ne.s32.totalorder %s82, %s83
    %p92 = scmp.eq.s32.totalorder %s30, 0
    %p93 = por %p91, %p92
    %p94 = scmp.ne.s32.totalorder %s82, %s83
    %p95 = scmp.eq.s32.totalorder %s31, 1
    %p96 = por %p94, %p95
    %p98 = scmp.ne.s32.totalorder %s83, %s97
    %p99 = scmp.eq.s32.totalorder %s31, 0
    %p100 = por %p98, %p99
    %s102 = sadd.s32 %s101, 1
    %p105 = scmp.eq.s32.totalorder %s25, 1
    %p106 = scmp.ne.s32.totalorder %s101, %s103
    %p107 = scmp.eq.s32.totalorder %s25, 0
    %p108 = por %p106, %p107
    %p109 = scmp.ne.s32.totalorder %s101, %s103
    %p110 = scmp.eq.s32.totalorder %s30, 1
    %p111 = por %p109, %p110
    %p112 = scmp.ne.s32.totalorder %s103, %s104
    %p113 = scmp.eq.s32.totalorder %s30, 0
    %p114 = por %p112, %p113
    %p115 = scmp.ne.s32.totalorder %s103, %s104
    %p116 = scmp.eq.s32.totalorder %s31, 1
    %p117 = por %p115, %p116
    %p119 = scmp.ne.s32.totalorder %s104, %s118
    %p120 = scmp.eq.s32.totalorder %s31, 0
    %p121 = por %p119, %p120
    %s123 = sadd.s32 %s122, 1
    %p126 = scmp.eq.s32.totalorder %s25, 1
    %p127 = scmp.ne.s32.totalorder %s122, %s124
    %p128 = scmp.eq.s32.totalorder %s25, 0
    %p129 = por %p127, %p128
    %p130 = scmp.ne.s32.totalorder %s122, %s124
    %p131 = scmp.eq.s32.totalorder %s30, 1
    %p132 = por %p130, %p131
    %p133 = scmp.ne.s32.totalorder %s124, %s125
    %p134 = scmp.eq.s32.totalorder %s30, 0
    %p135 = por %p133, %p134
    %p136 = scmp.ne.s32.totalorder %s124, %s125
    %p137 = scmp.eq.s32.totalorder %s31, 1
    %p138 = por %p136, %p137
    %p140 = scmp.ne.s32.totalorder %s125, %s139
    %p141 = scmp.eq.s32.totalorder %s31, 0
    %p142 = por %p140, %p141
    %s144 = sadd.s32 %s143, 1
    %p147 = scmp.eq.s32.totalorder %s25, 1
    %p148 = scmp.ne.s32.totalorder %s143, %s145
    %p149 = scmp.eq.s32.totalorder %s25, 0
    %p150 = por %p148, %p149
    %p151 = scmp.ne.s32.totalorder %s143, %s145
    %p152 = scmp.eq.s32.totalorder %s30, 1
    %p153 = por %p151, %p152
    %p154 = scmp.ne.s32.totalorder %s145, %s146
    %p155 = scmp.eq.s32.totalorder %s30, 0
    %p156 = por %p154, %p155
    %p157 = scmp.ne.s32.totalorder %s145, %s146
    %p158 = scmp.eq.s32.totalorder %s31, 1
    %p159 = por %p157, %p158
    %p161 = scmp.ne.s32.totalorder %s146, %s160
    %p162 = scmp.eq.s32.totalorder %s31, 0
    %p163 = por %p161, %p162
    %s165 = sadd.s32 %s164, 1
    %p168 = scmp.eq.s32.totalorder %s25, 1
    %p169 = scmp.ne.s32.totalorder %s164, %s166
    %p170 = scmp.eq.s32.totalorder %s25, 0
    %p171 = por %p169, %p170
    %p172 = scmp.ne.s32.totalorder %s164, %s166
    %p173 = scmp.eq.s32.totalorder %s30, 1
    %p174 = por %p172, %p173
    %p175 = scmp.ne.s32.totalorder %s166, %s167
    %p176 = scmp.eq.s32.totalorder %s30, 0
    %p177 = por %p175, %p176
    %p178 = scmp.ne.s32.totalorder %s166, %s167
    %p179 = scmp.eq.s32.totalorder %s31, 1
    %p180 = por %p178, %p179
    %p182 = scmp.ne.s32.totalorder %s167, %s181
    %p183 = scmp.eq.s32.totalorder %s31, 0
    %p184 = por %p182, %p183
    %s186 = sadd.s32 %s185, 1
    %p189 = scmp.eq.s32.totalorder %s25, 1
    %p190 = scmp.ne.s32.totalorder %s185, %s187
    %p191 = scmp.eq.s32.totalorder %s25, 0
    %p192 = por %p190, %p191
    %p193 = scmp.ne.s32.totalorder %s185, %s187
    %p194 = scmp.eq.s32.totalorder %s30, 1
    %p195 = por %p193, %p194
    %p196 = scmp.ne.s32.totalorder %s187, %s188
    %p197 = scmp.eq.s32.totalorder %s30, 0
    %p198 = por %p196, %p197
    %p199 = scmp.ne.s32.totalorder %s187, %s188
    %p200 = scmp.eq.s32.totalorder %s31, 1
    %p201 = por %p199, %p200
    %p203 = scmp.ne.s32.totalorder %s188, %s202
    %p204 = scmp.eq.s32.totalorder %s31, 0
    %p205 = por %p203, %p204
    %s207 = sadd.s32 %s206, 1
    %p210 = scmp.eq.s32.totalorder %s25, 1
    %p211 = scmp.ne.s32.totalorder %s206, %s208
    %p212 = scmp.eq.s32.totalorder %s25, 0
    %p213 = por %p211, %p212
    %p214 = scmp.ne.s32.totalorder %s206, %s208
    %p215 = scmp.eq.s32.totalorder %s30, 1
    %p216 = por %p214, %p215
    %p217 = scmp.ne.s32.totalorder %s208, %s209
    %p218 = scmp.eq.s32.totalorder %s30, 0
    %p219 = por %p217, %p218
    %p220 = scmp.ne.s32.totalorder %s208, %s209
    %p221 = scmp.eq.s32.totalorder %s31, 1
    %p222 = por %p220, %p221
    %p224 = scmp.ne.s32.totalorder %s209, %s223
    %p225 = scmp.eq.s32.totalorder %s31, 0
    %p226 = por %p224, %p225
    %s228 = sadd.s32 %s227, 1
    %p231 = scmp.eq.s32.totalorder %s25, 1
    %p232 = scmp.ne.s32.totalorder %s227, %s229
    %p233 = scmp.eq.s32.totalorder %s25, 0
    %p234 = por %p232, %p233
    %p235 = scmp.ne.s32.totalorder %s227, %s229
    %p236 = scmp.eq.s32.totalorder %s30, 1
    %p237 = por %p235, %p236
    %p238 = scmp.ne.s32.totalorder %s229, %s230
    %p239 = scmp.eq.s32.totalorder %s30, 0
    %p240 = por %p238, %p239
    %p241 = scmp.ne.s32.totalorder %s229, %s230
    %p242 = scmp.eq.s32.totalorder %s31, 1
    %p243 = por %p241, %p242
    %p245 = scmp.ne.s32.totalorder %s230, %s244
    %p246 = scmp.eq.s32.totalorder %s31, 0
    %p247 = por %p245, %p246
    %s249 = sadd.s32 %s248, 1
    %p252 = scmp.eq.s32.totalorder %s25, 1
    %p253 = scmp.ne.s32.totalorder %s248, %s250
    %p254 = scmp.eq.s32.totalorder %s25, 0
    %p255 = por %p253, %p254
    %p256 = scmp.ne.s32.totalorder %s248, %s250
    %p257 = scmp.eq.s32.totalorder %s30, 1
    %p258 = por %p256, %p257
    %p259 = scmp.ne.s32.totalorder %s250, %s251
    %p260 = scmp.eq.s32.totalorder %s30, 0
    %p261 = por %p259, %p260
    %p262 = scmp.ne.s32.totalorder %s250, %s251
    %p263 = scmp.eq.s32.totalorder %s31, 1
    %p264 = por %p262, %p263
    %p266 = scmp.ne.s32.totalorder %s251, %s265
    %p267 = scmp.eq.s32.totalorder %s31, 0
    %p268 = por %p266, %p267
    %s270 = sadd.s32 %s269, 1
    %p273 = scmp.eq.s32.totalorder %s25, 1
    %p274 = scmp.ne.s32.totalorder %s269, %s271
    %p275 = scmp.eq.s32.totalorder %s25, 0
    %p276 = por %p274, %p275
    %p277 = scmp.ne.s32.totalorder %s269, %s271
    %p278 = scmp.eq.s32.totalorder %s30, 1
    %p279 = por %p277, %p278
    %p280 = scmp.ne.s32.totalorder %s271, %s272
    %p281 = scmp.eq.s32.totalorder %s30, 0
    %p282 = por %p280, %p281
    %p283 = scmp.ne.s32.totalorder %s271, %s272
    %p284 = scmp.eq.s32.totalorder %s31, 1
    %p285 = por %p283, %p284
    %p287 = scmp.ne.s32.totalorder %s272, %s286
    %p288 = scmp.eq.s32.totalorder %s31, 0
    %p289 = por %p287, %p288
    %s291 = sadd.s32 %s290, 1
    %p294 = scmp.eq.s32.totalorder %s25, 1
    %p295 = scmp.ne.s32.totalorder %s290, %s292
    %p296 = scmp.eq.s32.totalorder %s25, 0
    %p297 = por %p295, %p296
    %p298 = scmp.ne.s32.totalorder %s290, %s292
    %p299 = scmp.eq.s32.totalorder %s30, 1
    %p300 = por %p298, %p299
    %p301 = scmp.ne.s32.totalorder %s292, %s293
    %p302 = scmp.eq.s32.totalorder %s30, 0
    %p303 = por %p301, %p302
    %p304 = scmp.ne.s32.totalorder %s292, %s293
    %p305 = scmp.eq.s32.totalorder %s31, 1
    %p306 = por %p304, %p305
    %p308 = scmp.ne.s32.totalorder %s293, %s307
    %p309 = scmp.eq.s32.totalorder %s31, 0
    %p310 = por %p308, %p309
    %s312 = sadd.s32 %s311, 1
    %p315 = scmp.eq.s32.totalorder %s25, 1
    %p316 = scmp.ne.s32.totalorder %s311, %s313
    %p317 = scmp.eq.s32.totalorder %s25, 0
    %p318 = por %p316, %p317
    %p319 = scmp.ne.s32.totalorder %s311, %s313
    %p320 = scmp.eq.s32.totalorder %s30, 1
    %p321 = por %p319, %p320
    %p322 = scmp.ne.s32.totalorder %s313, %s314
    %p323 = scmp.eq.s32.totalorder %s30, 0
    %p324 = por %p322, %p323
    %p325 = scmp.ne.s32.totalorder %s313, %s314
    %p326 = scmp.eq.s32.totalorder %s31, 1
    %p327 = por %p325, %p326
    %p329 = scmp.ne.s32.totalorder %s314, %s328
    %p330 = scmp.eq.s32.totalorder %s31, 0
    %p331 = por %p329, %p330
    %s333 = sadd.s32 %s332, 1
    %p336 = scmp.eq.s32.totalorder %s25, 1
    %p337 = scmp.ne.s32.totalorder %s332, %s334
    %p338 = scmp.eq.s32.totalorder %s25, 0
    %p339 = por %p337, %p338
    %p340 = scmp.ne.s32.totalorder %s332, %s334
    %p341 = scmp.eq.s32.totalorder %s30, 1
    %p342 = por %p340, %p341
    %p343 = scmp.ne.s32.totalorder %s334, %s335
    %p344 = scmp.eq.s32.totalorder %s30, 0
    %p345 = por %p343, %p344
    %p346 = scmp.ne.s32.totalorder %s334, %s335
    %p347 = scmp.eq.s32.totalorder %s31, 1
    %p348 = por %p346, %p347
    %p350 = scmp.ne.s32.totalorder %s335, %s349
    %p351 = scmp.eq.s32.totalorder %s31, 0
    %p352 = por %p350, %p351
    %s354 = sadd.s32 %s353, 1
    %p357 = scmp.eq.s32.totalorder %s25, 1
    %p358 = scmp.ne.s32.totalorder %s353, %s355
    %p359 = scmp.eq.s32.totalorder %s25, 0
    %p360 = por %p358, %p359
    %p361 = scmp.ne.s32.totalorder %s353, %s355
    %p362 = scmp.eq.s32.totalorder %s30, 1
    %p363 = por %p361, %p362
    %p364 = scmp.ne.s32.totalorder %s355, %s356
    %p365 = scmp.eq.s32.totalorder %s30, 0
    %p366 = por %p364, %p365
    %p367 = scmp.ne.s32.totalorder %s355, %s356
    %p368 = scmp.eq.s32.totalorder %s31, 1
    %p369 = por %p367, %p368
    %p371 = scmp.ne.s32.totalorder %s356, %s370
    %p372 = scmp.eq.s32.totalorder %s31, 0
    %p373 = por %p371, %p372
    %s375 = sadd.s32 %s374, 1
    %p378 = scmp.eq.s32.totalorder %s25, 1
    %p379 = scmp.ne.s32.totalorder %s374, %s376
    %p380 = scmp.eq.s32.totalorder %s25, 0
    %p381 = por %p379, %p380
    %p382 = scmp.ne.s32.totalorder %s374, %s376
    %p383 = scmp.eq.s32.totalorder %s30, 1
    %p384 = por %p382, %p383
    %p385 = scmp.ne.s32.totalorder %s376, %s377
    %p386 = scmp.eq.s32.totalorder %s30, 0
    %p387 = por %p385, %p386
    %p388 = scmp.ne.s32.totalorder %s376, %s377
    %p389 = scmp.eq.s32.totalorder %s31, 1
    %p390 = por %p388, %p389
    %p392 = scmp.ne.s32.totalorder %s377, %s391
    %p393 = scmp.eq.s32.totalorder %s31, 0
    %p394 = por %p392, %p393
    %s396 = sadd.s32 %s395, 1
    %p399 = scmp.eq.s32.totalorder %s25, 1
    %p400 = scmp.ne.s32.totalorder %s395, %s397
    %p401 = scmp.eq.s32.totalorder %s25, 0
    %p402 = por %p400, %p401
    %p403 = scmp.ne.s32.totalorder %s395, %s397
    %p404 = scmp.eq.s32.totalorder %s30, 1
    %p405 = por %p403, %p404
    %p406 = scmp.ne.s32.totalorder %s397, %s398
    %p407 = scmp.eq.s32.totalorder %s30, 0
    %p408 = por %p406, %p407
    %p409 = scmp.ne.s32.totalorder %s397, %s398
    %p410 = scmp.eq.s32.totalorder %s31, 1
    %p411 = por %p409, %p410
    %p413 = scmp.ne.s32.totalorder %s398, %s412
    %p414 = scmp.eq.s32.totalorder %s31, 0
    %p415 = por %p413, %p414
    %s417 = sadd.s32 %s416, 1
    %p420 = scmp.eq.s32.totalorder %s25, 1
    %p421 = scmp.ne.s32.totalorder %s416, %s418
    %p422 = scmp.eq.s32.totalorder %s25, 0
    %p423 = por %p421, %p422
    %p424 = scmp.ne.s32.totalorder %s416, %s418
    %p425 = scmp.eq.s32.totalorder %s30, 1
    %p426 = por %p424, %p425
    %p427 = scmp.ne.s32.totalorder %s418, %s419
    %p428 = scmp.eq.s32.totalorder %s30, 0
    %p429 = por %p427, %p428
    %p430 = scmp.ne.s32.totalorder %s418, %s419
    %p431 = scmp.eq.s32.totalorder %s31, 1
    %p432 = por %p430, %p431
    %p434 = scmp.ne.s32.totalorder %s419, %s433
    %p435 = scmp.eq.s32.totalorder %s31, 0
    %p436 = por %p434, %p435
    %s437 = ssub.s32 %s25, %s32
    %p438 = scmp.eq.s32.totalorder %s437, 0
    %s440 = sadd.s32 %s439, 1
    %s441 = scalar_select %p438, %s439, %s440
    %p444 = pneg %p438
    %p445 = scmp.eq.s32.totalorder %s25, 1
    %p446 = por %p444, %p445
    %p447 = scmp.ne.s32.totalorder %s439, %s442
    %p448 = scmp.eq.s32.totalorder %s25, 0
    %p449 = por %p447, %p448
    %p450 = scmp.ne.s32.totalorder %s439, %s442
    %p451 = scmp.eq.s32.totalorder %s30, 1
    %p452 = por %p450, %p451
    %p453 = scmp.ne.s32.totalorder %s442, %s443
    %p454 = scmp.eq.s32.totalorder %s30, 0
    %p455 = por %p453, %p454
    %p456 = scmp.ne.s32.totalorder %s442, %s443
    %p457 = scmp.eq.s32.totalorder %s31, 1
    %p458 = por %p456, %p457
    %p460 = scmp.ne.s32.totalorder %s443, %s459
    %p461 = scmp.eq.s32.totalorder %s31, 0
    %p462 = por %p460, %p461
    %p463 = scmp.le.s32.totalorder 1, %s25
    %p464 = scmp.lt.s32.totalorder %s25, 3
    %p465 = pnand %p463, %p464
    %p466 = pneg %p465
    // Predicated region
    $region9: #{siamese_forward.1} parent=5 // pred_check
      _
    $region10: #{siamese_forward.1} parent=5 // pred_check_branch
      %468 = sbr.rel (%p465) target = $region12
    $region11: #{siamese_forward.1} parent=5 // pred_region
      %s469 = ssub.s32 %s25, 1
      // Predicated region
      $region13: #{siamese_forward.1} parent=11 // pred_check
        %p470 = pneg %p72
      $region14: #{siamese_forward.1} parent=11 // pred_check_branch
        %472 = sbr.rel (%p470) target = $region16
      $region15: #{siamese_forward.1} parent=11 // pred_region
        _
      $region16: #{siamese_forward.1} parent=11 // pred_fallthru
        _
      // Predicated region
      $region17: #{siamese_forward.1} parent=11 // pred_check
        %p473 = pneg %p93
      $region18: #{siamese_forward.1} parent=11 // pred_check_branch
        %475 = sbr.rel (%p473) target = $region20
      $region19: #{siamese_forward.1} parent=11 // pred_region
        _
      $region20: #{siamese_forward.1} parent=11 // pred_fallthru
        _
      // Predicated region
      $region21: #{siamese_forward.1} parent=11 // pred_check
        %p476 = pneg %p114
      $region22: #{siamese_forward.1} parent=11 // pred_check_branch
        %478 = sbr.rel (%p476) target = $region24
      $region23: #{siamese_forward.1} parent=11 // pred_region
        _
      $region24: #{siamese_forward.1} parent=11 // pred_fallthru
        _
      // Predicated region
      $region25: #{siamese_forward.1} parent=11 // pred_check
        %p479 = pneg %p135
      $region26: #{siamese_forward.1} parent=11 // pred_check_branch
        %481 = sbr.rel (%p479) target = $region28
      $region27: #{siamese_forward.1} parent=11 // pred_region
        _
      $region28: #{siamese_forward.1} parent=11 // pred_fallthru
        _
      // Predicated region
      $region29: #{siamese_forward.1} parent=11 // pred_check
        %p482 = pneg %p156
      $region30: #{siamese_forward.1} parent=11 // pred_check_branch
        %484 = sbr.rel (%p482) target = $region32
      $region31: #{siamese_forward.1} parent=11 // pred_region
        _
      $region32: #{siamese_forward.1} parent=11 // pred_fallthru
        _
      // Predicated region
      $region33: #{siamese_forward.1} parent=11 // pred_check
        %p485 = pneg %p177
      $region34: #{siamese_forward.1} parent=11 // pred_check_branch
        %487 = sbr.rel (%p485) target = $region36
      $region35: #{siamese_forward.1} parent=11 // pred_region
        _
      $region36: #{siamese_forward.1} parent=11 // pred_fallthru
        _
      // Predicated region
      $region37: #{siamese_forward.1} parent=11 // pred_check
        %p488 = pneg %p198
      $region38: #{siamese_forward.1} parent=11 // pred_check_branch
        %490 = sbr.rel (%p488) target = $region40
      $region39: #{siamese_forward.1} parent=11 // pred_region
        _
      $region40: #{siamese_forward.1} parent=11 // pred_fallthru
        _
      // Predicated region
      $region41: #{siamese_forward.1} parent=11 // pred_check
        %p491 = pneg %p219
      $region42: #{siamese_forward.1} parent=11 // pred_check_branch
        %493 = sbr.rel (%p491) target = $region44
      $region43: #{siamese_forward.1} parent=11 // pred_region
        _
      $region44: #{siamese_forward.1} parent=11 // pred_fallthru
        _
      // Predicated region
      $region45: #{siamese_forward.1} parent=11 // pred_check
        %p494 = pneg %p240
      $region46: #{siamese_forward.1} parent=11 // pred_check_branch
        %496 = sbr.rel (%p494) target = $region48
      $region47: #{siamese_forward.1} parent=11 // pred_region
        _
      $region48: #{siamese_forward.1} parent=11 // pred_fallthru
        _
      // Predicated region
      $region49: #{siamese_forward.1} parent=11 // pred_check
        %p497 = pneg %p261
      $region50: #{siamese_forward.1} parent=11 // pred_check_branch
        %499 = sbr.rel (%p497) target = $region52
      $region51: #{siamese_forward.1} parent=11 // pred_region
        _
      $region52: #{siamese_forward.1} parent=11 // pred_fallthru
        _
      // Predicated region
      $region53: #{siamese_forward.1} parent=11 // pred_check
        %p500 = pneg %p282
      $region54: #{siamese_forward.1} parent=11 // pred_check_branch
        %502 = sbr.rel (%p500) target = $region56
      $region55: #{siamese_forward.1} parent=11 // pred_region
        _
      $region56: #{siamese_forward.1} parent=11 // pred_fallthru
        _
      // Predicated region
      $region57: #{siamese_forward.1} parent=11 // pred_check
        %p503 = pneg %p303
      $region58: #{siamese_forward.1} parent=11 // pred_check_branch
        %505 = sbr.rel (%p503) target = $region60
      $region59: #{siamese_forward.1} parent=11 // pred_region
        _
      $region60: #{siamese_forward.1} parent=11 // pred_fallthru
        _
      // Predicated region
      $region61: #{siamese_forward.1} parent=11 // pred_check
        %p506 = pneg %p324
      $region62: #{siamese_forward.1} parent=11 // pred_check_branch
        %508 = sbr.rel (%p506) target = $region64
      $region63: #{siamese_forward.1} parent=11 // pred_region
        _
      $region64: #{siamese_forward.1} parent=11 // pred_fallthru
        _
      // Predicated region
      $region65: #{siamese_forward.1} parent=11 // pred_check
        %p509 = pneg %p345
      $region66: #{siamese_forward.1} parent=11 // pred_check_branch
        %511 = sbr.rel (%p509) target = $region68
      $region67: #{siamese_forward.1} parent=11 // pred_region
        _
      $region68: #{siamese_forward.1} parent=11 // pred_fallthru
        _
      // Predicated region
      $region69: #{siamese_forward.1} parent=11 // pred_check
        %p512 = pneg %p366
      $region70: #{siamese_forward.1} parent=11 // pred_check_branch
        %514 = sbr.rel (%p512) target = $region72
      $region71: #{siamese_forward.1} parent=11 // pred_region
        _
      $region72: #{siamese_forward.1} parent=11 // pred_fallthru
        _
      // Predicated region
      $region73: #{siamese_forward.1} parent=11 // pred_check
        %p515 = pneg %p387
      $region74: #{siamese_forward.1} parent=11 // pred_check_branch
        %517 = sbr.rel (%p515) target = $region76
      $region75: #{siamese_forward.1} parent=11 // pred_region
        _
      $region76: #{siamese_forward.1} parent=11 // pred_fallthru
        _
      // Predicated region
      $region77: #{siamese_forward.1} parent=11 // pred_check
        %p518 = pneg %p408
      $region78: #{siamese_forward.1} parent=11 // pred_check_branch
        %520 = sbr.rel (%p518) target = $region80
      $region79: #{siamese_forward.1} parent=11 // pred_region
        _
      $region80: #{siamese_forward.1} parent=11 // pred_fallthru
        _
      // Predicated region
      $region81: #{siamese_forward.1} parent=11 // pred_check
        %p521 = pneg %p429
      $region82: #{siamese_forward.1} parent=11 // pred_check_branch
        %523 = sbr.rel (%p521) target = $region84
      $region83: #{siamese_forward.1} parent=11 // pred_region
        _
      $region84: #{siamese_forward.1} parent=11 // pred_fallthru
        _
    $region12: #{siamese_forward.1} parent=5 // pred_fallthru
      _
    %p524 = scmp.lt.s32.totalorder %s25, 2
    // Predicated region
    $region85: #{siamese_forward.1} parent=5 // pred_check
      %p525 = pneg %p524
    $region86: #{siamese_forward.1} parent=5 // pred_check_branch
      %527 = sbr.rel (%p525) target = $region88
    $region87: #{siamese_forward.1} parent=5 // pred_region
      // Predicated region
      $region89: #{siamese_forward.1} parent=87 // pred_check
        %p528 = pneg %p45
      $region90: #{siamese_forward.1} parent=87 // pred_check_branch
        %530 = sbr.rel (%p528) target = $region92
      $region91: #{siamese_forward.1} parent=87 // pred_region
        %p531 = scmp.lt.s32.totalorder %s25, 1
        %s532 = scalar_select %p531, %s25, 1
        %s533 = smul.addr %s532, 64
        %s534 = smul.addr %s533, 8
        %s535 = scalar_lea.vmem %s0, %s534
      $region92: #{siamese_forward.1} parent=87 // pred_fallthru
        _
    $region88: #{siamese_forward.1} parent=5 // pred_fallthru
      _
    %p536 = scmp.le.s32.totalorder 1, %s25
    %p537 = scmp.lt.s32.totalorder %s25, 3
    %p538 = pnand %p536, %p537
    %p539 = pneg %p538
    // Predicated region
    $region93: #{siamese_forward.1} parent=5 // pred_check
      _
    $region94: #{siamese_forward.1} parent=5 // pred_check_branch
      %541 = sbr.rel (%p538) target = $region96
    $region95: #{siamese_forward.1} parent=5 // pred_region
      %s542 = ssub.s32 %s25, 1
      %p543 = scmp.lt.s32.totalorder %s30, 1
      %s544 = scalar_select %p543, %s30, 1
      %s545 = smul.addr %s544, 64
      %s546 = smul.addr %s545, 8
      %s547 = scalar_lea.vmem %s0, %s546
      %p548 = pneg %p51
      %p549 = pneg %p48
      %p550 = pneg %p72
      %p551 = pneg %p69
      %p552 = pneg %p93
      %p553 = pneg %p90
      %p554 = pneg %p114
      %p555 = pneg %p111
      %p556 = pneg %p135
      %p557 = pneg %p132
      %p558 = pneg %p156
      %p559 = pneg %p153
      %p560 = pneg %p177
      %p561 = pneg %p174
      %p562 = pneg %p198
      %p563 = pneg %p195
      %p564 = pneg %p219
      %p565 = pneg %p216
      %p566 = pneg %p240
      %p567 = pneg %p237
      %p568 = pneg %p261
      %p569 = pneg %p258
      %p570 = pneg %p282
      %p571 = pneg %p279
      %p572 = pneg %p303
      %p573 = pneg %p300
      %p574 = pneg %p324
      %p575 = pneg %p321
      %p576 = pneg %p345
      %p577 = pneg %p342
      %p578 = pneg %p366
      %p579 = pneg %p363
      %p580 = pneg %p387
      %p581 = pneg %p384
      %p582 = pneg %p408
      %p583 = pneg %p405
      %p584 = pneg %p429
      %p585 = pneg %p426
      %p586 = pneg %p455
      %p587 = pneg %p452
      %p588 = scmp.lt.s32.totalorder %s30, 1
      %s589 = scalar_select %p588, %s30, 1
      %s590 = smul.addr %s589, 2
      %s591 = scalar_lea.vmem %s19, %s590
      %p592 = scmp.lt.s32.totalorder %s30, 1
      %s593 = scalar_select %p592, %s30, 1
      %s594 = smul.addr %s593, 64
      %s595 = smul.addr %s594, 8
      %s596 = scalar_lea.vmem %s0, %s595
      %p597 = scmp.lt.s32.totalorder %s30, 1
      %s598 = scalar_select %p597, %s30, 1
      %s599 = smul.addr %s598, 2
      %s600 = scalar_lea.vmem %s19, %s599
      %v601 = vld [vmem:[%s596] sm:$0xff]
      %v602 = vld [vmem:[%s596 + $0x8] sm:$0xff]
      %v603 = vld [vmem:[%s596 + $0x10] sm:$0xff]
      %v604 = vld [vmem:[%s596 + $0x18] sm:$0xff]
      %v605 = vld [vmem:[%s596 + $0x20] sm:$0xff]
      %v606 = vld [vmem:[%s596 + $0x28] sm:$0xff]
      %v607 = vld [vmem:[%s596 + $0x30] sm:$0xff]
      %v608 = vld [vmem:[%s596 + $0x38] sm:$0xff]
      %v609 = vld [vmem:[%s596 + $0x40] sm:$0xff]
      %v610 = vld [vmem:[%s596 + $0x48] sm:$0xff]
      %v611 = vld [vmem:[%s596 + $0x50] sm:$0xff]
      %v612 = vld [vmem:[%s596 + $0x58] sm:$0xff]
      %v613 = vld [vmem:[%s596 + $0x60] sm:$0xff]
      %v614 = vld [vmem:[%s596 + $0x68] sm:$0xff]
      %v615 = vld [vmem:[%s596 + $0x70] sm:$0xff]
      %v616 = vld [vmem:[%s596 + $0x78] sm:$0xff]
      %v617 = vld [vmem:[%s596 + $0x80] sm:$0xff]
      %v618 = vld [vmem:[%s596 + $0x88] sm:$0xff]
      %v619 = vld [vmem:[%s596 + $0x90] sm:$0xff]
      %v620 = vld [vmem:[%s596 + $0x98] sm:$0xff]
      %v621 = vld [vmem:[%s596 + $0xa0] sm:$0xff]
      %v622 = vld [vmem:[%s596 + $0xa8] sm:$0xff]
      %v623 = vld [vmem:[%s596 + $0xb0] sm:$0xff]
      %v624 = vld [vmem:[%s596 + $0xb8] sm:$0xff]
      %v625 = vld [vmem:[%s596 + $0xc0] sm:$0xff]
      %v626 = vld [vmem:[%s596 + $0xc8] sm:$0xff]
      %v627 = vld [vmem:[%s596 + $0xd0] sm:$0xff]
      %v628 = vld [vmem:[%s596 + $0xd8] sm:$0xff]
      %v629 = vld [vmem:[%s596 + $0xe0] sm:$0xff]
      %v630 = vld [vmem:[%s596 + $0xe8] sm:$0xff]
      %v631 = vld [vmem:[%s596 + $0xf0] sm:$0xff]
      %v632 = vld [vmem:[%s596 + $0xf8] sm:$0xff]
      %v633 = vld [vmem:[%s596 + $0x100] sm:$0xff]
      %v634 = vld [vmem:[%s596 + $0x108] sm:$0xff]
      %v635 = vld [vmem:[%s596 + $0x110] sm:$0xff]
      %v636 = vld [vmem:[%s596 + $0x118] sm:$0xff]
      %v637 = vld [vmem:[%s596 + $0x120] sm:$0xff]
      %v638 = vld [vmem:[%s596 + $0x128] sm:$0xff]
      %v639 = vld [vmem:[%s596 + $0x130] sm:$0xff]
      %v640 = vld [vmem:[%s596 + $0x138] sm:$0xff]
      %v641 = vld [vmem:[%s596 + $0x140] sm:$0xff]
      %v642 = vld [vmem:[%s596 + $0x148] sm:$0xff]
      %v643 = vld [vmem:[%s596 + $0x150] sm:$0xff]
      %v644 = vld [vmem:[%s596 + $0x158] sm:$0xff]
      %v645 = vld [vmem:[%s596 + $0x160] sm:$0xff]
      %v646 = vld [vmem:[%s596 + $0x168] sm:$0xff]
      %v647 = vld [vmem:[%s596 + $0x170] sm:$0xff]
      %v648 = vld [vmem:[%s596 + $0x178] sm:$0xff]
      %v649 = vld [vmem:[%s596 + $0x180] sm:$0xff]
      %v650 = vld [vmem:[%s596 + $0x188] sm:$0xff]
      %v651 = vld [vmem:[%s596 + $0x190] sm:$0xff]
      %v652 = vld [vmem:[%s596 + $0x198] sm:$0xff]
      %v653 = vld [vmem:[%s596 + $0x1a0] sm:$0xff]
      %v654 = vld [vmem:[%s596 + $0x1a8] sm:$0xff]
      %v655 = vld [vmem:[%s596 + $0x1b0] sm:$0xff]
      %v656 = vld [vmem:[%s596 + $0x1b8] sm:$0xff]
      %v657 = vld [vmem:[%s596 + $0x1c0] sm:$0xff]
      %v658 = vld [vmem:[%s596 + $0x1c8] sm:$0xff]
      %v659 = vld [vmem:[%s596 + $0x1d0] sm:$0xff]
      %v660 = vld [vmem:[%s596 + $0x1d8] sm:$0xff]
      %v661 = vld [vmem:[%s596 + $0x1e0] sm:$0xff]
      %v662 = vld [vmem:[%s596 + $0x1e8] sm:$0xff]
      %v663 = vld [vmem:[%s596 + $0x1f0] sm:$0xff]
      %v664 = vld [vmem:[%s596 + $0x1f8] sm:$0xff]
      %v665 = vld [vmem:[%s1] sm:$0xff]
      %v666 = vld [vmem:[%s1 + $0x8] sm:$0x1]
      %v667 = vld [vmem:[%s2] sm:$0x1]
      %v668 = vld [vmem:[%s3] sm:$0x1]
      %v669 = vld [vmem:[%s4] sm:$0x1]
      %v671 = vlaneseq
      %v672 = vshrl.u32 %v671, 7
      %v673 = vsub.s32 0, %v672
      %v674 = vrot.slane %v667, %v673
      %vm676 = vcmask 72704
      %v678 = vsel %vm676, %v601, 0
      %v681 = vsel %vm676, %v602, 0
      %v684 = vsel %vm676, %v603, 0
      %v687 = vsel %vm676, %v604, 0
      %v690 = vsel %vm676, %v605, 0
      %v693 = vsel %vm676, %v606, 0
      %v696 = vsel %vm676, %v607, 0
      %v699 = vsel %vm676, %v608, 0
      %v702 = vsel %vm676, %v609, 0
      %v705 = vsel %vm676, %v610, 0
      %v708 = vsel %vm676, %v611, 0
      %v711 = vsel %vm676, %v612, 0
      %v714 = vsel %vm676, %v613, 0
      %v717 = vsel %vm676, %v614, 0
      %v720 = vsel %vm676, %v615, 0
      %v723 = vsel %vm676, %v616, 0
      %v726 = vsel %vm676, %v617, 0
      %v729 = vsel %vm676, %v618, 0
      %v732 = vsel %vm676, %v619, 0
      %v735 = vsel %vm676, %v620, 0
      %v738 = vsel %vm676, %v621, 0
      %v741 = vsel %vm676, %v622, 0
      %v744 = vsel %vm676, %v623, 0
      %v747 = vsel %vm676, %v624, 0
      %v750 = vsel %vm676, %v625, 0
      %v753 = vsel %vm676, %v626, 0
      %v756 = vsel %vm676, %v627, 0
      %v759 = vsel %vm676, %v628, 0
      %v762 = vsel %vm676, %v629, 0
      %v765 = vsel %vm676, %v630, 0
      %v768 = vsel %vm676, %v631, 0
      %v771 = vsel %vm676, %v632, 0
      %v774 = vsel %vm676, %v633, 0
      %v777 = vsel %vm676, %v634, 0
      %v780 = vsel %vm676, %v635, 0
      %v783 = vsel %vm676, %v636, 0
      %v786 = vsel %vm676, %v637, 0
      %v789 = vsel %vm676, %v638, 0
      %v792 = vsel %vm676, %v639, 0
      %v795 = vsel %vm676, %v640, 0
      %v798 = vsel %vm676, %v641, 0
      %v801 = vsel %vm676, %v642, 0
      %v804 = vsel %vm676, %v643, 0
      %v807 = vsel %vm676, %v644, 0
      %v810 = vsel %vm676, %v645, 0
      %v813 = vsel %vm676, %v646, 0
      %v816 = vsel %vm676, %v647, 0
      %v819 = vsel %vm676, %v648, 0
      %v822 = vsel %vm676, %v649, 0
      %v825 = vsel %vm676, %v650, 0
      %v828 = vsel %vm676, %v651, 0
      %v831 = vsel %vm676, %v652, 0
      %v834 = vsel %vm676, %v653, 0
      %v837 = vsel %vm676, %v654, 0
      %v840 = vsel %vm676, %v655, 0
      %v843 = vsel %vm676, %v656, 0
      %v846 = vsel %vm676, %v657, 0
      %v849 = vsel %vm676, %v658, 0
      %v852 = vsel %vm676, %v659, 0
      %v855 = vsel %vm676, %v660, 0
      %v858 = vsel %vm676, %v661, 0
      %v861 = vsel %vm676, %v662, 0
      %v864 = vsel %vm676, %v663, 0
      %v867 = vsel %vm676, %v664, 0
      %vm869 = vcmask 1040384
      %v871 = vsel %vm869, %v666, 0
      %873 = vmatprep.subr.mxu0 0.0
      %874 = vmatpush1.msra.mxu0 %v665
      %875 = vmatprep.subr.mxu0 0.0
      %876 = vmatpush1.msra.mxu0 %v871
      %877 = vmatprep.subr.mxu0 0.0
      %878 = vmatpush1.msra.mxu0 0.0
      %879 = vmatprep.subr.mxu0 0.0
      %880 = vmatpush1.msra.mxu0 0.0
      %881 = vmatprep.subr.mxu0 0.0
      %882 = vmatpush1.msra.mxu0 0.0
      %883 = vmatprep.subr.mxu0 0.0
      %884 = vmatpush1.msra.mxu0 0.0
      %885 = vmatprep.subr.mxu0 0.0
      %886 = vmatpush1.msra.mxu0 0.0
      %887 = vmatprep.subr.mxu0 0.0
      %888 = vmatpush1.msra.mxu0 0.0
      %889 = vmatprep.subr.mxu0 0.0
      %890 = vmatpush1.msra.mxu0 0.0
      %891 = vmatprep.subr.mxu0 0.0
      %892 = vmatpush1.msra.mxu0 0.0
      %893 = vmatprep.subr.mxu0 0.0
      %894 = vmatpush1.msra.mxu0 0.0
      %895 = vmatprep.subr.mxu0 0.0
      %896 = vmatpush1.msra.mxu0 0.0
      %897 = vmatprep.subr.mxu0 0.0
      %898 = vmatpush1.msra.mxu0 0.0
      %899 = vmatprep.subr.mxu0 0.0
      %900 = vmatpush1.msra.mxu0 0.0
      %901 = vmatprep.subr.mxu0 0.0
      %902 = vmatpush1.msra.mxu0 0.0
      %903 = vmatprep.subr.mxu0 0.0
      %904 = vmatpush1.msra.mxu0 0.0
      %905 = vmatprep.subr.mxu0 0.0
      %906 = vmatpush1.msra.mxu0 0.0
      %907 = vmatprep.subr.mxu0 0.0
      %908 = vmatpush1.msra.mxu0 0.0
      %909 = vmatprep.subr.mxu0 0.0
      %910 = vmatpush1.msra.mxu0 0.0
      %911 = vmatprep.subr.mxu0 0.0
      %912 = vmatpush1.msra.mxu0 0.0
      %913 = vmatprep.subr.mxu0 0.0
      %914 = vmatpush1.msra.mxu0 0.0
      %915 = vmatprep.subr.mxu0 0.0
      %916 = vmatpush1.msra.mxu0 0.0
      %917 = vmatprep.subr.mxu0 0.0
      %918 = vmatpush1.msra.mxu0 0.0
      %919 = vmatprep.subr.mxu0 0.0
      %920 = vmatpush1.msra.mxu0 0.0
      %921 = vmatprep.subr.mxu0 0.0
      %922 = vmatpush1.msra.mxu0 0.0
      %923 = vmatprep.subr.mxu0 0.0
      %924 = vmatpush1.msra.mxu0 0.0
      %925 = vmatprep.subr.mxu0 0.0
      %926 = vmatpush1.msra.mxu0 0.0
      %927 = vmatprep.subr.mxu0 0.0
      %928 = vmatpush1.msra.mxu0 0.0
      %929 = vmatprep.subr.mxu0 0.0
      %930 = vmatpush1.msra.mxu0 0.0
      %931 = vmatprep.subr.mxu0 0.0
      %932 = vmatpush1.msra.mxu0 0.0
      %933 = vmatprep.subr.mxu0 0.0
      %934 = vmatpush1.msra.mxu0 0.0
      %935 = vmatprep.subr.mxu0 0.0
      %936 = vmatpush1.msra.mxu0 0.0
      %937 = vmatprep.mubr.f32.mxu0 0.0
      %938 = vmatmul.mubr.f32.gmra.mrb[0].mxu0 %v678
      %v939 = vpop.f32.mrb[0].mxu0
      %v940 = vadd.f32 %v674, %v939
      %v941 = vpop.f32.mrb[0].mxu0
      %942 = vmatprep.mubr.f32.mxu0 0.0
      %943 = vmatmul.mubr.f32.gmra.mrb[0].mxu0 %v681
      %v944 = vpop.f32.mrb[0].mxu0
      %v945 = vadd.f32 %v674, %v944
      %v946 = vpop.f32.mrb[0].mxu0
      %947 = vmatprep.mubr.f32.mxu0 0.0
      %948 = vmatmul.mubr.f32.gmra.mrb[0].mxu0 %v684
      %v949 = vpop.f32.mrb[0].mxu0
      %v950 = vadd.f32 %v674, %v949
      %v951 = vpop.f32.mrb[0].mxu0
      %952 = vmatprep.mubr.f32.mxu0 0.0
      %953 = vmatmul.mubr.f32.gmra.mrb[0].mxu0 %v687
      %v954 = vpop.f32.mrb[0].mxu0
      %v955 = vadd.f32 %v674, %v954
      %v956 = vpop.f32.mrb[0].mxu0
      %957 = vmatprep.mubr.f32.mxu0 0.0
      %958 = vmatmul.mubr.f32.gmra.mrb[0].mxu0 %v690
      %v959 = vpop.f32.mrb[0].mxu0
      %v960 = vadd.f32 %v674, %v959
      %v961 = vpop.f32.mrb[0].mxu0
      %962 = vmatprep.mubr.f32.mxu0 0.0
      %963 = vmatmul.mubr.f32.gmra.mrb[0].mxu0 %v693
      %v964 = vpop.f32.mrb[0].mxu0
      %v965 = vadd.f32 %v674, %v964
      %v966 = vpop.f32.mrb[0].mxu0
      %967 = vmatprep.mubr.f32.mxu0 0.0
      %968 = vmatmul.mubr.f32.gmra.mrb[0].mxu0 %v696
      %v969 = vpop.f32.mrb[0].mxu0
      %v970 = vadd.f32 %v674, %v969
      %v971 = vpop.f32.mrb[0].mxu0
      %972 = vmatprep.mubr.f32.mxu0 0.0
      %973 = vmatmul.mubr.f32.gmra.mrb[0].mxu0 %v699
      %v974 = vpop.f32.mrb[0].mxu0
      %v975 = vadd.f32 %v674, %v974
      %v976 = vpop.f32.mrb[0].mxu0
      %977 = vmatprep.mubr.f32.mxu0 0.0
      %978 = vmatmul.mubr.f32.gmra.mrb[0].mxu0 %v702
      %v979 = vpop.f32.mrb[0].mxu0
      %v980 = vadd.f32 %v674, %v979
      %v981 = vpop.f32.mrb[0].mxu0
      %982 = vmatprep.mubr.f32.mxu0 0.0
      %983 = vmatmul.mubr.f32.gmra.mrb[0].mxu0 %v705
      %v984 = vpop.f32.mrb[0].mxu0
      %v985 = vadd.f32 %v674, %v984
      %v986 = vpop.f32.mrb[0].mxu0
      %987 = vmatprep.mubr.f32.mxu0 0.0
      %988 = vmatmul.mubr.f32.gmra.mrb[0].mxu0 %v708
      %v989 = vpop.f32.mrb[0].mxu0
      %v990 = vadd.f32 %v674, %v989
      %v991 = vpop.f32.mrb[0].mxu0
      %992 = vmatprep.mubr.f32.mxu0 0.0
      %993 = vmatmul.mubr.f32.gmra.mrb[0].mxu0 %v711
      %v994 = vpop.f32.mrb[0].mxu0
      %v995 = vadd.f32 %v674, %v994
      %v996 = vpop.f32.mrb[0].mxu0
      %997 = vmatprep.mubr.f32.mxu0 0.0
      %998 = vmatmul.mubr.f32.gmra.mrb[0].mxu0 %v714
      %v999 = vpop.f32.mrb[0].mxu0
      %v1000 = vadd.f32 %v674, %v999
      %v1001 = vpop.f32.mrb[0].mxu0
      %1002 = vmatprep.mubr.f32.mxu0 0.0
      %1003 = vmatmul.mubr.f32.gmra.mrb[0].mxu0 %v717
      %v1004 = vpop.f32.mrb[0].mxu0
      %v1005 = vadd.f32 %v674, %v1004
      %v1006 = vpop.f32.mrb[0].mxu0
      %1007 = vmatprep.mubr.f32.mxu0 0.0
      %1008 = vmatmul.mubr.f32.gmra.mrb[0].mxu0 %v720
      %v1009 = vpop.f32.mrb[0].mxu0
      %v1010 = vadd.f32 %v674, %v1009
      %v1011 = vpop.f32.mrb[0].mxu0
      %1012 = vmatprep.mubr.f32.mxu0 0.0
      %1013 = vmatmul.mubr.f32.gmra.mrb[0].mxu0 %v723
      %v1014 = vpop.f32.mrb[0].mxu0
      %v1015 = vadd.f32 %v674, %v1014
      %v1016 = vpop.f32.mrb[0].mxu0
      %1017 = vmatprep.mubr.f32.mxu0 0.0
      %1018 = vmatmul.mubr.f32.gmra.mrb[0].mxu0 %v726
      %v1019 = vpop.f32.mrb[0].mxu0
      %v1020 = vadd.f32 %v674, %v1019
      %v1021 = vpop.f32.mrb[0].mxu0
      %1022 = vmatprep.mubr.f32.mxu0 0.0
      %1023 = vmatmul.mubr.f32.gmra.mrb[0].mxu0 %v729
      %v1024 = vpop.f32.mrb[0].mxu0
      %v1025 = vadd.f32 %v674, %v1024
      %v1026 = vpop.f32.mrb[0].mxu0
      %1027 = vmatprep.mubr.f32.mxu0 0.0
      %1028 = vmatmul.mubr.f32.gmra.mrb[0].mxu0 %v732
      %v1029 = vpop.f32.mrb[0].mxu0
      %v1030 = vadd.f32 %v674, %v1029
      %v1031 = vpop.f32.mrb[0].mxu0
      %1032 = vmatprep.mubr.f32.mxu0 0.0
      %1033 = vmatmul.mubr.f32.gmra.mrb[0].mxu0 %v735
      %v1034 = vpop.f32.mrb[0].mxu0
      %v1035 = vadd.f32 %v674, %v1034
      %v1036 = vpop.f32.mrb[0].mxu0
      %1037 = vmatprep.mubr.f32.mxu0 0.0
      %1038 = vmatmul.mubr.f32.gmra.mrb[0].mxu0 %v738
      %v1039 = vpop.f32.mrb[0].mxu0
      %v1040 = vadd.f32 %v674, %v1039
      %v1041 = vpop.f32.mrb[0].mxu0
      %1042 = vmatprep.mubr.f32.mxu0 0.0
      %1043 = vmatmul.mubr.f32.gmra.mrb[0].mxu0 %v741
      %v1044 = vpop.f32.mrb[0].mxu0
      %v1045 = vadd.f32 %v674, %v1044
      %v1046 = vpop.f32.mrb[0].mxu0
      %1047 = vmatprep.mubr.f32.mxu0 0.0
      %1048 = vmatmul.mubr.f32.gmra.mrb[0].mxu0 %v744
      %v1049 = vpop.f32.mrb[0].mxu0
      %v1050 = vadd.f32 %v674, %v1049
      %v1051 = vpop.f32.mrb[0].mxu0
      %1052 = vmatprep.mubr.f32.mxu0 0.0
      %1053 = vmatmul.mubr.f32.gmra.mrb[0].mxu0 %v747
      %v1054 = vpop.f32.mrb[0].mxu0
      %v1055 = vadd.f32 %v674, %v1054
      %v1056 = vpop.f32.mrb[0].mxu0
      %1057 = vmatprep.mubr.f32.mxu0 0.0
      %1058 = vmatmul.mubr.f32.gmra.mrb[0].mxu0 %v750
      %v1059 = vpop.f32.mrb[0].mxu0
      %v1060 = vadd.f32 %v674, %v1059
      %v1061 = vpop.f32.mrb[0].mxu0
      %1062 = vmatprep.mubr.f32.mxu0 0.0
      %1063 = vmatmul.mubr.f32.gmra.mrb[0].mxu0 %v753
      %v1064 = vpop.f32.mrb[0].mxu0
      %v1065 = vadd.f32 %v674, %v1064
      %v1066 = vpop.f32.mrb[0].mxu0
      %1067 = vmatprep.mubr.f32.mxu0 0.0
      %1068 = vmatmul.mubr.f32.gmra.mrb[0].mxu0 %v756
      %v1069 = vpop.f32.mrb[0].mxu0
      %v1070 = vadd.f32 %v674, %v1069
      %v1071 = vpop.f32.mrb[0].mxu0
      %1072 = vmatprep.mubr.f32.mxu0 0.0
      %1073 = vmatmul.mubr.f32.gmra.mrb[0].mxu0 %v759
      %v1074 = vpop.f32.mrb[0].mxu0
      %v1075 = vadd.f32 %v674, %v1074
      %v1076 = vpop.f32.mrb[0].mxu0
      %1077 = vmatprep.mubr.f32.mxu0 0.0
      %1078 = vmatmul.mubr.f32.gmra.mrb[0].mxu0 %v762
      %v1079 = vpop.f32.mrb[0].mxu0
      %v1080 = vadd.f32 %v674, %v1079
      %v1081 = vpop.f32.mrb[0].mxu0
      %1082 = vmatprep.mubr.f32.mxu0 0.0
      %1083 = vmatmul.mubr.f32.gmra.mrb[0].mxu0 %v765
      %v1084 = vpop.f32.mrb[0].mxu0
      %v1085 = vadd.f32 %v674, %v1084
      %v1086 = vpop.f32.mrb[0].mxu0
      %1087 = vmatprep.mubr.f32.mxu0 0.0
      %1088 = vmatmul.mubr.f32.gmra.mrb[0].mxu0 %v768
      %v1089 = vpop.f32.mrb[0].mxu0
      %v1090 = vadd.f32 %v674, %v1089
      %v1091 = vpop.f32.mrb[0].mxu0
      %1092 = vmatprep.mubr.f32.mxu0 0.0
      %1093 = vmatmul.mubr.f32.gmra.mrb[0].mxu0 %v771
      %v1094 = vpop.f32.mrb[0].mxu0
      %v1095 = vadd.f32 %v674, %v1094
      %v1096 = vpop.f32.mrb[0].mxu0
      %1097 = vmatprep.mubr.f32.mxu0 0.0
      %1098 = vmatmul.mubr.f32.gmra.mrb[0].mxu0 %v774
      %v1099 = vpop.f32.mrb[0].mxu0
      %v1100 = vadd.f32 %v674, %v1099
      %v1101 = vpop.f32.mrb[0].mxu0
      %1102 = vmatprep.mubr.f32.mxu0 0.0
      %1103 = vmatmul.mubr.f32.gmra.mrb[0].mxu0 %v777
      %v1104 = vpop.f32.mrb[0].mxu0
      %v1105 = vadd.f32 %v674, %v1104
      %v1106 = vpop.f32.mrb[0].mxu0
      %1107 = vmatprep.mubr.f32.mxu0 0.0
      %1108 = vmatmul.mubr.f32.gmra.mrb[0].mxu0 %v780
      %v1109 = vpop.f32.mrb[0].mxu0
      %v1110 = vadd.f32 %v674, %v1109
      %v1111 = vpop.f32.mrb[0].mxu0
      %1112 = vmatprep.mubr.f32.mxu0 0.0
      %1113 = vmatmul.mubr.f32.gmra.mrb[0].mxu0 %v783
      %v1114 = vpop.f32.mrb[0].mxu0
      %v1115 = vadd.f32 %v674, %v1114
      %v1116 = vpop.f32.mrb[0].mxu0
      %1117 = vmatprep.mubr.f32.mxu0 0.0
      %1118 = vmatmul.mubr.f32.gmra.mrb[0].mxu0 %v786
      %v1119 = vpop.f32.mrb[0].mxu0
      %v1120 = vadd.f32 %v674, %v1119
      %v1121 = vpop.f32.mrb[0].mxu0
      %1122 = vmatprep.mubr.f32.mxu0 0.0
      %1123 = vmatmul.mubr.f32.gmra.mrb[0].mxu0 %v789
      %v1124 = vpop.f32.mrb[0].mxu0
      %v1125 = vadd.f32 %v674, %v1124
      %v1126 = vpop.f32.mrb[0].mxu0
      %1127 = vmatprep.mubr.f32.mxu0 0.0
      %1128 = vmatmul.mubr.f32.gmra.mrb[0].mxu0 %v792
      %v1129 = vpop.f32.mrb[0].mxu0
      %v1130 = vadd.f32 %v674, %v1129
      %v1131 = vpop.f32.mrb[0].mxu0
      %1132 = vmatprep.mubr.f32.mxu0 0.0
      %1133 = vmatmul.mubr.f32.gmra.mrb[0].mxu0 %v795
      %v1134 = vpop.f32.mrb[0].mxu0
      %v1135 = vadd.f32 %v674, %v1134
      %v1136 = vpop.f32.mrb[0].mxu0
      %1137 = vmatprep.mubr.f32.mxu0 0.0
      %1138 = vmatmul.mubr.f32.gmra.mrb[0].mxu0 %v798
      %v1139 = vpop.f32.mrb[0].mxu0
      %v1140 = vadd.f32 %v674, %v1139
      %v1141 = vpop.f32.mrb[0].mxu0
      %1142 = vmatprep.mubr.f32.mxu0 0.0
      %1143 = vmatmul.mubr.f32.gmra.mrb[0].mxu0 %v801
      %v1144 = vpop.f32.mrb[0].mxu0
      %v1145 = vadd.f32 %v674, %v1144
      %v1146 = vpop.f32.mrb[0].mxu0
      %1147 = vmatprep.mubr.f32.mxu0 0.0
      %1148 = vmatmul.mubr.f32.gmra.mrb[0].mxu0 %v804
      %v1149 = vpop.f32.mrb[0].mxu0
      %v1150 = vadd.f32 %v674, %v1149
      %v1151 = vpop.f32.mrb[0].mxu0
      %1152 = vmatprep.mubr.f32.mxu0 0.0
      %1153 = vmatmul.mubr.f32.gmra.mrb[0].mxu0 %v807
      %v1154 = vpop.f32.mrb[0].mxu0
      %v1155 = vadd.f32 %v674, %v1154
      %v1156 = vpop.f32.mrb[0].mxu0
      %1157 = vmatprep.mubr.f32.mxu0 0.0
      %1158 = vmatmul.mubr.f32.gmra.mrb[0].mxu0 %v810
      %v1159 = vpop.f32.mrb[0].mxu0
      %v1160 = vadd.f32 %v674, %v1159
      %v1161 = vpop.f32.mrb[0].mxu0
      %1162 = vmatprep.mubr.f32.mxu0 0.0
      %1163 = vmatmul.mubr.f32.gmra.mrb[0].mxu0 %v813
      %v1164 = vpop.f32.mrb[0].mxu0
      %v1165 = vadd.f32 %v674, %v1164
      %v1166 = vpop.f32.mrb[0].mxu0
      %1167 = vmatprep.mubr.f32.mxu0 0.0
      %1168 = vmatmul.mubr.f32.gmra.mrb[0].mxu0 %v816
      %v1169 = vpop.f32.mrb[0].mxu0
      %v1170 = vadd.f32 %v674, %v1169
      %v1171 = vpop.f32.mrb[0].mxu0
      %1172 = vmatprep.mubr.f32.mxu0 0.0
      %1173 = vmatmul.mubr.f32.gmra.mrb[0].mxu0 %v819
      %v1174 = vpop.f32.mrb[0].mxu0
      %v1175 = vadd.f32 %v674, %v1174
      %v1176 = vpop.f32.mrb[0].mxu0
      %1177 = vmatprep.mubr.f32.mxu0 0.0
      %1178 = vmatmul.mubr.f32.gmra.mrb[0].mxu0 %v822
      %v1179 = vpop.f32.mrb[0].mxu0
      %v1180 = vadd.f32 %v674, %v1179
      %v1181 = vpop.f32.mrb[0].mxu0
      %1182 = vmatprep.mubr.f32.mxu0 0.0
      %1183 = vmatmul.mubr.f32.gmra.mrb[0].mxu0 %v825
      %v1184 = vpop.f32.mrb[0].mxu0
      %v1185 = vadd.f32 %v674, %v1184
      %v1186 = vpop.f32.mrb[0].mxu0
      %1187 = vmatprep.mubr.f32.mxu0 0.0
      %1188 = vmatmul.mubr.f32.gmra.mrb[0].mxu0 %v828
      %v1189 = vpop.f32.mrb[0].mxu0
      %v1190 = vadd.f32 %v674, %v1189
      %v1191 = vpop.f32.mrb[0].mxu0
      %1192 = vmatprep.mubr.f32.mxu0 0.0
      %1193 = vmatmul.mubr.f32.gmra.mrb[0].mxu0 %v831
      %v1194 = vpop.f32.mrb[0].mxu0
      %v1195 = vadd.f32 %v674, %v1194
      %v1196 = vpop.f32.mrb[0].mxu0
      %1197 = vmatprep.mubr.f32.mxu0 0.0
      %1198 = vmatmul.mubr.f32.gmra.mrb[0].mxu0 %v834
      %v1199 = vpop.f32.mrb[0].mxu0
      %v1200 = vadd.f32 %v674, %v1199
      %v1201 = vpop.f32.mrb[0].mxu0
      %1202 = vmatprep.mubr.f32.mxu0 0.0
      %1203 = vmatmul.mubr.f32.gmra.mrb[0].mxu0 %v837
      %v1204 = vpop.f32.mrb[0].mxu0
      %v1205 = vadd.f32 %v674, %v1204
      %v1206 = vpop.f32.mrb[0].mxu0
      %1207 = vmatprep.mubr.f32.mxu0 0.0
      %1208 = vmatmul.mubr.f32.gmra.mrb[0].mxu0 %v840
      %v1209 = vpop.f32.mrb[0].mxu0
      %v1210 = vadd.f32 %v674, %v1209
      %v1211 = vpop.f32.mrb[0].mxu0
      %1212 = vmatprep.mubr.f32.mxu0 0.0
      %1213 = vmatmul.mubr.f32.gmra.mrb[0].mxu0 %v843
      %v1214 = vpop.f32.mrb[0].mxu0
      %v1215 = vadd.f32 %v674, %v1214
      %v1216 = vpop.f32.mrb[0].mxu0
      %1217 = vmatprep.mubr.f32.mxu0 0.0
      %1218 = vmatmul.mubr.f32.gmra.mrb[0].mxu0 %v846
      %v1219 = vpop.f32.mrb[0].mxu0
      %v1220 = vadd.f32 %v674, %v1219
      %v1221 = vpop.f32.mrb[0].mxu0
      %1222 = vmatprep.mubr.f32.mxu0 0.0
      %1223 = vmatmul.mubr.f32.gmra.mrb[0].mxu0 %v849
      %v1224 = vpop.f32.mrb[0].mxu0
      %v1225 = vadd.f32 %v674, %v1224
      %v1226 = vpop.f32.mrb[0].mxu0
      %1227 = vmatprep.mubr.f32.mxu0 0.0
      %1228 = vmatmul.mubr.f32.gmra.mrb[0].mxu0 %v852
      %v1229 = vpop.f32.mrb[0].mxu0
      %v1230 = vadd.f32 %v674, %v1229
      %v1231 = vpop.f32.mrb[0].mxu0
      %1232 = vmatprep.mubr.f32.mxu0 0.0
      %1233 = vmatmul.mubr.f32.gmra.mrb[0].mxu0 %v855
      %v1234 = vpop.f32.mrb[0].mxu0
      %v1235 = vadd.f32 %v674, %v1234
      %v1236 = vpop.f32.mrb[0].mxu0
      %1237 = vmatprep.mubr.f32.mxu0 0.0
      %1238 = vmatmul.mubr.f32.gmra.mrb[0].mxu0 %v858
      %v1239 = vpop.f32.mrb[0].mxu0
      %v1240 = vadd.f32 %v674, %v1239
      %v1241 = vpop.f32.mrb[0].mxu0
      %1242 = vmatprep.mubr.f32.mxu0 0.0
      %1243 = vmatmul.mubr.f32.gmra.mrb[0].mxu0 %v861
      %v1244 = vpop.f32.mrb[0].mxu0
      %v1245 = vadd.f32 %v674, %v1244
      %v1246 = vpop.f32.mrb[0].mxu0
      %1247 = vmatprep.mubr.f32.mxu0 0.0
      %1248 = vmatmul.mubr.f32.gmra.mrb[0].mxu0 %v864
      %v1249 = vpop.f32.mrb[0].mxu0
      %v1250 = vadd.f32 %v674, %v1249
      %v1251 = vpop.f32.mrb[0].mxu0
      %1252 = vmatprep.mubr.f32.mxu0 0.0
      %1253 = vmatmul.mubr.f32.gmra.mrb[0].mxu0 %v867
      %v1254 = vpop.f32.mrb[0].mxu0
      %v1255 = vadd.f32 %v674, %v1254
      %v1256 = vpop.f32.mrb[0].mxu0
      %1257 = vdwg.mxu0
      %v1258 = vmax.f32 %v940, 0.0
      %v1259 = vmax.f32 %v945, 0.0
      %v1260 = vmax.f32 %v950, 0.0
      %v1261 = vmax.f32 %v955, 0.0
      %v1262 = vmax.f32 %v960, 0.0
      %v1263 = vmax.f32 %v965, 0.0
      %v1264 = vmax.f32 %v970, 0.0
      %v1265 = vmax.f32 %v975, 0.0
      %v1266 = vmax.f32 %v980, 0.0
      %v1267 = vmax.f32 %v985, 0.0
      %v1268 = vmax.f32 %v990, 0.0
      %v1269 = vmax.f32 %v995, 0.0
      %v1270 = vmax.f32 %v1000, 0.0
      %v1271 = vmax.f32 %v1005, 0.0
      %v1272 = vmax.f32 %v1010, 0.0
      %v1273 = vmax.f32 %v1015, 0.0
      %v1274 = vmax.f32 %v1020, 0.0
      %v1275 = vmax.f32 %v1025, 0.0
      %v1276 = vmax.f32 %v1030, 0.0
      %v1277 = vmax.f32 %v1035, 0.0
      %v1278 = vmax.f32 %v1040, 0.0
      %v1279 = vmax.f32 %v1045, 0.0
      %v1280 = vmax.f32 %v1050, 0.0
      %v1281 = vmax.f32 %v1055, 0.0
      %v1282 = vmax.f32 %v1060, 0.0
      %v1283 = vmax.f32 %v1065, 0.0
      %v1284 = vmax.f32 %v1070, 0.0
      %v1285 = vmax.f32 %v1075, 0.0
      %v1286 = vmax.f32 %v1080, 0.0
      %v1287 = vmax.f32 %v1085, 0.0
      %v1288 = vmax.f32 %v1090, 0.0
      %v1289 = vmax.f32 %v1095, 0.0
      %v1290 = vmax.f32 %v1100, 0.0
      %v1291 = vmax.f32 %v1105, 0.0
      %v1292 = vmax.f32 %v1110, 0.0
      %v1293 = vmax.f32 %v1115, 0.0
      %v1294 = vmax.f32 %v1120, 0.0
      %v1295 = vmax.f32 %v1125, 0.0
      %v1296 = vmax.f32 %v1130, 0.0
      %v1297 = vmax.f32 %v1135, 0.0
      %v1298 = vmax.f32 %v1140, 0.0
      %v1299 = vmax.f32 %v1145, 0.0
      %v1300 = vmax.f32 %v1150, 0.0
      %v1301 = vmax.f32 %v1155, 0.0
      %v1302 = vmax.f32 %v1160, 0.0
      %v1303 = vmax.f32 %v1165, 0.0
      %v1304 = vmax.f32 %v1170, 0.0
      %v1305 = vmax.f32 %v1175, 0.0
      %v1306 = vmax.f32 %v1180, 0.0
      %v1307 = vmax.f32 %v1185, 0.0
      %v1308 = vmax.f32 %v1190, 0.0
      %v1309 = vmax.f32 %v1195, 0.0
      %v1310 = vmax.f32 %v1200, 0.0
      %v1311 = vmax.f32 %v1205, 0.0
      %v1312 = vmax.f32 %v1210, 0.0
      %v1313 = vmax.f32 %v1215, 0.0
      %v1314 = vmax.f32 %v1220, 0.0
      %v1315 = vmax.f32 %v1225, 0.0
      %v1316 = vmax.f32 %v1230, 0.0
      %v1317 = vmax.f32 %v1235, 0.0
      %v1318 = vmax.f32 %v1240, 0.0
      %v1319 = vmax.f32 %v1245, 0.0
      %v1320 = vmax.f32 %v1250, 0.0
      %v1321 = vmax.f32 %v1255, 0.0
      %vm1322 = vcmask 31744
      %v1323 = vsel %vm1322, %v1258, 0.0
      %v1324 = vsel %vm1322, %v1259, 0.0
      %v1325 = vadd.f32 %v1323, %v1324
      %v1326 = vsel %vm1322, %v1260, 0.0
      %v1327 = vadd.f32 %v1325, %v1326
      %v1328 = vsel %vm1322, %v1261, 0.0
      %v1329 = vadd.f32 %v1327, %v1328
      %v1330 = vsel %vm1322, %v1262, 0.0
      %v1331 = vadd.f32 %v1329, %v1330
      %v1332 = vsel %vm1322, %v1263, 0.0
      %v1333 = vadd.f32 %v1331, %v1332
      %v1334 = vsel %vm1322, %v1264, 0.0
      %v1335 = vadd.f32 %v1333, %v1334
      %v1336 = vsel %vm1322, %v1265, 0.0
      %v1337 = vadd.f32 %v1335, %v1336
      %v1338 = vsel %vm1322, %v1266, 0.0
      %v1339 = vadd.f32 %v1337, %v1338
      %v1340 = vsel %vm1322, %v1267, 0.0
      %v1341 = vadd.f32 %v1339, %v1340
      %v1342 = vsel %vm1322, %v1268, 0.0
      %v1343 = vadd.f32 %v1341, %v1342
      %v1344 = vsel %vm1322, %v1269, 0.0
      %v1345 = vadd.f32 %v1343, %v1344
      %v1346 = vsel %vm1322, %v1270, 0.0
      %v1347 = vadd.f32 %v1345, %v1346
      %v1348 = vsel %vm1322, %v1271, 0.0
      %v1349 = vadd.f32 %v1347, %v1348
      %v1350 = vsel %vm1322, %v1272, 0.0
      %v1351 = vadd.f32 %v1349, %v1350
      %v1352 = vsel %vm1322, %v1273, 0.0
      %v1353 = vadd.f32 %v1351, %v1352
      %v1354 = vsel %vm1322, %v1274, 0.0
      %v1355 = vadd.f32 %v1353, %v1354
      %v1356 = vsel %vm1322, %v1275, 0.0
      %v1357 = vadd.f32 %v1355, %v1356
      %v1358 = vsel %vm1322, %v1276, 0.0
      %v1359 = vadd.f32 %v1357, %v1358
      %v1360 = vsel %vm1322, %v1277, 0.0
      %v1361 = vadd.f32 %v1359, %v1360
      %v1362 = vsel %vm1322, %v1278, 0.0
      %v1363 = vadd.f32 %v1361, %v1362
      %v1364 = vsel %vm1322, %v1279, 0.0
      %v1365 = vadd.f32 %v1363, %v1364
      %v1366 = vsel %vm1322, %v1280, 0.0
      %v1367 = vadd.f32 %v1365, %v1366
      %v1368 = vsel %vm1322, %v1281, 0.0
      %v1369 = vadd.f32 %v1367, %v1368
      %v1370 = vsel %vm1322, %v1282, 0.0
      %v1371 = vadd.f32 %v1369, %v1370
      %v1372 = vsel %vm1322, %v1283, 0.0
      %v1373 = vadd.f32 %v1371, %v1372
      %v1374 = vsel %vm1322, %v1284, 0.0
      %v1375 = vadd.f32 %v1373, %v1374
      %v1376 = vsel %vm1322, %v1285, 0.0
      %v1377 = vadd.f32 %v1375, %v1376
      %v1378 = vsel %vm1322, %v1286, 0.0
      %v1379 = vadd.f32 %v1377, %v1378
      %v1380 = vsel %vm1322, %v1287, 0.0
      %v1381 = vadd.f32 %v1379, %v1380
      %v1382 = vsel %vm1322, %v1288, 0.0
      %v1383 = vadd.f32 %v1381, %v1382
      %v1384 = vsel %vm1322, %v1289, 0.0
      %v1385 = vadd.f32 %v1383, %v1384
      %v1386 = vsel %vm1322, %v1290, 0.0
      %v1387 = vadd.f32 %v1385, %v1386
      %v1388 = vsel %vm1322, %v1291, 0.0
      %v1389 = vadd.f32 %v1387, %v1388
      %v1390 = vsel %vm1322, %v1292, 0.0
      %v1391 = vadd.f32 %v1389, %v1390
      %v1392 = vsel %vm1322, %v1293, 0.0
      %v1393 = vadd.f32 %v1391, %v1392
      %v1394 = vsel %vm1322, %v1294, 0.0
      %v1395 = vadd.f32 %v1393, %v1394
      %v1396 = vsel %vm1322, %v1295, 0.0
      %v1397 = vadd.f32 %v1395, %v1396
      %v1398 = vsel %vm1322, %v1296, 0.0
      %v1399 = vadd.f32 %v1397, %v1398
      %v1400 = vsel %vm1322, %v1297, 0.0
      %v1401 = vadd.f32 %v1399, %v1400
      %v1402 = vsel %vm1322, %v1298, 0.0
      %v1403 = vadd.f32 %v1401, %v1402
      %v1404 = vsel %vm1322, %v1299, 0.0
      %v1405 = vadd.f32 %v1403, %v1404
      %v1406 = vsel %vm1322, %v1300, 0.0
      %v1407 = vadd.f32 %v1405, %v1406
      %v1408 = vsel %vm1322, %v1301, 0.0
      %v1409 = vadd.f32 %v1407, %v1408
      %v1410 = vsel %vm1322, %v1302, 0.0
      %v1411 = vadd.f32 %v1409, %v1410
      %v1412 = vsel %vm1322, %v1303, 0.0
      %v1413 = vadd.f32 %v1411, %v1412
      %v1414 = vsel %vm1322, %v1304, 0.0
      %v1415 = vadd.f32 %v1413, %v1414
      %v1416 = vsel %vm1322, %v1305, 0.0
      %v1417 = vadd.f32 %v1415, %v1416
      %v1418 = vsel %vm1322, %v1306, 0.0
      %v1419 = vadd.f32 %v1417, %v1418
      %v1420 = vsel %vm1322, %v1307, 0.0
      %v1421 = vadd.f32 %v1419, %v1420
      %v1422 = vsel %vm1322, %v1308, 0.0
      %v1423 = vadd.f32 %v1421, %v1422
      %v1424 = vsel %vm1322, %v1309, 0.0
      %v1425 = vadd.f32 %v1423, %v1424
      %v1426 = vsel %vm1322, %v1310, 0.0
      %v1427 = vadd.f32 %v1425, %v1426
      %v1428 = vsel %vm1322, %v1311, 0.0
      %v1429 = vadd.f32 %v1427, %v1428
      %v1430 = vsel %vm1322, %v1312, 0.0
      %v1431 = vadd.f32 %v1429, %v1430
      %v1432 = vsel %vm1322, %v1313, 0.0
      %v1433 = vadd.f32 %v1431, %v1432
      %v1434 = vsel %vm1322, %v1314, 0.0
      %v1435 = vadd.f32 %v1433, %v1434
      %v1436 = vsel %vm1322, %v1315, 0.0
      %v1437 = vadd.f32 %v1435, %v1436
      %v1438 = vsel %vm1322, %v1316, 0.0
      %v1439 = vadd.f32 %v1437, %v1438
      %v1440 = vsel %vm1322, %v1317, 0.0
      %v1441 = vadd.f32 %v1439, %v1440
      %v1442 = vsel %vm1322, %v1318, 0.0
      %v1443 = vadd.f32 %v1441, %v1442
      %v1444 = vsel %vm1322, %v1319, 0.0
      %v1445 = vadd.f32 %v1443, %v1444
      %v1446 = vsel %vm1322, %v1320, 0.0
      %v1447 = vadd.f32 %v1445, %v1446
      %v1448 = vsel %vm1322, %v1321, 0.0
      %v1449 = vadd.f32 %v1447, %v1448
      %v1450 = vrot.slane %v1449, 4
      %v1451 = vadd.f32 %v1449, %v1450
      %v1452 = vrot.slane %v1451, 2
      %v1453 = vadd.f32 %v1451, %v1452
      %v1454 = vrot.slane %v1453, 1
      %v1455 = vadd.f32 %v1453, %v1454
      %v1456 = vrcp.pop 512.0
      %v1457 = vmul.f32 %v1455, %v1456
      %v1458 = vsub.f32 %v1258, %v1457
      %v1459 = vsub.f32 %v1259, %v1457
      %v1460 = vsub.f32 %v1260, %v1457
      %v1461 = vsub.f32 %v1261, %v1457
      %v1462 = vsub.f32 %v1262, %v1457
      %v1463 = vsub.f32 %v1263, %v1457
      %v1464 = vsub.f32 %v1264, %v1457
      %v1465 = vsub.f32 %v1265, %v1457
      %v1466 = vsub.f32 %v1266, %v1457
      %v1467 = vsub.f32 %v1267, %v1457
      %v1468 = vsub.f32 %v1268, %v1457
      %v1469 = vsub.f32 %v1269, %v1457
      %v1470 = vsub.f32 %v1270, %v1457
      %v1471 = vsub.f32 %v1271, %v1457
      %v1472 = vsub.f32 %v1272, %v1457
      %v1473 = vsub.f32 %v1273, %v1457
      %v1474 = vsub.f32 %v1274, %v1457
      %v1475 = vsub.f32 %v1275, %v1457
      %v1476 = vsub.f32 %v1276, %v1457
      %v1477 = vsub.f32 %v1277, %v1457
      %v1478 = vsub.f32 %v1278, %v1457
      %v1479 = vsub.f32 %v1279, %v1457
      %v1480 = vsub.f32 %v1280, %v1457
      %v1481 = vsub.f32 %v1281, %v1457
      %v1482 = vsub.f32 %v1282, %v1457
      %v1483 = vsub.f32 %v1283, %v1457
      %v1484 = vsub.f32 %v1284, %v1457
      %v1485 = vsub.f32 %v1285, %v1457
      %v1486 = vsub.f32 %v1286, %v1457
      %v1487 = vsub.f32 %v1287, %v1457
      %v1488 = vsub.f32 %v1288, %v1457
      %v1489 = vsub.f32 %v1289, %v1457
      %v1490 = vsub.f32 %v1290, %v1457
      %v1491 = vsub.f32 %v1291, %v1457
      %v1492 = vsub.f32 %v1292, %v1457
      %v1493 = vsub.f32 %v1293, %v1457
      %v1494 = vsub.f32 %v1294, %v1457
      %v1495 = vsub.f32 %v1295, %v1457
      %v1496 = vsub.f32 %v1296, %v1457
      %v1497 = vsub.f32 %v1297, %v1457
      %v1498 = vsub.f32 %v1298, %v1457
      %v1499 = vsub.f32 %v1299, %v1457
      %v1500 = vsub.f32 %v1300, %v1457
      %v1501 = vsub.f32 %v1301, %v1457
      %v1502 = vsub.f32 %v1302, %v1457
      %v1503 = vsub.f32 %v1303, %v1457
      %v1504 = vsub.f32 %v1304, %v1457
      %v1505 = vsub.f32 %v1305, %v1457
      %v1506 = vsub.f32 %v1306, %v1457
      %v1507 = vsub.f32 %v1307, %v1457
      %v1508 = vsub.f32 %v1308, %v1457
      %v1509 = vsub.f32 %v1309, %v1457
      %v1510 = vsub.f32 %v1310, %v1457
      %v1511 = vsub.f32 %v1311, %v1457
      %v1512 = vsub.f32 %v1312, %v1457
      %v1513 = vsub.f32 %v1313, %v1457
      %v1514 = vsub.f32 %v1314, %v1457
      %v1515 = vsub.f32 %v1315, %v1457
      %v1516 = vsub.f32 %v1316, %v1457
      %v1517 = vsub.f32 %v1317, %v1457
      %v1518 = vsub.f32 %v1318, %v1457
      %v1519 = vsub.f32 %v1319, %v1457
      %v1520 = vsub.f32 %v1320, %v1457
      %v1521 = vsub.f32 %v1321, %v1457
      %v1522 = vmul.f32 %v1458, %v1458
      %v1523 = vmul.f32 %v1459, %v1459
      %v1524 = vmul.f32 %v1460, %v1460
      %v1525 = vmul.f32 %v1461, %v1461
      %v1526 = vmul.f32 %v1462, %v1462
      %v1527 = vmul.f32 %v1463, %v1463
      %v1528 = vmul.f32 %v1464, %v1464
      %v1529 = vmul.f32 %v1465, %v1465
      %v1530 = vmul.f32 %v1466, %v1466
      %v1531 = vmul.f32 %v1467, %v1467
      %v1532 = vmul.f32 %v1468, %v1468
      %v1533 = vmul.f32 %v1469, %v1469
      %v1534 = vmul.f32 %v1470, %v1470
      %v1535 = vmul.f32 %v1471, %v1471
      %v1536 = vmul.f32 %v1472, %v1472
      %v1537 = vmul.f32 %v1473, %v1473
      %v1538 = vmul.f32 %v1474, %v1474
      %v1539 = vmul.f32 %v1475, %v1475
      %v1540 = vmul.f32 %v1476, %v1476
      %v1541 = vmul.f32 %v1477, %v1477
      %v1542 = vmul.f32 %v1478, %v1478
      %v1543 = vmul.f32 %v1479, %v1479
      %v1544 = vmul.f32 %v1480, %v1480
      %v1545 = vmul.f32 %v1481, %v1481
      %v1546 = vmul.f32 %v1482, %v1482
      %v1547 = vmul.f32 %v1483, %v1483
      %v1548 = vmul.f32 %v1484, %v1484
      %v1549 = vmul.f32 %v1485, %v1485
      %v1550 = vmul.f32 %v1486, %v1486
      %v1551 = vmul.f32 %v1487, %v1487
      %v1552 = vmul.f32 %v1488, %v1488
      %v1553 = vmul.f32 %v1489, %v1489
      %v1554 = vmul.f32 %v1490, %v1490
      %v1555 = vmul.f32 %v1491, %v1491
      %v1556 = vmul.f32 %v1492, %v1492
      %v1557 = vmul.f32 %v1493, %v1493
      %v1558 = vmul.f32 %v1494, %v1494
      %v1559 = vmul.f32 %v1495, %v1495
      %v1560 = vmul.f32 %v1496, %v1496
      %v1561 = vmul.f32 %v1497, %v1497
      %v1562 = vmul.f32 %v1498, %v1498
      %v1563 = vmul.f32 %v1499, %v1499
      %v1564 = vmul.f32 %v1500, %v1500
      %v1565 = vmul.f32 %v1501, %v1501
      %v1566 = vmul.f32 %v1502, %v1502
      %v1567 = vmul.f32 %v1503, %v1503
      %v1568 = vmul.f32 %v1504, %v1504
      %v1569 = vmul.f32 %v1505, %v1505
      %v1570 = vmul.f32 %v1506, %v1506
      %v1571 = vmul.f32 %v1507, %v1507
      %v1572 = vmul.f32 %v1508, %v1508
      %v1573 = vmul.f32 %v1509, %v1509
      %v1574 = vmul.f32 %v1510, %v1510
      %v1575 = vmul.f32 %v1511, %v1511
      %v1576 = vmul.f32 %v1512, %v1512
      %v1577 = vmul.f32 %v1513, %v1513
      %v1578 = vmul.f32 %v1514, %v1514
      %v1579 = vmul.f32 %v1515, %v1515
      %v1580 = vmul.f32 %v1516, %v1516
      %v1581 = vmul.f32 %v1517, %v1517
      %v1582 = vmul.f32 %v1518, %v1518
      %v1583 = vmul.f32 %v1519, %v1519
      %v1584 = vmul.f32 %v1520, %v1520
      %v1585 = vmul.f32 %v1521, %v1521
      %v1586 = vsel %vm1322, %v1522, 0.0
      %v1587 = vsel %vm1322, %v1523, 0.0
      %v1588 = vadd.f32 %v1586, %v1587
      %v1589 = vsel %vm1322, %v1524, 0.0
      %v1590 = vadd.f32 %v1588, %v1589
      %v1591 = vsel %vm1322, %v1525, 0.0
      %v1592 = vadd.f32 %v1590, %v1591
      %v1593 = vsel %vm1322, %v1526, 0.0
      %v1594 = vadd.f32 %v1592, %v1593
      %v1595 = vsel %vm1322, %v1527, 0.0
      %v1596 = vadd.f32 %v1594, %v1595
      %v1597 = vsel %vm1322, %v1528, 0.0
      %v1598 = vadd.f32 %v1596, %v1597
      %v1599 = vsel %vm1322, %v1529, 0.0
      %v1600 = vadd.f32 %v1598, %v1599
      %v1601 = vsel %vm1322, %v1530, 0.0
      %v1602 = vadd.f32 %v1600, %v1601
      %v1603 = vsel %vm1322, %v1531, 0.0
      %v1604 = vadd.f32 %v1602, %v1603
      %v1605 = vsel %vm1322, %v1532, 0.0
      %v1606 = vadd.f32 %v1604, %v1605
      %v1607 = vsel %vm1322, %v1533, 0.0
      %v1608 = vadd.f32 %v1606, %v1607
      %v1609 = vsel %vm1322, %v1534, 0.0
      %v1610 = vadd.f32 %v1608, %v1609
      %v1611 = vsel %vm1322, %v1535, 0.0
      %v1612 = vadd.f32 %v1610, %v1611
      %v1613 = vsel %vm1322, %v1536, 0.0
      %v1614 = vadd.f32 %v1612, %v1613
      %v1615 = vsel %vm1322, %v1537, 0.0
      %v1616 = vadd.f32 %v1614, %v1615
      %v1617 = vsel %vm1322, %v1538, 0.0
      %v1618 = vadd.f32 %v1616, %v1617
      %v1619 = vsel %vm1322, %v1539, 0.0
      %v1620 = vadd.f32 %v1618, %v1619
      %v1621 = vsel %vm1322, %v1540, 0.0
      %v1622 = vadd.f32 %v1620, %v1621
      %v1623 = vsel %vm1322, %v1541, 0.0
      %v1624 = vadd.f32 %v1622, %v1623
      %v1625 = vsel %vm1322, %v1542, 0.0
      %v1626 = vadd.f32 %v1624, %v1625
      %v1627 = vsel %vm1322, %v1543, 0.0
      %v1628 = vadd.f32 %v1626, %v1627
      %v1629 = vsel %vm1322, %v1544, 0.0
      %v1630 = vadd.f32 %v1628, %v1629
      %v1631 = vsel %vm1322, %v1545, 0.0
      %v1632 = vadd.f32 %v1630, %v1631
      %v1633 = vsel %vm1322, %v1546, 0.0
      %v1634 = vadd.f32 %v1632, %v1633
      %v1635 = vsel %vm1322, %v1547, 0.0
      %v1636 = vadd.f32 %v1634, %v1635
      %v1637 = vsel %vm1322, %v1548, 0.0
      %v1638 = vadd.f32 %v1636, %v1637
      %v1639 = vsel %vm1322, %v1549, 0.0
      %v1640 = vadd.f32 %v1638, %v1639
      %v1641 = vsel %vm1322, %v1550, 0.0
      %v1642 = vadd.f32 %v1640, %v1641
      %v1643 = vsel %vm1322, %v1551, 0.0
      %v1644 = vadd.f32 %v1642, %v1643
      %v1645 = vsel %vm1322, %v1552, 0.0
      %v1646 = vadd.f32 %v1644, %v1645
      %v1647 = vsel %vm1322, %v1553, 0.0
      %v1648 = vadd.f32 %v1646, %v1647
      %v1649 = vsel %vm1322, %v1554, 0.0
      %v1650 = vadd.f32 %v1648, %v1649
      %v1651 = vsel %vm1322, %v1555, 0.0
      %v1652 = vadd.f32 %v1650, %v1651
      %v1653 = vsel %vm1322, %v1556, 0.0
      %v1654 = vadd.f32 %v1652, %v1653
      %v1655 = vsel %vm1322, %v1557, 0.0
      %v1656 = vadd.f32 %v1654, %v1655
      %v1657 = vsel %vm1322, %v1558, 0.0
      %v1658 = vadd.f32 %v1656, %v1657
      %v1659 = vsel %vm1322, %v1559, 0.0
      %v1660 = vadd.f32 %v1658, %v1659
      %v1661 = vsel %vm1322, %v1560, 0.0
      %v1662 = vadd.f32 %v1660, %v1661
      %v1663 = vsel %vm1322, %v1561, 0.0
      %v1664 = vadd.f32 %v1662, %v1663
      %v1665 = vsel %vm1322, %v1562, 0.0
      %v1666 = vadd.f32 %v1664, %v1665
      %v1667 = vsel %vm1322, %v1563, 0.0
      %v1668 = vadd.f32 %v1666, %v1667
      %v1669 = vsel %vm1322, %v1564, 0.0
      %v1670 = vadd.f32 %v1668, %v1669
      %v1671 = vsel %vm1322, %v1565, 0.0
      %v1672 = vadd.f32 %v1670, %v1671
      %v1673 = vsel %vm1322, %v1566, 0.0
      %v1674 = vadd.f32 %v1672, %v1673
      %v1675 = vsel %vm1322, %v1567, 0.0
      %v1676 = vadd.f32 %v1674, %v1675
      %v1677 = vsel %vm1322, %v1568, 0.0
      %v1678 = vadd.f32 %v1676, %v1677
      %v1679 = vsel %vm1322, %v1569, 0.0
      %v1680 = vadd.f32 %v1678, %v1679
      %v1681 = vsel %vm1322, %v1570, 0.0
      %v1682 = vadd.f32 %v1680, %v1681
      %v1683 = vsel %vm1322, %v1571, 0.0
      %v1684 = vadd.f32 %v1682, %v1683
      %v1685 = vsel %vm1322, %v1572, 0.0
      %v1686 = vadd.f32 %v1684, %v1685
      %v1687 = vsel %vm1322, %v1573, 0.0
      %v1688 = vadd.f32 %v1686, %v1687
      %v1689 = vsel %vm1322, %v1574, 0.0
      %v1690 = vadd.f32 %v1688, %v1689
      %v1691 = vsel %vm1322, %v1575, 0.0
      %v1692 = vadd.f32 %v1690, %v1691
      %v1693 = vsel %vm1322, %v1576, 0.0
      %v1694 = vadd.f32 %v1692, %v1693
      %v1695 = vsel %vm1322, %v1577, 0.0
      %v1696 = vadd.f32 %v1694, %v1695
      %v1697 = vsel %vm1322, %v1578, 0.0
      %v1698 = vadd.f32 %v1696, %v1697
      %v1699 = vsel %vm1322, %v1579, 0.0
      %v1700 = vadd.f32 %v1698, %v1699
      %v1701 = vsel %vm1322, %v1580, 0.0
      %v1702 = vadd.f32 %v1700, %v1701
      %v1703 = vsel %vm1322, %v1581, 0.0
      %v1704 = vadd.f32 %v1702, %v1703
      %v1705 = vsel %vm1322, %v1582, 0.0
      %v1706 = vadd.f32 %v1704, %v1705
      %v1707 = vsel %vm1322, %v1583, 0.0
      %v1708 = vadd.f32 %v1706, %v1707
      %v1709 = vsel %vm1322, %v1584, 0.0
      %v1710 = vadd.f32 %v1708, %v1709
      %v1711 = vsel %vm1322, %v1585, 0.0
      %v1712 = vadd.f32 %v1710, %v1711
      %v1713 = vrot.slane %v1712, 4
      %v1714 = vadd.f32 %v1712, %v1713
      %v1715 = vrot.slane %v1714, 2
      %v1716 = vadd.f32 %v1714, %v1715
      %v1717 = vrot.slane %v1716, 1
      %v1718 = vadd.f32 %v1716, %v1717
      %v1719 = vmul.f32 %v1718, %v1456
      %v1721 = vlaneseq
      %v1722 = vshrl.u32 %v1721, 7
      %v1723 = vsub.s32 0, %v1722
      %v1724 = vrot.slane %v668, %v1723
      %v1726 = vmul.f32 %v1724, %v1458
      %v1727 = vmul.f32 %v1724, %v1459
      %v1728 = vmul.f32 %v1724, %v1460
      %v1729 = vmul.f32 %v1724, %v1461
      %v1730 = vmul.f32 %v1724, %v1462
      %v1731 = vmul.f32 %v1724, %v1463
      %v1732 = vmul.f32 %v1724, %v1464
      %v1733 = vmul.f32 %v1724, %v1465
      %v1734 = vmul.f32 %v1724, %v1466
      %v1735 = vmul.f32 %v1724, %v1467
      %v1736 = vmul.f32 %v1724, %v1468
      %v1737 = vmul.f32 %v1724, %v1469
      %v1738 = vmul.f32 %v1724, %v1470
      %v1739 = vmul.f32 %v1724, %v1471
      %v1740 = vmul.f32 %v1724, %v1472
      %v1741 = vmul.f32 %v1724, %v1473
      %v1742 = vmul.f32 %v1724, %v1474
      %v1743 = vmul.f32 %v1724, %v1475
      %v1744 = vmul.f32 %v1724, %v1476
      %v1745 = vmul.f32 %v1724, %v1477
      %v1746 = vmul.f32 %v1724, %v1478
      %v1747 = vmul.f32 %v1724, %v1479
      %v1748 = vmul.f32 %v1724, %v1480
      %v1749 = vmul.f32 %v1724, %v1481
      %v1750 = vmul.f32 %v1724, %v1482
      %v1751 = vmul.f32 %v1724, %v1483
      %v1752 = vmul.f32 %v1724, %v1484
      %v1753 = vmul.f32 %v1724, %v1485
      %v1754 = vmul.f32 %v1724, %v1486
      %v1755 = vmul.f32 %v1724, %v1487
      %v1756 = vmul.f32 %v1724, %v1488
      %v1757 = vmul.f32 %v1724, %v1489
      %v1758 = vmul.f32 %v1724, %v1490
      %v1759 = vmul.f32 %v1724, %v1491
      %v1760 = vmul.f32 %v1724, %v1492
      %v1761 = vmul.f32 %v1724, %v1493
      %v1762 = vmul.f32 %v1724, %v1494
      %v1763 = vmul.f32 %v1724, %v1495
      %v1764 = vmul.f32 %v1724, %v1496
      %v1765 = vmul.f32 %v1724, %v1497
      %v1766 = vmul.f32 %v1724, %v1498
      %v1767 = vmul.f32 %v1724, %v1499
      %v1768 = vmul.f32 %v1724, %v1500
      %v1769 = vmul.f32 %v1724, %v1501
      %v1770 = vmul.f32 %v1724, %v1502
      %v1771 = vmul.f32 %v1724, %v1503
      %v1772 = vmul.f32 %v1724, %v1504
      %v1773 = vmul.f32 %v1724, %v1505
      %v1774 = vmul.f32 %v1724, %v1506
      %v1775 = vmul.f32 %v1724, %v1507
      %v1776 = vmul.f32 %v1724, %v1508
      %v1777 = vmul.f32 %v1724, %v1509
      %v1778 = vmul.f32 %v1724, %v1510
      %v1779 = vmul.f32 %v1724, %v1511
      %v1780 = vmul.f32 %v1724, %v1512
      %v1781 = vmul.f32 %v1724, %v1513
      %v1782 = vmul.f32 %v1724, %v1514
      %v1783 = vmul.f32 %v1724, %v1515
      %v1784 = vmul.f32 %v1724, %v1516
      %v1785 = vmul.f32 %v1724, %v1517
      %v1786 = vmul.f32 %v1724, %v1518
      %v1787 = vmul.f32 %v1724, %v1519
      %v1788 = vmul.f32 %v1724, %v1520
      %v1789 = vmul.f32 %v1724, %v1521
      %v1790 = vadd.f32 %v1719, 1e-05
      %v1791 = vrsqrt.pop %v1790
      %v1792 = vmul.f32 %v1726, %v1791
      %v1793 = vmul.f32 %v1727, %v1791
      %v1794 = vmul.f32 %v1728, %v1791
      %v1795 = vmul.f32 %v1729, %v1791
      %v1796 = vmul.f32 %v1730, %v1791
      %v1797 = vmul.f32 %v1731, %v1791
      %v1798 = vmul.f32 %v1732, %v1791
      %v1799 = vmul.f32 %v1733, %v1791
      %v1800 = vmul.f32 %v1734, %v1791
      %v1801 = vmul.f32 %v1735, %v1791
      %v1802 = vmul.f32 %v1736, %v1791
      %v1803 = vmul.f32 %v1737, %v1791
      %v1804 = vmul.f32 %v1738, %v1791
      %v1805 = vmul.f32 %v1739, %v1791
      %v1806 = vmul.f32 %v1740, %v1791
      %v1807 = vmul.f32 %v1741, %v1791
      %v1808 = vmul.f32 %v1742, %v1791
      %v1809 = vmul.f32 %v1743, %v1791
      %v1810 = vmul.f32 %v1744, %v1791
      %v1811 = vmul.f32 %v1745, %v1791
      %v1812 = vmul.f32 %v1746, %v1791
      %v1813 = vmul.f32 %v1747, %v1791
      %v1814 = vmul.f32 %v1748, %v1791
      %v1815 = vmul.f32 %v1749, %v1791
      %v1816 = vmul.f32 %v1750, %v1791
      %v1817 = vmul.f32 %v1751, %v1791
      %v1818 = vmul.f32 %v1752, %v1791
      %v1819 = vmul.f32 %v1753, %v1791
      %v1820 = vmul.f32 %v1754, %v1791
      %v1821 = vmul.f32 %v1755, %v1791
      %v1822 = vmul.f32 %v1756, %v1791
      %v1823 = vmul.f32 %v1757, %v1791
      %v1824 = vmul.f32 %v1758, %v1791
      %v1825 = vmul.f32 %v1759, %v1791
      %v1826 = vmul.f32 %v1760, %v1791
      %v1827 = vmul.f32 %v1761, %v1791
      %v1828 = vmul.f32 %v1762, %v1791
      %v1829 = vmul.f32 %v1763, %v1791
      %v1830 = vmul.f32 %v1764, %v1791
      %v1831 = vmul.f32 %v1765, %v1791
      %v1832 = vmul.f32 %v1766, %v1791
      %v1833 = vmul.f32 %v1767, %v1791
      %v1834 = vmul.f32 %v1768, %v1791
      %v1835 = vmul.f32 %v1769, %v1791
      %v1836 = vmul.f32 %v1770, %v1791
      %v1837 = vmul.f32 %v1771, %v1791
      %v1838 = vmul.f32 %v1772, %v1791
      %v1839 = vmul.f32 %v1773, %v1791
      %v1840 = vmul.f32 %v1774, %v1791
      %v1841 = vmul.f32 %v1775, %v1791
      %v1842 = vmul.f32 %v1776, %v1791
      %v1843 = vmul.f32 %v1777, %v1791
      %v1844 = vmul.f32 %v1778, %v1791
      %v1845 = vmul.f32 %v1779, %v1791
      %v1846 = vmul.f32 %v1780, %v1791
      %v1847 = vmul.f32 %v1781, %v1791
      %v1848 = vmul.f32 %v1782, %v1791
      %v1849 = vmul.f32 %v1783, %v1791
      %v1850 = vmul.f32 %v1784, %v1791
      %v1851 = vmul.f32 %v1785, %v1791
      %v1852 = vmul.f32 %v1786, %v1791
      %v1853 = vmul.f32 %v1787, %v1791
      %v1854 = vmul.f32 %v1788, %v1791
      %v1855 = vmul.f32 %v1789, %v1791
      %v1857 = vlaneseq
      %v1858 = vshrl.u32 %v1857, 7
      %v1859 = vsub.s32 0, %v1858
      %v1860 = vrot.slane %v669, %v1859
      %v1862 = vadd.f32 %v1792, %v1860
      %v1863 = vadd.f32 %v1793, %v1860
      %v1864 = vadd.f32 %v1794, %v1860
      %v1865 = vadd.f32 %v1795, %v1860
      %v1866 = vadd.f32 %v1796, %v1860
      %v1867 = vadd.f32 %v1797, %v1860
      %v1868 = vadd.f32 %v1798, %v1860
      %v1869 = vadd.f32 %v1799, %v1860
      %v1870 = vadd.f32 %v1800, %v1860
      %v1871 = vadd.f32 %v1801, %v1860
      %v1872 = vadd.f32 %v1802, %v1860
      %v1873 = vadd.f32 %v1803, %v1860
      %v1874 = vadd.f32 %v1804, %v1860
      %v1875 = vadd.f32 %v1805, %v1860
      %v1876 = vadd.f32 %v1806, %v1860
      %v1877 = vadd.f32 %v1807, %v1860
      %v1878 = vadd.f32 %v1808, %v1860
      %v1879 = vadd.f32 %v1809, %v1860
      %v1880 = vadd.f32 %v1810, %v1860
      %v1881 = vadd.f32 %v1811, %v1860
      %v1882 = vadd.f32 %v1812, %v1860
      %v1883 = vadd.f32 %v1813, %v1860
      %v1884 = vadd.f32 %v1814, %v1860
      %v1885 = vadd.f32 %v1815, %v1860
      %v1886 = vadd.f32 %v1816, %v1860
      %v1887 = vadd.f32 %v1817, %v1860
      %v1888 = vadd.f32 %v1818, %v1860
      %v1889 = vadd.f32 %v1819, %v1860
      %v1890 = vadd.f32 %v1820, %v1860
      %v1891 = vadd.f32 %v1821, %v1860
      %v1892 = vadd.f32 %v1822, %v1860
      %v1893 = vadd.f32 %v1823, %v1860
      %v1894 = vadd.f32 %v1824, %v1860
      %v1895 = vadd.f32 %v1825, %v1860
      %v1896 = vadd.f32 %v1826, %v1860
      %v1897 = vadd.f32 %v1827, %v1860
      %v1898 = vadd.f32 %v1828, %v1860
      %v1899 = vadd.f32 %v1829, %v1860
      %v1900 = vadd.f32 %v1830, %v1860
      %v1901 = vadd.f32 %v1831, %v1860
      %v1902 = vadd.f32 %v1832, %v1860
      %v1903 = vadd.f32 %v1833, %v1860
      %v1904 = vadd.f32 %v1834, %v1860
      %v1905 = vadd.f32 %v1835, %v1860
      %v1906 = vadd.f32 %v1836, %v1860
      %v1907 = vadd.f32 %v1837, %v1860
      %v1908 = vadd.f32 %v1838, %v1860
      %v1909 = vadd.f32 %v1839, %v1860
      %v1910 = vadd.f32 %v1840, %v1860
      %v1911 = vadd.f32 %v1841, %v1860
      %v1912 = vadd.f32 %v1842, %v1860
      %v1913 = vadd.f32 %v1843, %v1860
      %v1914 = vadd.f32 %v1844, %v1860
      %v1915 = vadd.f32 %v1845, %v1860
      %v1916 = vadd.f32 %v1846, %v1860
      %v1917 = vadd.f32 %v1847, %v1860
      %v1918 = vadd.f32 %v1848, %v1860
      %v1919 = vadd.f32 %v1849, %v1860
      %v1920 = vadd.f32 %v1850, %v1860
      %v1921 = vadd.f32 %v1851, %v1860
      %v1922 = vadd.f32 %v1852, %v1860
      %v1923 = vadd.f32 %v1853, %v1860
      %v1924 = vadd.f32 %v1854, %v1860
      %v1925 = vadd.f32 %v1855, %v1860
      %v1958 = vrot.slane %v1864, 1
      %v1959 = vrot.slane %v1862, 1
      %v1960 = vrot.slane %v1866, 1
      %v1961 = vrot.slane %v1868, 1
      %v1962 = vrot.slane %v1870, 1
      %v1963 = vrot.slane %v1872, 1
      %v1964 = vrot.slane %v1874, 1
      %v1965 = vrot.slane %v1876, 1
      %v1966 = vrot.slane %v1878, 1
      %v1967 = vrot.slane %v1880, 1
      %v1968 = vrot.slane %v1882, 1
      %v1969 = vrot.slane %v1884, 1
      %v1970 = vrot.slane %v1886, 1
      %v1971 = vrot.slane %v1888, 1
      %v1972 = vrot.slane %v1890, 1
      %v1973 = vrot.slane %v1892, 1
      %v1974 = vrot.slane %v1896, 1
      %v1975 = vrot.slane %v1894, 1
      %v1976 = vrot.slane %v1898, 1
      %v1977 = vrot.slane %v1900, 1
      %v1978 = vrot.slane %v1902, 1
      %v1979 = vrot.slane %v1904, 1
      %v1980 = vrot.slane %v1906, 1
      %v1981 = vrot.slane %v1908, 1
      %v1982 = vrot.slane %v1910, 1
      %v1983 = vrot.slane %v1912, 1
      %v1984 = vrot.slane %v1914, 1
      %v1985 = vrot.slane %v1916, 1
      %v1986 = vrot.slane %v1918, 1
      %v1987 = vrot.slane %v1920, 1
      %v1988 = vrot.slane %v1922, 1
      %v1989 = vrot.slane %v1924, 1
      %v2054 = vrot.slane %v1864, 7
      %v2055 = vrot.slane %v1865, 7
      %v2056 = vsel %vm869, %v2054, %v2055
      %v2057 = vrot.slane %v1862, 7
      %v2058 = vrot.slane %v1863, 7
      %v2059 = vsel %vm869, %v2057, %v2058
      %v2060 = vrot.slane %v1866, 7
      %v2061 = vrot.slane %v1867, 7
      %v2062 = vsel %vm869, %v2060, %v2061
      %v2063 = vrot.slane %v1868, 7
      %v2064 = vrot.slane %v1869, 7
      %v2065 = vsel %vm869, %v2063, %v2064
      %v2066 = vrot.slane %v1870, 7
      %v2067 = vrot.slane %v1871, 7
      %v2068 = vsel %vm869, %v2066, %v2067
      %v2069 = vrot.slane %v1872, 7
      %v2070 = vrot.slane %v1873, 7
      %v2071 = vsel %vm869, %v2069, %v2070
      %v2072 = vrot.slane %v1874, 7
      %v2073 = vrot.slane %v1875, 7
      %v2074 = vsel %vm869, %v2072, %v2073
      %v2075 = vrot.slane %v1876, 7
      %v2076 = vrot.slane %v1877, 7
      %v2077 = vsel %vm869, %v2075, %v2076
      %v2078 = vrot.slane %v1878, 7
      %v2079 = vrot.slane %v1879, 7
      %v2080 = vsel %vm869, %v2078, %v2079
      %v2081 = vrot.slane %v1880, 7
      %v2082 = vrot.slane %v1881, 7
      %v2083 = vsel %vm869, %v2081, %v2082
      %v2084 = vrot.slane %v1882, 7
      %v2085 = vrot.slane %v1883, 7
      %v2086 = vsel %vm869, %v2084, %v2085
      %v2087 = vrot.slane %v1884, 7
      %v2088 = vrot.slane %v1885, 7
      %v2089 = vsel %vm869, %v2087, %v2088
      %v2090 = vrot.slane %v1886, 7
      %v2091 = vrot.slane %v1887, 7
      %v2092 = vsel %vm869, %v2090, %v2091
      %v2093 = vrot.slane %v1888, 7
      %v2094 = vrot.slane %v1889, 7
      %v2095 = vsel %vm869, %v2093, %v2094
      %v2096 = vrot.slane %v1890, 7
      %v2097 = vrot.slane %v1891, 7
      %v2098 = vsel %vm869, %v2096, %v2097
      %v2099 = vrot.slane %v1892, 7
      %v2100 = vrot.slane %v1893, 7
      %v2101 = vsel %vm869, %v2099, %v2100
      %v2102 = vrot.slane %v1896, 7
      %v2103 = vrot.slane %v1897, 7
      %v2104 = vsel %vm869, %v2102, %v2103
      %v2105 = vrot.slane %v1894, 7
      %v2106 = vrot.slane %v1895, 7
      %v2107 = vsel %vm869, %v2105, %v2106
      %v2108 = vrot.slane %v1898, 7
      %v2109 = vrot.slane %v1899, 7
      %v2110 = vsel %vm869, %v2108, %v2109
      %v2111 = vrot.slane %v1900, 7
      %v2112 = vrot.slane %v1901, 7
      %v2113 = vsel %vm869, %v2111, %v2112
      %v2114 = vrot.slane %v1902, 7
      %v2115 = vrot.slane %v1903, 7
      %v2116 = vsel %vm869, %v2114, %v2115
      %v2117 = vrot.slane %v1904, 7
      %v2118 = vrot.slane %v1905, 7
      %v2119 = vsel %vm869, %v2117, %v2118
      %v2120 = vrot.slane %v1906, 7
      %v2121 = vrot.slane %v1907, 7
      %v2122 = vsel %vm869, %v2120, %v2121
      %v2123 = vrot.slane %v1908, 7
      %v2124 = vrot.slane %v1909, 7
      %v2125 = vsel %vm869, %v2123, %v2124
      %v2126 = vrot.slane %v1910, 7
      %v2127 = vrot.slane %v1911, 7
      %v2128 = vsel %vm869, %v2126, %v2127
      %v2129 = vrot.slane %v1912, 7
      %v2130 = vrot.slane %v1913, 7
      %v2131 = vsel %vm869, %v2129, %v2130
      %v2132 = vrot.slane %v1914, 7
      %v2133 = vrot.slane %v1915, 7
      %v2134 = vsel %vm869, %v2132, %v2133
      %v2135 = vrot.slane %v1916, 7
      %v2136 = vrot.slane %v1917, 7
      %v2137 = vsel %vm869, %v2135, %v2136
      %v2138 = vrot.slane %v1918, 7
      %v2139 = vrot.slane %v1919, 7
      %v2140 = vsel %vm869, %v2138, %v2139
      %v2141 = vrot.slane %v1920, 7
      %v2142 = vrot.slane %v1921, 7
      %v2143 = vsel %vm869, %v2141, %v2142
      %v2144 = vrot.slane %v1922, 7
      %v2145 = vrot.slane %v1923, 7
      %v2146 = vsel %vm869, %v2144, %v2145
      %v2147 = vrot.slane %v1924, 7
      %v2148 = vrot.slane %v1925, 7
      %v2149 = vsel %vm869, %v2147, %v2148
      %v2244 = vrot.slane %v1865, 5
      %v2245 = vrot.slane %v1863, 5
      %v2246 = vrot.slane %v1867, 5
      %v2247 = vrot.slane %v1869, 5
      %v2248 = vrot.slane %v1871, 5
      %v2249 = vrot.slane %v1873, 5
      %v2250 = vrot.slane %v1875, 5
      %v2251 = vrot.slane %v1877, 5
      %v2252 = vrot.slane %v1879, 5
      %v2253 = vrot.slane %v1881, 5
      %v2254 = vrot.slane %v1883, 5
      %v2255 = vrot.slane %v1885, 5
      %v2256 = vrot.slane %v1887, 5
      %v2257 = vrot.slane %v1889, 5
      %v2258 = vrot.slane %v1891, 5
      %v2259 = vrot.slane %v1893, 5
      %v2260 = vrot.slane %v1897, 5
      %v2261 = vrot.slane %v1895, 5
      %v2262 = vrot.slane %v1899, 5
      %v2263 = vrot.slane %v1901, 5
      %v2264 = vrot.slane %v1903, 5
      %v2265 = vrot.slane %v1905, 5
      %v2266 = vrot.slane %v1907, 5
      %v2267 = vrot.slane %v1909, 5
      %v2268 = vrot.slane %v1911, 5
      %v2269 = vrot.slane %v1913, 5
      %v2270 = vrot.slane %v1915, 5
      %v2271 = vrot.slane %v1917, 5
      %v2272 = vrot.slane %v1919, 5
      %v2273 = vrot.slane %v1921, 5
      %v2274 = vrot.slane %v1923, 5
      %v2275 = vrot.slane %v1925, 5
      %v2308 = vsel %vm869, %v1958, %v2054
      %v2309 = vsel %vm869, %v1959, %v2057
      %v2310 = vsel %vm869, %v1960, %v2060
      %v2311 = vsel %vm869, %v1961, %v2063
      %v2312 = vsel %vm869, %v1962, %v2066
      %v2313 = vsel %vm869, %v1963, %v2069
      %v2314 = vsel %vm869, %v1964, %v2072
      %v2315 = vsel %vm869, %v1965, %v2075
      %v2316 = vsel %vm869, %v1966, %v2078
      %v2317 = vsel %vm869, %v1967, %v2081
      %v2318 = vsel %vm869, %v1968, %v2084
      %v2319 = vsel %vm869, %v1969, %v2087
      %v2320 = vsel %vm869, %v1970, %v2090
      %v2321 = vsel %vm869, %v1971, %v2093
      %v2322 = vsel %vm869, %v1972, %v2096
      %v2323 = vsel %vm869, %v1973, %v2099
      %v2324 = vsel %vm869, %v1974, %v2102
      %v2325 = vsel %vm869, %v1975, %v2105
      %v2326 = vsel %vm869, %v1976, %v2108
      %v2327 = vsel %vm869, %v1977, %v2111
      %v2328 = vsel %vm869, %v1978, %v2114
      %v2329 = vsel %vm869, %v1979, %v2117
      %v2330 = vsel %vm869, %v1980, %v2120
      %v2331 = vsel %vm869, %v1981, %v2123
      %v2332 = vsel %vm869, %v1982, %v2126
      %v2333 = vsel %vm869, %v1983, %v2129
      %v2334 = vsel %vm869, %v1984, %v2132
      %v2335 = vsel %vm869, %v1985, %v2135
      %v2336 = vsel %vm869, %v1986, %v2138
      %v2337 = vsel %vm869, %v1987, %v2141
      %v2338 = vsel %vm869, %v1988, %v2144
      %v2339 = vsel %vm869, %v1989, %v2147
      %v2340 = vsel %vm869, %v2055, %v2244
      %v2341 = vsel %vm869, %v2058, %v2245
      %v2342 = vsel %vm869, %v2061, %v2246
      %v2343 = vsel %vm869, %v2064, %v2247
      %v2344 = vsel %vm869, %v2067, %v2248
      %v2345 = vsel %vm869, %v2070, %v2249
      %v2346 = vsel %vm869, %v2073, %v2250
      %v2347 = vsel %vm869, %v2076, %v2251
      %v2348 = vsel %vm869, %v2079, %v2252
      %v2349 = vsel %vm869, %v2082, %v2253
      %v2350 = vsel %vm869, %v2085, %v2254
      %v2351 = vsel %vm869, %v2088, %v2255
      %v2352 = vsel %vm869, %v2091, %v2256
      %v2353 = vsel %vm869, %v2094, %v2257
      %v2354 = vsel %vm869, %v2097, %v2258
      %v2355 = vsel %vm869, %v2100, %v2259
      %v2356 = vsel %vm869, %v2103, %v2260
      %v2357 = vsel %vm869, %v2106, %v2261
      %v2358 = vsel %vm869, %v2109, %v2262
      %v2359 = vsel %vm869, %v2112, %v2263
      %v2360 = vsel %vm869, %v2115, %v2264
      %v2361 = vsel %vm869, %v2118, %v2265
      %v2362 = vsel %vm869, %v2121, %v2266
      %v2363 = vsel %vm869, %v2124, %v2267
      %v2364 = vsel %vm869, %v2127, %v2268
      %v2365 = vsel %vm869, %v2130, %v2269
      %v2366 = vsel %vm869, %v2133, %v2270
      %v2367 = vsel %vm869, %v2136, %v2271
      %v2368 = vsel %vm869, %v2139, %v2272
      %v2369 = vsel %vm869, %v2142, %v2273
      %v2370 = vsel %vm869, %v2145, %v2274
      %v2371 = vsel %vm869, %v2148, %v2275
      %vm2432 = vcmask 1046528
      %v2433 = vrot.slane %v2308, 1
      %v2434 = vrot.slane %v2056, 1
      %v2435 = vsel %vm2432, %v2433, %v2434
      %v2436 = vrot.slane %v2340, 1
      %v2437 = vsel %vm2432, %v2434, %v2436
      %v2438 = vrot.slane %v2309, 1
      %v2439 = vrot.slane %v2059, 1
      %v2440 = vsel %vm2432, %v2438, %v2439
      %v2441 = vrot.slane %v2341, 1
      %v2442 = vsel %vm2432, %v2439, %v2441
      %v2443 = vrot.slane %v2310, 1
      %v2444 = vrot.slane %v2062, 1
      %v2445 = vsel %vm2432, %v2443, %v2444
      %v2446 = vrot.slane %v2342, 1
      %v2447 = vsel %vm2432, %v2444, %v2446
      %v2448 = vrot.slane %v2311, 1
      %v2449 = vrot.slane %v2065, 1
      %v2450 = vsel %vm2432, %v2448, %v2449
      %v2451 = vrot.slane %v2343, 1
      %v2452 = vsel %vm2432, %v2449, %v2451
      %v2453 = vrot.slane %v2312, 1
      %v2454 = vrot.slane %v2068, 1
      %v2455 = vsel %vm2432, %v2453, %v2454
      %v2456 = vrot.slane %v2344, 1
      %v2457 = vsel %vm2432, %v2454, %v2456
      %v2458 = vrot.slane %v2313, 1
      %v2459 = vrot.slane %v2071, 1
      %v2460 = vsel %vm2432, %v2458, %v2459
      %v2461 = vrot.slane %v2345, 1
      %v2462 = vsel %vm2432, %v2459, %v2461
      %v2463 = vrot.slane %v2314, 1
      %v2464 = vrot.slane %v2074, 1
      %v2465 = vsel %vm2432, %v2463, %v2464
      %v2466 = vrot.slane %v2346, 1
      %v2467 = vsel %vm2432, %v2464, %v2466
      %v2468 = vrot.slane %v2315, 1
      %v2469 = vrot.slane %v2077, 1
      %v2470 = vsel %vm2432, %v2468, %v2469
      %v2471 = vrot.slane %v2347, 1
      %v2472 = vsel %vm2432, %v2469, %v2471
      %v2473 = vrot.slane %v2316, 1
      %v2474 = vrot.slane %v2080, 1
      %v2475 = vsel %vm2432, %v2473, %v2474
      %v2476 = vrot.slane %v2348, 1
      %v2477 = vsel %vm2432, %v2474, %v2476
      %v2478 = vrot.slane %v2317, 1
      %v2479 = vrot.slane %v2083, 1
      %v2480 = vsel %vm2432, %v2478, %v2479
      %v2481 = vrot.slane %v2349, 1
      %v2482 = vsel %vm2432, %v2479, %v2481
      %v2483 = vrot.slane %v2318, 1
      %v2484 = vrot.slane %v2086, 1
      %v2485 = vsel %vm2432, %v2483, %v2484
      %v2486 = vrot.slane %v2350, 1
      %v2487 = vsel %vm2432, %v2484, %v2486
      %v2488 = vrot.slane %v2319, 1
      %v2489 = vrot.slane %v2089, 1
      %v2490 = vsel %vm2432, %v2488, %v2489
      %v2491 = vrot.slane %v2351, 1
      %v2492 = vsel %vm2432, %v2489, %v2491
      %v2493 = vrot.slane %v2320, 1
      %v2494 = vrot.slane %v2092, 1
      %v2495 = vsel %vm2432, %v2493, %v2494
      %v2496 = vrot.slane %v2352, 1
      %v2497 = vsel %vm2432, %v2494, %v2496
      %v2498 = vrot.slane %v2321, 1
      %v2499 = vrot.slane %v2095, 1
      %v2500 = vsel %vm2432, %v2498, %v2499
      %v2501 = vrot.slane %v2353, 1
      %v2502 = vsel %vm2432, %v2499, %v2501
      %v2503 = vrot.slane %v2322, 1
      %v2504 = vrot.slane %v2098, 1
      %v2505 = vsel %vm2432, %v2503, %v2504
      %v2506 = vrot.slane %v2354, 1
      %v2507 = vsel %vm2432, %v2504, %v2506
      %v2508 = vrot.slane %v2324, 1
      %v2509 = vrot.slane %v2104, 1
      %v2510 = vsel %vm2432, %v2508, %v2509
      %v2511 = vrot.slane %v2356, 1
      %v2512 = vsel %vm2432, %v2509, %v2511
      %v2513 = vrot.slane %v2325, 1
      %v2514 = vrot.slane %v2107, 1
      %v2515 = vsel %vm2432, %v2513, %v2514
      %v2516 = vrot.slane %v2357, 1
      %v2517 = vsel %vm2432, %v2514, %v2516
      %v2518 = vrot.slane %v2326, 1
      %v2519 = vrot.slane %v2110, 1
      %v2520 = vsel %vm2432, %v2518, %v2519
      %v2521 = vrot.slane %v2358, 1
      %v2522 = vsel %vm2432, %v2519, %v2521
      %v2523 = vrot.slane %v2327, 1
      %v2524 = vrot.slane %v2113, 1
      %v2525 = vsel %vm2432, %v2523, %v2524
      %v2526 = vrot.slane %v2359, 1
      %v2527 = vsel %vm2432, %v2524, %v2526
      %v2528 = vrot.slane %v2328, 1
      %v2529 = vrot.slane %v2116, 1
      %v2530 = vsel %vm2432, %v2528, %v2529
      %v2531 = vrot.slane %v2360, 1
      %v2532 = vsel %vm2432, %v2529, %v2531
      %v2533 = vrot.slane %v2329, 1
      %v2534 = vrot.slane %v2119, 1
      %v2535 = vsel %vm2432, %v2533, %v2534
      %v2536 = vrot.slane %v2361, 1
      %v2537 = vsel %vm2432, %v2534, %v2536
      %v2538 = vrot.slane %v2330, 1
      %v2539 = vrot.slane %v2122, 1
      %v2540 = vsel %vm2432, %v2538, %v2539
      %v2541 = vrot.slane %v2362, 1
      %v2542 = vsel %vm2432, %v2539, %v2541
      %v2543 = vrot.slane %v2331, 1
      %v2544 = vrot.slane %v2125, 1
      %v2545 = vsel %vm2432, %v2543, %v2544
      %v2546 = vrot.slane %v2363, 1
      %v2547 = vsel %vm2432, %v2544, %v2546
      %v2548 = vrot.slane %v2332, 1
      %v2549 = vrot.slane %v2128, 1
      %v2550 = vsel %vm2432, %v2548, %v2549
      %v2551 = vrot.slane %v2364, 1
      %v2552 = vsel %vm2432, %v2549, %v2551
      %v2553 = vrot.slane %v2333, 1
      %v2554 = vrot.slane %v2131, 1
      %v2555 = vsel %vm2432, %v2553, %v2554
      %v2556 = vrot.slane %v2365, 1
      %v2557 = vsel %vm2432, %v2554, %v2556
      %v2558 = vrot.slane %v2334, 1
      %v2559 = vrot.slane %v2134, 1
      %v2560 = vsel %vm2432, %v2558, %v2559
      %v2561 = vrot.slane %v2366, 1
      %v2562 = vsel %vm2432, %v2559, %v2561
      %v2563 = vrot.slane %v2335, 1
      %v2564 = vrot.slane %v2137, 1
      %v2565 = vsel %vm2432, %v2563, %v2564
      %v2566 = vrot.slane %v2367, 1
      %v2567 = vsel %vm2432, %v2564, %v2566
      %v2568 = vrot.slane %v2336, 1
      %v2569 = vrot.slane %v2140, 1
      %v2570 = vsel %vm2432, %v2568, %v2569
      %v2571 = vrot.slane %v2368, 1
      %v2572 = vsel %vm2432, %v2569, %v2571
      %v2573 = vrot.slane %v2337, 1
      %v2574 = vrot.slane %v2143, 1
      %v2575 = vsel %vm2432, %v2573, %v2574
      %v2576 = vrot.slane %v2369, 1
      %v2577 = vsel %vm2432, %v2574, %v2576
      %v2578 = vrot.slane %v2338, 1
      %v2579 = vrot.slane %v2146, 1
      %v2580 = vsel %vm2432, %v2578, %v2579
      %v2581 = vrot.slane %v2370, 1
      %v2582 = vsel %vm2432, %v2579, %v2581
      %2583 = vrot.lane.b32.xlu0 %v2435, 4
      %v2584 = vpop.permute.xlu0 %2583
      %2585 = vrot.lane.b32.xlu0 %v2437, 4
      %v2586 = vpop.permute.xlu0 %2585
      %2587 = vrot.lane.b32.xlu0 %v2440, 4
      %v2588 = vpop.permute.xlu0 %2587
      %2589 = vrot.lane.b32.xlu0 %v2442, 4
      %v2590 = vpop.permute.xlu0 %2589
      %2591 = vrot.lane.b32.xlu0 %v2445, 4
      %v2592 = vpop.permute.xlu0 %2591
      %2593 = vrot.lane.b32.xlu0 %v2447, 4
      %v2594 = vpop.permute.xlu0 %2593
      %2595 = vrot.lane.b32.xlu0 %v2450, 4
      %v2596 = vpop.permute.xlu0 %2595
      %2597 = vrot.lane.b32.xlu0 %v2452, 4
      %v2598 = vpop.permute.xlu0 %2597
      %2599 = vrot.lane.b32.xlu0 %v2455, 4
      %v2600 = vpop.permute.xlu0 %2599
      %2601 = vrot.lane.b32.xlu0 %v2457, 4
      %v2602 = vpop.permute.xlu0 %2601
      %2603 = vrot.lane.b32.xlu0 %v2460, 4
      %v2604 = vpop.permute.xlu0 %2603
      %2605 = vrot.lane.b32.xlu0 %v2462, 4
      %v2606 = vpop.permute.xlu0 %2605
      %2607 = vrot.lane.b32.xlu0 %v2465, 4
      %v2608 = vpop.permute.xlu0 %2607
      %2609 = vrot.lane.b32.xlu0 %v2467, 4
      %v2610 = vpop.permute.xlu0 %2609
      %2611 = vrot.lane.b32.xlu0 %v2470, 4
      %v2612 = vpop.permute.xlu0 %2611
      %2613 = vrot.lane.b32.xlu0 %v2472, 4
      %v2614 = vpop.permute.xlu0 %2613
      %2615 = vrot.lane.b32.xlu0 %v2475, 4
      %v2616 = vpop.permute.xlu0 %2615
      %2617 = vrot.lane.b32.xlu0 %v2477, 4
      %v2618 = vpop.permute.xlu0 %2617
      %2619 = vrot.lane.b32.xlu0 %v2480, 4
      %v2620 = vpop.permute.xlu0 %2619
      %2621 = vrot.lane.b32.xlu0 %v2482, 4
      %v2622 = vpop.permute.xlu0 %2621
      %2623 = vrot.lane.b32.xlu0 %v2485, 4
      %v2624 = vpop.permute.xlu0 %2623
      %2625 = vrot.lane.b32.xlu0 %v2487, 4
      %v2626 = vpop.permute.xlu0 %2625
      %2627 = vrot.lane.b32.xlu0 %v2490, 4
      %v2628 = vpop.permute.xlu0 %2627
      %2629 = vrot.lane.b32.xlu0 %v2492, 4
      %v2630 = vpop.permute.xlu0 %2629
      %2631 = vrot.lane.b32.xlu0 %v2495, 4
      %v2632 = vpop.permute.xlu0 %2631
      %2633 = vrot.lane.b32.xlu0 %v2497, 4
      %v2634 = vpop.permute.xlu0 %2633
      %2635 = vrot.lane.b32.xlu0 %v2500, 4
      %v2636 = vpop.permute.xlu0 %2635
      %2637 = vrot.lane.b32.xlu0 %v2502, 4
      %v2638 = vpop.permute.xlu0 %2637
      %2639 = vrot.lane.b32.xlu0 %v2505, 4
      %v2640 = vpop.permute.xlu0 %2639
      %2641 = vrot.lane.b32.xlu0 %v2507, 4
      %v2642 = vpop.permute.xlu0 %2641
      %2643 = vrot.lane.b32.xlu0 %v2510, 4
      %v2644 = vpop.permute.xlu0 %2643
      %2645 = vrot.lane.b32.xlu0 %v2512, 4
      %v2646 = vpop.permute.xlu0 %2645
      %2647 = vrot.lane.b32.xlu0 %v2515, 4
      %v2648 = vpop.permute.xlu0 %2647
      %2649 = vrot.lane.b32.xlu0 %v2517, 4
      %v2650 = vpop.permute.xlu0 %2649
      %2651 = vrot.lane.b32.xlu0 %v2520, 4
      %v2652 = vpop.permute.xlu0 %2651
      %2653 = vrot.lane.b32.xlu0 %v2522, 4
      %v2654 = vpop.permute.xlu0 %2653
      %2655 = vrot.lane.b32.xlu0 %v2525, 4
      %v2656 = vpop.permute.xlu0 %2655
      %2657 = vrot.lane.b32.xlu0 %v2527, 4
      %v2658 = vpop.permute.xlu0 %2657
      %2659 = vrot.lane.b32.xlu0 %v2530, 4
      %v2660 = vpop.permute.xlu0 %2659
      %2661 = vrot.lane.b32.xlu0 %v2532, 4
      %v2662 = vpop.permute.xlu0 %2661
      %2663 = vrot.lane.b32.xlu0 %v2535, 4
      %v2664 = vpop.permute.xlu0 %2663
      %2665 = vrot.lane.b32.xlu0 %v2537, 4
      %v2666 = vpop.permute.xlu0 %2665
      %2667 = vrot.lane.b32.xlu0 %v2540, 4
      %v2668 = vpop.permute.xlu0 %2667
      %2669 = vrot.lane.b32.xlu0 %v2542, 4
      %v2670 = vpop.permute.xlu0 %2669
      %2671 = vrot.lane.b32.xlu0 %v2545, 4
      %v2672 = vpop.permute.xlu0 %2671
      %2673 = vrot.lane.b32.xlu0 %v2547, 4
      %v2674 = vpop.permute.xlu0 %2673
      %2675 = vrot.lane.b32.xlu0 %v2550, 4
      %v2676 = vpop.permute.xlu0 %2675
      %2677 = vrot.lane.b32.xlu0 %v2552, 4
      %v2678 = vpop.permute.xlu0 %2677
      %2679 = vrot.lane.b32.xlu0 %v2555, 4
      %v2680 = vpop.permute.xlu0 %2679
      %2681 = vrot.lane.b32.xlu0 %v2557, 4
      %v2682 = vpop.permute.xlu0 %2681
      %2683 = vrot.lane.b32.xlu0 %v2560, 4
      %v2684 = vpop.permute.xlu0 %2683
      %2685 = vrot.lane.b32.xlu0 %v2562, 4
      %v2686 = vpop.permute.xlu0 %2685
      %2687 = vrot.lane.b32.xlu0 %v2565, 4
      %v2688 = vpop.permute.xlu0 %2687
      %2689 = vrot.lane.b32.xlu0 %v2567, 4
      %v2690 = vpop.permute.xlu0 %2689
      %2691 = vrot.lane.b32.xlu0 %v2570, 4
      %v2692 = vpop.permute.xlu0 %2691
      %2693 = vrot.lane.b32.xlu0 %v2572, 4
      %v2694 = vpop.permute.xlu0 %2693
      %2695 = vrot.lane.b32.xlu0 %v2575, 4
      %v2696 = vpop.permute.xlu0 %2695
      %2697 = vrot.lane.b32.xlu0 %v2577, 4
      %v2698 = vpop.permute.xlu0 %2697
      %2699 = vrot.lane.b32.xlu0 %v2580, 4
      %v2700 = vpop.permute.xlu0 %2699
      %2701 = vrot.lane.b32.xlu0 %v2582, 4
      %v2702 = vpop.permute.xlu0 %2701
      %vm2763 = vcmask 1045504
      %v2764 = vrot.slane %v2308, 2
      %v2765 = vrot.slane %v2056, 2
      %v2766 = vsel %vm2763, %v2764, %v2765
      %v2767 = vrot.slane %v2340, 2
      %v2768 = vsel %vm2763, %v2765, %v2767
      %v2769 = vrot.slane %v2309, 2
      %v2770 = vrot.slane %v2059, 2
      %v2771 = vsel %vm2763, %v2769, %v2770
      %v2772 = vrot.slane %v2341, 2
      %v2773 = vsel %vm2763, %v2770, %v2772
      %v2774 = vrot.slane %v2310, 2
      %v2775 = vrot.slane %v2062, 2
      %v2776 = vsel %vm2763, %v2774, %v2775
      %v2777 = vrot.slane %v2342, 2
      %v2778 = vsel %vm2763, %v2775, %v2777
      %v2779 = vrot.slane %v2311, 2
      %v2780 = vrot.slane %v2065, 2
      %v2781 = vsel %vm2763, %v2779, %v2780
      %v2782 = vrot.slane %v2343, 2
      %v2783 = vsel %vm2763, %v2780, %v2782
      %v2784 = vrot.slane %v2312, 2
      %v2785 = vrot.slane %v2068, 2
      %v2786 = vsel %vm2763, %v2784, %v2785
      %v2787 = vrot.slane %v2344, 2
      %v2788 = vsel %vm2763, %v2785, %v2787
      %v2789 = vrot.slane %v2313, 2
      %v2790 = vrot.slane %v2071, 2
      %v2791 = vsel %vm2763, %v2789, %v2790
      %v2792 = vrot.slane %v2345, 2
      %v2793 = vsel %vm2763, %v2790, %v2792
      %v2794 = vrot.slane %v2314, 2
      %v2795 = vrot.slane %v2074, 2
      %v2796 = vsel %vm2763, %v2794, %v2795
      %v2797 = vrot.slane %v2346, 2
      %v2798 = vsel %vm2763, %v2795, %v2797
      %v2799 = vrot.slane %v2315, 2
      %v2800 = vrot.slane %v2077, 2
      %v2801 = vsel %vm2763, %v2799, %v2800
      %v2802 = vrot.slane %v2347, 2
      %v2803 = vsel %vm2763, %v2800, %v2802
      %v2804 = vrot.slane %v2316, 2
      %v2805 = vrot.slane %v2080, 2
      %v2806 = vsel %vm2763, %v2804, %v2805
      %v2807 = vrot.slane %v2348, 2
      %v2808 = vsel %vm2763, %v2805, %v2807
      %v2809 = vrot.slane %v2317, 2
      %v2810 = vrot.slane %v2083, 2
      %v2811 = vsel %vm2763, %v2809, %v2810
      %v2812 = vrot.slane %v2349, 2
      %v2813 = vsel %vm2763, %v2810, %v2812
      %v2814 = vrot.slane %v2318, 2
      %v2815 = vrot.slane %v2086, 2
      %v2816 = vsel %vm2763, %v2814, %v2815
      %v2817 = vrot.slane %v2350, 2
      %v2818 = vsel %vm2763, %v2815, %v2817
      %v2819 = vrot.slane %v2319, 2
      %v2820 = vrot.slane %v2089, 2
      %v2821 = vsel %vm2763, %v2819, %v2820
      %v2822 = vrot.slane %v2351, 2
      %v2823 = vsel %vm2763, %v2820, %v2822
      %v2824 = vrot.slane %v2320, 2
      %v2825 = vrot.slane %v2092, 2
      %v2826 = vsel %vm2763, %v2824, %v2825
      %v2827 = vrot.slane %v2352, 2
      %v2828 = vsel %vm2763, %v2825, %v2827
      %v2829 = vrot.slane %v2321, 2
      %v2830 = vrot.slane %v2095, 2
      %v2831 = vsel %vm2763, %v2829, %v2830
      %v2832 = vrot.slane %v2353, 2
      %v2833 = vsel %vm2763, %v2830, %v2832
      %v2834 = vrot.slane %v2322, 2
      %v2835 = vrot.slane %v2098, 2
      %v2836 = vsel %vm2763, %v2834, %v2835
      %v2837 = vrot.slane %v2354, 2
      %v2838 = vsel %vm2763, %v2835, %v2837
      %v2839 = vrot.slane %v2324, 2
      %v2840 = vrot.slane %v2104, 2
      %v2841 = vsel %vm2763, %v2839, %v2840
      %v2842 = vrot.slane %v2356, 2
      %v2843 = vsel %vm2763, %v2840, %v2842
      %v2844 = vrot.slane %v2325, 2
      %v2845 = vrot.slane %v2107, 2
      %v2846 = vsel %vm2763, %v2844, %v2845
      %v2847 = vrot.slane %v2357, 2
      %v2848 = vsel %vm2763, %v2845, %v2847
      %v2849 = vrot.slane %v2326, 2
      %v2850 = vrot.slane %v2110, 2
      %v2851 = vsel %vm2763, %v2849, %v2850
      %v2852 = vrot.slane %v2358, 2
      %v2853 = vsel %vm2763, %v2850, %v2852
      %v2854 = vrot.slane %v2327, 2
      %v2855 = vrot.slane %v2113, 2
      %v2856 = vsel %vm2763, %v2854, %v2855
      %v2857 = vrot.slane %v2359, 2
      %v2858 = vsel %vm2763, %v2855, %v2857
      %v2859 = vrot.slane %v2328, 2
      %v2860 = vrot.slane %v2116, 2
      %v2861 = vsel %vm2763, %v2859, %v2860
      %v2862 = vrot.slane %v2360, 2
      %v2863 = vsel %vm2763, %v2860, %v2862
      %v2864 = vrot.slane %v2329, 2
      %v2865 = vrot.slane %v2119, 2
      %v2866 = vsel %vm2763, %v2864, %v2865
      %v2867 = vrot.slane %v2361, 2
      %v2868 = vsel %vm2763, %v2865, %v2867
      %v2869 = vrot.slane %v2330, 2
      %v2870 = vrot.slane %v2122, 2
      %v2871 = vsel %vm2763, %v2869, %v2870
      %v2872 = vrot.slane %v2362, 2
      %v2873 = vsel %vm2763, %v2870, %v2872
      %v2874 = vrot.slane %v2331, 2
      %v2875 = vrot.slane %v2125, 2
      %v2876 = vsel %vm2763, %v2874, %v2875
      %v2877 = vrot.slane %v2363, 2
      %v2878 = vsel %vm2763, %v2875, %v2877
      %v2879 = vrot.slane %v2332, 2
      %v2880 = vrot.slane %v2128, 2
      %v2881 = vsel %vm2763, %v2879, %v2880
      %v2882 = vrot.slane %v2364, 2
      %v2883 = vsel %vm2763, %v2880, %v2882
      %v2884 = vrot.slane %v2333, 2
      %v2885 = vrot.slane %v2131, 2
      %v2886 = vsel %vm2763, %v2884, %v2885
      %v2887 = vrot.slane %v2365, 2
      %v2888 = vsel %vm2763, %v2885, %v2887
      %v2889 = vrot.slane %v2334, 2
      %v2890 = vrot.slane %v2134, 2
      %v2891 = vsel %vm2763, %v2889, %v2890
      %v2892 = vrot.slane %v2366, 2
      %v2893 = vsel %vm2763, %v2890, %v2892
      %v2894 = vrot.slane %v2335, 2
      %v2895 = vrot.slane %v2137, 2
      %v2896 = vsel %vm2763, %v2894, %v2895
      %v2897 = vrot.slane %v2367, 2
      %v2898 = vsel %vm2763, %v2895, %v2897
      %v2899 = vrot.slane %v2336, 2
      %v2900 = vrot.slane %v2140, 2
      %v2901 = vsel %vm2763, %v2899, %v2900
      %v2902 = vrot.slane %v2368, 2
      %v2903 = vsel %vm2763, %v2900, %v2902
      %v2904 = vrot.slane %v2337, 2
      %v2905 = vrot.slane %v2143, 2
      %v2906 = vsel %vm2763, %v2904, %v2905
      %v2907 = vrot.slane %v2369, 2
      %v2908 = vsel %vm2763, %v2905, %v2907
      %v2909 = vrot.slane %v2338, 2
      %v2910 = vrot.slane %v2146, 2
      %v2911 = vsel %vm2763, %v2909, %v2910
      %v2912 = vrot.slane %v2370, 2
      %v2913 = vsel %vm2763, %v2910, %v2912
      %2914 = vrot.lane.b32.xlu0 %v2766, 8
      %v2915 = vpop.permute.xlu0 %2914
      %2916 = vrot.lane.b32.xlu0 %v2768, 8
      %v2917 = vpop.permute.xlu0 %2916
      %2918 = vrot.lane.b32.xlu0 %v2771, 8
      %v2919 = vpop.permute.xlu0 %2918
      %2920 = vrot.lane.b32.xlu0 %v2773, 8
      %v2921 = vpop.permute.xlu0 %2920
      %2922 = vrot.lane.b32.xlu0 %v2776, 8
      %v2923 = vpop.permute.xlu0 %2922
      %2924 = vrot.lane.b32.xlu0 %v2778, 8
      %v2925 = vpop.permute.xlu0 %2924
      %2926 = vrot.lane.b32.xlu0 %v2781, 8
      %v2927 = vpop.permute.xlu0 %2926
      %2928 = vrot.lane.b32.xlu0 %v2783, 8
      %v2929 = vpop.permute.xlu0 %2928
      %2930 = vrot.lane.b32.xlu0 %v2786, 8
      %v2931 = vpop.permute.xlu0 %2930
      %2932 = vrot.lane.b32.xlu0 %v2788, 8
      %v2933 = vpop.permute.xlu0 %2932
      %2934 = vrot.lane.b32.xlu0 %v2791, 8
      %v2935 = vpop.permute.xlu0 %2934
      %2936 = vrot.lane.b32.xlu0 %v2793, 8
      %v2937 = vpop.permute.xlu0 %2936
      %2938 = vrot.lane.b32.xlu0 %v2796, 8
      %v2939 = vpop.permute.xlu0 %2938
      %2940 = vrot.lane.b32.xlu0 %v2798, 8
      %v2941 = vpop.permute.xlu0 %2940
      %2942 = vrot.lane.b32.xlu0 %v2801, 8
      %v2943 = vpop.permute.xlu0 %2942
      %2944 = vrot.lane.b32.xlu0 %v2803, 8
      %v2945 = vpop.permute.xlu0 %2944
      %2946 = vrot.lane.b32.xlu0 %v2806, 8
      %v2947 = vpop.permute.xlu0 %2946
      %2948 = vrot.lane.b32.xlu0 %v2808, 8
      %v2949 = vpop.permute.xlu0 %2948
      %2950 = vrot.lane.b32.xlu0 %v2811, 8
      %v2951 = vpop.permute.xlu0 %2950
      %2952 = vrot.lane.b32.xlu0 %v2813, 8
      %v2953 = vpop.permute.xlu0 %2952
      %2954 = vrot.lane.b32.xlu0 %v2816, 8
      %v2955 = vpop.permute.xlu0 %2954
      %2956 = vrot.lane.b32.xlu0 %v2818, 8
      %v2957 = vpop.permute.xlu0 %2956
      %2958 = vrot.lane.b32.xlu0 %v2821, 8
      %v2959 = vpop.permute.xlu0 %2958
      %2960 = vrot.lane.b32.xlu0 %v2823, 8
      %v2961 = vpop.permute.xlu0 %2960
      %2962 = vrot.lane.b32.xlu0 %v2826, 8
      %v2963 = vpop.permute.xlu0 %2962
      %2964 = vrot.lane.b32.xlu0 %v2828, 8
      %v2965 = vpop.permute.xlu0 %2964
      %2966 = vrot.lane.b32.xlu0 %v2831, 8
      %v2967 = vpop.permute.xlu0 %2966
      %2968 = vrot.lane.b32.xlu0 %v2833, 8
      %v2969 = vpop.permute.xlu0 %2968
      %2970 = vrot.lane.b32.xlu0 %v2836, 8
      %v2971 = vpop.permute.xlu0 %2970
      %2972 = vrot.lane.b32.xlu0 %v2838, 8
      %v2973 = vpop.permute.xlu0 %2972
      %2974 = vrot.lane.b32.xlu0 %v2841, 8
      %v2975 = vpop.permute.xlu0 %2974
      %2976 = vrot.lane.b32.xlu0 %v2843, 8
      %v2977 = vpop.permute.xlu0 %2976
      %2978 = vrot.lane.b32.xlu0 %v2846, 8
      %v2979 = vpop.permute.xlu0 %2978
      %2980 = vrot.lane.b32.xlu0 %v2848, 8
      %v2981 = vpop.permute.xlu0 %2980
      %2982 = vrot.lane.b32.xlu0 %v2851, 8
      %v2983 = vpop.permute.xlu0 %2982
      %2984 = vrot.lane.b32.xlu0 %v2853, 8
      %v2985 = vpop.permute.xlu0 %2984
      %2986 = vrot.lane.b32.xlu0 %v2856, 8
      %v2987 = vpop.permute.xlu0 %2986
      %2988 = vrot.lane.b32.xlu0 %v2858, 8
      %v2989 = vpop.permute.xlu0 %2988
      %2990 = vrot.lane.b32.xlu0 %v2861, 8
      %v2991 = vpop.permute.xlu0 %2990
      %2992 = vrot.lane.b32.xlu0 %v2863, 8
      %v2993 = vpop.permute.xlu0 %2992
      %2994 = vrot.lane.b32.xlu0 %v2866, 8
      %v2995 = vpop.permute.xlu0 %2994
      %2996 = vrot.lane.b32.xlu0 %v2868, 8
      %v2997 = vpop.permute.xlu0 %2996
      %2998 = vrot.lane.b32.xlu0 %v2871, 8
      %v2999 = vpop.permute.xlu0 %2998
      %3000 = vrot.lane.b32.xlu0 %v2873, 8
      %v3001 = vpop.permute.xlu0 %3000
      %3002 = vrot.lane.b32.xlu0 %v2876, 8
      %v3003 = vpop.permute.xlu0 %3002
      %3004 = vrot.lane.b32.xlu0 %v2878, 8
      %v3005 = vpop.permute.xlu0 %3004
      %3006 = vrot.lane.b32.xlu0 %v2881, 8
      %v3007 = vpop.permute.xlu0 %3006
      %3008 = vrot.lane.b32.xlu0 %v2883, 8
      %v3009 = vpop.permute.xlu0 %3008
      %3010 = vrot.lane.b32.xlu0 %v2886, 8
      %v3011 = vpop.permute.xlu0 %3010
      %3012 = vrot.lane.b32.xlu0 %v2888, 8
      %v3013 = vpop.permute.xlu0 %3012
      %3014 = vrot.lane.b32.xlu0 %v2891, 8
      %v3015 = vpop.permute.xlu0 %3014
      %3016 = vrot.lane.b32.xlu0 %v2893, 8
      %v3017 = vpop.permute.xlu0 %3016
      %3018 = vrot.lane.b32.xlu0 %v2896, 8
      %v3019 = vpop.permute.xlu0 %3018
      %3020 = vrot.lane.b32.xlu0 %v2898, 8
      %v3021 = vpop.permute.xlu0 %3020
      %3022 = vrot.lane.b32.xlu0 %v2901, 8
      %v3023 = vpop.permute.xlu0 %3022
      %3024 = vrot.lane.b32.xlu0 %v2903, 8
      %v3025 = vpop.permute.xlu0 %3024
      %3026 = vrot.lane.b32.xlu0 %v2906, 8
      %v3027 = vpop.permute.xlu0 %3026
      %3028 = vrot.lane.b32.xlu0 %v2908, 8
      %v3029 = vpop.permute.xlu0 %3028
      %3030 = vrot.lane.b32.xlu0 %v2911, 8
      %v3031 = vpop.permute.xlu0 %3030
      %3032 = vrot.lane.b32.xlu0 %v2913, 8
      %v3033 = vpop.permute.xlu0 %3032
      %3096 = vrot.lane.b32.xlu0 %v2309, 12
      %v3097 = vpop.permute.xlu0 %3096
      %3098 = vrot.lane.b32.xlu0 %v2059, 12
      %v3099 = vpop.permute.xlu0 %3098
      %3100 = vrot.lane.b32.xlu0 %v2308, 12
      %v3101 = vpop.permute.xlu0 %3100
      %3102 = vrot.lane.b32.xlu0 %v2056, 12
      %v3103 = vpop.permute.xlu0 %3102
      %3104 = vrot.lane.b32.xlu0 %v2310, 12
      %v3105 = vpop.permute.xlu0 %3104
      %3106 = vrot.lane.b32.xlu0 %v2062, 12
      %v3107 = vpop.permute.xlu0 %3106
      %3108 = vrot.lane.b32.xlu0 %v2311, 12
      %v3109 = vpop.permute.xlu0 %3108
      %3110 = vrot.lane.b32.xlu0 %v2065, 12
      %v3111 = vpop.permute.xlu0 %3110
      %3112 = vrot.lane.b32.xlu0 %v2312, 12
      %v3113 = vpop.permute.xlu0 %3112
      %3114 = vrot.lane.b32.xlu0 %v2068, 12
      %v3115 = vpop.permute.xlu0 %3114
      %3116 = vrot.lane.b32.xlu0 %v2313, 12
      %v3117 = vpop.permute.xlu0 %3116
      %3118 = vrot.lane.b32.xlu0 %v2071, 12
      %v3119 = vpop.permute.xlu0 %3118
      %3120 = vrot.lane.b32.xlu0 %v2314, 12
      %v3121 = vpop.permute.xlu0 %3120
      %3122 = vrot.lane.b32.xlu0 %v2074, 12
      %v3123 = vpop.permute.xlu0 %3122
      %3124 = vrot.lane.b32.xlu0 %v2315, 12
      %v3125 = vpop.permute.xlu0 %3124
      %3126 = vrot.lane.b32.xlu0 %v2077, 12
      %v3127 = vpop.permute.xlu0 %3126
      %3128 = vrot.lane.b32.xlu0 %v2316, 12
      %v3129 = vpop.permute.xlu0 %3128
      %3130 = vrot.lane.b32.xlu0 %v2080, 12
      %v3131 = vpop.permute.xlu0 %3130
      %3132 = vrot.lane.b32.xlu0 %v2317, 12
      %v3133 = vpop.permute.xlu0 %3132
      %3134 = vrot.lane.b32.xlu0 %v2083, 12
      %v3135 = vpop.permute.xlu0 %3134
      %3136 = vrot.lane.b32.xlu0 %v2318, 12
      %v3137 = vpop.permute.xlu0 %3136
      %3138 = vrot.lane.b32.xlu0 %v2086, 12
      %v3139 = vpop.permute.xlu0 %3138
      %3140 = vrot.lane.b32.xlu0 %v2319, 12
      %v3141 = vpop.permute.xlu0 %3140
      %3142 = vrot.lane.b32.xlu0 %v2089, 12
      %v3143 = vpop.permute.xlu0 %3142
      %3144 = vrot.lane.b32.xlu0 %v2320, 12
      %v3145 = vpop.permute.xlu0 %3144
      %3146 = vrot.lane.b32.xlu0 %v2092, 12
      %v3147 = vpop.permute.xlu0 %3146
      %3148 = vrot.lane.b32.xlu0 %v2321, 12
      %v3149 = vpop.permute.xlu0 %3148
      %3150 = vrot.lane.b32.xlu0 %v2095, 12
      %v3151 = vpop.permute.xlu0 %3150
      %3152 = vrot.lane.b32.xlu0 %v2322, 12
      %v3153 = vpop.permute.xlu0 %3152
      %3154 = vrot.lane.b32.xlu0 %v2098, 12
      %v3155 = vpop.permute.xlu0 %3154
      %3156 = vrot.lane.b32.xlu0 %v2323, 12
      %v3157 = vpop.permute.xlu0 %3156
      %3158 = vrot.lane.b32.xlu0 %v2101, 12
      %v3159 = vpop.permute.xlu0 %3158
      %3160 = vrot.lane.b32.xlu0 %v2325, 12
      %v3161 = vpop.permute.xlu0 %3160
      %3162 = vrot.lane.b32.xlu0 %v2107, 12
      %v3163 = vpop.permute.xlu0 %3162
      %3164 = vrot.lane.b32.xlu0 %v2324, 12
      %v3165 = vpop.permute.xlu0 %3164
      %3166 = vrot.lane.b32.xlu0 %v2104, 12
      %v3167 = vpop.permute.xlu0 %3166
      %3168 = vrot.lane.b32.xlu0 %v2326, 12
      %v3169 = vpop.permute.xlu0 %3168
      %3170 = vrot.lane.b32.xlu0 %v2110, 12
      %v3171 = vpop.permute.xlu0 %3170
      %3172 = vrot.lane.b32.xlu0 %v2327, 12
      %v3173 = vpop.permute.xlu0 %3172
      %3174 = vrot.lane.b32.xlu0 %v2113, 12
      %v3175 = vpop.permute.xlu0 %3174
      %3176 = vrot.lane.b32.xlu0 %v2328, 12
      %v3177 = vpop.permute.xlu0 %3176
      %3178 = vrot.lane.b32.xlu0 %v2116, 12
      %v3179 = vpop.permute.xlu0 %3178
      %3180 = vrot.lane.b32.xlu0 %v2329, 12
      %v3181 = vpop.permute.xlu0 %3180
      %3182 = vrot.lane.b32.xlu0 %v2119, 12
      %v3183 = vpop.permute.xlu0 %3182
      %3184 = vrot.lane.b32.xlu0 %v2330, 12
      %v3185 = vpop.permute.xlu0 %3184
      %3186 = vrot.lane.b32.xlu0 %v2122, 12
      %v3187 = vpop.permute.xlu0 %3186
      %3188 = vrot.lane.b32.xlu0 %v2331, 12
      %v3189 = vpop.permute.xlu0 %3188
      %3190 = vrot.lane.b32.xlu0 %v2125, 12
      %v3191 = vpop.permute.xlu0 %3190
      %3192 = vrot.lane.b32.xlu0 %v2332, 12
      %v3193 = vpop.permute.xlu0 %3192
      %3194 = vrot.lane.b32.xlu0 %v2128, 12
      %v3195 = vpop.permute.xlu0 %3194
      %3196 = vrot.lane.b32.xlu0 %v2333, 12
      %v3197 = vpop.permute.xlu0 %3196
      %3198 = vrot.lane.b32.xlu0 %v2131, 12
      %v3199 = vpop.permute.xlu0 %3198
      %3200 = vrot.lane.b32.xlu0 %v2334, 12
      %v3201 = vpop.permute.xlu0 %3200
      %3202 = vrot.lane.b32.xlu0 %v2134, 12
      %v3203 = vpop.permute.xlu0 %3202
      %3204 = vrot.lane.b32.xlu0 %v2335, 12
      %v3205 = vpop.permute.xlu0 %3204
      %3206 = vrot.lane.b32.xlu0 %v2137, 12
      %v3207 = vpop.permute.xlu0 %3206
      %3208 = vrot.lane.b32.xlu0 %v2336, 12
      %v3209 = vpop.permute.xlu0 %3208
      %3210 = vrot.lane.b32.xlu0 %v2140, 12
      %v3211 = vpop.permute.xlu0 %3210
      %3212 = vrot.lane.b32.xlu0 %v2337, 12
      %v3213 = vpop.permute.xlu0 %3212
      %3214 = vrot.lane.b32.xlu0 %v2143, 12
      %v3215 = vpop.permute.xlu0 %3214
      %3216 = vrot.lane.b32.xlu0 %v2338, 12
      %v3217 = vpop.permute.xlu0 %3216
      %3218 = vrot.lane.b32.xlu0 %v2146, 12
      %v3219 = vpop.permute.xlu0 %3218
      %3220 = vrot.lane.b32.xlu0 %v2339, 12
      %v3221 = vpop.permute.xlu0 %3220
      %3222 = vrot.lane.b32.xlu0 %v2149, 12
      %v3223 = vpop.permute.xlu0 %3222
      %v3290 = vrot.slane %v2323, 1
      %v3291 = vrot.slane %v2101, 1
      %v3292 = vsel %vm2432, %v3290, %v3291
      %v3293 = vrot.slane %v2355, 1
      %v3294 = vsel %vm2432, %v3291, %v3293
      %v3295 = vrot.slane %v2339, 1
      %v3296 = vrot.slane %v2149, 1
      %v3297 = vsel %vm2432, %v3295, %v3296
      %v3298 = vrot.slane %v2371, 1
      %v3299 = vsel %vm2432, %v3296, %v3298
      %3300 = vrot.lane.b32.xlu0 %v2440, 16
      %v3301 = vpop.permute.xlu0 %3300
      %3302 = vrot.lane.b32.xlu0 %v2442, 16
      %v3303 = vpop.permute.xlu0 %3302
      %3304 = vrot.lane.b32.xlu0 %v2435, 16
      %v3305 = vpop.permute.xlu0 %3304
      %3306 = vrot.lane.b32.xlu0 %v2437, 16
      %v3307 = vpop.permute.xlu0 %3306
      %3308 = vrot.lane.b32.xlu0 %v2445, 16
      %v3309 = vpop.permute.xlu0 %3308
      %3310 = vrot.lane.b32.xlu0 %v2447, 16
      %v3311 = vpop.permute.xlu0 %3310
      %3312 = vrot.lane.b32.xlu0 %v2450, 16
      %v3313 = vpop.permute.xlu0 %3312
      %3314 = vrot.lane.b32.xlu0 %v2452, 16
      %v3315 = vpop.permute.xlu0 %3314
      %3316 = vrot.lane.b32.xlu0 %v2455, 16
      %v3317 = vpop.permute.xlu0 %3316
      %3318 = vrot.lane.b32.xlu0 %v2457, 16
      %v3319 = vpop.permute.xlu0 %3318
      %3320 = vrot.lane.b32.xlu0 %v2460, 16
      %v3321 = vpop.permute.xlu0 %3320
      %3322 = vrot.lane.b32.xlu0 %v2462, 16
      %v3323 = vpop.permute.xlu0 %3322
      %3324 = vrot.lane.b32.xlu0 %v2465, 16
      %v3325 = vpop.permute.xlu0 %3324
      %3326 = vrot.lane.b32.xlu0 %v2467, 16
      %v3327 = vpop.permute.xlu0 %3326
      %3328 = vrot.lane.b32.xlu0 %v2470, 16
      %v3329 = vpop.permute.xlu0 %3328
      %3330 = vrot.lane.b32.xlu0 %v2472, 16
      %v3331 = vpop.permute.xlu0 %3330
      %3332 = vrot.lane.b32.xlu0 %v2475, 16
      %v3333 = vpop.permute.xlu0 %3332
      %3334 = vrot.lane.b32.xlu0 %v2477, 16
      %v3335 = vpop.permute.xlu0 %3334
      %3336 = vrot.lane.b32.xlu0 %v2480, 16
      %v3337 = vpop.permute.xlu0 %3336
      %3338 = vrot.lane.b32.xlu0 %v2482, 16
      %v3339 = vpop.permute.xlu0 %3338
      %3340 = vrot.lane.b32.xlu0 %v2485, 16
      %v3341 = vpop.permute.xlu0 %3340
      %3342 = vrot.lane.b32.xlu0 %v2487, 16
      %v3343 = vpop.permute.xlu0 %3342
      %3344 = vrot.lane.b32.xlu0 %v2490, 16
      %v3345 = vpop.permute.xlu0 %3344
      %3346 = vrot.lane.b32.xlu0 %v2492, 16
      %v3347 = vpop.permute.xlu0 %3346
      %3348 = vrot.lane.b32.xlu0 %v2495, 16
      %v3349 = vpop.permute.xlu0 %3348
      %3350 = vrot.lane.b32.xlu0 %v2497, 16
      %v3351 = vpop.permute.xlu0 %3350
      %3352 = vrot.lane.b32.xlu0 %v2500, 16
      %v3353 = vpop.permute.xlu0 %3352
      %3354 = vrot.lane.b32.xlu0 %v2502, 16
      %v3355 = vpop.permute.xlu0 %3354
      %3356 = vrot.lane.b32.xlu0 %v2505, 16
      %v3357 = vpop.permute.xlu0 %3356
      %3358 = vrot.lane.b32.xlu0 %v2507, 16
      %v3359 = vpop.permute.xlu0 %3358
      %3360 = vrot.lane.b32.xlu0 %v3292, 16
      %v3361 = vpop.permute.xlu0 %3360
      %3362 = vrot.lane.b32.xlu0 %v3294, 16
      %v3363 = vpop.permute.xlu0 %3362
      %3364 = vrot.lane.b32.xlu0 %v2515, 16
      %v3365 = vpop.permute.xlu0 %3364
      %3366 = vrot.lane.b32.xlu0 %v2517, 16
      %v3367 = vpop.permute.xlu0 %3366
      %3368 = vrot.lane.b32.xlu0 %v2510, 16
      %v3369 = vpop.permute.xlu0 %3368
      %3370 = vrot.lane.b32.xlu0 %v2512, 16
      %v3371 = vpop.permute.xlu0 %3370
      %3372 = vrot.lane.b32.xlu0 %v2520, 16
      %v3373 = vpop.permute.xlu0 %3372
      %3374 = vrot.lane.b32.xlu0 %v2522, 16
      %v3375 = vpop.permute.xlu0 %3374
      %3376 = vrot.lane.b32.xlu0 %v2525, 16
      %v3377 = vpop.permute.xlu0 %3376
      %3378 = vrot.lane.b32.xlu0 %v2527, 16
      %v3379 = vpop.permute.xlu0 %3378
      %3380 = vrot.lane.b32.xlu0 %v2530, 16
      %v3381 = vpop.permute.xlu0 %3380
      %3382 = vrot.lane.b32.xlu0 %v2532, 16
      %v3383 = vpop.permute.xlu0 %3382
      %3384 = vrot.lane.b32.xlu0 %v2535, 16
      %v3385 = vpop.permute.xlu0 %3384
      %3386 = vrot.lane.b32.xlu0 %v2537, 16
      %v3387 = vpop.permute.xlu0 %3386
      %3388 = vrot.lane.b32.xlu0 %v2540, 16
      %v3389 = vpop.permute.xlu0 %3388
      %3390 = vrot.lane.b32.xlu0 %v2542, 16
      %v3391 = vpop.permute.xlu0 %3390
      %3392 = vrot.lane.b32.xlu0 %v2545, 16
      %v3393 = vpop.permute.xlu0 %3392
      %3394 = vrot.lane.b32.xlu0 %v2547, 16
      %v3395 = vpop.permute.xlu0 %3394
      %3396 = vrot.lane.b32.xlu0 %v2550, 16
      %v3397 = vpop.permute.xlu0 %3396
      %3398 = vrot.lane.b32.xlu0 %v2552, 16
      %v3399 = vpop.permute.xlu0 %3398
      %3400 = vrot.lane.b32.xlu0 %v2555, 16
      %v3401 = vpop.permute.xlu0 %3400
      %3402 = vrot.lane.b32.xlu0 %v2557, 16
      %v3403 = vpop.permute.xlu0 %3402
      %3404 = vrot.lane.b32.xlu0 %v2560, 16
      %v3405 = vpop.permute.xlu0 %3404
      %3406 = vrot.lane.b32.xlu0 %v2562, 16
      %v3407 = vpop.permute.xlu0 %3406
      %3408 = vrot.lane.b32.xlu0 %v2565, 16
      %v3409 = vpop.permute.xlu0 %3408
      %3410 = vrot.lane.b32.xlu0 %v2567, 16
      %v3411 = vpop.permute.xlu0 %3410
      %3412 = vrot.lane.b32.xlu0 %v2570, 16
      %v3413 = vpop.permute.xlu0 %3412
      %3414 = vrot.lane.b32.xlu0 %v2572, 16
      %v3415 = vpop.permute.xlu0 %3414
      %3416 = vrot.lane.b32.xlu0 %v2575, 16
      %v3417 = vpop.permute.xlu0 %3416
      %3418 = vrot.lane.b32.xlu0 %v2577, 16
      %v3419 = vpop.permute.xlu0 %3418
      %3420 = vrot.lane.b32.xlu0 %v2580, 16
      %v3421 = vpop.permute.xlu0 %3420
      %3422 = vrot.lane.b32.xlu0 %v2582, 16
      %v3423 = vpop.permute.xlu0 %3422
      %3424 = vrot.lane.b32.xlu0 %v3297, 16
      %v3425 = vpop.permute.xlu0 %3424
      %3426 = vrot.lane.b32.xlu0 %v3299, 16
      %v3427 = vpop.permute.xlu0 %3426
      %v3492 = vrot.slane %v2323, 2
      %v3493 = vrot.slane %v2101, 2
      %v3494 = vsel %vm2763, %v3492, %v3493
      %v3495 = vrot.slane %v2355, 2
      %v3496 = vsel %vm2763, %v3493, %v3495
      %v3497 = vrot.slane %v2339, 2
      %v3498 = vrot.slane %v2149, 2
      %v3499 = vsel %vm2763, %v3497, %v3498
      %v3500 = vrot.slane %v2371, 2
      %v3501 = vsel %vm2763, %v3498, %v3500
      %3502 = vrot.lane.b32.xlu0 %v2771, 20
      %v3503 = vpop.permute.xlu0 %3502
      %3504 = vrot.lane.b32.xlu0 %v2773, 20
      %v3505 = vpop.permute.xlu0 %3504
      %3506 = vrot.lane.b32.xlu0 %v2766, 20
      %v3507 = vpop.permute.xlu0 %3506
      %3508 = vrot.lane.b32.xlu0 %v2768, 20
      %v3509 = vpop.permute.xlu0 %3508
      %3510 = vrot.lane.b32.xlu0 %v2776, 20
      %v3511 = vpop.permute.xlu0 %3510
      %3512 = vrot.lane.b32.xlu0 %v2778, 20
      %v3513 = vpop.permute.xlu0 %3512
      %3514 = vrot.lane.b32.xlu0 %v2781, 20
      %v3515 = vpop.permute.xlu0 %3514
      %3516 = vrot.lane.b32.xlu0 %v2783, 20
      %v3517 = vpop.permute.xlu0 %3516
      %3518 = vrot.lane.b32.xlu0 %v2786, 20
      %v3519 = vpop.permute.xlu0 %3518
      %3520 = vrot.lane.b32.xlu0 %v2788, 20
      %v3521 = vpop.permute.xlu0 %3520
      %3522 = vrot.lane.b32.xlu0 %v2791, 20
      %v3523 = vpop.permute.xlu0 %3522
      %3524 = vrot.lane.b32.xlu0 %v2793, 20
      %v3525 = vpop.permute.xlu0 %3524
      %3526 = vrot.lane.b32.xlu0 %v2796, 20
      %v3527 = vpop.permute.xlu0 %3526
      %3528 = vrot.lane.b32.xlu0 %v2798, 20
      %v3529 = vpop.permute.xlu0 %3528
      %3530 = vrot.lane.b32.xlu0 %v2801, 20
      %v3531 = vpop.permute.xlu0 %3530
      %3532 = vrot.lane.b32.xlu0 %v2803, 20
      %v3533 = vpop.permute.xlu0 %3532
      %3534 = vrot.lane.b32.xlu0 %v2806, 20
      %v3535 = vpop.permute.xlu0 %3534
      %3536 = vrot.lane.b32.xlu0 %v2808, 20
      %v3537 = vpop.permute.xlu0 %3536
      %3538 = vrot.lane.b32.xlu0 %v2811, 20
      %v3539 = vpop.permute.xlu0 %3538
      %3540 = vrot.lane.b32.xlu0 %v2813, 20
      %v3541 = vpop.permute.xlu0 %3540
      %3542 = vrot.lane.b32.xlu0 %v2816, 20
      %v3543 = vpop.permute.xlu0 %3542
      %3544 = vrot.lane.b32.xlu0 %v2818, 20
      %v3545 = vpop.permute.xlu0 %3544
      %3546 = vrot.lane.b32.xlu0 %v2821, 20
      %v3547 = vpop.permute.xlu0 %3546
      %3548 = vrot.lane.b32.xlu0 %v2823, 20
      %v3549 = vpop.permute.xlu0 %3548
      %3550 = vrot.lane.b32.xlu0 %v2826, 20
      %v3551 = vpop.permute.xlu0 %3550
      %3552 = vrot.lane.b32.xlu0 %v2828, 20
      %v3553 = vpop.permute.xlu0 %3552
      %3554 = vrot.lane.b32.xlu0 %v2831, 20
      %v3555 = vpop.permute.xlu0 %3554
      %3556 = vrot.lane.b32.xlu0 %v2833, 20
      %v3557 = vpop.permute.xlu0 %3556
      %3558 = vrot.lane.b32.xlu0 %v2836, 20
      %v3559 = vpop.permute.xlu0 %3558
      %3560 = vrot.lane.b32.xlu0 %v2838, 20
      %v3561 = vpop.permute.xlu0 %3560
      %3562 = vrot.lane.b32.xlu0 %v3494, 20
      %v3563 = vpop.permute.xlu0 %3562
      %3564 = vrot.lane.b32.xlu0 %v3496, 20
      %v3565 = vpop.permute.xlu0 %3564
      %3566 = vrot.lane.b32.xlu0 %v2846, 20
      %v3567 = vpop.permute.xlu0 %3566
      %3568 = vrot.lane.b32.xlu0 %v2848, 20
      %v3569 = vpop.permute.xlu0 %3568
      %3570 = vrot.lane.b32.xlu0 %v2841, 20
      %v3571 = vpop.permute.xlu0 %3570
      %3572 = vrot.lane.b32.xlu0 %v2843, 20
      %v3573 = vpop.permute.xlu0 %3572
      %3574 = vrot.lane.b32.xlu0 %v2851, 20
      %v3575 = vpop.permute.xlu0 %3574
      %3576 = vrot.lane.b32.xlu0 %v2853, 20
      %v3577 = vpop.permute.xlu0 %3576
      %3578 = vrot.lane.b32.xlu0 %v2856, 20
      %v3579 = vpop.permute.xlu0 %3578
      %3580 = vrot.lane.b32.xlu0 %v2858, 20
      %v3581 = vpop.permute.xlu0 %3580
      %3582 = vrot.lane.b32.xlu0 %v2861, 20
      %v3583 = vpop.permute.xlu0 %3582
      %3584 = vrot.lane.b32.xlu0 %v2863, 20
      %v3585 = vpop.permute.xlu0 %3584
      %3586 = vrot.lane.b32.xlu0 %v2866, 20
      %v3587 = vpop.permute.xlu0 %3586
      %3588 = vrot.lane.b32.xlu0 %v2868, 20
      %v3589 = vpop.permute.xlu0 %3588
      %3590 = vrot.lane.b32.xlu0 %v2871, 20
      %v3591 = vpop.permute.xlu0 %3590
      %3592 = vrot.lane.b32.xlu0 %v2873, 20
      %v3593 = vpop.permute.xlu0 %3592
      %3594 = vrot.lane.b32.xlu0 %v2876, 20
      %v3595 = vpop.permute.xlu0 %3594
      %3596 = vrot.lane.b32.xlu0 %v2878, 20
      %v3597 = vpop.permute.xlu0 %3596
      %3598 = vrot.lane.b32.xlu0 %v2881, 20
      %v3599 = vpop.permute.xlu0 %3598
      %3600 = vrot.lane.b32.xlu0 %v2883, 20
      %v3601 = vpop.permute.xlu0 %3600
      %3602 = vrot.lane.b32.xlu0 %v2886, 20
      %v3603 = vpop.permute.xlu0 %3602
      %3604 = vrot.lane.b32.xlu0 %v2888, 20
      %v3605 = vpop.permute.xlu0 %3604
      %3606 = vrot.lane.b32.xlu0 %v2891, 20
      %v3607 = vpop.permute.xlu0 %3606
      %3608 = vrot.lane.b32.xlu0 %v2893, 20
      %v3609 = vpop.permute.xlu0 %3608
      %3610 = vrot.lane.b32.xlu0 %v2896, 20
      %v3611 = vpop.permute.xlu0 %3610
      %3612 = vrot.lane.b32.xlu0 %v2898, 20
      %v3613 = vpop.permute.xlu0 %3612
      %3614 = vrot.lane.b32.xlu0 %v2901, 20
      %v3615 = vpop.permute.xlu0 %3614
      %3616 = vrot.lane.b32.xlu0 %v2903, 20
      %v3617 = vpop.permute.xlu0 %3616
      %3618 = vrot.lane.b32.xlu0 %v2906, 20
      %v3619 = vpop.permute.xlu0 %3618
      %3620 = vrot.lane.b32.xlu0 %v2908, 20
      %v3621 = vpop.permute.xlu0 %3620
      %3622 = vrot.lane.b32.xlu0 %v2911, 20
      %v3623 = vpop.permute.xlu0 %3622
      %3624 = vrot.lane.b32.xlu0 %v2913, 20
      %v3625 = vpop.permute.xlu0 %3624
      %3626 = vrot.lane.b32.xlu0 %v3499, 20
      %v3627 = vpop.permute.xlu0 %3626
      %3628 = vrot.lane.b32.xlu0 %v3501, 20
      %v3629 = vpop.permute.xlu0 %3628
      %3694 = vrot.lane.b32.xlu0 %v2308, 24
      %v3695 = vpop.permute.xlu0 %3694
      %3696 = vrot.lane.b32.xlu0 %v2056, 24
      %v3697 = vpop.permute.xlu0 %3696
      %3698 = vrot.lane.b32.xlu0 %v2310, 24
      %v3699 = vpop.permute.xlu0 %3698
      %3700 = vrot.lane.b32.xlu0 %v2062, 24
      %v3701 = vpop.permute.xlu0 %3700
      %3702 = vrot.lane.b32.xlu0 %v2311, 24
      %v3703 = vpop.permute.xlu0 %3702
      %3704 = vrot.lane.b32.xlu0 %v2065, 24
      %v3705 = vpop.permute.xlu0 %3704
      %3706 = vrot.lane.b32.xlu0 %v2312, 24
      %v3707 = vpop.permute.xlu0 %3706
      %3708 = vrot.lane.b32.xlu0 %v2068, 24
      %v3709 = vpop.permute.xlu0 %3708
      %3710 = vrot.lane.b32.xlu0 %v2313, 24
      %v3711 = vpop.permute.xlu0 %3710
      %3712 = vrot.lane.b32.xlu0 %v2071, 24
      %v3713 = vpop.permute.xlu0 %3712
      %3714 = vrot.lane.b32.xlu0 %v2314, 24
      %v3715 = vpop.permute.xlu0 %3714
      %3716 = vrot.lane.b32.xlu0 %v2074, 24
      %v3717 = vpop.permute.xlu0 %3716
      %3718 = vrot.lane.b32.xlu0 %v2315, 24
      %v3719 = vpop.permute.xlu0 %3718
      %3720 = vrot.lane.b32.xlu0 %v2077, 24
      %v3721 = vpop.permute.xlu0 %3720
      %3722 = vrot.lane.b32.xlu0 %v2316, 24
      %v3723 = vpop.permute.xlu0 %3722
      %3724 = vrot.lane.b32.xlu0 %v2080, 24
      %v3725 = vpop.permute.xlu0 %3724
      %3726 = vrot.lane.b32.xlu0 %v2317, 24
      %v3727 = vpop.permute.xlu0 %3726
      %3728 = vrot.lane.b32.xlu0 %v2083, 24
      %v3729 = vpop.permute.xlu0 %3728
      %3730 = vrot.lane.b32.xlu0 %v2318, 24
      %v3731 = vpop.permute.xlu0 %3730
      %3732 = vrot.lane.b32.xlu0 %v2086, 24
      %v3733 = vpop.permute.xlu0 %3732
      %3734 = vrot.lane.b32.xlu0 %v2319, 24
      %v3735 = vpop.permute.xlu0 %3734
      %3736 = vrot.lane.b32.xlu0 %v2089, 24
      %v3737 = vpop.permute.xlu0 %3736
      %3738 = vrot.lane.b32.xlu0 %v2320, 24
      %v3739 = vpop.permute.xlu0 %3738
      %3740 = vrot.lane.b32.xlu0 %v2092, 24
      %v3741 = vpop.permute.xlu0 %3740
      %3742 = vrot.lane.b32.xlu0 %v2321, 24
      %v3743 = vpop.permute.xlu0 %3742
      %3744 = vrot.lane.b32.xlu0 %v2095, 24
      %v3745 = vpop.permute.xlu0 %3744
      %3746 = vrot.lane.b32.xlu0 %v2322, 24
      %v3747 = vpop.permute.xlu0 %3746
      %3748 = vrot.lane.b32.xlu0 %v2098, 24
      %v3749 = vpop.permute.xlu0 %3748
      %3750 = vrot.lane.b32.xlu0 %v2323, 24
      %v3751 = vpop.permute.xlu0 %3750
      %3752 = vrot.lane.b32.xlu0 %v2101, 24
      %v3753 = vpop.permute.xlu0 %3752
      %3754 = vrot.lane.b32.xlu0 %v2324, 24
      %v3755 = vpop.permute.xlu0 %3754
      %3756 = vrot.lane.b32.xlu0 %v2104, 24
      %v3757 = vpop.permute.xlu0 %3756
      %3758 = vrot.lane.b32.xlu0 %v2326, 24
      %v3759 = vpop.permute.xlu0 %3758
      %3760 = vrot.lane.b32.xlu0 %v2110, 24
      %v3761 = vpop.permute.xlu0 %3760
      %3762 = vrot.lane.b32.xlu0 %v2327, 24
      %v3763 = vpop.permute.xlu0 %3762
      %3764 = vrot.lane.b32.xlu0 %v2113, 24
      %v3765 = vpop.permute.xlu0 %3764
      %3766 = vrot.lane.b32.xlu0 %v2328, 24
      %v3767 = vpop.permute.xlu0 %3766
      %3768 = vrot.lane.b32.xlu0 %v2116, 24
      %v3769 = vpop.permute.xlu0 %3768
      %3770 = vrot.lane.b32.xlu0 %v2329, 24
      %v3771 = vpop.permute.xlu0 %3770
      %3772 = vrot.lane.b32.xlu0 %v2119, 24
      %v3773 = vpop.permute.xlu0 %3772
      %3774 = vrot.lane.b32.xlu0 %v2330, 24
      %v3775 = vpop.permute.xlu0 %3774
      %3776 = vrot.lane.b32.xlu0 %v2122, 24
      %v3777 = vpop.permute.xlu0 %3776
      %3778 = vrot.lane.b32.xlu0 %v2331, 24
      %v3779 = vpop.permute.xlu0 %3778
      %3780 = vrot.lane.b32.xlu0 %v2125, 24
      %v3781 = vpop.permute.xlu0 %3780
      %3782 = vrot.lane.b32.xlu0 %v2332, 24
      %v3783 = vpop.permute.xlu0 %3782
      %3784 = vrot.lane.b32.xlu0 %v2128, 24
      %v3785 = vpop.permute.xlu0 %3784
      %3786 = vrot.lane.b32.xlu0 %v2333, 24
      %v3787 = vpop.permute.xlu0 %3786
      %3788 = vrot.lane.b32.xlu0 %v2131, 24
      %v3789 = vpop.permute.xlu0 %3788
      %3790 = vrot.lane.b32.xlu0 %v2334, 24
      %v3791 = vpop.permute.xlu0 %3790
      %3792 = vrot.lane.b32.xlu0 %v2134, 24
      %v3793 = vpop.permute.xlu0 %3792
      %3794 = vrot.lane.b32.xlu0 %v2335, 24
      %v3795 = vpop.permute.xlu0 %3794
      %3796 = vrot.lane.b32.xlu0 %v2137, 24
      %v3797 = vpop.permute.xlu0 %3796
      %3798 = vrot.lane.b32.xlu0 %v2336, 24
      %v3799 = vpop.permute.xlu0 %3798
      %3800 = vrot.lane.b32.xlu0 %v2140, 24
      %v3801 = vpop.permute.xlu0 %3800
      %3802 = vrot.lane.b32.xlu0 %v2337, 24
      %v3803 = vpop.permute.xlu0 %3802
      %3804 = vrot.lane.b32.xlu0 %v2143, 24
      %v3805 = vpop.permute.xlu0 %3804
      %3806 = vrot.lane.b32.xlu0 %v2338, 24
      %v3807 = vpop.permute.xlu0 %3806
      %3808 = vrot.lane.b32.xlu0 %v2146, 24
      %v3809 = vpop.permute.xlu0 %3808
      %3810 = vrot.lane.b32.xlu0 %v2339, 24
      %v3811 = vpop.permute.xlu0 %3810
      %3812 = vrot.lane.b32.xlu0 %v2149, 24
      %v3813 = vpop.permute.xlu0 %3812
      %3874 = vrot.lane.b32.xlu0 %v2435, 28
      %v3875 = vpop.permute.xlu0 %3874
      %3876 = vrot.lane.b32.xlu0 %v2437, 28
      %v3877 = vpop.permute.xlu0 %3876
      %3878 = vrot.lane.b32.xlu0 %v2445, 28
      %v3879 = vpop.permute.xlu0 %3878
      %3880 = vrot.lane.b32.xlu0 %v2447, 28
      %v3881 = vpop.permute.xlu0 %3880
      %3882 = vrot.lane.b32.xlu0 %v2450, 28
      %v3883 = vpop.permute.xlu0 %3882
      %3884 = vrot.lane.b32.xlu0 %v2452, 28
      %v3885 = vpop.permute.xlu0 %3884
      %3886 = vrot.lane.b32.xlu0 %v2455, 28
      %v3887 = vpop.permute.xlu0 %3886
      %3888 = vrot.lane.b32.xlu0 %v2457, 28
      %v3889 = vpop.permute.xlu0 %3888
      %3890 = vrot.lane.b32.xlu0 %v2460, 28
      %v3891 = vpop.permute.xlu0 %3890
      %3892 = vrot.lane.b32.xlu0 %v2462, 28
      %v3893 = vpop.permute.xlu0 %3892
      %3894 = vrot.lane.b32.xlu0 %v2465, 28
      %v3895 = vpop.permute.xlu0 %3894
      %3896 = vrot.lane.b32.xlu0 %v2467, 28
      %v3897 = vpop.permute.xlu0 %3896
      %3898 = vrot.lane.b32.xlu0 %v2470, 28
      %v3899 = vpop.permute.xlu0 %3898
      %3900 = vrot.lane.b32.xlu0 %v2472, 28
      %v3901 = vpop.permute.xlu0 %3900
      %3902 = vrot.lane.b32.xlu0 %v2475, 28
      %v3903 = vpop.permute.xlu0 %3902
      %3904 = vrot.lane.b32.xlu0 %v2477, 28
      %v3905 = vpop.permute.xlu0 %3904
      %3906 = vrot.lane.b32.xlu0 %v2480, 28
      %v3907 = vpop.permute.xlu0 %3906
      %3908 = vrot.lane.b32.xlu0 %v2482, 28
      %v3909 = vpop.permute.xlu0 %3908
      %3910 = vrot.lane.b32.xlu0 %v2485, 28
      %v3911 = vpop.permute.xlu0 %3910
      %3912 = vrot.lane.b32.xlu0 %v2487, 28
      %v3913 = vpop.permute.xlu0 %3912
      %3914 = vrot.lane.b32.xlu0 %v2490, 28
      %v3915 = vpop.permute.xlu0 %3914
      %3916 = vrot.lane.b32.xlu0 %v2492, 28
      %v3917 = vpop.permute.xlu0 %3916
      %3918 = vrot.lane.b32.xlu0 %v2495, 28
      %v3919 = vpop.permute.xlu0 %3918
      %3920 = vrot.lane.b32.xlu0 %v2497, 28
      %v3921 = vpop.permute.xlu0 %3920
      %3922 = vrot.lane.b32.xlu0 %v2500, 28
      %v3923 = vpop.permute.xlu0 %3922
      %3924 = vrot.lane.b32.xlu0 %v2502, 28
      %v3925 = vpop.permute.xlu0 %3924
      %3926 = vrot.lane.b32.xlu0 %v2505, 28
      %v3927 = vpop.permute.xlu0 %3926
      %3928 = vrot.lane.b32.xlu0 %v2507, 28
      %v3929 = vpop.permute.xlu0 %3928
      %3930 = vrot.lane.b32.xlu0 %v3292, 28
      %v3931 = vpop.permute.xlu0 %3930
      %3932 = vrot.lane.b32.xlu0 %v3294, 28
      %v3933 = vpop.permute.xlu0 %3932
      %3934 = vrot.lane.b32.xlu0 %v2510, 28
      %v3935 = vpop.permute.xlu0 %3934
      %3936 = vrot.lane.b32.xlu0 %v2512, 28
      %v3937 = vpop.permute.xlu0 %3936
      %3938 = vrot.lane.b32.xlu0 %v2520, 28
      %v3939 = vpop.permute.xlu0 %3938
      %3940 = vrot.lane.b32.xlu0 %v2522, 28
      %v3941 = vpop.permute.xlu0 %3940
      %3942 = vrot.lane.b32.xlu0 %v2525, 28
      %v3943 = vpop.permute.xlu0 %3942
      %3944 = vrot.lane.b32.xlu0 %v2527, 28
      %v3945 = vpop.permute.xlu0 %3944
      %3946 = vrot.lane.b32.xlu0 %v2530, 28
      %v3947 = vpop.permute.xlu0 %3946
      %3948 = vrot.lane.b32.xlu0 %v2532, 28
      %v3949 = vpop.permute.xlu0 %3948
      %3950 = vrot.lane.b32.xlu0 %v2535, 28
      %v3951 = vpop.permute.xlu0 %3950
      %3952 = vrot.lane.b32.xlu0 %v2537, 28
      %v3953 = vpop.permute.xlu0 %3952
      %3954 = vrot.lane.b32.xlu0 %v2540, 28
      %v3955 = vpop.permute.xlu0 %3954
      %3956 = vrot.lane.b32.xlu0 %v2542, 28
      %v3957 = vpop.permute.xlu0 %3956
      %3958 = vrot.lane.b32.xlu0 %v2545, 28
      %v3959 = vpop.permute.xlu0 %3958
      %3960 = vrot.lane.b32.xlu0 %v2547, 28
      %v3961 = vpop.permute.xlu0 %3960
      %3962 = vrot.lane.b32.xlu0 %v2550, 28
      %v3963 = vpop.permute.xlu0 %3962
      %3964 = vrot.lane.b32.xlu0 %v2552, 28
      %v3965 = vpop.permute.xlu0 %3964
      %3966 = vrot.lane.b32.xlu0 %v2555, 28
      %v3967 = vpop.permute.xlu0 %3966
      %3968 = vrot.lane.b32.xlu0 %v2557, 28
      %v3969 = vpop.permute.xlu0 %3968
      %3970 = vrot.lane.b32.xlu0 %v2560, 28
      %v3971 = vpop.permute.xlu0 %3970
      %3972 = vrot.lane.b32.xlu0 %v2562, 28
      %v3973 = vpop.permute.xlu0 %3972
      %3974 = vrot.lane.b32.xlu0 %v2565, 28
      %v3975 = vpop.permute.xlu0 %3974
      %3976 = vrot.lane.b32.xlu0 %v2567, 28
      %v3977 = vpop.permute.xlu0 %3976
      %3978 = vrot.lane.b32.xlu0 %v2570, 28
      %v3979 = vpop.permute.xlu0 %3978
      %3980 = vrot.lane.b32.xlu0 %v2572, 28
      %v3981 = vpop.permute.xlu0 %3980
      %3982 = vrot.lane.b32.xlu0 %v2575, 28
      %v3983 = vpop.permute.xlu0 %3982
      %3984 = vrot.lane.b32.xlu0 %v2577, 28
      %v3985 = vpop.permute.xlu0 %3984
      %3986 = vrot.lane.b32.xlu0 %v2580, 28
      %v3987 = vpop.permute.xlu0 %3986
      %3988 = vrot.lane.b32.xlu0 %v2582, 28
      %v3989 = vpop.permute.xlu0 %3988
      %3990 = vrot.lane.b32.xlu0 %v3297, 28
      %v3991 = vpop.permute.xlu0 %3990
      %3992 = vrot.lane.b32.xlu0 %v3299, 28
      %v3993 = vpop.permute.xlu0 %3992
      %4054 = vrot.lane.b32.xlu0 %v2766, 32
      %v4055 = vpop.permute.xlu0 %4054
      %4056 = vrot.lane.b32.xlu0 %v2768, 32
      %v4057 = vpop.permute.xlu0 %4056
      %4058 = vrot.lane.b32.xlu0 %v2776, 32
      %v4059 = vpop.permute.xlu0 %4058
      %4060 = vrot.lane.b32.xlu0 %v2778, 32
      %v4061 = vpop.permute.xlu0 %4060
      %4062 = vrot.lane.b32.xlu0 %v2781, 32
      %v4063 = vpop.permute.xlu0 %4062
      %4064 = vrot.lane.b32.xlu0 %v2783, 32
      %v4065 = vpop.permute.xlu0 %4064
      %4066 = vrot.lane.b32.xlu0 %v2786, 32
      %v4067 = vpop.permute.xlu0 %4066
      %4068 = vrot.lane.b32.xlu0 %v2788, 32
      %v4069 = vpop.permute.xlu0 %4068
      %4070 = vrot.lane.b32.xlu0 %v2791, 32
      %v4071 = vpop.permute.xlu0 %4070
      %4072 = vrot.lane.b32.xlu0 %v2793, 32
      %v4073 = vpop.permute.xlu0 %4072
      %4074 = vrot.lane.b32.xlu0 %v2796, 32
      %v4075 = vpop.permute.xlu0 %4074
      %4076 = vrot.lane.b32.xlu0 %v2798, 32
      %v4077 = vpop.permute.xlu0 %4076
      %4078 = vrot.lane.b32.xlu0 %v2801, 32
      %v4079 = vpop.permute.xlu0 %4078
      %4080 = vrot.lane.b32.xlu0 %v2803, 32
      %v4081 = vpop.permute.xlu0 %4080
      %4082 = vrot.lane.b32.xlu0 %v2806, 32
      %v4083 = vpop.permute.xlu0 %4082
      %4084 = vrot.lane.b32.xlu0 %v2808, 32
      %v4085 = vpop.permute.xlu0 %4084
      %4086 = vrot.lane.b32.xlu0 %v2811, 32
      %v4087 = vpop.permute.xlu0 %4086
      %4088 = vrot.lane.b32.xlu0 %v2813, 32
      %v4089 = vpop.permute.xlu0 %4088
      %4090 = vrot.lane.b32.xlu0 %v2816, 32
      %v4091 = vpop.permute.xlu0 %4090
      %4092 = vrot.lane.b32.xlu0 %v2818, 32
      %v4093 = vpop.permute.xlu0 %4092
      %4094 = vrot.lane.b32.xlu0 %v2821, 32
      %v4095 = vpop.permute.xlu0 %4094
      %4096 = vrot.lane.b32.xlu0 %v2823, 32
      %v4097 = vpop.permute.xlu0 %4096
      %4098 = vrot.lane.b32.xlu0 %v2826, 32
      %v4099 = vpop.permute.xlu0 %4098
      %4100 = vrot.lane.b32.xlu0 %v2828, 32
      %v4101 = vpop.permute.xlu0 %4100
      %4102 = vrot.lane.b32.xlu0 %v2831, 32
      %v4103 = vpop.permute.xlu0 %4102
      %4104 = vrot.lane.b32.xlu0 %v2833, 32
      %v4105 = vpop.permute.xlu0 %4104
      %4106 = vrot.lane.b32.xlu0 %v2836, 32
      %v4107 = vpop.permute.xlu0 %4106
      %4108 = vrot.lane.b32.xlu0 %v2838, 32
      %v4109 = vpop.permute.xlu0 %4108
      %4110 = vrot.lane.b32.xlu0 %v3494, 32
      %v4111 = vpop.permute.xlu0 %4110
      %4112 = vrot.lane.b32.xlu0 %v3496, 32
      %v4113 = vpop.permute.xlu0 %4112
      %4114 = vrot.lane.b32.xlu0 %v2841, 32
      %v4115 = vpop.permute.xlu0 %4114
      %4116 = vrot.lane.b32.xlu0 %v2843, 32
      %v4117 = vpop.permute.xlu0 %4116
      %4118 = vrot.lane.b32.xlu0 %v2851, 32
      %v4119 = vpop.permute.xlu0 %4118
      %4120 = vrot.lane.b32.xlu0 %v2853, 32
      %v4121 = vpop.permute.xlu0 %4120
      %4122 = vrot.lane.b32.xlu0 %v2856, 32
      %v4123 = vpop.permute.xlu0 %4122
      %4124 = vrot.lane.b32.xlu0 %v2858, 32
      %v4125 = vpop.permute.xlu0 %4124
      %4126 = vrot.lane.b32.xlu0 %v2861, 32
      %v4127 = vpop.permute.xlu0 %4126
      %4128 = vrot.lane.b32.xlu0 %v2863, 32
      %v4129 = vpop.permute.xlu0 %4128
      %4130 = vrot.lane.b32.xlu0 %v2866, 32
      %v4131 = vpop.permute.xlu0 %4130
      %4132 = vrot.lane.b32.xlu0 %v2868, 32
      %v4133 = vpop.permute.xlu0 %4132
      %4134 = vrot.lane.b32.xlu0 %v2871, 32
      %v4135 = vpop.permute.xlu0 %4134
      %4136 = vrot.lane.b32.xlu0 %v2873, 32
      %v4137 = vpop.permute.xlu0 %4136
      %4138 = vrot.lane.b32.xlu0 %v2876, 32
      %v4139 = vpop.permute.xlu0 %4138
      %4140 = vrot.lane.b32.xlu0 %v2878, 32
      %v4141 = vpop.permute.xlu0 %4140
      %4142 = vrot.lane.b32.xlu0 %v2881, 32
      %v4143 = vpop.permute.xlu0 %4142
      %4144 = vrot.lane.b32.xlu0 %v2883, 32
      %v4145 = vpop.permute.xlu0 %4144
      %4146 = vrot.lane.b32.xlu0 %v2886, 32
      %v4147 = vpop.permute.xlu0 %4146
      %4148 = vrot.lane.b32.xlu0 %v2888, 32
      %v4149 = vpop.permute.xlu0 %4148
      %4150 = vrot.lane.b32.xlu0 %v2891, 32
      %v4151 = vpop.permute.xlu0 %4150
      %4152 = vrot.lane.b32.xlu0 %v2893, 32
      %v4153 = vpop.permute.xlu0 %4152
      %4154 = vrot.lane.b32.xlu0 %v2896, 32
      %v4155 = vpop.permute.xlu0 %4154
      %4156 = vrot.lane.b32.xlu0 %v2898, 32
      %v4157 = vpop.permute.xlu0 %4156
      %4158 = vrot.lane.b32.xlu0 %v2901, 32
      %v4159 = vpop.permute.xlu0 %4158
      %4160 = vrot.lane.b32.xlu0 %v2903, 32
      %v4161 = vpop.permute.xlu0 %4160
      %4162 = vrot.lane.b32.xlu0 %v2906, 32
      %v4163 = vpop.permute.xlu0 %4162
      %4164 = vrot.lane.b32.xlu0 %v2908, 32
      %v4165 = vpop.permute.xlu0 %4164
      %4166 = vrot.lane.b32.xlu0 %v2911, 32
      %v4167 = vpop.permute.xlu0 %4166
      %4168 = vrot.lane.b32.xlu0 %v2913, 32
      %v4169 = vpop.permute.xlu0 %4168
      %4170 = vrot.lane.b32.xlu0 %v3499, 32
      %v4171 = vpop.permute.xlu0 %4170
      %4172 = vrot.lane.b32.xlu0 %v3501, 32
      %v4173 = vpop.permute.xlu0 %4172
      %v4234 = vsel %vm1322, %v2308, %v2584
      %v4235 = vsel %vm1322, %v2056, %v2586
      %v4236 = vsel %vm1322, %v2309, %v2588
      %v4237 = vsel %vm1322, %v2059, %v2590
      %v4238 = vsel %vm1322, %v2310, %v2592
      %v4239 = vsel %vm1322, %v2062, %v2594
      %v4240 = vsel %vm1322, %v2311, %v2596
      %v4241 = vsel %vm1322, %v2065, %v2598
      %v4242 = vsel %vm1322, %v2312, %v2600
      %v4243 = vsel %vm1322, %v2068, %v2602
      %v4244 = vsel %vm1322, %v2313, %v2604
      %v4245 = vsel %vm1322, %v2071, %v2606
      %v4246 = vsel %vm1322, %v2314, %v2608
      %v4247 = vsel %vm1322, %v2074, %v2610
      %v4248 = vsel %vm1322, %v2315, %v2612
      %v4249 = vsel %vm1322, %v2077, %v2614
      %v4250 = vsel %vm1322, %v2316, %v2616
      %v4251 = vsel %vm1322, %v2080, %v2618
      %v4252 = vsel %vm1322, %v2317, %v2620
      %v4253 = vsel %vm1322, %v2083, %v2622
      %v4254 = vsel %vm1322, %v2318, %v2624
      %v4255 = vsel %vm1322, %v2086, %v2626
      %v4256 = vsel %vm1322, %v2319, %v2628
      %v4257 = vsel %vm1322, %v2089, %v2630
      %v4258 = vsel %vm1322, %v2320, %v2632
      %v4259 = vsel %vm1322, %v2092, %v2634
      %v4260 = vsel %vm1322, %v2321, %v2636
      %v4261 = vsel %vm1322, %v2095, %v2638
      %v4262 = vsel %vm1322, %v2322, %v2640
      %v4263 = vsel %vm1322, %v2098, %v2642
      %v4264 = vsel %vm1322, %v2324, %v2644
      %v4265 = vsel %vm1322, %v2104, %v2646
      %v4266 = vsel %vm1322, %v2325, %v2648
      %v4267 = vsel %vm1322, %v2107, %v2650
      %v4268 = vsel %vm1322, %v2326, %v2652
      %v4269 = vsel %vm1322, %v2110, %v2654
      %v4270 = vsel %vm1322, %v2327, %v2656
      %v4271 = vsel %vm1322, %v2113, %v2658
      %v4272 = vsel %vm1322, %v2328, %v2660
      %v4273 = vsel %vm1322, %v2116, %v2662
      %v4274 = vsel %vm1322, %v2329, %v2664
      %v4275 = vsel %vm1322, %v2119, %v2666
      %v4276 = vsel %vm1322, %v2330, %v2668
      %v4277 = vsel %vm1322, %v2122, %v2670
      %v4278 = vsel %vm1322, %v2331, %v2672
      %v4279 = vsel %vm1322, %v2125, %v2674
      %v4280 = vsel %vm1322, %v2332, %v2676
      %v4281 = vsel %vm1322, %v2128, %v2678
      %v4282 = vsel %vm1322, %v2333, %v2680
      %v4283 = vsel %vm1322, %v2131, %v2682
      %v4284 = vsel %vm1322, %v2334, %v2684
      %v4285 = vsel %vm1322, %v2134, %v2686
      %v4286 = vsel %vm1322, %v2335, %v2688
      %v4287 = vsel %vm1322, %v2137, %v2690
      %v4288 = vsel %vm1322, %v2336, %v2692
      %v4289 = vsel %vm1322, %v2140, %v2694
      %v4290 = vsel %vm1322, %v2337, %v2696
      %v4291 = vsel %vm1322, %v2143, %v2698
      %v4292 = vsel %vm1322, %v2338, %v2700
      %v4293 = vsel %vm1322, %v2146, %v2702
      %vm4294 = vcmask 64512
      %v4295 = vsel %vm4294, %v4234, %v2915
      %v4296 = vsel %vm4294, %v4235, %v2917
      %v4297 = vsel %vm4294, %v4236, %v2919
      %v4298 = vsel %vm4294, %v4237, %v2921
      %v4299 = vsel %vm4294, %v4238, %v2923
      %v4300 = vsel %vm4294, %v4239, %v2925
      %v4301 = vsel %vm4294, %v4240, %v2927
      %v4302 = vsel %vm4294, %v4241, %v2929
      %v4303 = vsel %vm4294, %v4242, %v2931
      %v4304 = vsel %vm4294, %v4243, %v2933
      %v4305 = vsel %vm4294, %v4244, %v2935
      %v4306 = vsel %vm4294, %v4245, %v2937
      %v4307 = vsel %vm4294, %v4246, %v2939
      %v4308 = vsel %vm4294, %v4247, %v2941
      %v4309 = vsel %vm4294, %v4248, %v2943
      %v4310 = vsel %vm4294, %v4249, %v2945
      %v4311 = vsel %vm4294, %v4250, %v2947
      %v4312 = vsel %vm4294, %v4251, %v2949
      %v4313 = vsel %vm4294, %v4252, %v2951
      %v4314 = vsel %vm4294, %v4253, %v2953
      %v4315 = vsel %vm4294, %v4254, %v2955
      %v4316 = vsel %vm4294, %v4255, %v2957
      %v4317 = vsel %vm4294, %v4256, %v2959
      %v4318 = vsel %vm4294, %v4257, %v2961
      %v4319 = vsel %vm4294, %v4258, %v2963
      %v4320 = vsel %vm4294, %v4259, %v2965
      %v4321 = vsel %vm4294, %v4260, %v2967
      %v4322 = vsel %vm4294, %v4261, %v2969
      %v4323 = vsel %vm4294, %v4262, %v2971
      %v4324 = vsel %vm4294, %v4263, %v2973
      %v4325 = vsel %vm4294, %v4264, %v2975
      %v4326 = vsel %vm4294, %v4265, %v2977
      %v4327 = vsel %vm4294, %v4266, %v2979
      %v4328 = vsel %vm4294, %v4267, %v2981
      %v4329 = vsel %vm4294, %v4268, %v2983
      %v4330 = vsel %vm4294, %v4269, %v2985
      %v4331 = vsel %vm4294, %v4270, %v2987
      %v4332 = vsel %vm4294, %v4271, %v2989
      %v4333 = vsel %vm4294, %v4272, %v2991
      %v4334 = vsel %vm4294, %v4273, %v2993
      %v4335 = vsel %vm4294, %v4274, %v2995
      %v4336 = vsel %vm4294, %v4275, %v2997
      %v4337 = vsel %vm4294, %v4276, %v2999
      %v4338 = vsel %vm4294, %v4277, %v3001
      %v4339 = vsel %vm4294, %v4278, %v3003
      %v4340 = vsel %vm4294, %v4279, %v3005
      %v4341 = vsel %vm4294, %v4280, %v3007
      %v4342 = vsel %vm4294, %v4281, %v3009
      %v4343 = vsel %vm4294, %v4282, %v3011
      %v4344 = vsel %vm4294, %v4283, %v3013
      %v4345 = vsel %vm4294, %v4284, %v3015
      %v4346 = vsel %vm4294, %v4285, %v3017
      %v4347 = vsel %vm4294, %v4286, %v3019
      %v4348 = vsel %vm4294, %v4287, %v3021
      %v4349 = vsel %vm4294, %v4288, %v3023
      %v4350 = vsel %vm4294, %v4289, %v3025
      %v4351 = vsel %vm4294, %v4290, %v3027
      %v4352 = vsel %vm4294, %v4291, %v3029
      %v4353 = vsel %vm4294, %v4292, %v3031
      %v4354 = vsel %vm4294, %v4293, %v3033
      %vm4355 = vcmask 97280
      %v4356 = vsel %vm4355, %v4295, %v3097
      %v4357 = vsel %vm4355, %v4296, %v3099
      %v4358 = vsel %vm4355, %v4297, %v3101
      %v4359 = vsel %vm4355, %v4298, %v3103
      %v4360 = vsel %vm4355, %v4295, %v3105
      %v4361 = vsel %vm4355, %v4296, %v3107
      %v4362 = vsel %vm4355, %v4299, %v3109
      %v4363 = vsel %vm4355, %v4300, %v3111
      %v4364 = vsel %vm4355, %v4301, %v3113
      %v4365 = vsel %vm4355, %v4302, %v3115
      %v4366 = vsel %vm4355, %v4303, %v3117
      %v4367 = vsel %vm4355, %v4304, %v3119
      %v4368 = vsel %vm4355, %v4305, %v3121
      %v4369 = vsel %vm4355, %v4306, %v3123
      %v4370 = vsel %vm4355, %v4307, %v3125
      %v4371 = vsel %vm4355, %v4308, %v3127
      %v4372 = vsel %vm4355, %v4309, %v3129
      %v4373 = vsel %vm4355, %v4310, %v3131
      %v4374 = vsel %vm4355, %v4311, %v3133
      %v4375 = vsel %vm4355, %v4312, %v3135
      %v4376 = vsel %vm4355, %v4313, %v3137
      %v4377 = vsel %vm4355, %v4314, %v3139
      %v4378 = vsel %vm4355, %v4315, %v3141
      %v4379 = vsel %vm4355, %v4316, %v3143
      %v4380 = vsel %vm4355, %v4317, %v3145
      %v4381 = vsel %vm4355, %v4318, %v3147
      %v4382 = vsel %vm4355, %v4319, %v3149
      %v4383 = vsel %vm4355, %v4320, %v3151
      %v4384 = vsel %vm4355, %v4321, %v3153
      %v4385 = vsel %vm4355, %v4322, %v3155
      %v4386 = vsel %vm4355, %v4323, %v3157
      %v4387 = vsel %vm4355, %v4324, %v3159
      %v4388 = vsel %vm4355, %v4325, %v3161
      %v4389 = vsel %vm4355, %v4326, %v3163
      %v4390 = vsel %vm4355, %v4327, %v3165
      %v4391 = vsel %vm4355, %v4328, %v3167
      %v4392 = vsel %vm4355, %v4325, %v3169
      %v4393 = vsel %vm4355, %v4326, %v3171
      %v4394 = vsel %vm4355, %v4329, %v3173
      %v4395 = vsel %vm4355, %v4330, %v3175
      %v4396 = vsel %vm4355, %v4331, %v3177
      %v4397 = vsel %vm4355, %v4332, %v3179
      %v4398 = vsel %vm4355, %v4333, %v3181
      %v4399 = vsel %vm4355, %v4334, %v3183
      %v4400 = vsel %vm4355, %v4335, %v3185
      %v4401 = vsel %vm4355, %v4336, %v3187
      %v4402 = vsel %vm4355, %v4337, %v3189
      %v4403 = vsel %vm4355, %v4338, %v3191
      %v4404 = vsel %vm4355, %v4339, %v3193
      %v4405 = vsel %vm4355, %v4340, %v3195
      %v4406 = vsel %vm4355, %v4341, %v3197
      %v4407 = vsel %vm4355, %v4342, %v3199
      %v4408 = vsel %vm4355, %v4343, %v3201
      %v4409 = vsel %vm4355, %v4344, %v3203
      %v4410 = vsel %vm4355, %v4345, %v3205
      %v4411 = vsel %vm4355, %v4346, %v3207
      %v4412 = vsel %vm4355, %v4347, %v3209
      %v4413 = vsel %vm4355, %v4348, %v3211
      %v4414 = vsel %vm4355, %v4349, %v3213
      %v4415 = vsel %vm4355, %v4350, %v3215
      %v4416 = vsel %vm4355, %v4351, %v3217
      %v4417 = vsel %vm4355, %v4352, %v3219
      %v4418 = vsel %vm4355, %v4353, %v3221
      %v4419 = vsel %vm4355, %v4354, %v3223
      %vm4420 = vcmask 130048
      %v4421 = vsel %vm4420, %v4356, %v3301
      %v4422 = vsel %vm4420, %v4357, %v3303
      %v4423 = vsel %vm4420, %v4358, %v3305
      %v4424 = vsel %vm4420, %v4359, %v3307
      %v4425 = vsel %vm4420, %v4360, %v3309
      %v4426 = vsel %vm4420, %v4361, %v3311
      %v4427 = vsel %vm4420, %v4362, %v3313
      %v4428 = vsel %vm4420, %v4363, %v3315
      %v4429 = vsel %vm4420, %v4364, %v3317
      %v4430 = vsel %vm4420, %v4365, %v3319
      %v4431 = vsel %vm4420, %v4366, %v3321
      %v4432 = vsel %vm4420, %v4367, %v3323
      %v4433 = vsel %vm4420, %v4368, %v3325
      %v4434 = vsel %vm4420, %v4369, %v3327
      %v4435 = vsel %vm4420, %v4370, %v3329
      %v4436 = vsel %vm4420, %v4371, %v3331
      %v4437 = vsel %vm4420, %v4372, %v3333
      %v4438 = vsel %vm4420, %v4373, %v3335
      %v4439 = vsel %vm4420, %v4374, %v3337
      %v4440 = vsel %vm4420, %v4375, %v3339
      %v4441 = vsel %vm4420, %v4376, %v3341
      %v4442 = vsel %vm4420, %v4377, %v3343
      %v4443 = vsel %vm4420, %v4378, %v3345
      %v4444 = vsel %vm4420, %v4379, %v3347
      %v4445 = vsel %vm4420, %v4380, %v3349
      %v4446 = vsel %vm4420, %v4381, %v3351
      %v4447 = vsel %vm4420, %v4382, %v3353
      %v4448 = vsel %vm4420, %v4383, %v3355
      %v4449 = vsel %vm4420, %v4384, %v3357
      %v4450 = vsel %vm4420, %v4385, %v3359
      %v4451 = vsel %vm4420, %v4386, %v3361
      %v4452 = vsel %vm4420, %v4387, %v3363
      %v4453 = vsel %vm4420, %v4388, %v3365
      %v4454 = vsel %vm4420, %v4389, %v3367
      %v4455 = vsel %vm4420, %v4390, %v3369
      %v4456 = vsel %vm4420, %v4391, %v3371
      %v4457 = vsel %vm4420, %v4392, %v3373
      %v4458 = vsel %vm4420, %v4393, %v3375
      %v4459 = vsel %vm4420, %v4394, %v3377
      %v4460 = vsel %vm4420, %v4395, %v3379
      %v4461 = vsel %vm4420, %v4396, %v3381
      %v4462 = vsel %vm4420, %v4397, %v3383
      %v4463 = vsel %vm4420, %v4398, %v3385
      %v4464 = vsel %vm4420, %v4399, %v3387
      %v4465 = vsel %vm4420, %v4400, %v3389
      %v4466 = vsel %vm4420, %v4401, %v3391
      %v4467 = vsel %vm4420, %v4402, %v3393
      %v4468 = vsel %vm4420, %v4403, %v3395
      %v4469 = vsel %vm4420, %v4404, %v3397
      %v4470 = vsel %vm4420, %v4405, %v3399
      %v4471 = vsel %vm4420, %v4406, %v3401
      %v4472 = vsel %vm4420, %v4407, %v3403
      %v4473 = vsel %vm4420, %v4408, %v3405
      %v4474 = vsel %vm4420, %v4409, %v3407
      %v4475 = vsel %vm4420, %v4410, %v3409
      %v4476 = vsel %vm4420, %v4411, %v3411
      %v4477 = vsel %vm4420, %v4412, %v3413
      %v4478 = vsel %vm4420, %v4413, %v3415
      %v4479 = vsel %vm4420, %v4414, %v3417
      %v4480 = vsel %vm4420, %v4415, %v3419
      %v4481 = vsel %vm4420, %v4416, %v3421
      %v4482 = vsel %vm4420, %v4417, %v3423
      %v4483 = vsel %vm4420, %v4418, %v3425
      %v4484 = vsel %vm4420, %v4419, %v3427
      %vm4485 = vcmask 162816
      %v4486 = vsel %vm4485, %v4421, %v3503
      %v4487 = vsel %vm4485, %v4422, %v3505
      %v4488 = vsel %vm4485, %v4423, %v3507
      %v4489 = vsel %vm4485, %v4424, %v3509
      %v4490 = vsel %vm4485, %v4425, %v3511
      %v4491 = vsel %vm4485, %v4426, %v3513
      %v4492 = vsel %vm4485, %v4427, %v3515
      %v4493 = vsel %vm4485, %v4428, %v3517
      %v4494 = vsel %vm4485, %v4429, %v3519
      %v4495 = vsel %vm4485, %v4430, %v3521
      %v4496 = vsel %vm4485, %v4431, %v3523
      %v4497 = vsel %vm4485, %v4432, %v3525
      %v4498 = vsel %vm4485, %v4433, %v3527
      %v4499 = vsel %vm4485, %v4434, %v3529
      %v4500 = vsel %vm4485, %v4435, %v3531
      %v4501 = vsel %vm4485, %v4436, %v3533
      %v4502 = vsel %vm4485, %v4437, %v3535
      %v4503 = vsel %vm4485, %v4438, %v3537
      %v4504 = vsel %vm4485, %v4439, %v3539
      %v4505 = vsel %vm4485, %v4440, %v3541
      %v4506 = vsel %vm4485, %v4441, %v3543
      %v4507 = vsel %vm4485, %v4442, %v3545
      %v4508 = vsel %vm4485, %v4443, %v3547
      %v4509 = vsel %vm4485, %v4444, %v3549
      %v4510 = vsel %vm4485, %v4445, %v3551
      %v4511 = vsel %vm4485, %v4446, %v3553
      %v4512 = vsel %vm4485, %v4447, %v3555
      %v4513 = vsel %vm4485, %v4448, %v3557
      %v4514 = vsel %vm4485, %v4449, %v3559
      %v4515 = vsel %vm4485, %v4450, %v3561
      %v4516 = vsel %vm4485, %v4451, %v3563
      %v4517 = vsel %vm4485, %v4452, %v3565
      %v4518 = vsel %vm4485, %v4453, %v3567
      %v4519 = vsel %vm4485, %v4454, %v3569
      %v4520 = vsel %vm4485, %v4455, %v3571
      %v4521 = vsel %vm4485, %v4456, %v3573
      %v4522 = vsel %vm4485, %v4457, %v3575
      %v4523 = vsel %vm4485, %v4458, %v3577
      %v4524 = vsel %vm4485, %v4459, %v3579
      %v4525 = vsel %vm4485, %v4460, %v3581
      %v4526 = vsel %vm4485, %v4461, %v3583
      %v4527 = vsel %vm4485, %v4462, %v3585
      %v4528 = vsel %vm4485, %v4463, %v3587
      %v4529 = vsel %vm4485, %v4464, %v3589
      %v4530 = vsel %vm4485, %v4465, %v3591
      %v4531 = vsel %vm4485, %v4466, %v3593
      %v4532 = vsel %vm4485, %v4467, %v3595
      %v4533 = vsel %vm4485, %v4468, %v3597
      %v4534 = vsel %vm4485, %v4469, %v3599
      %v4535 = vsel %vm4485, %v4470, %v3601
      %v4536 = vsel %vm4485, %v4471, %v3603
      %v4537 = vsel %vm4485, %v4472, %v3605
      %v4538 = vsel %vm4485, %v4473, %v3607
      %v4539 = vsel %vm4485, %v4474, %v3609
      %v4540 = vsel %vm4485, %v4475, %v3611
      %v4541 = vsel %vm4485, %v4476, %v3613
      %v4542 = vsel %vm4485, %v4477, %v3615
      %v4543 = vsel %vm4485, %v4478, %v3617
      %v4544 = vsel %vm4485, %v4479, %v3619
      %v4545 = vsel %vm4485, %v4480, %v3621
      %v4546 = vsel %vm4485, %v4481, %v3623
      %v4547 = vsel %vm4485, %v4482, %v3625
      %v4548 = vsel %vm4485, %v4483, %v3627
      %v4549 = vsel %vm4485, %v4484, %v3629
      %vm4550 = vcmask 195584
      %v4551 = vsel %vm4550, %v4486, %v3695
      %v4552 = vsel %vm4550, %v4487, %v3697
      %v4553 = vsel %vm4550, %v4488, %v3699
      %v4554 = vsel %vm4550, %v4489, %v3701
      %v4555 = vsel %vm4550, %v4490, %v3703
      %v4556 = vsel %vm4550, %v4491, %v3705
      %v4557 = vsel %vm4550, %v4492, %v3707
      %v4558 = vsel %vm4550, %v4493, %v3709
      %v4559 = vsel %vm4550, %v4494, %v3711
      %v4560 = vsel %vm4550, %v4495, %v3713
      %v4561 = vsel %vm4550, %v4496, %v3715
      %v4562 = vsel %vm4550, %v4497, %v3717
      %v4563 = vsel %vm4550, %v4498, %v3719
      %v4564 = vsel %vm4550, %v4499, %v3721
      %v4565 = vsel %vm4550, %v4500, %v3723
      %v4566 = vsel %vm4550, %v4501, %v3725
      %v4567 = vsel %vm4550, %v4502, %v3727
      %v4568 = vsel %vm4550, %v4503, %v3729
      %v4569 = vsel %vm4550, %v4504, %v3731
      %v4570 = vsel %vm4550, %v4505, %v3733
      %v4571 = vsel %vm4550, %v4506, %v3735
      %v4572 = vsel %vm4550, %v4507, %v3737
      %v4573 = vsel %vm4550, %v4508, %v3739
      %v4574 = vsel %vm4550, %v4509, %v3741
      %v4575 = vsel %vm4550, %v4510, %v3743
      %v4576 = vsel %vm4550, %v4511, %v3745
      %v4577 = vsel %vm4550, %v4512, %v3747
      %v4578 = vsel %vm4550, %v4513, %v3749
      %v4579 = vsel %vm4550, %v4514, %v3751
      %v4580 = vsel %vm4550, %v4515, %v3753
      %v4581 = vsel %vm4550, %v4516, %v3747
      %v4582 = vsel %vm4550, %v4517, %v3749
      %v4583 = vsel %vm4550, %v4518, %v3755
      %v4584 = vsel %vm4550, %v4519, %v3757
      %v4585 = vsel %vm4550, %v4520, %v3759
      %v4586 = vsel %vm4550, %v4521, %v3761
      %v4587 = vsel %vm4550, %v4522, %v3763
      %v4588 = vsel %vm4550, %v4523, %v3765
      %v4589 = vsel %vm4550, %v4524, %v3767
      %v4590 = vsel %vm4550, %v4525, %v3769
      %v4591 = vsel %vm4550, %v4526, %v3771
      %v4592 = vsel %vm4550, %v4527, %v3773
      %v4593 = vsel %vm4550, %v4528, %v3775
      %v4594 = vsel %vm4550, %v4529, %v3777
      %v4595 = vsel %vm4550, %v4530, %v3779
      %v4596 = vsel %vm4550, %v4531, %v3781
      %v4597 = vsel %vm4550, %v4532, %v3783
      %v4598 = vsel %vm4550, %v4533, %v3785
      %v4599 = vsel %vm4550, %v4534, %v3787
      %v4600 = vsel %vm4550, %v4535, %v3789
      %v4601 = vsel %vm4550, %v4536, %v3791
      %v4602 = vsel %vm4550, %v4537, %v3793
      %v4603 = vsel %vm4550, %v4538, %v3795
      %v4604 = vsel %vm4550, %v4539, %v3797
      %v4605 = vsel %vm4550, %v4540, %v3799
      %v4606 = vsel %vm4550, %v4541, %v3801
      %v4607 = vsel %vm4550, %v4542, %v3803
      %v4608 = vsel %vm4550, %v4543, %v3805
      %v4609 = vsel %vm4550, %v4544, %v3807
      %v4610 = vsel %vm4550, %v4545, %v3809
      %v4611 = vsel %vm4550, %v4546, %v3811
      %v4612 = vsel %vm4550, %v4547, %v3813
      %v4613 = vsel %vm4550, %v4548, %v3807
      %v4614 = vsel %vm4550, %v4549, %v3809
      %vm4615 = vcmask 228352
      %v4616 = vsel %vm4615, %v4551, %v3875
      %v4617 = vsel %vm4615, %v4552, %v3877
      %v4618 = vsel %vm4615, %v4553, %v3879
      %v4619 = vsel %vm4615, %v4554, %v3881
      %v4620 = vsel %vm4615, %v4555, %v3883
      %v4621 = vsel %vm4615, %v4556, %v3885
      %v4622 = vsel %vm4615, %v4557, %v3887
      %v4623 = vsel %vm4615, %v4558, %v3889
      %v4624 = vsel %vm4615, %v4559, %v3891
      %v4625 = vsel %vm4615, %v4560, %v3893
      %v4626 = vsel %vm4615, %v4561, %v3895
      %v4627 = vsel %vm4615, %v4562, %v3897
      %v4628 = vsel %vm4615, %v4563, %v3899
      %v4629 = vsel %vm4615, %v4564, %v3901
      %v4630 = vsel %vm4615, %v4565, %v3903
      %v4631 = vsel %vm4615, %v4566, %v3905
      %v4632 = vsel %vm4615, %v4567, %v3907
      %v4633 = vsel %vm4615, %v4568, %v3909
      %v4634 = vsel %vm4615, %v4569, %v3911
      %v4635 = vsel %vm4615, %v4570, %v3913
      %v4636 = vsel %vm4615, %v4571, %v3915
      %v4637 = vsel %vm4615, %v4572, %v3917
      %v4638 = vsel %vm4615, %v4573, %v3919
      %v4639 = vsel %vm4615, %v4574, %v3921
      %v4640 = vsel %vm4615, %v4575, %v3923
      %v4641 = vsel %vm4615, %v4576, %v3925
      %v4642 = vsel %vm4615, %v4577, %v3927
      %v4643 = vsel %vm4615, %v4578, %v3929
      %v4644 = vsel %vm4615, %v4579, %v3931
      %v4645 = vsel %vm4615, %v4580, %v3933
      %v4646 = vsel %vm4615, %v4581, %v3927
      %v4647 = vsel %vm4615, %v4582, %v3929
      %v4648 = vsel %vm4615, %v4583, %v3935
      %v4649 = vsel %vm4615, %v4584, %v3937
      %v4650 = vsel %vm4615, %v4585, %v3939
      %v4651 = vsel %vm4615, %v4586, %v3941
      %v4652 = vsel %vm4615, %v4587, %v3943
      %v4653 = vsel %vm4615, %v4588, %v3945
      %v4654 = vsel %vm4615, %v4589, %v3947
      %v4655 = vsel %vm4615, %v4590, %v3949
      %v4656 = vsel %vm4615, %v4591, %v3951
      %v4657 = vsel %vm4615, %v4592, %v3953
      %v4658 = vsel %vm4615, %v4593, %v3955
      %v4659 = vsel %vm4615, %v4594, %v3957
      %v4660 = vsel %vm4615, %v4595, %v3959
      %v4661 = vsel %vm4615, %v4596, %v3961
      %v4662 = vsel %vm4615, %v4597, %v3963
      %v4663 = vsel %vm4615, %v4598, %v3965
      %v4664 = vsel %vm4615, %v4599, %v3967
      %v4665 = vsel %vm4615, %v4600, %v3969
      %v4666 = vsel %vm4615, %v4601, %v3971
      %v4667 = vsel %vm4615, %v4602, %v3973
      %v4668 = vsel %vm4615, %v4603, %v3975
      %v4669 = vsel %vm4615, %v4604, %v3977
      %v4670 = vsel %vm4615, %v4605, %v3979
      %v4671 = vsel %vm4615, %v4606, %v3981
      %v4672 = vsel %vm4615, %v4607, %v3983
      %v4673 = vsel %vm4615, %v4608, %v3985
      %v4674 = vsel %vm4615, %v4609, %v3987
      %v4675 = vsel %vm4615, %v4610, %v3989
      %v4676 = vsel %vm4615, %v4611, %v3991
      %v4677 = vsel %vm4615, %v4612, %v3993
      %v4678 = vsel %vm4615, %v4613, %v3987
      %v4679 = vsel %vm4615, %v4614, %v3989
      %vm4680 = vcmask 261120
      %v4681 = vsel %vm4680, %v4616, %v4055
      %v4682 = vsel %vm4680, %v4617, %v4057
      %v4683 = vsel %vm4680, %v4618, %v4059
      %v4684 = vsel %vm4680, %v4619, %v4061
      %v4685 = vsel %vm4680, %v4620, %v4063
      %v4686 = vsel %vm4680, %v4621, %v4065
      %v4687 = vsel %vm4680, %v4622, %v4067
      %v4688 = vsel %vm4680, %v4623, %v4069
      %v4689 = vsel %vm4680, %v4624, %v4071
      %v4690 = vsel %vm4680, %v4625, %v4073
      %v4691 = vsel %vm4680, %v4626, %v4075
      %v4692 = vsel %vm4680, %v4627, %v4077
      %v4693 = vsel %vm4680, %v4628, %v4079
      %v4694 = vsel %vm4680, %v4629, %v4081
      %v4695 = vsel %vm4680, %v4630, %v4083
      %v4696 = vsel %vm4680, %v4631, %v4085
      %v4697 = vsel %vm4680, %v4632, %v4087
      %v4698 = vsel %vm4680, %v4633, %v4089
      %v4699 = vsel %vm4680, %v4634, %v4091
      %v4700 = vsel %vm4680, %v4635, %v4093
      %v4701 = vsel %vm4680, %v4636, %v4095
      %v4702 = vsel %vm4680, %v4637, %v4097
      %v4703 = vsel %vm4680, %v4638, %v4099
      %v4704 = vsel %vm4680, %v4639, %v4101
      %v4705 = vsel %vm4680, %v4640, %v4103
      %v4706 = vsel %vm4680, %v4641, %v4105
      %v4707 = vsel %vm4680, %v4642, %v4107
      %v4708 = vsel %vm4680, %v4643, %v4109
      %v4709 = vsel %vm4680, %v4644, %v4111
      %v4710 = vsel %vm4680, %v4645, %v4113
      %v4711 = vsel %vm4680, %v4646, %v4107
      %v4712 = vsel %vm4680, %v4647, %v4109
      %v4713 = vsel %vm4680, %v4648, %v4115
      %v4714 = vsel %vm4680, %v4649, %v4117
      %v4715 = vsel %vm4680, %v4650, %v4119
      %v4716 = vsel %vm4680, %v4651, %v4121
      %v4717 = vsel %vm4680, %v4652, %v4123
      %v4718 = vsel %vm4680, %v4653, %v4125
      %v4719 = vsel %vm4680, %v4654, %v4127
      %v4720 = vsel %vm4680, %v4655, %v4129
      %v4721 = vsel %vm4680, %v4656, %v4131
      %v4722 = vsel %vm4680, %v4657, %v4133
      %v4723 = vsel %vm4680, %v4658, %v4135
      %v4724 = vsel %vm4680, %v4659, %v4137
      %v4725 = vsel %vm4680, %v4660, %v4139
      %v4726 = vsel %vm4680, %v4661, %v4141
      %v4727 = vsel %vm4680, %v4662, %v4143
      %v4728 = vsel %vm4680, %v4663, %v4145
      %v4729 = vsel %vm4680, %v4664, %v4147
      %v4730 = vsel %vm4680, %v4665, %v4149
      %v4731 = vsel %vm4680, %v4666, %v4151
      %v4732 = vsel %vm4680, %v4667, %v4153
      %v4733 = vsel %vm4680, %v4668, %v4155
      %v4734 = vsel %vm4680, %v4669, %v4157
      %v4735 = vsel %vm4680, %v4670, %v4159
      %v4736 = vsel %vm4680, %v4671, %v4161
      %v4737 = vsel %vm4680, %v4672, %v4163
      %v4738 = vsel %vm4680, %v4673, %v4165
      %v4739 = vsel %vm4680, %v4674, %v4167
      %v4740 = vsel %vm4680, %v4675, %v4169
      %v4741 = vsel %vm4680, %v4676, %v4171
      %v4742 = vsel %vm4680, %v4677, %v4173
      %v4743 = vsel %vm4680, %v4678, %v4167
      %v4744 = vsel %vm4680, %v4679, %v4169
      %v4745 = vld [vmem:[%s5] sm:$0xff]
      %v4746 = vld [vmem:[%s5 + $0x8] sm:$0xff]
      %v4747 = vld [vmem:[%s5 + $0x10] sm:$0xff]
      %v4748 = vld [vmem:[%s5 + $0x18] sm:$0xff]
      %v4749 = vld [vmem:[%s5 + $0x20] sm:$0xf]
      %v4750 = vld [vmem:[%s6] sm:$0x1]
      %v4751 = vld [vmem:[%s7] sm:$0x1]
      %v4752 = vld [vmem:[%s8] sm:$0x1]
      %v4754 = vlaneseq
      %v4755 = vshrl.u32 %v4754, 7
      %v4756 = vsub.s32 0, %v4755
      %v4757 = vrot.slane %v4750, %v4756
      %vm4759 = vcmask 293888
      %v4761 = vsel %vm4759, %v4681, 0
      %v4764 = vsel %vm4759, %v4682, 0
      %v4767 = vsel %vm4759, %v4683, 0
      %v4770 = vsel %vm4759, %v4684, 0
      %v4773 = vsel %vm4759, %v4685, 0
      %v4776 = vsel %vm4759, %v4686, 0
      %v4779 = vsel %vm4759, %v4687, 0
      %v4782 = vsel %vm4759, %v4688, 0
      %v4785 = vsel %vm4759, %v4689, 0
      %v4788 = vsel %vm4759, %v4690, 0
      %v4791 = vsel %vm4759, %v4691, 0
      %v4794 = vsel %vm4759, %v4692, 0
      %v4797 = vsel %vm4759, %v4693, 0
      %v4800 = vsel %vm4759, %v4694, 0
      %v4803 = vsel %vm4759, %v4695, 0
      %v4806 = vsel %vm4759, %v4696, 0
      %v4809 = vsel %vm4759, %v4697, 0
      %v4812 = vsel %vm4759, %v4698, 0
      %v4815 = vsel %vm4759, %v4699, 0
      %v4818 = vsel %vm4759, %v4700, 0
      %v4821 = vsel %vm4759, %v4701, 0
      %v4824 = vsel %vm4759, %v4702, 0
      %v4827 = vsel %vm4759, %v4703, 0
      %v4830 = vsel %vm4759, %v4704, 0
      %v4833 = vsel %vm4759, %v4705, 0
      %v4836 = vsel %vm4759, %v4706, 0
      %v4839 = vsel %vm4759, %v4707, 0
      %v4842 = vsel %vm4759, %v4708, 0
      %v4845 = vsel %vm4759, %v4709, 0
      %v4848 = vsel %vm4759, %v4710, 0
      %v4851 = vsel %vm4759, %v4711, 0
      %v4854 = vsel %vm4759, %v4712, 0
      %v4857 = vsel %vm4759, %v4713, 0
      %v4860 = vsel %vm4759, %v4714, 0
      %v4863 = vsel %vm4759, %v4715, 0
      %v4866 = vsel %vm4759, %v4716, 0
      %v4869 = vsel %vm4759, %v4717, 0
      %v4872 = vsel %vm4759, %v4718, 0
      %v4875 = vsel %vm4759, %v4719, 0
      %v4878 = vsel %vm4759, %v4720, 0
      %v4881 = vsel %vm4759, %v4721, 0
      %v4884 = vsel %vm4759, %v4722, 0
      %v4887 = vsel %vm4759, %v4723, 0
      %v4890 = vsel %vm4759, %v4724, 0
      %v4893 = vsel %vm4759, %v4725, 0
      %v4896 = vsel %vm4759, %v4726, 0
      %v4899 = vsel %vm4759, %v4727, 0
      %v4902 = vsel %vm4759, %v4728, 0
      %v4905 = vsel %vm4759, %v4729, 0
      %v4908 = vsel %vm4759, %v4730, 0
      %v4911 = vsel %vm4759, %v4731, 0
      %v4914 = vsel %vm4759, %v4732, 0
      %v4917 = vsel %vm4759, %v4733, 0
      %v4920 = vsel %vm4759, %v4734, 0
      %v4923 = vsel %vm4759, %v4735, 0
      %v4926 = vsel %vm4759, %v4736, 0
      %v4929 = vsel %vm4759, %v4737, 0
      %v4932 = vsel %vm4759, %v4738, 0
      %v4935 = vsel %vm4759, %v4739, 0
      %v4938 = vsel %vm4759, %v4740, 0
      %v4941 = vsel %vm4759, %v4741, 0
      %v4944 = vsel %vm4759, %v4742, 0
      %v4947 = vsel %vm4759, %v4743, 0
      %v4950 = vsel %vm4759, %v4744, 0
      %vm4952 = vcmask 1043456
      %v4954 = vsel %vm4952, %v4749, 0
      %4956 = vmatprep.subr.mxu0 0.0
      %4957 = vmatpush1.msra.mxu0 %v4745
      %4958 = vmatprep.subr.mxu0 0.0
      %4959 = vmatpush1.msra.mxu0 %v4746
      %4960 = vmatprep.subr.mxu0 0.0
      %4961 = vmatpush1.msra.mxu0 %v4747
      %4962 = vmatprep.subr.mxu0 0.0
      %4963 = vmatpush1.msra.mxu0 %v4748
      %4964 = vmatprep.subr.mxu0 0.0
      %4965 = vmatpush1.msra.mxu0 %v4954
      %4966 = vmatprep.subr.mxu0 0.0
      %4967 = vmatpush1.msra.mxu0 0.0
      %4968 = vmatprep.subr.mxu0 0.0
      %4969 = vmatpush1.msra.mxu0 0.0
      %4970 = vmatprep.subr.mxu0 0.0
      %4971 = vmatpush1.msra.mxu0 0.0
      %4972 = vmatprep.subr.mxu0 0.0
      %4973 = vmatpush1.msra.mxu0 0.0
      %4974 = vmatprep.subr.mxu0 0.0
      %4975 = vmatpush1.msra.mxu0 0.0
      %4976 = vmatprep.subr.mxu0 0.0
      %4977 = vmatpush1.msra.mxu0 0.0
      %4978 = vmatprep.subr.mxu0 0.0
      %4979 = vmatpush1.msra.mxu0 0.0
      %4980 = vmatprep.subr.mxu0 0.0
      %4981 = vmatpush1.msra.mxu0 0.0
      %4982 = vmatprep.subr.mxu0 0.0
      %4983 = vmatpush1.msra.mxu0 0.0
      %4984 = vmatprep.subr.mxu0 0.0
      %4985 = vmatpush1.msra.mxu0 0.0
      %4986 = vmatprep.subr.mxu0 0.0
      %4987 = vmatpush1.msra.mxu0 0.0
      %4988 = vmatprep.subr.mxu0 0.0
      %4989 = vmatpush1.msra.mxu0 0.0
      %4990 = vmatprep.subr.mxu0 0.0
      %4991 = vmatpush1.msra.mxu0 0.0
      %4992 = vmatprep.subr.mxu0 0.0
      %4993 = vmatpush1.msra.mxu0 0.0
      %4994 = vmatprep.subr.mxu0 0.0
      %4995 = vmatpush1.msra.mxu0 0.0
      %4996 = vmatprep.subr.mxu0 0.0
      %4997 = vmatpush1.msra.mxu0 0.0
      %4998 = vmatprep.subr.mxu0 0.0
      %4999 = vmatpush1.msra.mxu0 0.0
      %5000 = vmatprep.subr.mxu0 0.0
      %5001 = vmatpush1.msra.mxu0 0.0
      %5002 = vmatprep.subr.mxu0 0.0
      %5003 = vmatpush1.msra.mxu0 0.0
      %5004 = vmatprep.subr.mxu0 0.0
      %5005 = vmatpush1.msra.mxu0 0.0
      %5006 = vmatprep.subr.mxu0 0.0
      %5007 = vmatpush1.msra.mxu0 0.0
      %5008 = vmatprep.subr.mxu0 0.0
      %5009 = vmatpush1.msra.mxu0 0.0
      %5010 = vmatprep.subr.mxu0 0.0
      %5011 = vmatpush1.msra.mxu0 0.0
      %5012 = vmatprep.subr.mxu0 0.0
      %5013 = vmatpush1.msra.mxu0 0.0
      %5014 = vmatprep.subr.mxu0 0.0
      %5015 = vmatpush1.msra.mxu0 0.0
      %5016 = vmatprep.subr.mxu0 0.0
      %5017 = vmatpush1.msra.mxu0 0.0
      %5018 = vmatprep.subr.mxu0 0.0
      %5019 = vmatpush1.msra.mxu0 0.0
      %5020 = vmatprep.mubr.f32.mxu0 0.0
      %5021 = vmatmul.mubr.f32.gmra.mrb[0].mxu0 %v4761
      %v5022 = vpop.f32.mrb[0].mxu0
      %v5023 = vadd.f32 %v4757, %v5022
      %v5024 = vpop.f32.mrb[0].mxu0
      %5025 = vmatprep.mubr.f32.mxu0 0.0
      %5026 = vmatmul.mubr.f32.gmra.mrb[0].mxu0 %v4764
      %v5027 = vpop.f32.mrb[0].mxu0
      %v5028 = vadd.f32 %v4757, %v5027
      %v5029 = vpop.f32.mrb[0].mxu0
      %5030 = vmatprep.mubr.f32.mxu0 0.0
      %5031 = vmatmul.mubr.f32.gmra.mrb[0].mxu0 %v4767
      %v5032 = vpop.f32.mrb[0].mxu0
      %v5033 = vadd.f32 %v4757, %v5032
      %v5034 = vpop.f32.mrb[0].mxu0
      %5035 = vmatprep.mubr.f32.mxu0 0.0
      %5036 = vmatmul.mubr.f32.gmra.mrb[0].mxu0 %v4770
      %v5037 = vpop.f32.mrb[0].mxu0
      %v5038 = vadd.f32 %v4757, %v5037
      %v5039 = vpop.f32.mrb[0].mxu0
      %5040 = vmatprep.mubr.f32.mxu0 0.0
      %5041 = vmatmul.mubr.f32.gmra.mrb[0].mxu0 %v4773
      %v5042 = vpop.f32.mrb[0].mxu0
      %v5043 = vadd.f32 %v4757, %v5042
      %v5044 = vpop.f32.mrb[0].mxu0
      %5045 = vmatprep.mubr.f32.mxu0 0.0
      %5046 = vmatmul.mubr.f32.gmra.mrb[0].mxu0 %v4776
      %v5047 = vpop.f32.mrb[0].mxu0
      %v5048 = vadd.f32 %v4757, %v5047
      %v5049 = vpop.f32.mrb[0].mxu0
      %5050 = vmatprep.mubr.f32.mxu0 0.0
      %5051 = vmatmul.mubr.f32.gmra.mrb[0].mxu0 %v4779
      %v5052 = vpop.f32.mrb[0].mxu0
      %v5053 = vadd.f32 %v4757, %v5052
      %v5054 = vpop.f32.mrb[0].mxu0
      %5055 = vmatprep.mubr.f32.mxu0 0.0
      %5056 = vmatmul.mubr.f32.gmra.mrb[0].mxu0 %v4782
      %v5057 = vpop.f32.mrb[0].mxu0
      %v5058 = vadd.f32 %v4757, %v5057
      %v5059 = vpop.f32.mrb[0].mxu0
      %5060 = vmatprep.mubr.f32.mxu0 0.0
      %5061 = vmatmul.mubr.f32.gmra.mrb[0].mxu0 %v4785
      %v5062 = vpop.f32.mrb[0].mxu0
      %v5063 = vadd.f32 %v4757, %v5062
      %v5064 = vpop.f32.mrb[0].mxu0
      %5065 = vmatprep.mubr.f32.mxu0 0.0
      %5066 = vmatmul.mubr.f32.gmra.mrb[0].mxu0 %v4788
      %v5067 = vpop.f32.mrb[0].mxu0
      %v5068 = vadd.f32 %v4757, %v5067
      %v5069 = vpop.f32.mrb[0].mxu0
      %5070 = vmatprep.mubr.f32.mxu0 0.0
      %5071 = vmatmul.mubr.f32.gmra.mrb[0].mxu0 %v4791
      %v5072 = vpop.f32.mrb[0].mxu0
      %v5073 = vadd.f32 %v4757, %v5072
      %v5074 = vpop.f32.mrb[0].mxu0
      %5075 = vmatprep.mubr.f32.mxu0 0.0
      %5076 = vmatmul.mubr.f32.gmra.mrb[0].mxu0 %v4794
      %v5077 = vpop.f32.mrb[0].mxu0
      %v5078 = vadd.f32 %v4757, %v5077
      %v5079 = vpop.f32.mrb[0].mxu0
      %5080 = vmatprep.mubr.f32.mxu0 0.0
      %5081 = vmatmul.mubr.f32.gmra.mrb[0].mxu0 %v4797
      %v5082 = vpop.f32.mrb[0].mxu0
      %v5083 = vadd.f32 %v4757, %v5082
      %v5084 = vpop.f32.mrb[0].mxu0
      %5085 = vmatprep.mubr.f32.mxu0 0.0
      %5086 = vmatmul.mubr.f32.gmra.mrb[0].mxu0 %v4800
      %v5087 = vpop.f32.mrb[0].mxu0
      %v5088 = vadd.f32 %v4757, %v5087
      %v5089 = vpop.f32.mrb[0].mxu0
      %5090 = vmatprep.mubr.f32.mxu0 0.0
      %5091 = vmatmul.mubr.f32.gmra.mrb[0].mxu0 %v4803
      %v5092 = vpop.f32.mrb[0].mxu0
      %v5093 = vadd.f32 %v4757, %v5092
      %v5094 = vpop.f32.mrb[0].mxu0
      %5095 = vmatprep.mubr.f32.mxu0 0.0
      %5096 = vmatmul.mubr.f32.gmra.mrb[0].mxu0 %v4806
      %v5097 = vpop.f32.mrb[0].mxu0
      %v5098 = vadd.f32 %v4757, %v5097
      %v5099 = vpop.f32.mrb[0].mxu0
      %5100 = vmatprep.mubr.f32.mxu0 0.0
      %5101 = vmatmul.mubr.f32.gmra.mrb[0].mxu0 %v4809
      %v5102 = vpop.f32.mrb[0].mxu0
      %v5103 = vadd.f32 %v4757, %v5102
      %v5104 = vpop.f32.mrb[0].mxu0
      %5105 = vmatprep.mubr.f32.mxu0 0.0
      %5106 = vmatmul.mubr.f32.gmra.mrb[0].mxu0 %v4812
      %v5107 = vpop.f32.mrb[0].mxu0
      %v5108 = vadd.f32 %v4757, %v5107
      %v5109 = vpop.f32.mrb[0].mxu0
      %5110 = vmatprep.mubr.f32.mxu0 0.0
      %5111 = vmatmul.mubr.f32.gmra.mrb[0].mxu0 %v4815
      %v5112 = vpop.f32.mrb[0].mxu0
      %v5113 = vadd.f32 %v4757, %v5112
      %v5114 = vpop.f32.mrb[0].mxu0
      %5115 = vmatprep.mubr.f32.mxu0 0.0
      %5116 = vmatmul.mubr.f32.gmra.mrb[0].mxu0 %v4818
      %v5117 = vpop.f32.mrb[0].mxu0
      %v5118 = vadd.f32 %v4757, %v5117
      %v5119 = vpop.f32.mrb[0].mxu0
      %5120 = vmatprep.mubr.f32.mxu0 0.0
      %5121 = vmatmul.mubr.f32.gmra.mrb[0].mxu0 %v4821
      %v5122 = vpop.f32.mrb[0].mxu0
      %v5123 = vadd.f32 %v4757, %v5122
      %v5124 = vpop.f32.mrb[0].mxu0
      %5125 = vmatprep.mubr.f32.mxu0 0.0
      %5126 = vmatmul.mubr.f32.gmra.mrb[0].mxu0 %v4824
      %v5127 = vpop.f32.mrb[0].mxu0
      %v5128 = vadd.f32 %v4757, %v5127
      %v5129 = vpop.f32.mrb[0].mxu0
      %5130 = vmatprep.mubr.f32.mxu0 0.0
      %5131 = vmatmul.mubr.f32.gmra.mrb[0].mxu0 %v4827
      %v5132 = vpop.f32.mrb[0].mxu0
      %v5133 = vadd.f32 %v4757, %v5132
      %v5134 = vpop.f32.mrb[0].mxu0
      %5135 = vmatprep.mubr.f32.mxu0 0.0
      %5136 = vmatmul.mubr.f32.gmra.mrb[0].mxu0 %v4830
      %v5137 = vpop.f32.mrb[0].mxu0
      %v5138 = vadd.f32 %v4757, %v5137
      %v5139 = vpop.f32.mrb[0].mxu0
      %5140 = vmatprep.mubr.f32.mxu0 0.0
      %5141 = vmatmul.mubr.f32.gmra.mrb[0].mxu0 %v4833
      %v5142 = vpop.f32.mrb[0].mxu0
      %v5143 = vadd.f32 %v4757, %v5142
      %v5144 = vpop.f32.mrb[0].mxu0
      %5145 = vmatprep.mubr.f32.mxu0 0.0
      %5146 = vmatmul.mubr.f32.gmra.mrb[0].mxu0 %v4836
      %v5147 = vpop.f32.mrb[0].mxu0
      %v5148 = vadd.f32 %v4757, %v5147
      %v5149 = vpop.f32.mrb[0].mxu0
      %5150 = vmatprep.mubr.f32.mxu0 0.0
      %5151 = vmatmul.mubr.f32.gmra.mrb[0].mxu0 %v4839
      %v5152 = vpop.f32.mrb[0].mxu0
      %v5153 = vadd.f32 %v4757, %v5152
      %v5154 = vpop.f32.mrb[0].mxu0
      %5155 = vmatprep.mubr.f32.mxu0 0.0
      %5156 = vmatmul.mubr.f32.gmra.mrb[0].mxu0 %v4842
      %v5157 = vpop.f32.mrb[0].mxu0
      %v5158 = vadd.f32 %v4757, %v5157
      %v5159 = vpop.f32.mrb[0].mxu0
      %5160 = vmatprep.mubr.f32.mxu0 0.0
      %5161 = vmatmul.mubr.f32.gmra.mrb[0].mxu0 %v4845
      %v5162 = vpop.f32.mrb[0].mxu0
      %v5163 = vadd.f32 %v4757, %v5162
      %v5164 = vpop.f32.mrb[0].mxu0
      %5165 = vmatprep.mubr.f32.mxu0 0.0
      %5166 = vmatmul.mubr.f32.gmra.mrb[0].mxu0 %v4848
      %v5167 = vpop.f32.mrb[0].mxu0
      %v5168 = vadd.f32 %v4757, %v5167
      %v5169 = vpop.f32.mrb[0].mxu0
      %5170 = vmatprep.mubr.f32.mxu0 0.0
      %5171 = vmatmul.mubr.f32.gmra.mrb[0].mxu0 %v4851
      %v5172 = vpop.f32.mrb[0].mxu0
      %v5173 = vadd.f32 %v4757, %v5172
      %v5174 = vpop.f32.mrb[0].mxu0
      %5175 = vmatprep.mubr.f32.mxu0 0.0
      %5176 = vmatmul.mubr.f32.gmra.mrb[0].mxu0 %v4854
      %v5177 = vpop.f32.mrb[0].mxu0
      %v5178 = vadd.f32 %v4757, %v5177
      %v5179 = vpop.f32.mrb[0].mxu0
      %5180 = vmatprep.mubr.f32.mxu0 0.0
      %5181 = vmatmul.mubr.f32.gmra.mrb[0].mxu0 %v4857
      %v5182 = vpop.f32.mrb[0].mxu0
      %v5183 = vadd.f32 %v4757, %v5182
      %v5184 = vpop.f32.mrb[0].mxu0
      %5185 = vmatprep.mubr.f32.mxu0 0.0
      %5186 = vmatmul.mubr.f32.gmra.mrb[0].mxu0 %v4860
      %v5187 = vpop.f32.mrb[0].mxu0
      %v5188 = vadd.f32 %v4757, %v5187
      %v5189 = vpop.f32.mrb[0].mxu0
      %5190 = vmatprep.mubr.f32.mxu0 0.0
      %5191 = vmatmul.mubr.f32.gmra.mrb[0].mxu0 %v4863
      %v5192 = vpop.f32.mrb[0].mxu0
      %v5193 = vadd.f32 %v4757, %v5192
      %v5194 = vpop.f32.mrb[0].mxu0
      %5195 = vmatprep.mubr.f32.mxu0 0.0
      %5196 = vmatmul.mubr.f32.gmra.mrb[0].mxu0 %v4866
      %v5197 = vpop.f32.mrb[0].mxu0
      %v5198 = vadd.f32 %v4757, %v5197
      %v5199 = vpop.f32.mrb[0].mxu0
      %5200 = vmatprep.mubr.f32.mxu0 0.0
      %5201 = vmatmul.mubr.f32.gmra.mrb[0].mxu0 %v4869
      %v5202 = vpop.f32.mrb[0].mxu0
      %v5203 = vadd.f32 %v4757, %v5202
      %v5204 = vpop.f32.mrb[0].mxu0
      %5205 = vmatprep.mubr.f32.mxu0 0.0
      %5206 = vmatmul.mubr.f32.gmra.mrb[0].mxu0 %v4872
      %v5207 = vpop.f32.mrb[0].mxu0
      %v5208 = vadd.f32 %v4757, %v5207
      %v5209 = vpop.f32.mrb[0].mxu0
      %5210 = vmatprep.mubr.f32.mxu0 0.0
      %5211 = vmatmul.mubr.f32.gmra.mrb[0].mxu0 %v4875
      %v5212 = vpop.f32.mrb[0].mxu0
      %v5213 = vadd.f32 %v4757, %v5212
      %v5214 = vpop.f32.mrb[0].mxu0
      %5215 = vmatprep.mubr.f32.mxu0 0.0
      %5216 = vmatmul.mubr.f32.gmra.mrb[0].mxu0 %v4878
      %v5217 = vpop.f32.mrb[0].mxu0
      %v5218 = vadd.f32 %v4757, %v5217
      %v5219 = vpop.f32.mrb[0].mxu0
      %5220 = vmatprep.mubr.f32.mxu0 0.0
      %5221 = vmatmul.mubr.f32.gmra.mrb[0].mxu0 %v4881
      %v5222 = vpop.f32.mrb[0].mxu0
      %v5223 = vadd.f32 %v4757, %v5222
      %v5224 = vpop.f32.mrb[0].mxu0
      %5225 = vmatprep.mubr.f32.mxu0 0.0
      %5226 = vmatmul.mubr.f32.gmra.mrb[0].mxu0 %v4884
      %v5227 = vpop.f32.mrb[0].mxu0
      %v5228 = vadd.f32 %v4757, %v5227
      %v5229 = vpop.f32.mrb[0].mxu0
      %5230 = vmatprep.mubr.f32.mxu0 0.0
      %5231 = vmatmul.mubr.f32.gmra.mrb[0].mxu0 %v4887
      %v5232 = vpop.f32.mrb[0].mxu0
      %v5233 = vadd.f32 %v4757, %v5232
      %v5234 = vpop.f32.mrb[0].mxu0
      %5235 = vmatprep.mubr.f32.mxu0 0.0
      %5236 = vmatmul.mubr.f32.gmra.mrb[0].mxu0 %v4890
      %v5237 = vpop.f32.mrb[0].mxu0
      %v5238 = vadd.f32 %v4757, %v5237
      %v5239 = vpop.f32.mrb[0].mxu0
      %5240 = vmatprep.mubr.f32.mxu0 0.0
      %5241 = vmatmul.mubr.f32.gmra.mrb[0].mxu0 %v4893
      %v5242 = vpop.f32.mrb[0].mxu0
      %v5243 = vadd.f32 %v4757, %v5242
      %v5244 = vpop.f32.mrb[0].mxu0
      %5245 = vmatprep.mubr.f32.mxu0 0.0
      %5246 = vmatmul.mubr.f32.gmra.mrb[0].mxu0 %v4896
      %v5247 = vpop.f32.mrb[0].mxu0
      %v5248 = vadd.f32 %v4757, %v5247
      %v5249 = vpop.f32.mrb[0].mxu0
      %5250 = vmatprep.mubr.f32.mxu0 0.0
      %5251 = vmatmul.mubr.f32.gmra.mrb[0].mxu0 %v4899
      %v5252 = vpop.f32.mrb[0].mxu0
      %v5253 = vadd.f32 %v4757, %v5252
      %v5254 = vpop.f32.mrb[0].mxu0
      %5255 = vmatprep.mubr.f32.mxu0 0.0
      %5256 = vmatmul.mubr.f32.gmra.mrb[0].mxu0 %v4902
      %v5257 = vpop.f32.mrb[0].mxu0
      %v5258 = vadd.f32 %v4757, %v5257
      %v5259 = vpop.f32.mrb[0].mxu0
      %5260 = vmatprep.mubr.f32.mxu0 0.0
      %5261 = vmatmul.mubr.f32.gmra.mrb[0].mxu0 %v4905
      %v5262 = vpop.f32.mrb[0].mxu0
      %v5263 = vadd.f32 %v4757, %v5262
      %v5264 = vpop.f32.mrb[0].mxu0
      %5265 = vmatprep.mubr.f32.mxu0 0.0
      %5266 = vmatmul.mubr.f32.gmra.mrb[0].mxu0 %v4908
      %v5267 = vpop.f32.mrb[0].mxu0
      %v5268 = vadd.f32 %v4757, %v5267
      %v5269 = vpop.f32.mrb[0].mxu0
      %5270 = vmatprep.mubr.f32.mxu0 0.0
      %5271 = vmatmul.mubr.f32.gmra.mrb[0].mxu0 %v4911
      %v5272 = vpop.f32.mrb[0].mxu0
      %v5273 = vadd.f32 %v4757, %v5272
      %v5274 = vpop.f32.mrb[0].mxu0
      %5275 = vmatprep.mubr.f32.mxu0 0.0
      %5276 = vmatmul.mubr.f32.gmra.mrb[0].mxu0 %v4914
      %v5277 = vpop.f32.mrb[0].mxu0
      %v5278 = vadd.f32 %v4757, %v5277
      %v5279 = vpop.f32.mrb[0].mxu0
      %5280 = vmatprep.mubr.f32.mxu0 0.0
      %5281 = vmatmul.mubr.f32.gmra.mrb[0].mxu0 %v4917
      %v5282 = vpop.f32.mrb[0].mxu0
      %v5283 = vadd.f32 %v4757, %v5282
      %v5284 = vpop.f32.mrb[0].mxu0
      %5285 = vmatprep.mubr.f32.mxu0 0.0
      %5286 = vmatmul.mubr.f32.gmra.mrb[0].mxu0 %v4920
      %v5287 = vpop.f32.mrb[0].mxu0
      %v5288 = vadd.f32 %v4757, %v5287
      %v5289 = vpop.f32.mrb[0].mxu0
      %5290 = vmatprep.mubr.f32.mxu0 0.0
      %5291 = vmatmul.mubr.f32.gmra.mrb[0].mxu0 %v4923
      %v5292 = vpop.f32.mrb[0].mxu0
      %v5293 = vadd.f32 %v4757, %v5292
      %v5294 = vpop.f32.mrb[0].mxu0
      %5295 = vmatprep.mubr.f32.mxu0 0.0
      %5296 = vmatmul.mubr.f32.gmra.mrb[0].mxu0 %v4926
      %v5297 = vpop.f32.mrb[0].mxu0
      %v5298 = vadd.f32 %v4757, %v5297
      %v5299 = vpop.f32.mrb[0].mxu0
      %5300 = vmatprep.mubr.f32.mxu0 0.0
      %5301 = vmatmul.mubr.f32.gmra.mrb[0].mxu0 %v4929
      %v5302 = vpop.f32.mrb[0].mxu0
      %v5303 = vadd.f32 %v4757, %v5302
      %v5304 = vpop.f32.mrb[0].mxu0
      %5305 = vmatprep.mubr.f32.mxu0 0.0
      %5306 = vmatmul.mubr.f32.gmra.mrb[0].mxu0 %v4932
      %v5307 = vpop.f32.mrb[0].mxu0
      %v5308 = vadd.f32 %v4757, %v5307
      %v5309 = vpop.f32.mrb[0].mxu0
      %5310 = vmatprep.mubr.f32.mxu0 0.0
      %5311 = vmatmul.mubr.f32.gmra.mrb[0].mxu0 %v4935
      %v5312 = vpop.f32.mrb[0].mxu0
      %v5313 = vadd.f32 %v4757, %v5312
      %v5314 = vpop.f32.mrb[0].mxu0
      %5315 = vmatprep.mubr.f32.mxu0 0.0
      %5316 = vmatmul.mubr.f32.gmra.mrb[0].mxu0 %v4938
      %v5317 = vpop.f32.mrb[0].mxu0
      %v5318 = vadd.f32 %v4757, %v5317
      %v5319 = vpop.f32.mrb[0].mxu0
      %5320 = vmatprep.mubr.f32.mxu0 0.0
      %5321 = vmatmul.mubr.f32.gmra.mrb[0].mxu0 %v4941
      %v5322 = vpop.f32.mrb[0].mxu0
      %v5323 = vadd.f32 %v4757, %v5322
      %v5324 = vpop.f32.mrb[0].mxu0
      %5325 = vmatprep.mubr.f32.mxu0 0.0
      %5326 = vmatmul.mubr.f32.gmra.mrb[0].mxu0 %v4944
      %v5327 = vpop.f32.mrb[0].mxu0
      %v5328 = vadd.f32 %v4757, %v5327
      %v5329 = vpop.f32.mrb[0].mxu0
      %5330 = vmatprep.mubr.f32.mxu0 0.0
      %5331 = vmatmul.mubr.f32.gmra.mrb[0].mxu0 %v4947
      %v5332 = vpop.f32.mrb[0].mxu0
      %v5333 = vadd.f32 %v4757, %v5332
      %v5334 = vpop.f32.mrb[0].mxu0
      %5335 = vmatprep.mubr.f32.mxu0 0.0
      %5336 = vmatmul.mubr.f32.gmra.mrb[0].mxu0 %v4950
      %v5337 = vpop.f32.mrb[0].mxu0
      %v5338 = vadd.f32 %v4757, %v5337
      %v5339 = vpop.f32.mrb[0].mxu0
      %5340 = vdwg.mxu0
      %v5341 = vmax.f32 %v5023, 0.0
      %v5342 = vmax.f32 %v5028, 0.0
      %v5343 = vmax.f32 %v5033, 0.0
      %v5344 = vmax.f32 %v5038, 0.0
      %v5345 = vmax.f32 %v5043, 0.0
      %v5346 = vmax.f32 %v5048, 0.0
      %v5347 = vmax.f32 %v5053, 0.0
      %v5348 = vmax.f32 %v5058, 0.0
      %v5349 = vmax.f32 %v5063, 0.0
      %v5350 = vmax.f32 %v5068, 0.0
      %v5351 = vmax.f32 %v5073, 0.0
      %v5352 = vmax.f32 %v5078, 0.0
      %v5353 = vmax.f32 %v5083, 0.0
      %v5354 = vmax.f32 %v5088, 0.0
      %v5355 = vmax.f32 %v5093, 0.0
      %v5356 = vmax.f32 %v5098, 0.0
      %v5357 = vmax.f32 %v5103, 0.0
      %v5358 = vmax.f32 %v5108, 0.0
      %v5359 = vmax.f32 %v5113, 0.0
      %v5360 = vmax.f32 %v5118, 0.0
      %v5361 = vmax.f32 %v5123, 0.0
      %v5362 = vmax.f32 %v5128, 0.0
      %v5363 = vmax.f32 %v5133, 0.0
      %v5364 = vmax.f32 %v5138, 0.0
      %v5365 = vmax.f32 %v5143, 0.0
      %v5366 = vmax.f32 %v5148, 0.0
      %v5367 = vmax.f32 %v5153, 0.0
      %v5368 = vmax.f32 %v5158, 0.0
      %v5369 = vmax.f32 %v5163, 0.0
      %v5370 = vmax.f32 %v5168, 0.0
      %v5371 = vmax.f32 %v5173, 0.0
      %v5372 = vmax.f32 %v5178, 0.0
      %v5373 = vmax.f32 %v5183, 0.0
      %v5374 = vmax.f32 %v5188, 0.0
      %v5375 = vmax.f32 %v5193, 0.0
      %v5376 = vmax.f32 %v5198, 0.0
      %v5377 = vmax.f32 %v5203, 0.0
      %v5378 = vmax.f32 %v5208, 0.0
      %v5379 = vmax.f32 %v5213, 0.0
      %v5380 = vmax.f32 %v5218, 0.0
      %v5381 = vmax.f32 %v5223, 0.0
      %v5382 = vmax.f32 %v5228, 0.0
      %v5383 = vmax.f32 %v5233, 0.0
      %v5384 = vmax.f32 %v5238, 0.0
      %v5385 = vmax.f32 %v5243, 0.0
      %v5386 = vmax.f32 %v5248, 0.0
      %v5387 = vmax.f32 %v5253, 0.0
      %v5388 = vmax.f32 %v5258, 0.0
      %v5389 = vmax.f32 %v5263, 0.0
      %v5390 = vmax.f32 %v5268, 0.0
      %v5391 = vmax.f32 %v5273, 0.0
      %v5392 = vmax.f32 %v5278, 0.0
      %v5393 = vmax.f32 %v5283, 0.0
      %v5394 = vmax.f32 %v5288, 0.0
      %v5395 = vmax.f32 %v5293, 0.0
      %v5396 = vmax.f32 %v5298, 0.0
      %v5397 = vmax.f32 %v5303, 0.0
      %v5398 = vmax.f32 %v5308, 0.0
      %v5399 = vmax.f32 %v5313, 0.0
      %v5400 = vmax.f32 %v5318, 0.0
      %v5401 = vmax.f32 %v5323, 0.0
      %v5402 = vmax.f32 %v5328, 0.0
      %v5403 = vmax.f32 %v5333, 0.0
      %v5404 = vmax.f32 %v5338, 0.0
      %v5405 = vsel %vm4294, %v5341, 0.0
      %v5406 = vsel %vm4294, %v5342, 0.0
      %v5407 = vadd.f32 %v5405, %v5406
      %v5408 = vsel %vm4294, %v5343, 0.0
      %v5409 = vadd.f32 %v5407, %v5408
      %v5410 = vsel %vm4294, %v5344, 0.0
      %v5411 = vadd.f32 %v5409, %v5410
      %v5412 = vsel %vm4294, %v5345, 0.0
      %v5413 = vadd.f32 %v5411, %v5412
      %v5414 = vsel %vm4294, %v5346, 0.0
      %v5415 = vadd.f32 %v5413, %v5414
      %v5416 = vsel %vm4294, %v5347, 0.0
      %v5417 = vadd.f32 %v5415, %v5416
      %v5418 = vsel %vm4294, %v5348, 0.0
      %v5419 = vadd.f32 %v5417, %v5418
      %v5420 = vsel %vm4294, %v5349, 0.0
      %v5421 = vadd.f32 %v5419, %v5420
      %v5422 = vsel %vm4294, %v5350, 0.0
      %v5423 = vadd.f32 %v5421, %v5422
      %v5424 = vsel %vm4294, %v5351, 0.0
      %v5425 = vadd.f32 %v5423, %v5424
      %v5426 = vsel %vm4294, %v5352, 0.0
      %v5427 = vadd.f32 %v5425, %v5426
      %v5428 = vsel %vm4294, %v5353, 0.0
      %v5429 = vadd.f32 %v5427, %v5428
      %v5430 = vsel %vm4294, %v5354, 0.0
      %v5431 = vadd.f32 %v5429, %v5430
      %v5432 = vsel %vm4294, %v5355, 0.0
      %v5433 = vadd.f32 %v5431, %v5432
      %v5434 = vsel %vm4294, %v5356, 0.0
      %v5435 = vadd.f32 %v5433, %v5434
      %v5436 = vsel %vm4294, %v5357, 0.0
      %v5437 = vadd.f32 %v5435, %v5436
      %v5438 = vsel %vm4294, %v5358, 0.0
      %v5439 = vadd.f32 %v5437, %v5438
      %v5440 = vsel %vm4294, %v5359, 0.0
      %v5441 = vadd.f32 %v5439, %v5440
      %v5442 = vsel %vm4294, %v5360, 0.0
      %v5443 = vadd.f32 %v5441, %v5442
      %v5444 = vsel %vm4294, %v5361, 0.0
      %v5445 = vadd.f32 %v5443, %v5444
      %v5446 = vsel %vm4294, %v5362, 0.0
      %v5447 = vadd.f32 %v5445, %v5446
      %v5448 = vsel %vm4294, %v5363, 0.0
      %v5449 = vadd.f32 %v5447, %v5448
      %v5450 = vsel %vm4294, %v5364, 0.0
      %v5451 = vadd.f32 %v5449, %v5450
      %v5452 = vsel %vm4294, %v5365, 0.0
      %v5453 = vadd.f32 %v5451, %v5452
      %v5454 = vsel %vm4294, %v5366, 0.0
      %v5455 = vadd.f32 %v5453, %v5454
      %v5456 = vsel %vm4294, %v5367, 0.0
      %v5457 = vadd.f32 %v5455, %v5456
      %v5458 = vsel %vm4294, %v5368, 0.0
      %v5459 = vadd.f32 %v5457, %v5458
      %v5460 = vsel %vm4294, %v5369, 0.0
      %v5461 = vadd.f32 %v5459, %v5460
      %v5462 = vsel %vm4294, %v5370, 0.0
      %v5463 = vadd.f32 %v5461, %v5462
      %v5464 = vsel %vm4294, %v5371, 0.0
      %v5465 = vadd.f32 %v5463, %v5464
      %v5466 = vsel %vm4294, %v5372, 0.0
      %v5467 = vadd.f32 %v5465, %v5466
      %v5468 = vsel %vm4294, %v5373, 0.0
      %v5469 = vadd.f32 %v5467, %v5468
      %v5470 = vsel %vm4294, %v5374, 0.0
      %v5471 = vadd.f32 %v5469, %v5470
      %v5472 = vsel %vm4294, %v5375, 0.0
      %v5473 = vadd.f32 %v5471, %v5472
      %v5474 = vsel %vm4294, %v5376, 0.0
      %v5475 = vadd.f32 %v5473, %v5474
      %v5476 = vsel %vm4294, %v5377, 0.0
      %v5477 = vadd.f32 %v5475, %v5476
      %v5478 = vsel %vm4294, %v5378, 0.0
      %v5479 = vadd.f32 %v5477, %v5478
      %v5480 = vsel %vm4294, %v5379, 0.0
      %v5481 = vadd.f32 %v5479, %v5480
      %v5482 = vsel %vm4294, %v5380, 0.0
      %v5483 = vadd.f32 %v5481, %v5482
      %v5484 = vsel %vm4294, %v5381, 0.0
      %v5485 = vadd.f32 %v5483, %v5484
      %v5486 = vsel %vm4294, %v5382, 0.0
      %v5487 = vadd.f32 %v5485, %v5486
      %v5488 = vsel %vm4294, %v5383, 0.0
      %v5489 = vadd.f32 %v5487, %v5488
      %v5490 = vsel %vm4294, %v5384, 0.0
      %v5491 = vadd.f32 %v5489, %v5490
      %v5492 = vsel %vm4294, %v5385, 0.0
      %v5493 = vadd.f32 %v5491, %v5492
      %v5494 = vsel %vm4294, %v5386, 0.0
      %v5495 = vadd.f32 %v5493, %v5494
      %v5496 = vsel %vm4294, %v5387, 0.0
      %v5497 = vadd.f32 %v5495, %v5496
      %v5498 = vsel %vm4294, %v5388, 0.0
      %v5499 = vadd.f32 %v5497, %v5498
      %v5500 = vsel %vm4294, %v5389, 0.0
      %v5501 = vadd.f32 %v5499, %v5500
      %v5502 = vsel %vm4294, %v5390, 0.0
      %v5503 = vadd.f32 %v5501, %v5502
      %v5504 = vsel %vm4294, %v5391, 0.0
      %v5505 = vadd.f32 %v5503, %v5504
      %v5506 = vsel %vm4294, %v5392, 0.0
      %v5507 = vadd.f32 %v5505, %v5506
      %v5508 = vsel %vm4294, %v5393, 0.0
      %v5509 = vadd.f32 %v5507, %v5508
      %v5510 = vsel %vm4294, %v5394, 0.0
      %v5511 = vadd.f32 %v5509, %v5510
      %v5512 = vsel %vm4294, %v5395, 0.0
      %v5513 = vadd.f32 %v5511, %v5512
      %v5514 = vsel %vm4294, %v5396, 0.0
      %v5515 = vadd.f32 %v5513, %v5514
      %v5516 = vsel %vm4294, %v5397, 0.0
      %v5517 = vadd.f32 %v5515, %v5516
      %v5518 = vsel %vm4294, %v5398, 0.0
      %v5519 = vadd.f32 %v5517, %v5518
      %v5520 = vsel %vm4294, %v5399, 0.0
      %v5521 = vadd.f32 %v5519, %v5520
      %v5522 = vsel %vm4294, %v5400, 0.0
      %v5523 = vadd.f32 %v5521, %v5522
      %v5524 = vsel %vm4294, %v5401, 0.0
      %v5525 = vadd.f32 %v5523, %v5524
      %v5526 = vsel %vm4294, %v5402, 0.0
      %v5527 = vadd.f32 %v5525, %v5526
      %v5528 = vsel %vm4294, %v5403, 0.0
      %v5529 = vadd.f32 %v5527, %v5528
      %v5530 = vsel %vm4294, %v5404, 0.0
      %v5531 = vadd.f32 %v5529, %v5530
      %v5532 = vrot.slane %v5531, 4
      %v5533 = vadd.f32 %v5531, %v5532
      %v5534 = vrot.slane %v5533, 2
      %v5535 = vadd.f32 %v5533, %v5534
      %v5536 = vrot.slane %v5535, 1
      %v5537 = vadd.f32 %v5535, %v5536
      %v5538 = vmul.f32 %v5537, %v1456
      %v5539 = vsub.f32 %v5341, %v5538
      %v5540 = vsub.f32 %v5342, %v5538
      %v5541 = vsub.f32 %v5343, %v5538
      %v5542 = vsub.f32 %v5344, %v5538
      %v5543 = vsub.f32 %v5345, %v5538
      %v5544 = vsub.f32 %v5346, %v5538
      %v5545 = vsub.f32 %v5347, %v5538
      %v5546 = vsub.f32 %v5348, %v5538
      %v5547 = vsub.f32 %v5349, %v5538
      %v5548 = vsub.f32 %v5350, %v5538
      %v5549 = vsub.f32 %v5351, %v5538
      %v5550 = vsub.f32 %v5352, %v5538
      %v5551 = vsub.f32 %v5353, %v5538
      %v5552 = vsub.f32 %v5354, %v5538
      %v5553 = vsub.f32 %v5355, %v5538
      %v5554 = vsub.f32 %v5356, %v5538
      %v5555 = vsub.f32 %v5357, %v5538
      %v5556 = vsub.f32 %v5358, %v5538
      %v5557 = vsub.f32 %v5359, %v5538
      %v5558 = vsub.f32 %v5360, %v5538
      %v5559 = vsub.f32 %v5361, %v5538
      %v5560 = vsub.f32 %v5362, %v5538
      %v5561 = vsub.f32 %v5363, %v5538
      %v5562 = vsub.f32 %v5364, %v5538
      %v5563 = vsub.f32 %v5365, %v5538
      %v5564 = vsub.f32 %v5366, %v5538
      %v5565 = vsub.f32 %v5367, %v5538
      %v5566 = vsub.f32 %v5368, %v5538
      %v5567 = vsub.f32 %v5369, %v5538
      %v5568 = vsub.f32 %v5370, %v5538
      %v5569 = vsub.f32 %v5371, %v5538
      %v5570 = vsub.f32 %v5372, %v5538
      %v5571 = vsub.f32 %v5373, %v5538
      %v5572 = vsub.f32 %v5374, %v5538
      %v5573 = vsub.f32 %v5375, %v5538
      %v5574 = vsub.f32 %v5376, %v5538
      %v5575 = vsub.f32 %v5377, %v5538
      %v5576 = vsub.f32 %v5378, %v5538
      %v5577 = vsub.f32 %v5379, %v5538
      %v5578 = vsub.f32 %v5380, %v5538
      %v5579 = vsub.f32 %v5381, %v5538
      %v5580 = vsub.f32 %v5382, %v5538
      %v5581 = vsub.f32 %v5383, %v5538
      %v5582 = vsub.f32 %v5384, %v5538
      %v5583 = vsub.f32 %v5385, %v5538
      %v5584 = vsub.f32 %v5386, %v5538
      %v5585 = vsub.f32 %v5387, %v5538
      %v5586 = vsub.f32 %v5388, %v5538
      %v5587 = vsub.f32 %v5389, %v5538
      %v5588 = vsub.f32 %v5390, %v5538
      %v5589 = vsub.f32 %v5391, %v5538
      %v5590 = vsub.f32 %v5392, %v5538
      %v5591 = vsub.f32 %v5393, %v5538
      %v5592 = vsub.f32 %v5394, %v5538
      %v5593 = vsub.f32 %v5395, %v5538
      %v5594 = vsub.f32 %v5396, %v5538
      %v5595 = vsub.f32 %v5397, %v5538
      %v5596 = vsub.f32 %v5398, %v5538
      %v5597 = vsub.f32 %v5399, %v5538
      %v5598 = vsub.f32 %v5400, %v5538
      %v5599 = vsub.f32 %v5401, %v5538
      %v5600 = vsub.f32 %v5402, %v5538
      %v5601 = vsub.f32 %v5403, %v5538
      %v5602 = vsub.f32 %v5404, %v5538
      %v5603 = vmul.f32 %v5539, %v5539
      %v5604 = vmul.f32 %v5540, %v5540
      %v5605 = vmul.f32 %v5541, %v5541
      %v5606 = vmul.f32 %v5542, %v5542
      %v5607 = vmul.f32 %v5543, %v5543
      %v5608 = vmul.f32 %v5544, %v5544
      %v5609 = vmul.f32 %v5545, %v5545
      %v5610 = vmul.f32 %v5546, %v5546
      %v5611 = vmul.f32 %v5547, %v5547
      %v5612 = vmul.f32 %v5548, %v5548
      %v5613 = vmul.f32 %v5549, %v5549
      %v5614 = vmul.f32 %v5550, %v5550
      %v5615 = vmul.f32 %v5551, %v5551
      %v5616 = vmul.f32 %v5552, %v5552
      %v5617 = vmul.f32 %v5553, %v5553
      %v5618 = vmul.f32 %v5554, %v5554
      %v5619 = vmul.f32 %v5555, %v5555
      %v5620 = vmul.f32 %v5556, %v5556
      %v5621 = vmul.f32 %v5557, %v5557
      %v5622 = vmul.f32 %v5558, %v5558
      %v5623 = vmul.f32 %v5559, %v5559
      %v5624 = vmul.f32 %v5560, %v5560
      %v5625 = vmul.f32 %v5561, %v5561
      %v5626 = vmul.f32 %v5562, %v5562
      %v5627 = vmul.f32 %v5563, %v5563
      %v5628 = vmul.f32 %v5564, %v5564
      %v5629 = vmul.f32 %v5565, %v5565
      %v5630 = vmul.f32 %v5566, %v5566
      %v5631 = vmul.f32 %v5567, %v5567
      %v5632 = vmul.f32 %v5568, %v5568
      %v5633 = vmul.f32 %v5569, %v5569
      %v5634 = vmul.f32 %v5570, %v5570
      %v5635 = vmul.f32 %v5571, %v5571
      %v5636 = vmul.f32 %v5572, %v5572
      %v5637 = vmul.f32 %v5573, %v5573
      %v5638 = vmul.f32 %v5574, %v5574
      %v5639 = vmul.f32 %v5575, %v5575
      %v5640 = vmul.f32 %v5576, %v5576
      %v5641 = vmul.f32 %v5577, %v5577
      %v5642 = vmul.f32 %v5578, %v5578
      %v5643 = vmul.f32 %v5579, %v5579
      %v5644 = vmul.f32 %v5580, %v5580
      %v5645 = vmul.f32 %v5581, %v5581
      %v5646 = vmul.f32 %v5582, %v5582
      %v5647 = vmul.f32 %v5583, %v5583
      %v5648 = vmul.f32 %v5584, %v5584
      %v5649 = vmul.f32 %v5585, %v5585
      %v5650 = vmul.f32 %v5586, %v5586
      %v5651 = vmul.f32 %v5587, %v5587
      %v5652 = vmul.f32 %v5588, %v5588
      %v5653 = vmul.f32 %v5589, %v5589
      %v5654 = vmul.f32 %v5590, %v5590
      %v5655 = vmul.f32 %v5591, %v5591
      %v5656 = vmul.f32 %v5592, %v5592
      %v5657 = vmul.f32 %v5593, %v5593
      %v5658 = vmul.f32 %v5594, %v5594
      %v5659 = vmul.f32 %v5595, %v5595
      %v5660 = vmul.f32 %v5596, %v5596
      %v5661 = vmul.f32 %v5597, %v5597
      %v5662 = vmul.f32 %v5598, %v5598
      %v5663 = vmul.f32 %v5599, %v5599
      %v5664 = vmul.f32 %v5600, %v5600
      %v5665 = vmul.f32 %v5601, %v5601
      %v5666 = vmul.f32 %v5602, %v5602
      %v5667 = vsel %vm4294, %v5603, 0.0
      %v5668 = vsel %vm4294, %v5604, 0.0
      %v5669 = vadd.f32 %v5667, %v5668
      %v5670 = vsel %vm4294, %v5605, 0.0
      %v5671 = vadd.f32 %v5669, %v5670
      %v5672 = vsel %vm4294, %v5606, 0.0
      %v5673 = vadd.f32 %v5671, %v5672
      %v5674 = vsel %vm4294, %v5607, 0.0
      %v5675 = vadd.f32 %v5673, %v5674
      %v5676 = vsel %vm4294, %v5608, 0.0
      %v5677 = vadd.f32 %v5675, %v5676
      %v5678 = vsel %vm4294, %v5609, 0.0
      %v5679 = vadd.f32 %v5677, %v5678
      %v5680 = vsel %vm4294, %v5610, 0.0
      %v5681 = vadd.f32 %v5679, %v5680
      %v5682 = vsel %vm4294, %v5611, 0.0
      %v5683 = vadd.f32 %v5681, %v5682
      %v5684 = vsel %vm4294, %v5612, 0.0
      %v5685 = vadd.f32 %v5683, %v5684
      %v5686 = vsel %vm4294, %v5613, 0.0
      %v5687 = vadd.f32 %v5685, %v5686
      %v5688 = vsel %vm4294, %v5614, 0.0
      %v5689 = vadd.f32 %v5687, %v5688
      %v5690 = vsel %vm4294, %v5615, 0.0
      %v5691 = vadd.f32 %v5689, %v5690
      %v5692 = vsel %vm4294, %v5616, 0.0
      %v5693 = vadd.f32 %v5691, %v5692
      %v5694 = vsel %vm4294, %v5617, 0.0
      %v5695 = vadd.f32 %v5693, %v5694
      %v5696 = vsel %vm4294, %v5618, 0.0
      %v5697 = vadd.f32 %v5695, %v5696
      %v5698 = vsel %vm4294, %v5619, 0.0
      %v5699 = vadd.f32 %v5697, %v5698
      %v5700 = vsel %vm4294, %v5620, 0.0
      %v5701 = vadd.f32 %v5699, %v5700
      %v5702 = vsel %vm4294, %v5621, 0.0
      %v5703 = vadd.f32 %v5701, %v5702
      %v5704 = vsel %vm4294, %v5622, 0.0
      %v5705 = vadd.f32 %v5703, %v5704
      %v5706 = vsel %vm4294, %v5623, 0.0
      %v5707 = vadd.f32 %v5705, %v5706
      %v5708 = vsel %vm4294, %v5624, 0.0
      %v5709 = vadd.f32 %v5707, %v5708
      %v5710 = vsel %vm4294, %v5625, 0.0
      %v5711 = vadd.f32 %v5709, %v5710
      %v5712 = vsel %vm4294, %v5626, 0.0
      %v5713 = vadd.f32 %v5711, %v5712
      %v5714 = vsel %vm4294, %v5627, 0.0
      %v5715 = vadd.f32 %v5713, %v5714
      %v5716 = vsel %vm4294, %v5628, 0.0
      %v5717 = vadd.f32 %v5715, %v5716
      %v5718 = vsel %vm4294, %v5629, 0.0
      %v5719 = vadd.f32 %v5717, %v5718
      %v5720 = vsel %vm4294, %v5630, 0.0
      %v5721 = vadd.f32 %v5719, %v5720
      %v5722 = vsel %vm4294, %v5631, 0.0
      %v5723 = vadd.f32 %v5721, %v5722
      %v5724 = vsel %vm4294, %v5632, 0.0
      %v5725 = vadd.f32 %v5723, %v5724
      %v5726 = vsel %vm4294, %v5633, 0.0
      %v5727 = vadd.f32 %v5725, %v5726
      %v5728 = vsel %vm4294, %v5634, 0.0
      %v5729 = vadd.f32 %v5727, %v5728
      %v5730 = vsel %vm4294, %v5635, 0.0
      %v5731 = vadd.f32 %v5729, %v5730
      %v5732 = vsel %vm4294, %v5636, 0.0
      %v5733 = vadd.f32 %v5731, %v5732
      %v5734 = vsel %vm4294, %v5637, 0.0
      %v5735 = vadd.f32 %v5733, %v5734
      %v5736 = vsel %vm4294, %v5638, 0.0
      %v5737 = vadd.f32 %v5735, %v5736
      %v5738 = vsel %vm4294, %v5639, 0.0
      %v5739 = vadd.f32 %v5737, %v5738
      %v5740 = vsel %vm4294, %v5640, 0.0
      %v5741 = vadd.f32 %v5739, %v5740
      %v5742 = vsel %vm4294, %v5641, 0.0
      %v5743 = vadd.f32 %v5741, %v5742
      %v5744 = vsel %vm4294, %v5642, 0.0
      %v5745 = vadd.f32 %v5743, %v5744
      %v5746 = vsel %vm4294, %v5643, 0.0
      %v5747 = vadd.f32 %v5745, %v5746
      %v5748 = vsel %vm4294, %v5644, 0.0
      %v5749 = vadd.f32 %v5747, %v5748
      %v5750 = vsel %vm4294, %v5645, 0.0
      %v5751 = vadd.f32 %v5749, %v5750
      %v5752 = vsel %vm4294, %v5646, 0.0
      %v5753 = vadd.f32 %v5751, %v5752
      %v5754 = vsel %vm4294, %v5647, 0.0
      %v5755 = vadd.f32 %v5753, %v5754
      %v5756 = vsel %vm4294, %v5648, 0.0
      %v5757 = vadd.f32 %v5755, %v5756
      %v5758 = vsel %vm4294, %v5649, 0.0
      %v5759 = vadd.f32 %v5757, %v5758
      %v5760 = vsel %vm4294, %v5650, 0.0
      %v5761 = vadd.f32 %v5759, %v5760
      %v5762 = vsel %vm4294, %v5651, 0.0
      %v5763 = vadd.f32 %v5761, %v5762
      %v5764 = vsel %vm4294, %v5652, 0.0
      %v5765 = vadd.f32 %v5763, %v5764
      %v5766 = vsel %vm4294, %v5653, 0.0
      %v5767 = vadd.f32 %v5765, %v5766
      %v5768 = vsel %vm4294, %v5654, 0.0
      %v5769 = vadd.f32 %v5767, %v5768
      %v5770 = vsel %vm4294, %v5655, 0.0
      %v5771 = vadd.f32 %v5769, %v5770
      %v5772 = vsel %vm4294, %v5656, 0.0
      %v5773 = vadd.f32 %v5771, %v5772
      %v5774 = vsel %vm4294, %v5657, 0.0
      %v5775 = vadd.f32 %v5773, %v5774
      %v5776 = vsel %vm4294, %v5658, 0.0
      %v5777 = vadd.f32 %v5775, %v5776
      %v5778 = vsel %vm4294, %v5659, 0.0
      %v5779 = vadd.f32 %v5777, %v5778
      %v5780 = vsel %vm4294, %v5660, 0.0
      %v5781 = vadd.f32 %v5779, %v5780
      %v5782 = vsel %vm4294, %v5661, 0.0
      %v5783 = vadd.f32 %v5781, %v5782
      %v5784 = vsel %vm4294, %v5662, 0.0
      %v5785 = vadd.f32 %v5783, %v5784
      %v5786 = vsel %vm4294, %v5663, 0.0
      %v5787 = vadd.f32 %v5785, %v5786
      %v5788 = vsel %vm4294, %v5664, 0.0
      %v5789 = vadd.f32 %v5787, %v5788
      %v5790 = vsel %vm4294, %v5665, 0.0
      %v5791 = vadd.f32 %v5789, %v5790
      %v5792 = vsel %vm4294, %v5666, 0.0
      %v5793 = vadd.f32 %v5791, %v5792
      %v5794 = vrot.slane %v5793, 4
      %v5795 = vadd.f32 %v5793, %v5794
      %v5796 = vrot.slane %v5795, 2
      %v5797 = vadd.f32 %v5795, %v5796
      %v5798 = vrot.slane %v5797, 1
      %v5799 = vadd.f32 %v5797, %v5798
      %v5800 = vmul.f32 %v5799, %v1456
      %v5802 = vlaneseq
      %v5803 = vshrl.u32 %v5802, 7
      %v5804 = vsub.s32 0, %v5803
      %v5805 = vrot.slane %v4751, %v5804
      %v5807 = vmul.f32 %v5805, %v5539
      %v5808 = vmul.f32 %v5805, %v5540
      %v5809 = vmul.f32 %v5805, %v5541
      %v5810 = vmul.f32 %v5805, %v5542
      %v5811 = vmul.f32 %v5805, %v5543
      %v5812 = vmul.f32 %v5805, %v5544
      %v5813 = vmul.f32 %v5805, %v5545
      %v5814 = vmul.f32 %v5805, %v5546
      %v5815 = vmul.f32 %v5805, %v5547
      %v5816 = vmul.f32 %v5805, %v5548
      %v5817 = vmul.f32 %v5805, %v5549
      %v5818 = vmul.f32 %v5805, %v5550
      %v5819 = vmul.f32 %v5805, %v5551
      %v5820 = vmul.f32 %v5805, %v5552
      %v5821 = vmul.f32 %v5805, %v5553
      %v5822 = vmul.f32 %v5805, %v5554
      %v5823 = vmul.f32 %v5805, %v5555
      %v5824 = vmul.f32 %v5805, %v5556
      %v5825 = vmul.f32 %v5805, %v5557
      %v5826 = vmul.f32 %v5805, %v5558
      %v5827 = vmul.f32 %v5805, %v5559
      %v5828 = vmul.f32 %v5805, %v5560
      %v5829 = vmul.f32 %v5805, %v5561
      %v5830 = vmul.f32 %v5805, %v5562
      %v5831 = vmul.f32 %v5805, %v5563
      %v5832 = vmul.f32 %v5805, %v5564
      %v5833 = vmul.f32 %v5805, %v5565
      %v5834 = vmul.f32 %v5805, %v5566
      %v5835 = vmul.f32 %v5805, %v5567
      %v5836 = vmul.f32 %v5805, %v5568
      %v5837 = vmul.f32 %v5805, %v5569
      %v5838 = vmul.f32 %v5805, %v5570
      %v5839 = vmul.f32 %v5805, %v5571
      %v5840 = vmul.f32 %v5805, %v5572
      %v5841 = vmul.f32 %v5805, %v5573
      %v5842 = vmul.f32 %v5805, %v5574
      %v5843 = vmul.f32 %v5805, %v5575
      %v5844 = vmul.f32 %v5805, %v5576
      %v5845 = vmul.f32 %v5805, %v5577
      %v5846 = vmul.f32 %v5805, %v5578
      %v5847 = vmul.f32 %v5805, %v5579
      %v5848 = vmul.f32 %v5805, %v5580
      %v5849 = vmul.f32 %v5805, %v5581
      %v5850 = vmul.f32 %v5805, %v5582
      %v5851 = vmul.f32 %v5805, %v5583
      %v5852 = vmul.f32 %v5805, %v5584
      %v5853 = vmul.f32 %v5805, %v5585
      %v5854 = vmul.f32 %v5805, %v5586
      %v5855 = vmul.f32 %v5805, %v5587
      %v5856 = vmul.f32 %v5805, %v5588
      %v5857 = vmul.f32 %v5805, %v5589
      %v5858 = vmul.f32 %v5805, %v5590
      %v5859 = vmul.f32 %v5805, %v5591
      %v5860 = vmul.f32 %v5805, %v5592
      %v5861 = vmul.f32 %v5805, %v5593
      %v5862 = vmul.f32 %v5805, %v5594
      %v5863 = vmul.f32 %v5805, %v5595
      %v5864 = vmul.f32 %v5805, %v5596
      %v5865 = vmul.f32 %v5805, %v5597
      %v5866 = vmul.f32 %v5805, %v5598
      %v5867 = vmul.f32 %v5805, %v5599
      %v5868 = vmul.f32 %v5805, %v5600
      %v5869 = vmul.f32 %v5805, %v5601
      %v5870 = vmul.f32 %v5805, %v5602
      %v5871 = vadd.f32 %v5800, 1e-05
      %v5872 = vrsqrt.pop %v5871
      %v5873 = vmul.f32 %v5807, %v5872
      %v5874 = vmul.f32 %v5808, %v5872
      %v5875 = vmul.f32 %v5809, %v5872
      %v5876 = vmul.f32 %v5810, %v5872
      %v5877 = vmul.f32 %v5811, %v5872
      %v5878 = vmul.f32 %v5812, %v5872
      %v5879 = vmul.f32 %v5813, %v5872
      %v5880 = vmul.f32 %v5814, %v5872
      %v5881 = vmul.f32 %v5815, %v5872
      %v5882 = vmul.f32 %v5816, %v5872
      %v5883 = vmul.f32 %v5817, %v5872
      %v5884 = vmul.f32 %v5818, %v5872
      %v5885 = vmul.f32 %v5819, %v5872
      %v5886 = vmul.f32 %v5820, %v5872
      %v5887 = vmul.f32 %v5821, %v5872
      %v5888 = vmul.f32 %v5822, %v5872
      %v5889 = vmul.f32 %v5823, %v5872
      %v5890 = vmul.f32 %v5824, %v5872
      %v5891 = vmul.f32 %v5825, %v5872
      %v5892 = vmul.f32 %v5826, %v5872
      %v5893 = vmul.f32 %v5827, %v5872
      %v5894 = vmul.f32 %v5828, %v5872
      %v5895 = vmul.f32 %v5829, %v5872
      %v5896 = vmul.f32 %v5830, %v5872
      %v5897 = vmul.f32 %v5831, %v5872
      %v5898 = vmul.f32 %v5832, %v5872
      %v5899 = vmul.f32 %v5833, %v5872
      %v5900 = vmul.f32 %v5834, %v5872
      %v5901 = vmul.f32 %v5835, %v5872
      %v5902 = vmul.f32 %v5836, %v5872
      %v5903 = vmul.f32 %v5837, %v5872
      %v5904 = vmul.f32 %v5838, %v5872
      %v5905 = vmul.f32 %v5839, %v5872
      %v5906 = vmul.f32 %v5840, %v5872
      %v5907 = vmul.f32 %v5841, %v5872
      %v5908 = vmul.f32 %v5842, %v5872
      %v5909 = vmul.f32 %v5843, %v5872
      %v5910 = vmul.f32 %v5844, %v5872
      %v5911 = vmul.f32 %v5845, %v5872
      %v5912 = vmul.f32 %v5846, %v5872
      %v5913 = vmul.f32 %v5847, %v5872
      %v5914 = vmul.f32 %v5848, %v5872
      %v5915 = vmul.f32 %v5849, %v5872
      %v5916 = vmul.f32 %v5850, %v5872
      %v5917 = vmul.f32 %v5851, %v5872
      %v5918 = vmul.f32 %v5852, %v5872
      %v5919 = vmul.f32 %v5853, %v5872
      %v5920 = vmul.f32 %v5854, %v5872
      %v5921 = vmul.f32 %v5855, %v5872
      %v5922 = vmul.f32 %v5856, %v5872
      %v5923 = vmul.f32 %v5857, %v5872
      %v5924 = vmul.f32 %v5858, %v5872
      %v5925 = vmul.f32 %v5859, %v5872
      %v5926 = vmul.f32 %v5860, %v5872
      %v5927 = vmul.f32 %v5861, %v5872
      %v5928 = vmul.f32 %v5862, %v5872
      %v5929 = vmul.f32 %v5863, %v5872
      %v5930 = vmul.f32 %v5864, %v5872
      %v5931 = vmul.f32 %v5865, %v5872
      %v5932 = vmul.f32 %v5866, %v5872
      %v5933 = vmul.f32 %v5867, %v5872
      %v5934 = vmul.f32 %v5868, %v5872
      %v5935 = vmul.f32 %v5869, %v5872
      %v5936 = vmul.f32 %v5870, %v5872
      %v5938 = vlaneseq
      %v5939 = vshrl.u32 %v5938, 7
      %v5940 = vsub.s32 0, %v5939
      %v5941 = vrot.slane %v4752, %v5940
      %v5943 = vadd.f32 %v5873, %v5941
      %v5944 = vadd.f32 %v5874, %v5941
      %v5945 = vadd.f32 %v5875, %v5941
      %v5946 = vadd.f32 %v5876, %v5941
      %v5947 = vadd.f32 %v5877, %v5941
      %v5948 = vadd.f32 %v5878, %v5941
      %v5949 = vadd.f32 %v5879, %v5941
      %v5950 = vadd.f32 %v5880, %v5941
      %v5951 = vadd.f32 %v5881, %v5941
      %v5952 = vadd.f32 %v5882, %v5941
      %v5953 = vadd.f32 %v5883, %v5941
      %v5954 = vadd.f32 %v5884, %v5941
      %v5955 = vadd.f32 %v5885, %v5941
      %v5956 = vadd.f32 %v5886, %v5941
      %v5957 = vadd.f32 %v5887, %v5941
      %v5958 = vadd.f32 %v5888, %v5941
      %v5959 = vadd.f32 %v5889, %v5941
      %v5960 = vadd.f32 %v5890, %v5941
      %v5961 = vadd.f32 %v5891, %v5941
      %v5962 = vadd.f32 %v5892, %v5941
      %v5963 = vadd.f32 %v5893, %v5941
      %v5964 = vadd.f32 %v5894, %v5941
      %v5965 = vadd.f32 %v5895, %v5941
      %v5966 = vadd.f32 %v5896, %v5941
      %v5967 = vadd.f32 %v5897, %v5941
      %v5968 = vadd.f32 %v5898, %v5941
      %v5969 = vadd.f32 %v5899, %v5941
      %v5970 = vadd.f32 %v5900, %v5941
      %v5971 = vadd.f32 %v5901, %v5941
      %v5972 = vadd.f32 %v5902, %v5941
      %v5973 = vadd.f32 %v5903, %v5941
      %v5974 = vadd.f32 %v5904, %v5941
      %v5975 = vadd.f32 %v5905, %v5941
      %v5976 = vadd.f32 %v5906, %v5941
      %v5977 = vadd.f32 %v5907, %v5941
      %v5978 = vadd.f32 %v5908, %v5941
      %v5979 = vadd.f32 %v5909, %v5941
      %v5980 = vadd.f32 %v5910, %v5941
      %v5981 = vadd.f32 %v5911, %v5941
      %v5982 = vadd.f32 %v5912, %v5941
      %v5983 = vadd.f32 %v5913, %v5941
      %v5984 = vadd.f32 %v5914, %v5941
      %v5985 = vadd.f32 %v5915, %v5941
      %v5986 = vadd.f32 %v5916, %v5941
      %v5987 = vadd.f32 %v5917, %v5941
      %v5988 = vadd.f32 %v5918, %v5941
      %v5989 = vadd.f32 %v5919, %v5941
      %v5990 = vadd.f32 %v5920, %v5941
      %v5991 = vadd.f32 %v5921, %v5941
      %v5992 = vadd.f32 %v5922, %v5941
      %v5993 = vadd.f32 %v5923, %v5941
      %v5994 = vadd.f32 %v5924, %v5941
      %v5995 = vadd.f32 %v5925, %v5941
      %v5996 = vadd.f32 %v5926, %v5941
      %v5997 = vadd.f32 %v5927, %v5941
      %v5998 = vadd.f32 %v5928, %v5941
      %v5999 = vadd.f32 %v5929, %v5941
      %v6000 = vadd.f32 %v5930, %v5941
      %v6001 = vadd.f32 %v5931, %v5941
      %v6002 = vadd.f32 %v5932, %v5941
      %v6003 = vadd.f32 %v5933, %v5941
      %v6004 = vadd.f32 %v5934, %v5941
      %v6005 = vadd.f32 %v5935, %v5941
      %v6006 = vadd.f32 %v5936, %v5941
      %v6039 = vrot.slane %v5945, 1
      %v6040 = vrot.slane %v5943, 1
      %v6041 = vrot.slane %v5947, 1
      %v6042 = vrot.slane %v5949, 1
      %v6043 = vrot.slane %v5951, 1
      %v6044 = vrot.slane %v5953, 1
      %v6045 = vrot.slane %v5955, 1
      %v6046 = vrot.slane %v5957, 1
      %v6047 = vrot.slane %v5959, 1
      %v6048 = vrot.slane %v5961, 1
      %v6049 = vrot.slane %v5963, 1
      %v6050 = vrot.slane %v5965, 1
      %v6051 = vrot.slane %v5967, 1
      %v6052 = vrot.slane %v5969, 1
      %v6053 = vrot.slane %v5971, 1
      %v6054 = vrot.slane %v5973, 1
      %v6055 = vrot.slane %v5977, 1
      %v6056 = vrot.slane %v5975, 1
      %v6057 = vrot.slane %v5979, 1
      %v6058 = vrot.slane %v5981, 1
      %v6059 = vrot.slane %v5983, 1
      %v6060 = vrot.slane %v5985, 1
      %v6061 = vrot.slane %v5987, 1
      %v6062 = vrot.slane %v5989, 1
      %v6063 = vrot.slane %v5991, 1
      %v6064 = vrot.slane %v5993, 1
      %v6065 = vrot.slane %v5995, 1
      %v6066 = vrot.slane %v5997, 1
      %v6067 = vrot.slane %v5999, 1
      %v6068 = vrot.slane %v6001, 1
      %v6069 = vrot.slane %v6003, 1
      %v6070 = vrot.slane %v6005, 1
      %v6135 = vrot.slane %v5945, 7
      %v6136 = vrot.slane %v5946, 7
      %v6137 = vsel %vm869, %v6135, %v6136
      %v6138 = vrot.slane %v5943, 7
      %v6139 = vrot.slane %v5944, 7
      %v6140 = vsel %vm869, %v6138, %v6139
      %v6141 = vrot.slane %v5947, 7
      %v6142 = vrot.slane %v5948, 7
      %v6143 = vsel %vm869, %v6141, %v6142
      %v6144 = vrot.slane %v5949, 7
      %v6145 = vrot.slane %v5950, 7
      %v6146 = vsel %vm869, %v6144, %v6145
      %v6147 = vrot.slane %v5951, 7
      %v6148 = vrot.slane %v5952, 7
      %v6149 = vsel %vm869, %v6147, %v6148
      %v6150 = vrot.slane %v5953, 7
      %v6151 = vrot.slane %v5954, 7
      %v6152 = vsel %vm869, %v6150, %v6151
      %v6153 = vrot.slane %v5955, 7
      %v6154 = vrot.slane %v5956, 7
      %v6155 = vsel %vm869, %v6153, %v6154
      %v6156 = vrot.slane %v5957, 7
      %v6157 = vrot.slane %v5958, 7
      %v6158 = vsel %vm869, %v6156, %v6157
      %v6159 = vrot.slane %v5959, 7
      %v6160 = vrot.slane %v5960, 7
      %v6161 = vsel %vm869, %v6159, %v6160
      %v6162 = vrot.slane %v5961, 7
      %v6163 = vrot.slane %v5962, 7
      %v6164 = vsel %vm869, %v6162, %v6163
      %v6165 = vrot.slane %v5963, 7
      %v6166 = vrot.slane %v5964, 7
      %v6167 = vsel %vm869, %v6165, %v6166
      %v6168 = vrot.slane %v5965, 7
      %v6169 = vrot.slane %v5966, 7
      %v6170 = vsel %vm869, %v6168, %v6169
      %v6171 = vrot.slane %v5967, 7
      %v6172 = vrot.slane %v5968, 7
      %v6173 = vsel %vm869, %v6171, %v6172
      %v6174 = vrot.slane %v5969, 7
      %v6175 = vrot.slane %v5970, 7
      %v6176 = vsel %vm869, %v6174, %v6175
      %v6177 = vrot.slane %v5971, 7
      %v6178 = vrot.slane %v5972, 7
      %v6179 = vsel %vm869, %v6177, %v6178
      %v6180 = vrot.slane %v5973, 7
      %v6181 = vrot.slane %v5974, 7
      %v6182 = vsel %vm869, %v6180, %v6181
      %v6183 = vrot.slane %v5977, 7
      %v6184 = vrot.slane %v5978, 7
      %v6185 = vsel %vm869, %v6183, %v6184
      %v6186 = vrot.slane %v5975, 7
      %v6187 = vrot.slane %v5976, 7
      %v6188 = vsel %vm869, %v6186, %v6187
      %v6189 = vrot.slane %v5979, 7
      %v6190 = vrot.slane %v5980, 7
      %v6191 = vsel %vm869, %v6189, %v6190
      %v6192 = vrot.slane %v5981, 7
      %v6193 = vrot.slane %v5982, 7
      %v6194 = vsel %vm869, %v6192, %v6193
      %v6195 = vrot.slane %v5983, 7
      %v6196 = vrot.slane %v5984, 7
      %v6197 = vsel %vm869, %v6195, %v6196
      %v6198 = vrot.slane %v5985, 7
      %v6199 = vrot.slane %v5986, 7
      %v6200 = vsel %vm869, %v6198, %v6199
      %v6201 = vrot.slane %v5987, 7
      %v6202 = vrot.slane %v5988, 7
      %v6203 = vsel %vm869, %v6201, %v6202
      %v6204 = vrot.slane %v5989, 7
      %v6205 = vrot.slane %v5990, 7
      %v6206 = vsel %vm869, %v6204, %v6205
      %v6207 = vrot.slane %v5991, 7
      %v6208 = vrot.slane %v5992, 7
      %v6209 = vsel %vm869, %v6207, %v6208
      %v6210 = vrot.slane %v5993, 7
      %v6211 = vrot.slane %v5994, 7
      %v6212 = vsel %vm869, %v6210, %v6211
      %v6213 = vrot.slane %v5995, 7
      %v6214 = vrot.slane %v5996, 7
      %v6215 = vsel %vm869, %v6213, %v6214
      %v6216 = vrot.slane %v5997, 7
      %v6217 = vrot.slane %v5998, 7
      %v6218 = vsel %vm869, %v6216, %v6217
      %v6219 = vrot.slane %v5999, 7
      %v6220 = vrot.slane %v6000, 7
      %v6221 = vsel %vm869, %v6219, %v6220
      %v6222 = vrot.slane %v6001, 7
      %v6223 = vrot.slane %v6002, 7
      %v6224 = vsel %vm869, %v6222, %v6223
      %v6225 = vrot.slane %v6003, 7
      %v6226 = vrot.slane %v6004, 7
      %v6227 = vsel %vm869, %v6225, %v6226
      %v6228 = vrot.slane %v6005, 7
      %v6229 = vrot.slane %v6006, 7
      %v6230 = vsel %vm869, %v6228, %v6229
      %v6325 = vrot.slane %v5946, 5
      %v6326 = vrot.slane %v5944, 5
      %v6327 = vrot.slane %v5948, 5
      %v6328 = vrot.slane %v5950, 5
      %v6329 = vrot.slane %v5952, 5
      %v6330 = vrot.slane %v5954, 5
      %v6331 = vrot.slane %v5956, 5
      %v6332 = vrot.slane %v5958, 5
      %v6333 = vrot.slane %v5960, 5
      %v6334 = vrot.slane %v5962, 5
      %v6335 = vrot.slane %v5964, 5
      %v6336 = vrot.slane %v5966, 5
      %v6337 = vrot.slane %v5968, 5
      %v6338 = vrot.slane %v5970, 5
      %v6339 = vrot.slane %v5972, 5
      %v6340 = vrot.slane %v5974, 5
      %v6341 = vrot.slane %v5978, 5
      %v6342 = vrot.slane %v5976, 5
      %v6343 = vrot.slane %v5980, 5
      %v6344 = vrot.slane %v5982, 5
      %v6345 = vrot.slane %v5984, 5
      %v6346 = vrot.slane %v5986, 5
      %v6347 = vrot.slane %v5988, 5
      %v6348 = vrot.slane %v5990, 5
      %v6349 = vrot.slane %v5992, 5
      %v6350 = vrot.slane %v5994, 5
      %v6351 = vrot.slane %v5996, 5
      %v6352 = vrot.slane %v5998, 5
      %v6353 = vrot.slane %v6000, 5
      %v6354 = vrot.slane %v6002, 5
      %v6355 = vrot.slane %v6004, 5
      %v6356 = vrot.slane %v6006, 5
      %v6389 = vsel %vm869, %v6039, %v6135
      %v6390 = vsel %vm869, %v6040, %v6138
      %v6391 = vsel %vm869, %v6041, %v6141
      %v6392 = vsel %vm869, %v6042, %v6144
      %v6393 = vsel %vm869, %v6043, %v6147
      %v6394 = vsel %vm869, %v6044, %v6150
      %v6395 = vsel %vm869, %v6045, %v6153
      %v6396 = vsel %vm869, %v6046, %v6156
      %v6397 = vsel %vm869, %v6047, %v6159
      %v6398 = vsel %vm869, %v6048, %v6162
      %v6399 = vsel %vm869, %v6049, %v6165
      %v6400 = vsel %vm869, %v6050, %v6168
      %v6401 = vsel %vm869, %v6051, %v6171
      %v6402 = vsel %vm869, %v6052, %v6174
      %v6403 = vsel %vm869, %v6053, %v6177
      %v6404 = vsel %vm869, %v6054, %v6180
      %v6405 = vsel %vm869, %v6055, %v6183
      %v6406 = vsel %vm869, %v6056, %v6186
      %v6407 = vsel %vm869, %v6057, %v6189
      %v6408 = vsel %vm869, %v6058, %v6192
      %v6409 = vsel %vm869, %v6059, %v6195
      %v6410 = vsel %vm869, %v6060, %v6198
      %v6411 = vsel %vm869, %v6061, %v6201
      %v6412 = vsel %vm869, %v6062, %v6204
      %v6413 = vsel %vm869, %v6063, %v6207
      %v6414 = vsel %vm869, %v6064, %v6210
      %v6415 = vsel %vm869, %v6065, %v6213
      %v6416 = vsel %vm869, %v6066, %v6216
      %v6417 = vsel %vm869, %v6067, %v6219
      %v6418 = vsel %vm869, %v6068, %v6222
      %v6419 = vsel %vm869, %v6069, %v6225
      %v6420 = vsel %vm869, %v6070, %v6228
      %v6421 = vsel %vm869, %v6136, %v6325
      %v6422 = vsel %vm869, %v6139, %v6326
      %v6423 = vsel %vm869, %v6142, %v6327
      %v6424 = vsel %vm869, %v6145, %v6328
      %v6425 = vsel %vm869, %v6148, %v6329
      %v6426 = vsel %vm869, %v6151, %v6330
      %v6427 = vsel %vm869, %v6154, %v6331
      %v6428 = vsel %vm869, %v6157, %v6332
      %v6429 = vsel %vm869, %v6160, %v6333
      %v6430 = vsel %vm869, %v6163, %v6334
      %v6431 = vsel %vm869, %v6166, %v6335
      %v6432 = vsel %vm869, %v6169, %v6336
      %v6433 = vsel %vm869, %v6172, %v6337
      %v6434 = vsel %vm869, %v6175, %v6338
      %v6435 = vsel %vm869, %v6178, %v6339
      %v6436 = vsel %vm869, %v6181, %v6340
      %v6437 = vsel %vm869, %v6184, %v6341
      %v6438 = vsel %vm869, %v6187, %v6342
      %v6439 = vsel %vm869, %v6190, %v6343
      %v6440 = vsel %vm869, %v6193, %v6344
      %v6441 = vsel %vm869, %v6196, %v6345
      %v6442 = vsel %vm869, %v6199, %v6346
      %v6443 = vsel %vm869, %v6202, %v6347
      %v6444 = vsel %vm869, %v6205, %v6348
      %v6445 = vsel %vm869, %v6208, %v6349
      %v6446 = vsel %vm869, %v6211, %v6350
      %v6447 = vsel %vm869, %v6214, %v6351
      %v6448 = vsel %vm869, %v6217, %v6352
      %v6449 = vsel %vm869, %v6220, %v6353
      %v6450 = vsel %vm869, %v6223, %v6354
      %v6451 = vsel %vm869, %v6226, %v6355
      %v6452 = vsel %vm869, %v6229, %v6356
      %v6513 = vrot.slane %v6389, 1
      %v6514 = vrot.slane %v6137, 1
      %v6515 = vsel %vm2432, %v6513, %v6514
      %v6516 = vrot.slane %v6421, 1
      %v6517 = vsel %vm2432, %v6514, %v6516
      %v6518 = vrot.slane %v6390, 1
      %v6519 = vrot.slane %v6140, 1
      %v6520 = vsel %vm2432, %v6518, %v6519
      %v6521 = vrot.slane %v6422, 1
      %v6522 = vsel %vm2432, %v6519, %v6521
      %v6523 = vrot.slane %v6391, 1
      %v6524 = vrot.slane %v6143, 1
      %v6525 = vsel %vm2432, %v6523, %v6524
      %v6526 = vrot.slane %v6423, 1
      %v6527 = vsel %vm2432, %v6524, %v6526
      %v6528 = vrot.slane %v6392, 1
      %v6529 = vrot.slane %v6146, 1
      %v6530 = vsel %vm2432, %v6528, %v6529
      %v6531 = vrot.slane %v6424, 1
      %v6532 = vsel %vm2432, %v6529, %v6531
      %v6533 = vrot.slane %v6393, 1
      %v6534 = vrot.slane %v6149, 1
      %v6535 = vsel %vm2432, %v6533, %v6534
      %v6536 = vrot.slane %v6425, 1
      %v6537 = vsel %vm2432, %v6534, %v6536
      %v6538 = vrot.slane %v6394, 1
      %v6539 = vrot.slane %v6152, 1
      %v6540 = vsel %vm2432, %v6538, %v6539
      %v6541 = vrot.slane %v6426, 1
      %v6542 = vsel %vm2432, %v6539, %v6541
      %v6543 = vrot.slane %v6395, 1
      %v6544 = vrot.slane %v6155, 1
      %v6545 = vsel %vm2432, %v6543, %v6544
      %v6546 = vrot.slane %v6427, 1
      %v6547 = vsel %vm2432, %v6544, %v6546
      %v6548 = vrot.slane %v6396, 1
      %v6549 = vrot.slane %v6158, 1
      %v6550 = vsel %vm2432, %v6548, %v6549
      %v6551 = vrot.slane %v6428, 1
      %v6552 = vsel %vm2432, %v6549, %v6551
      %v6553 = vrot.slane %v6397, 1
      %v6554 = vrot.slane %v6161, 1
      %v6555 = vsel %vm2432, %v6553, %v6554
      %v6556 = vrot.slane %v6429, 1
      %v6557 = vsel %vm2432, %v6554, %v6556
      %v6558 = vrot.slane %v6398, 1
      %v6559 = vrot.slane %v6164, 1
      %v6560 = vsel %vm2432, %v6558, %v6559
      %v6561 = vrot.slane %v6430, 1
      %v6562 = vsel %vm2432, %v6559, %v6561
      %v6563 = vrot.slane %v6399, 1
      %v6564 = vrot.slane %v6167, 1
      %v6565 = vsel %vm2432, %v6563, %v6564
      %v6566 = vrot.slane %v6431, 1
      %v6567 = vsel %vm2432, %v6564, %v6566
      %v6568 = vrot.slane %v6400, 1
      %v6569 = vrot.slane %v6170, 1
      %v6570 = vsel %vm2432, %v6568, %v6569
      %v6571 = vrot.slane %v6432, 1
      %v6572 = vsel %vm2432, %v6569, %v6571
      %v6573 = vrot.slane %v6401, 1
      %v6574 = vrot.slane %v6173, 1
      %v6575 = vsel %vm2432, %v6573, %v6574
      %v6576 = vrot.slane %v6433, 1
      %v6577 = vsel %vm2432, %v6574, %v6576
      %v6578 = vrot.slane %v6402, 1
      %v6579 = vrot.slane %v6176, 1
      %v6580 = vsel %vm2432, %v6578, %v6579
      %v6581 = vrot.slane %v6434, 1
      %v6582 = vsel %vm2432, %v6579, %v6581
      %v6583 = vrot.slane %v6403, 1
      %v6584 = vrot.slane %v6179, 1
      %v6585 = vsel %vm2432, %v6583, %v6584
      %v6586 = vrot.slane %v6435, 1
      %v6587 = vsel %vm2432, %v6584, %v6586
      %v6588 = vrot.slane %v6405, 1
      %v6589 = vrot.slane %v6185, 1
      %v6590 = vsel %vm2432, %v6588, %v6589
      %v6591 = vrot.slane %v6437, 1
      %v6592 = vsel %vm2432, %v6589, %v6591
      %v6593 = vrot.slane %v6406, 1
      %v6594 = vrot.slane %v6188, 1
      %v6595 = vsel %vm2432, %v6593, %v6594
      %v6596 = vrot.slane %v6438, 1
      %v6597 = vsel %vm2432, %v6594, %v6596
      %v6598 = vrot.slane %v6407, 1
      %v6599 = vrot.slane %v6191, 1
      %v6600 = vsel %vm2432, %v6598, %v6599
      %v6601 = vrot.slane %v6439, 1
      %v6602 = vsel %vm2432, %v6599, %v6601
      %v6603 = vrot.slane %v6408, 1
      %v6604 = vrot.slane %v6194, 1
      %v6605 = vsel %vm2432, %v6603, %v6604
      %v6606 = vrot.slane %v6440, 1
      %v6607 = vsel %vm2432, %v6604, %v6606
      %v6608 = vrot.slane %v6409, 1
      %v6609 = vrot.slane %v6197, 1
      %v6610 = vsel %vm2432, %v6608, %v6609
      %v6611 = vrot.slane %v6441, 1
      %v6612 = vsel %vm2432, %v6609, %v6611
      %v6613 = vrot.slane %v6410, 1
      %v6614 = vrot.slane %v6200, 1
      %v6615 = vsel %vm2432, %v6613, %v6614
      %v6616 = vrot.slane %v6442, 1
      %v6617 = vsel %vm2432, %v6614, %v6616
      %v6618 = vrot.slane %v6411, 1
      %v6619 = vrot.slane %v6203, 1
      %v6620 = vsel %vm2432, %v6618, %v6619
      %v6621 = vrot.slane %v6443, 1
      %v6622 = vsel %vm2432, %v6619, %v6621
      %v6623 = vrot.slane %v6412, 1
      %v6624 = vrot.slane %v6206, 1
      %v6625 = vsel %vm2432, %v6623, %v6624
      %v6626 = vrot.slane %v6444, 1
      %v6627 = vsel %vm2432, %v6624, %v6626
      %v6628 = vrot.slane %v6413, 1
      %v6629 = vrot.slane %v6209, 1
      %v6630 = vsel %vm2432, %v6628, %v6629
      %v6631 = vrot.slane %v6445, 1
      %v6632 = vsel %vm2432, %v6629, %v6631
      %v6633 = vrot.slane %v6414, 1
      %v6634 = vrot.slane %v6212, 1
      %v6635 = vsel %vm2432, %v6633, %v6634
      %v6636 = vrot.slane %v6446, 1
      %v6637 = vsel %vm2432, %v6634, %v6636
      %v6638 = vrot.slane %v6415, 1
      %v6639 = vrot.slane %v6215, 1
      %v6640 = vsel %vm2432, %v6638, %v6639
      %v6641 = vrot.slane %v6447, 1
      %v6642 = vsel %vm2432, %v6639, %v6641
      %v6643 = vrot.slane %v6416, 1
      %v6644 = vrot.slane %v6218, 1
      %v6645 = vsel %vm2432, %v6643, %v6644
      %v6646 = vrot.slane %v6448, 1
      %v6647 = vsel %vm2432, %v6644, %v6646
      %v6648 = vrot.slane %v6417, 1
      %v6649 = vrot.slane %v6221, 1
      %v6650 = vsel %vm2432, %v6648, %v6649
      %v6651 = vrot.slane %v6449, 1
      %v6652 = vsel %vm2432, %v6649, %v6651
      %v6653 = vrot.slane %v6418, 1
      %v6654 = vrot.slane %v6224, 1
      %v6655 = vsel %vm2432, %v6653, %v6654
      %v6656 = vrot.slane %v6450, 1
      %v6657 = vsel %vm2432, %v6654, %v6656
      %v6658 = vrot.slane %v6419, 1
      %v6659 = vrot.slane %v6227, 1
      %v6660 = vsel %vm2432, %v6658, %v6659
      %v6661 = vrot.slane %v6451, 1
      %v6662 = vsel %vm2432, %v6659, %v6661
      %6663 = vrot.lane.b32.xlu0 %v6515, 8
      %v6664 = vpop.permute.xlu0 %6663
      %6665 = vrot.lane.b32.xlu0 %v6517, 8
      %v6666 = vpop.permute.xlu0 %6665
      %6667 = vrot.lane.b32.xlu0 %v6520, 8
      %v6668 = vpop.permute.xlu0 %6667
      %6669 = vrot.lane.b32.xlu0 %v6522, 8
      %v6670 = vpop.permute.xlu0 %6669
      %6671 = vrot.lane.b32.xlu0 %v6525, 8
      %v6672 = vpop.permute.xlu0 %6671
      %6673 = vrot.lane.b32.xlu0 %v6527, 8
      %v6674 = vpop.permute.xlu0 %6673
      %6675 = vrot.lane.b32.xlu0 %v6530, 8
      %v6676 = vpop.permute.xlu0 %6675
      %6677 = vrot.lane.b32.xlu0 %v6532, 8
      %v6678 = vpop.permute.xlu0 %6677
      %6679 = vrot.lane.b32.xlu0 %v6535, 8
      %v6680 = vpop.permute.xlu0 %6679
      %6681 = vrot.lane.b32.xlu0 %v6537, 8
      %v6682 = vpop.permute.xlu0 %6681
      %6683 = vrot.lane.b32.xlu0 %v6540, 8
      %v6684 = vpop.permute.xlu0 %6683
      %6685 = vrot.lane.b32.xlu0 %v6542, 8
      %v6686 = vpop.permute.xlu0 %6685
      %6687 = vrot.lane.b32.xlu0 %v6545, 8
      %v6688 = vpop.permute.xlu0 %6687
      %6689 = vrot.lane.b32.xlu0 %v6547, 8
      %v6690 = vpop.permute.xlu0 %6689
      %6691 = vrot.lane.b32.xlu0 %v6550, 8
      %v6692 = vpop.permute.xlu0 %6691
      %6693 = vrot.lane.b32.xlu0 %v6552, 8
      %v6694 = vpop.permute.xlu0 %6693
      %6695 = vrot.lane.b32.xlu0 %v6555, 8
      %v6696 = vpop.permute.xlu0 %6695
      %6697 = vrot.lane.b32.xlu0 %v6557, 8
      %v6698 = vpop.permute.xlu0 %6697
      %6699 = vrot.lane.b32.xlu0 %v6560, 8
      %v6700 = vpop.permute.xlu0 %6699
      %6701 = vrot.lane.b32.xlu0 %v6562, 8
      %v6702 = vpop.permute.xlu0 %6701
      %6703 = vrot.lane.b32.xlu0 %v6565, 8
      %v6704 = vpop.permute.xlu0 %6703
      %6705 = vrot.lane.b32.xlu0 %v6567, 8
      %v6706 = vpop.permute.xlu0 %6705
      %6707 = vrot.lane.b32.xlu0 %v6570, 8
      %v6708 = vpop.permute.xlu0 %6707
      %6709 = vrot.lane.b32.xlu0 %v6572, 8
      %v6710 = vpop.permute.xlu0 %6709
      %6711 = vrot.lane.b32.xlu0 %v6575, 8
      %v6712 = vpop.permute.xlu0 %6711
      %6713 = vrot.lane.b32.xlu0 %v6577, 8
      %v6714 = vpop.permute.xlu0 %6713
      %6715 = vrot.lane.b32.xlu0 %v6580, 8
      %v6716 = vpop.permute.xlu0 %6715
      %6717 = vrot.lane.b32.xlu0 %v6582, 8
      %v6718 = vpop.permute.xlu0 %6717
      %6719 = vrot.lane.b32.xlu0 %v6585, 8
      %v6720 = vpop.permute.xlu0 %6719
      %6721 = vrot.lane.b32.xlu0 %v6587, 8
      %v6722 = vpop.permute.xlu0 %6721
      %6723 = vrot.lane.b32.xlu0 %v6590, 8
      %v6724 = vpop.permute.xlu0 %6723
      %6725 = vrot.lane.b32.xlu0 %v6592, 8
      %v6726 = vpop.permute.xlu0 %6725
      %6727 = vrot.lane.b32.xlu0 %v6595, 8
      %v6728 = vpop.permute.xlu0 %6727
      %6729 = vrot.lane.b32.xlu0 %v6597, 8
      %v6730 = vpop.permute.xlu0 %6729
      %6731 = vrot.lane.b32.xlu0 %v6600, 8
      %v6732 = vpop.permute.xlu0 %6731
      %6733 = vrot.lane.b32.xlu0 %v6602, 8
      %v6734 = vpop.permute.xlu0 %6733
      %6735 = vrot.lane.b32.xlu0 %v6605, 8
      %v6736 = vpop.permute.xlu0 %6735
      %6737 = vrot.lane.b32.xlu0 %v6607, 8
      %v6738 = vpop.permute.xlu0 %6737
      %6739 = vrot.lane.b32.xlu0 %v6610, 8
      %v6740 = vpop.permute.xlu0 %6739
      %6741 = vrot.lane.b32.xlu0 %v6612, 8
      %v6742 = vpop.permute.xlu0 %6741
      %6743 = vrot.lane.b32.xlu0 %v6615, 8
      %v6744 = vpop.permute.xlu0 %6743
      %6745 = vrot.lane.b32.xlu0 %v6617, 8
      %v6746 = vpop.permute.xlu0 %6745
      %6747 = vrot.lane.b32.xlu0 %v6620, 8
      %v6748 = vpop.permute.xlu0 %6747
      %6749 = vrot.lane.b32.xlu0 %v6622, 8
      %v6750 = vpop.permute.xlu0 %6749
      %6751 = vrot.lane.b32.xlu0 %v6625, 8
      %v6752 = vpop.permute.xlu0 %6751
      %6753 = vrot.lane.b32.xlu0 %v6627, 8
      %v6754 = vpop.permute.xlu0 %6753
      %6755 = vrot.lane.b32.xlu0 %v6630, 8
      %v6756 = vpop.permute.xlu0 %6755
      %6757 = vrot.lane.b32.xlu0 %v6632, 8
      %v6758 = vpop.permute.xlu0 %6757
      %6759 = vrot.lane.b32.xlu0 %v6635, 8
      %v6760 = vpop.permute.xlu0 %6759
      %6761 = vrot.lane.b32.xlu0 %v6637, 8
      %v6762 = vpop.permute.xlu0 %6761
      %6763 = vrot.lane.b32.xlu0 %v6640, 8
      %v6764 = vpop.permute.xlu0 %6763
      %6765 = vrot.lane.b32.xlu0 %v6642, 8
      %v6766 = vpop.permute.xlu0 %6765
      %6767 = vrot.lane.b32.xlu0 %v6645, 8
      %v6768 = vpop.permute.xlu0 %6767
      %6769 = vrot.lane.b32.xlu0 %v6647, 8
      %v6770 = vpop.permute.xlu0 %6769
      %6771 = vrot.lane.b32.xlu0 %v6650, 8
      %v6772 = vpop.permute.xlu0 %6771
      %6773 = vrot.lane.b32.xlu0 %v6652, 8
      %v6774 = vpop.permute.xlu0 %6773
      %6775 = vrot.lane.b32.xlu0 %v6655, 8
      %v6776 = vpop.permute.xlu0 %6775
      %6777 = vrot.lane.b32.xlu0 %v6657, 8
      %v6778 = vpop.permute.xlu0 %6777
      %6779 = vrot.lane.b32.xlu0 %v6660, 8
      %v6780 = vpop.permute.xlu0 %6779
      %6781 = vrot.lane.b32.xlu0 %v6662, 8
      %v6782 = vpop.permute.xlu0 %6781
      %v6843 = vrot.slane %v6389, 2
      %v6844 = vrot.slane %v6137, 2
      %v6845 = vsel %vm2763, %v6843, %v6844
      %v6846 = vrot.slane %v6421, 2
      %v6847 = vsel %vm2763, %v6844, %v6846
      %v6848 = vrot.slane %v6390, 2
      %v6849 = vrot.slane %v6140, 2
      %v6850 = vsel %vm2763, %v6848, %v6849
      %v6851 = vrot.slane %v6422, 2
      %v6852 = vsel %vm2763, %v6849, %v6851
      %v6853 = vrot.slane %v6391, 2
      %v6854 = vrot.slane %v6143, 2
      %v6855 = vsel %vm2763, %v6853, %v6854
      %v6856 = vrot.slane %v6423, 2
      %v6857 = vsel %vm2763, %v6854, %v6856
      %v6858 = vrot.slane %v6392, 2
      %v6859 = vrot.slane %v6146, 2
      %v6860 = vsel %vm2763, %v6858, %v6859
      %v6861 = vrot.slane %v6424, 2
      %v6862 = vsel %vm2763, %v6859, %v6861
      %v6863 = vrot.slane %v6393, 2
      %v6864 = vrot.slane %v6149, 2
      %v6865 = vsel %vm2763, %v6863, %v6864
      %v6866 = vrot.slane %v6425, 2
      %v6867 = vsel %vm2763, %v6864, %v6866
      %v6868 = vrot.slane %v6394, 2
      %v6869 = vrot.slane %v6152, 2
      %v6870 = vsel %vm2763, %v6868, %v6869
      %v6871 = vrot.slane %v6426, 2
      %v6872 = vsel %vm2763, %v6869, %v6871
      %v6873 = vrot.slane %v6395, 2
      %v6874 = vrot.slane %v6155, 2
      %v6875 = vsel %vm2763, %v6873, %v6874
      %v6876 = vrot.slane %v6427, 2
      %v6877 = vsel %vm2763, %v6874, %v6876
      %v6878 = vrot.slane %v6396, 2
      %v6879 = vrot.slane %v6158, 2
      %v6880 = vsel %vm2763, %v6878, %v6879
      %v6881 = vrot.slane %v6428, 2
      %v6882 = vsel %vm2763, %v6879, %v6881
      %v6883 = vrot.slane %v6397, 2
      %v6884 = vrot.slane %v6161, 2
      %v6885 = vsel %vm2763, %v6883, %v6884
      %v6886 = vrot.slane %v6429, 2
      %v6887 = vsel %vm2763, %v6884, %v6886
      %v6888 = vrot.slane %v6398, 2
      %v6889 = vrot.slane %v6164, 2
      %v6890 = vsel %vm2763, %v6888, %v6889
      %v6891 = vrot.slane %v6430, 2
      %v6892 = vsel %vm2763, %v6889, %v6891
      %v6893 = vrot.slane %v6399, 2
      %v6894 = vrot.slane %v6167, 2
      %v6895 = vsel %vm2763, %v6893, %v6894
      %v6896 = vrot.slane %v6431, 2
      %v6897 = vsel %vm2763, %v6894, %v6896
      %v6898 = vrot.slane %v6400, 2
      %v6899 = vrot.slane %v6170, 2
      %v6900 = vsel %vm2763, %v6898, %v6899
      %v6901 = vrot.slane %v6432, 2
      %v6902 = vsel %vm2763, %v6899, %v6901
      %v6903 = vrot.slane %v6401, 2
      %v6904 = vrot.slane %v6173, 2
      %v6905 = vsel %vm2763, %v6903, %v6904
      %v6906 = vrot.slane %v6433, 2
      %v6907 = vsel %vm2763, %v6904, %v6906
      %v6908 = vrot.slane %v6402, 2
      %v6909 = vrot.slane %v6176, 2
      %v6910 = vsel %vm2763, %v6908, %v6909
      %v6911 = vrot.slane %v6434, 2
      %v6912 = vsel %vm2763, %v6909, %v6911
      %v6913 = vrot.slane %v6403, 2
      %v6914 = vrot.slane %v6179, 2
      %v6915 = vsel %vm2763, %v6913, %v6914
      %v6916 = vrot.slane %v6435, 2
      %v6917 = vsel %vm2763, %v6914, %v6916
      %v6918 = vrot.slane %v6405, 2
      %v6919 = vrot.slane %v6185, 2
      %v6920 = vsel %vm2763, %v6918, %v6919
      %v6921 = vrot.slane %v6437, 2
      %v6922 = vsel %vm2763, %v6919, %v6921
      %v6923 = vrot.slane %v6406, 2
      %v6924 = vrot.slane %v6188, 2
      %v6925 = vsel %vm2763, %v6923, %v6924
      %v6926 = vrot.slane %v6438, 2
      %v6927 = vsel %vm2763, %v6924, %v6926
      %v6928 = vrot.slane %v6407, 2
      %v6929 = vrot.slane %v6191, 2
      %v6930 = vsel %vm2763, %v6928, %v6929
      %v6931 = vrot.slane %v6439, 2
      %v6932 = vsel %vm2763, %v6929, %v6931
      %v6933 = vrot.slane %v6408, 2
      %v6934 = vrot.slane %v6194, 2
      %v6935 = vsel %vm2763, %v6933, %v6934
      %v6936 = vrot.slane %v6440, 2
      %v6937 = vsel %vm2763, %v6934, %v6936
      %v6938 = vrot.slane %v6409, 2
      %v6939 = vrot.slane %v6197, 2
      %v6940 = vsel %vm2763, %v6938, %v6939
      %v6941 = vrot.slane %v6441, 2
      %v6942 = vsel %vm2763, %v6939, %v6941
      %v6943 = vrot.slane %v6410, 2
      %v6944 = vrot.slane %v6200, 2
      %v6945 = vsel %vm2763, %v6943, %v6944
      %v6946 = vrot.slane %v6442, 2
      %v6947 = vsel %vm2763, %v6944, %v6946
      %v6948 = vrot.slane %v6411, 2
      %v6949 = vrot.slane %v6203, 2
      %v6950 = vsel %vm2763, %v6948, %v6949
      %v6951 = vrot.slane %v6443, 2
      %v6952 = vsel %vm2763, %v6949, %v6951
      %v6953 = vrot.slane %v6412, 2
      %v6954 = vrot.slane %v6206, 2
      %v6955 = vsel %vm2763, %v6953, %v6954
      %v6956 = vrot.slane %v6444, 2
      %v6957 = vsel %vm2763, %v6954, %v6956
      %v6958 = vrot.slane %v6413, 2
      %v6959 = vrot.slane %v6209, 2
      %v6960 = vsel %vm2763, %v6958, %v6959
      %v6961 = vrot.slane %v6445, 2
      %v6962 = vsel %vm2763, %v6959, %v6961
      %v6963 = vrot.slane %v6414, 2
      %v6964 = vrot.slane %v6212, 2
      %v6965 = vsel %vm2763, %v6963, %v6964
      %v6966 = vrot.slane %v6446, 2
      %v6967 = vsel %vm2763, %v6964, %v6966
      %v6968 = vrot.slane %v6415, 2
      %v6969 = vrot.slane %v6215, 2
      %v6970 = vsel %vm2763, %v6968, %v6969
      %v6971 = vrot.slane %v6447, 2
      %v6972 = vsel %vm2763, %v6969, %v6971
      %v6973 = vrot.slane %v6416, 2
      %v6974 = vrot.slane %v6218, 2
      %v6975 = vsel %vm2763, %v6973, %v6974
      %v6976 = vrot.slane %v6448, 2
      %v6977 = vsel %vm2763, %v6974, %v6976
      %v6978 = vrot.slane %v6417, 2
      %v6979 = vrot.slane %v6221, 2
      %v6980 = vsel %vm2763, %v6978, %v6979
      %v6981 = vrot.slane %v6449, 2
      %v6982 = vsel %vm2763, %v6979, %v6981
      %v6983 = vrot.slane %v6418, 2
      %v6984 = vrot.slane %v6224, 2
      %v6985 = vsel %vm2763, %v6983, %v6984
      %v6986 = vrot.slane %v6450, 2
      %v6987 = vsel %vm2763, %v6984, %v6986
      %v6988 = vrot.slane %v6419, 2
      %v6989 = vrot.slane %v6227, 2
      %v6990 = vsel %vm2763, %v6988, %v6989
      %v6991 = vrot.slane %v6451, 2
      %v6992 = vsel %vm2763, %v6989, %v6991
      %6993 = vrot.lane.b32.xlu0 %v6845, 16
      %v6994 = vpop.permute.xlu0 %6993
      %6995 = vrot.lane.b32.xlu0 %v6847, 16
      %v6996 = vpop.permute.xlu0 %6995
      %6997 = vrot.lane.b32.xlu0 %v6850, 16
      %v6998 = vpop.permute.xlu0 %6997
      %6999 = vrot.lane.b32.xlu0 %v6852, 16
      %v7000 = vpop.permute.xlu0 %6999
      %7001 = vrot.lane.b32.xlu0 %v6855, 16
      %v7002 = vpop.permute.xlu0 %7001
      %7003 = vrot.lane.b32.xlu0 %v6857, 16
      %v7004 = vpop.permute.xlu0 %7003
      %7005 = vrot.lane.b32.xlu0 %v6860, 16
      %v7006 = vpop.permute.xlu0 %7005
      %7007 = vrot.lane.b32.xlu0 %v6862, 16
      %v7008 = vpop.permute.xlu0 %7007
      %7009 = vrot.lane.b32.xlu0 %v6865, 16
      %v7010 = vpop.permute.xlu0 %7009
      %7011 = vrot.lane.b32.xlu0 %v6867, 16
      %v7012 = vpop.permute.xlu0 %7011
      %7013 = vrot.lane.b32.xlu0 %v6870, 16
      %v7014 = vpop.permute.xlu0 %7013
      %7015 = vrot.lane.b32.xlu0 %v6872, 16
      %v7016 = vpop.permute.xlu0 %7015
      %7017 = vrot.lane.b32.xlu0 %v6875, 16
      %v7018 = vpop.permute.xlu0 %7017
      %7019 = vrot.lane.b32.xlu0 %v6877, 16
      %v7020 = vpop.permute.xlu0 %7019
      %7021 = vrot.lane.b32.xlu0 %v6880, 16
      %v7022 = vpop.permute.xlu0 %7021
      %7023 = vrot.lane.b32.xlu0 %v6882, 16
      %v7024 = vpop.permute.xlu0 %7023
      %7025 = vrot.lane.b32.xlu0 %v6885, 16
      %v7026 = vpop.permute.xlu0 %7025
      %7027 = vrot.lane.b32.xlu0 %v6887, 16
      %v7028 = vpop.permute.xlu0 %7027
      %7029 = vrot.lane.b32.xlu0 %v6890, 16
      %v7030 = vpop.permute.xlu0 %7029
      %7031 = vrot.lane.b32.xlu0 %v6892, 16
      %v7032 = vpop.permute.xlu0 %7031
      %7033 = vrot.lane.b32.xlu0 %v6895, 16
      %v7034 = vpop.permute.xlu0 %7033
      %7035 = vrot.lane.b32.xlu0 %v6897, 16
      %v7036 = vpop.permute.xlu0 %7035
      %7037 = vrot.lane.b32.xlu0 %v6900, 16
      %v7038 = vpop.permute.xlu0 %7037
      %7039 = vrot.lane.b32.xlu0 %v6902, 16
      %v7040 = vpop.permute.xlu0 %7039
      %7041 = vrot.lane.b32.xlu0 %v6905, 16
      %v7042 = vpop.permute.xlu0 %7041
      %7043 = vrot.lane.b32.xlu0 %v6907, 16
      %v7044 = vpop.permute.xlu0 %7043
      %7045 = vrot.lane.b32.xlu0 %v6910, 16
      %v7046 = vpop.permute.xlu0 %7045
      %7047 = vrot.lane.b32.xlu0 %v6912, 16
      %v7048 = vpop.permute.xlu0 %7047
      %7049 = vrot.lane.b32.xlu0 %v6915, 16
      %v7050 = vpop.permute.xlu0 %7049
      %7051 = vrot.lane.b32.xlu0 %v6917, 16
      %v7052 = vpop.permute.xlu0 %7051
      %7053 = vrot.lane.b32.xlu0 %v6920, 16
      %v7054 = vpop.permute.xlu0 %7053
      %7055 = vrot.lane.b32.xlu0 %v6922, 16
      %v7056 = vpop.permute.xlu0 %7055
      %7057 = vrot.lane.b32.xlu0 %v6925, 16
      %v7058 = vpop.permute.xlu0 %7057
      %7059 = vrot.lane.b32.xlu0 %v6927, 16
      %v7060 = vpop.permute.xlu0 %7059
      %7061 = vrot.lane.b32.xlu0 %v6930, 16
      %v7062 = vpop.permute.xlu0 %7061
      %7063 = vrot.lane.b32.xlu0 %v6932, 16
      %v7064 = vpop.permute.xlu0 %7063
      %7065 = vrot.lane.b32.xlu0 %v6935, 16
      %v7066 = vpop.permute.xlu0 %7065
      %7067 = vrot.lane.b32.xlu0 %v6937, 16
      %v7068 = vpop.permute.xlu0 %7067
      %7069 = vrot.lane.b32.xlu0 %v6940, 16
      %v7070 = vpop.permute.xlu0 %7069
      %7071 = vrot.lane.b32.xlu0 %v6942, 16
      %v7072 = vpop.permute.xlu0 %7071
      %7073 = vrot.lane.b32.xlu0 %v6945, 16
      %v7074 = vpop.permute.xlu0 %7073
      %7075 = vrot.lane.b32.xlu0 %v6947, 16
      %v7076 = vpop.permute.xlu0 %7075
      %7077 = vrot.lane.b32.xlu0 %v6950, 16
      %v7078 = vpop.permute.xlu0 %7077
      %7079 = vrot.lane.b32.xlu0 %v6952, 16
      %v7080 = vpop.permute.xlu0 %7079
      %7081 = vrot.lane.b32.xlu0 %v6955, 16
      %v7082 = vpop.permute.xlu0 %7081
      %7083 = vrot.lane.b32.xlu0 %v6957, 16
      %v7084 = vpop.permute.xlu0 %7083
      %7085 = vrot.lane.b32.xlu0 %v6960, 16
      %v7086 = vpop.permute.xlu0 %7085
      %7087 = vrot.lane.b32.xlu0 %v6962, 16
      %v7088 = vpop.permute.xlu0 %7087
      %7089 = vrot.lane.b32.xlu0 %v6965, 16
      %v7090 = vpop.permute.xlu0 %7089
      %7091 = vrot.lane.b32.xlu0 %v6967, 16
      %v7092 = vpop.permute.xlu0 %7091
      %7093 = vrot.lane.b32.xlu0 %v6970, 16
      %v7094 = vpop.permute.xlu0 %7093
      %7095 = vrot.lane.b32.xlu0 %v6972, 16
      %v7096 = vpop.permute.xlu0 %7095
      %7097 = vrot.lane.b32.xlu0 %v6975, 16
      %v7098 = vpop.permute.xlu0 %7097
      %7099 = vrot.lane.b32.xlu0 %v6977, 16
      %v7100 = vpop.permute.xlu0 %7099
      %7101 = vrot.lane.b32.xlu0 %v6980, 16
      %v7102 = vpop.permute.xlu0 %7101
      %7103 = vrot.lane.b32.xlu0 %v6982, 16
      %v7104 = vpop.permute.xlu0 %7103
      %7105 = vrot.lane.b32.xlu0 %v6985, 16
      %v7106 = vpop.permute.xlu0 %7105
      %7107 = vrot.lane.b32.xlu0 %v6987, 16
      %v7108 = vpop.permute.xlu0 %7107
      %7109 = vrot.lane.b32.xlu0 %v6990, 16
      %v7110 = vpop.permute.xlu0 %7109
      %7111 = vrot.lane.b32.xlu0 %v6992, 16
      %v7112 = vpop.permute.xlu0 %7111
      %7175 = vrot.lane.b32.xlu0 %v6390, 24
      %v7176 = vpop.permute.xlu0 %7175
      %7177 = vrot.lane.b32.xlu0 %v6140, 24
      %v7178 = vpop.permute.xlu0 %7177
      %7179 = vrot.lane.b32.xlu0 %v6389, 24
      %v7180 = vpop.permute.xlu0 %7179
      %7181 = vrot.lane.b32.xlu0 %v6137, 24
      %v7182 = vpop.permute.xlu0 %7181
      %7183 = vrot.lane.b32.xlu0 %v6391, 24
      %v7184 = vpop.permute.xlu0 %7183
      %7185 = vrot.lane.b32.xlu0 %v6143, 24
      %v7186 = vpop.permute.xlu0 %7185
      %7187 = vrot.lane.b32.xlu0 %v6392, 24
      %v7188 = vpop.permute.xlu0 %7187
      %7189 = vrot.lane.b32.xlu0 %v6146, 24
      %v7190 = vpop.permute.xlu0 %7189
      %7191 = vrot.lane.b32.xlu0 %v6393, 24
      %v7192 = vpop.permute.xlu0 %7191
      %7193 = vrot.lane.b32.xlu0 %v6149, 24
      %v7194 = vpop.permute.xlu0 %7193
      %7195 = vrot.lane.b32.xlu0 %v6394, 24
      %v7196 = vpop.permute.xlu0 %7195
      %7197 = vrot.lane.b32.xlu0 %v6152, 24
      %v7198 = vpop.permute.xlu0 %7197
      %7199 = vrot.lane.b32.xlu0 %v6395, 24
      %v7200 = vpop.permute.xlu0 %7199
      %7201 = vrot.lane.b32.xlu0 %v6155, 24
      %v7202 = vpop.permute.xlu0 %7201
      %7203 = vrot.lane.b32.xlu0 %v6396, 24
      %v7204 = vpop.permute.xlu0 %7203
      %7205 = vrot.lane.b32.xlu0 %v6158, 24
      %v7206 = vpop.permute.xlu0 %7205
      %7207 = vrot.lane.b32.xlu0 %v6397, 24
      %v7208 = vpop.permute.xlu0 %7207
      %7209 = vrot.lane.b32.xlu0 %v6161, 24
      %v7210 = vpop.permute.xlu0 %7209
      %7211 = vrot.lane.b32.xlu0 %v6398, 24
      %v7212 = vpop.permute.xlu0 %7211
      %7213 = vrot.lane.b32.xlu0 %v6164, 24
      %v7214 = vpop.permute.xlu0 %7213
      %7215 = vrot.lane.b32.xlu0 %v6399, 24
      %v7216 = vpop.permute.xlu0 %7215
      %7217 = vrot.lane.b32.xlu0 %v6167, 24
      %v7218 = vpop.permute.xlu0 %7217
      %7219 = vrot.lane.b32.xlu0 %v6400, 24
      %v7220 = vpop.permute.xlu0 %7219
      %7221 = vrot.lane.b32.xlu0 %v6170, 24
      %v7222 = vpop.permute.xlu0 %7221
      %7223 = vrot.lane.b32.xlu0 %v6401, 24
      %v7224 = vpop.permute.xlu0 %7223
      %7225 = vrot.lane.b32.xlu0 %v6173, 24
      %v7226 = vpop.permute.xlu0 %7225
      %7227 = vrot.lane.b32.xlu0 %v6402, 24
      %v7228 = vpop.permute.xlu0 %7227
      %7229 = vrot.lane.b32.xlu0 %v6176, 24
      %v7230 = vpop.permute.xlu0 %7229
      %7231 = vrot.lane.b32.xlu0 %v6403, 24
      %v7232 = vpop.permute.xlu0 %7231
      %7233 = vrot.lane.b32.xlu0 %v6179, 24
      %v7234 = vpop.permute.xlu0 %7233
      %7235 = vrot.lane.b32.xlu0 %v6404, 24
      %v7236 = vpop.permute.xlu0 %7235
      %7237 = vrot.lane.b32.xlu0 %v6182, 24
      %v7238 = vpop.permute.xlu0 %7237
      %7239 = vrot.lane.b32.xlu0 %v6406, 24
      %v7240 = vpop.permute.xlu0 %7239
      %7241 = vrot.lane.b32.xlu0 %v6188, 24
      %v7242 = vpop.permute.xlu0 %7241
      %7243 = vrot.lane.b32.xlu0 %v6405, 24
      %v7244 = vpop.permute.xlu0 %7243
      %7245 = vrot.lane.b32.xlu0 %v6185, 24
      %v7246 = vpop.permute.xlu0 %7245
      %7247 = vrot.lane.b32.xlu0 %v6407, 24
      %v7248 = vpop.permute.xlu0 %7247
      %7249 = vrot.lane.b32.xlu0 %v6191, 24
      %v7250 = vpop.permute.xlu0 %7249
      %7251 = vrot.lane.b32.xlu0 %v6408, 24
      %v7252 = vpop.permute.xlu0 %7251
      %7253 = vrot.lane.b32.xlu0 %v6194, 24
      %v7254 = vpop.permute.xlu0 %7253
      %7255 = vrot.lane.b32.xlu0 %v6409, 24
      %v7256 = vpop.permute.xlu0 %7255
      %7257 = vrot.lane.b32.xlu0 %v6197, 24
      %v7258 = vpop.permute.xlu0 %7257
      %7259 = vrot.lane.b32.xlu0 %v6410, 24
      %v7260 = vpop.permute.xlu0 %7259
      %7261 = vrot.lane.b32.xlu0 %v6200, 24
      %v7262 = vpop.permute.xlu0 %7261
      %7263 = vrot.lane.b32.xlu0 %v6411, 24
      %v7264 = vpop.permute.xlu0 %7263
      %7265 = vrot.lane.b32.xlu0 %v6203, 24
      %v7266 = vpop.permute.xlu0 %7265
      %7267 = vrot.lane.b32.xlu0 %v6412, 24
      %v7268 = vpop.permute.xlu0 %7267
      %7269 = vrot.lane.b32.xlu0 %v6206, 24
      %v7270 = vpop.permute.xlu0 %7269
      %7271 = vrot.lane.b32.xlu0 %v6413, 24
      %v7272 = vpop.permute.xlu0 %7271
      %7273 = vrot.lane.b32.xlu0 %v6209, 24
      %v7274 = vpop.permute.xlu0 %7273
      %7275 = vrot.lane.b32.xlu0 %v6414, 24
      %v7276 = vpop.permute.xlu0 %7275
      %7277 = vrot.lane.b32.xlu0 %v6212, 24
      %v7278 = vpop.permute.xlu0 %7277
      %7279 = vrot.lane.b32.xlu0 %v6415, 24
      %v7280 = vpop.permute.xlu0 %7279
      %7281 = vrot.lane.b32.xlu0 %v6215, 24
      %v7282 = vpop.permute.xlu0 %7281
      %7283 = vrot.lane.b32.xlu0 %v6416, 24
      %v7284 = vpop.permute.xlu0 %7283
      %7285 = vrot.lane.b32.xlu0 %v6218, 24
      %v7286 = vpop.permute.xlu0 %7285
      %7287 = vrot.lane.b32.xlu0 %v6417, 24
      %v7288 = vpop.permute.xlu0 %7287
      %7289 = vrot.lane.b32.xlu0 %v6221, 24
      %v7290 = vpop.permute.xlu0 %7289
      %7291 = vrot.lane.b32.xlu0 %v6418, 24
      %v7292 = vpop.permute.xlu0 %7291
      %7293 = vrot.lane.b32.xlu0 %v6224, 24
      %v7294 = vpop.permute.xlu0 %7293
      %7295 = vrot.lane.b32.xlu0 %v6419, 24
      %v7296 = vpop.permute.xlu0 %7295
      %7297 = vrot.lane.b32.xlu0 %v6227, 24
      %v7298 = vpop.permute.xlu0 %7297
      %7299 = vrot.lane.b32.xlu0 %v6420, 24
      %v7300 = vpop.permute.xlu0 %7299
      %7301 = vrot.lane.b32.xlu0 %v6230, 24
      %v7302 = vpop.permute.xlu0 %7301
      %v7369 = vrot.slane %v6404, 1
      %v7370 = vrot.slane %v6182, 1
      %v7371 = vsel %vm2432, %v7369, %v7370
      %v7372 = vrot.slane %v6436, 1
      %v7373 = vsel %vm2432, %v7370, %v7372
      %v7374 = vrot.slane %v6420, 1
      %v7375 = vrot.slane %v6230, 1
      %v7376 = vsel %vm2432, %v7374, %v7375
      %v7377 = vrot.slane %v6452, 1
      %v7378 = vsel %vm2432, %v7375, %v7377
      %7379 = vrot.lane.b32.xlu0 %v6520, 32
      %v7380 = vpop.permute.xlu0 %7379
      %7381 = vrot.lane.b32.xlu0 %v6522, 32
      %v7382 = vpop.permute.xlu0 %7381
      %7383 = vrot.lane.b32.xlu0 %v6515, 32
      %v7384 = vpop.permute.xlu0 %7383
      %7385 = vrot.lane.b32.xlu0 %v6517, 32
      %v7386 = vpop.permute.xlu0 %7385
      %7387 = vrot.lane.b32.xlu0 %v6525, 32
      %v7388 = vpop.permute.xlu0 %7387
      %7389 = vrot.lane.b32.xlu0 %v6527, 32
      %v7390 = vpop.permute.xlu0 %7389
      %7391 = vrot.lane.b32.xlu0 %v6530, 32
      %v7392 = vpop.permute.xlu0 %7391
      %7393 = vrot.lane.b32.xlu0 %v6532, 32
      %v7394 = vpop.permute.xlu0 %7393
      %7395 = vrot.lane.b32.xlu0 %v6535, 32
      %v7396 = vpop.permute.xlu0 %7395
      %7397 = vrot.lane.b32.xlu0 %v6537, 32
      %v7398 = vpop.permute.xlu0 %7397
      %7399 = vrot.lane.b32.xlu0 %v6540, 32
      %v7400 = vpop.permute.xlu0 %7399
      %7401 = vrot.lane.b32.xlu0 %v6542, 32
      %v7402 = vpop.permute.xlu0 %7401
      %7403 = vrot.lane.b32.xlu0 %v6545, 32
      %v7404 = vpop.permute.xlu0 %7403
      %7405 = vrot.lane.b32.xlu0 %v6547, 32
      %v7406 = vpop.permute.xlu0 %7405
      %7407 = vrot.lane.b32.xlu0 %v6550, 32
      %v7408 = vpop.permute.xlu0 %7407
      %7409 = vrot.lane.b32.xlu0 %v6552, 32
      %v7410 = vpop.permute.xlu0 %7409
      %7411 = vrot.lane.b32.xlu0 %v6555, 32
      %v7412 = vpop.permute.xlu0 %7411
      %7413 = vrot.lane.b32.xlu0 %v6557, 32
      %v7414 = vpop.permute.xlu0 %7413
      %7415 = vrot.lane.b32.xlu0 %v6560, 32
      %v7416 = vpop.permute.xlu0 %7415
      %7417 = vrot.lane.b32.xlu0 %v6562, 32
      %v7418 = vpop.permute.xlu0 %7417
      %7419 = vrot.lane.b32.xlu0 %v6565, 32
      %v7420 = vpop.permute.xlu0 %7419
      %7421 = vrot.lane.b32.xlu0 %v6567, 32
      %v7422 = vpop.permute.xlu0 %7421
      %7423 = vrot.lane.b32.xlu0 %v6570, 32
      %v7424 = vpop.permute.xlu0 %7423
      %7425 = vrot.lane.b32.xlu0 %v6572, 32
      %v7426 = vpop.permute.xlu0 %7425
      %7427 = vrot.lane.b32.xlu0 %v6575, 32
      %v7428 = vpop.permute.xlu0 %7427
      %7429 = vrot.lane.b32.xlu0 %v6577, 32
      %v7430 = vpop.permute.xlu0 %7429
      %7431 = vrot.lane.b32.xlu0 %v6580, 32
      %v7432 = vpop.permute.xlu0 %7431
      %7433 = vrot.lane.b32.xlu0 %v6582, 32
      %v7434 = vpop.permute.xlu0 %7433
      %7435 = vrot.lane.b32.xlu0 %v6585, 32
      %v7436 = vpop.permute.xlu0 %7435
      %7437 = vrot.lane.b32.xlu0 %v6587, 32
      %v7438 = vpop.permute.xlu0 %7437
      %7439 = vrot.lane.b32.xlu0 %v7371, 32
      %v7440 = vpop.permute.xlu0 %7439
      %7441 = vrot.lane.b32.xlu0 %v7373, 32
      %v7442 = vpop.permute.xlu0 %7441
      %7443 = vrot.lane.b32.xlu0 %v6595, 32
      %v7444 = vpop.permute.xlu0 %7443
      %7445 = vrot.lane.b32.xlu0 %v6597, 32
      %v7446 = vpop.permute.xlu0 %7445
      %7447 = vrot.lane.b32.xlu0 %v6590, 32
      %v7448 = vpop.permute.xlu0 %7447
      %7449 = vrot.lane.b32.xlu0 %v6592, 32
      %v7450 = vpop.permute.xlu0 %7449
      %7451 = vrot.lane.b32.xlu0 %v6600, 32
      %v7452 = vpop.permute.xlu0 %7451
      %7453 = vrot.lane.b32.xlu0 %v6602, 32
      %v7454 = vpop.permute.xlu0 %7453
      %7455 = vrot.lane.b32.xlu0 %v6605, 32
      %v7456 = vpop.permute.xlu0 %7455
      %7457 = vrot.lane.b32.xlu0 %v6607, 32
      %v7458 = vpop.permute.xlu0 %7457
      %7459 = vrot.lane.b32.xlu0 %v6610, 32
      %v7460 = vpop.permute.xlu0 %7459
      %7461 = vrot.lane.b32.xlu0 %v6612, 32
      %v7462 = vpop.permute.xlu0 %7461
      %7463 = vrot.lane.b32.xlu0 %v6615, 32
      %v7464 = vpop.permute.xlu0 %7463
      %7465 = vrot.lane.b32.xlu0 %v6617, 32
      %v7466 = vpop.permute.xlu0 %7465
      %7467 = vrot.lane.b32.xlu0 %v6620, 32
      %v7468 = vpop.permute.xlu0 %7467
      %7469 = vrot.lane.b32.xlu0 %v6622, 32
      %v7470 = vpop.permute.xlu0 %7469
      %7471 = vrot.lane.b32.xlu0 %v6625, 32
      %v7472 = vpop.permute.xlu0 %7471
      %7473 = vrot.lane.b32.xlu0 %v6627, 32
      %v7474 = vpop.permute.xlu0 %7473
      %7475 = vrot.lane.b32.xlu0 %v6630, 32
      %v7476 = vpop.permute.xlu0 %7475
      %7477 = vrot.lane.b32.xlu0 %v6632, 32
      %v7478 = vpop.permute.xlu0 %7477
      %7479 = vrot.lane.b32.xlu0 %v6635, 32
      %v7480 = vpop.permute.xlu0 %7479
      %7481 = vrot.lane.b32.xlu0 %v6637, 32
      %v7482 = vpop.permute.xlu0 %7481
      %7483 = vrot.lane.b32.xlu0 %v6640, 32
      %v7484 = vpop.permute.xlu0 %7483
      %7485 = vrot.lane.b32.xlu0 %v6642, 32
      %v7486 = vpop.permute.xlu0 %7485
      %7487 = vrot.lane.b32.xlu0 %v6645, 32
      %v7488 = vpop.permute.xlu0 %7487
      %7489 = vrot.lane.b32.xlu0 %v6647, 32
      %v7490 = vpop.permute.xlu0 %7489
      %7491 = vrot.lane.b32.xlu0 %v6650, 32
      %v7492 = vpop.permute.xlu0 %7491
      %7493 = vrot.lane.b32.xlu0 %v6652, 32
      %v7494 = vpop.permute.xlu0 %7493
      %7495 = vrot.lane.b32.xlu0 %v6655, 32
      %v7496 = vpop.permute.xlu0 %7495
      %7497 = vrot.lane.b32.xlu0 %v6657, 32
      %v7498 = vpop.permute.xlu0 %7497
      %7499 = vrot.lane.b32.xlu0 %v6660, 32
      %v7500 = vpop.permute.xlu0 %7499
      %7501 = vrot.lane.b32.xlu0 %v6662, 32
      %v7502 = vpop.permute.xlu0 %7501
      %7503 = vrot.lane.b32.xlu0 %v7376, 32
      %v7504 = vpop.permute.xlu0 %7503
      %7505 = vrot.lane.b32.xlu0 %v7378, 32
      %v7506 = vpop.permute.xlu0 %7505
      %v7571 = vrot.slane %v6404, 2
      %v7572 = vrot.slane %v6182, 2
      %v7573 = vsel %vm2763, %v7571, %v7572
      %v7574 = vrot.slane %v6436, 2
      %v7575 = vsel %vm2763, %v7572, %v7574
      %v7576 = vrot.slane %v6420, 2
      %v7577 = vrot.slane %v6230, 2
      %v7578 = vsel %vm2763, %v7576, %v7577
      %v7579 = vrot.slane %v6452, 2
      %v7580 = vsel %vm2763, %v7577, %v7579
      %7581 = vrot.lane.b32.xlu0 %v6850, 40
      %v7582 = vpop.permute.xlu0 %7581
      %7583 = vrot.lane.b32.xlu0 %v6852, 40
      %v7584 = vpop.permute.xlu0 %7583
      %7585 = vrot.lane.b32.xlu0 %v6845, 40
      %v7586 = vpop.permute.xlu0 %7585
      %7587 = vrot.lane.b32.xlu0 %v6847, 40
      %v7588 = vpop.permute.xlu0 %7587
      %7589 = vrot.lane.b32.xlu0 %v6855, 40
      %v7590 = vpop.permute.xlu0 %7589
      %7591 = vrot.lane.b32.xlu0 %v6857, 40
      %v7592 = vpop.permute.xlu0 %7591
      %7593 = vrot.lane.b32.xlu0 %v6860, 40
      %v7594 = vpop.permute.xlu0 %7593
      %7595 = vrot.lane.b32.xlu0 %v6862, 40
      %v7596 = vpop.permute.xlu0 %7595
      %7597 = vrot.lane.b32.xlu0 %v6865, 40
      %v7598 = vpop.permute.xlu0 %7597
      %7599 = vrot.lane.b32.xlu0 %v6867, 40
      %v7600 = vpop.permute.xlu0 %7599
      %7601 = vrot.lane.b32.xlu0 %v6870, 40
      %v7602 = vpop.permute.xlu0 %7601
      %7603 = vrot.lane.b32.xlu0 %v6872, 40
      %v7604 = vpop.permute.xlu0 %7603
      %7605 = vrot.lane.b32.xlu0 %v6875, 40
      %v7606 = vpop.permute.xlu0 %7605
      %7607 = vrot.lane.b32.xlu0 %v6877, 40
      %v7608 = vpop.permute.xlu0 %7607
      %7609 = vrot.lane.b32.xlu0 %v6880, 40
      %v7610 = vpop.permute.xlu0 %7609
      %7611 = vrot.lane.b32.xlu0 %v6882, 40
      %v7612 = vpop.permute.xlu0 %7611
      %7613 = vrot.lane.b32.xlu0 %v6885, 40
      %v7614 = vpop.permute.xlu0 %7613
      %7615 = vrot.lane.b32.xlu0 %v6887, 40
      %v7616 = vpop.permute.xlu0 %7615
      %7617 = vrot.lane.b32.xlu0 %v6890, 40
      %v7618 = vpop.permute.xlu0 %7617
      %7619 = vrot.lane.b32.xlu0 %v6892, 40
      %v7620 = vpop.permute.xlu0 %7619
      %7621 = vrot.lane.b32.xlu0 %v6895, 40
      %v7622 = vpop.permute.xlu0 %7621
      %7623 = vrot.lane.b32.xlu0 %v6897, 40
      %v7624 = vpop.permute.xlu0 %7623
      %7625 = vrot.lane.b32.xlu0 %v6900, 40
      %v7626 = vpop.permute.xlu0 %7625
      %7627 = vrot.lane.b32.xlu0 %v6902, 40
      %v7628 = vpop.permute.xlu0 %7627
      %7629 = vrot.lane.b32.xlu0 %v6905, 40
      %v7630 = vpop.permute.xlu0 %7629
      %7631 = vrot.lane.b32.xlu0 %v6907, 40
      %v7632 = vpop.permute.xlu0 %7631
      %7633 = vrot.lane.b32.xlu0 %v6910, 40
      %v7634 = vpop.permute.xlu0 %7633
      %7635 = vrot.lane.b32.xlu0 %v6912, 40
      %v7636 = vpop.permute.xlu0 %7635
      %7637 = vrot.lane.b32.xlu0 %v6915, 40
      %v7638 = vpop.permute.xlu0 %7637
      %7639 = vrot.lane.b32.xlu0 %v6917, 40
      %v7640 = vpop.permute.xlu0 %7639
      %7641 = vrot.lane.b32.xlu0 %v7573, 40
      %v7642 = vpop.permute.xlu0 %7641
      %7643 = vrot.lane.b32.xlu0 %v7575, 40
      %v7644 = vpop.permute.xlu0 %7643
      %7645 = vrot.lane.b32.xlu0 %v6925, 40
      %v7646 = vpop.permute.xlu0 %7645
      %7647 = vrot.lane.b32.xlu0 %v6927, 40
      %v7648 = vpop.permute.xlu0 %7647
      %7649 = vrot.lane.b32.xlu0 %v6920, 40
      %v7650 = vpop.permute.xlu0 %7649
      %7651 = vrot.lane.b32.xlu0 %v6922, 40
      %v7652 = vpop.permute.xlu0 %7651
      %7653 = vrot.lane.b32.xlu0 %v6930, 40
      %v7654 = vpop.permute.xlu0 %7653
      %7655 = vrot.lane.b32.xlu0 %v6932, 40
      %v7656 = vpop.permute.xlu0 %7655
      %7657 = vrot.lane.b32.xlu0 %v6935, 40
      %v7658 = vpop.permute.xlu0 %7657
      %7659 = vrot.lane.b32.xlu0 %v6937, 40
      %v7660 = vpop.permute.xlu0 %7659
      %7661 = vrot.lane.b32.xlu0 %v6940, 40
      %v7662 = vpop.permute.xlu0 %7661
      %7663 = vrot.lane.b32.xlu0 %v6942, 40
      %v7664 = vpop.permute.xlu0 %7663
      %7665 = vrot.lane.b32.xlu0 %v6945, 40
      %v7666 = vpop.permute.xlu0 %7665
      %7667 = vrot.lane.b32.xlu0 %v6947, 40
      %v7668 = vpop.permute.xlu0 %7667
      %7669 = vrot.lane.b32.xlu0 %v6950, 40
      %v7670 = vpop.permute.xlu0 %7669
      %7671 = vrot.lane.b32.xlu0 %v6952, 40
      %v7672 = vpop.permute.xlu0 %7671
      %7673 = vrot.lane.b32.xlu0 %v6955, 40
      %v7674 = vpop.permute.xlu0 %7673
      %7675 = vrot.lane.b32.xlu0 %v6957, 40
      %v7676 = vpop.permute.xlu0 %7675
      %7677 = vrot.lane.b32.xlu0 %v6960, 40
      %v7678 = vpop.permute.xlu0 %7677
      %7679 = vrot.lane.b32.xlu0 %v6962, 40
      %v7680 = vpop.permute.xlu0 %7679
      %7681 = vrot.lane.b32.xlu0 %v6965, 40
      %v7682 = vpop.permute.xlu0 %7681
      %7683 = vrot.lane.b32.xlu0 %v6967, 40
      %v7684 = vpop.permute.xlu0 %7683
      %7685 = vrot.lane.b32.xlu0 %v6970, 40
      %v7686 = vpop.permute.xlu0 %7685
      %7687 = vrot.lane.b32.xlu0 %v6972, 40
      %v7688 = vpop.permute.xlu0 %7687
      %7689 = vrot.lane.b32.xlu0 %v6975, 40
      %v7690 = vpop.permute.xlu0 %7689
      %7691 = vrot.lane.b32.xlu0 %v6977, 40
      %v7692 = vpop.permute.xlu0 %7691
      %7693 = vrot.lane.b32.xlu0 %v6980, 40
      %v7694 = vpop.permute.xlu0 %7693
      %7695 = vrot.lane.b32.xlu0 %v6982, 40
      %v7696 = vpop.permute.xlu0 %7695
      %7697 = vrot.lane.b32.xlu0 %v6985, 40
      %v7698 = vpop.permute.xlu0 %7697
      %7699 = vrot.lane.b32.xlu0 %v6987, 40
      %v7700 = vpop.permute.xlu0 %7699
      %7701 = vrot.lane.b32.xlu0 %v6990, 40
      %v7702 = vpop.permute.xlu0 %7701
      %7703 = vrot.lane.b32.xlu0 %v6992, 40
      %v7704 = vpop.permute.xlu0 %7703
      %7705 = vrot.lane.b32.xlu0 %v7578, 40
      %v7706 = vpop.permute.xlu0 %7705
      %7707 = vrot.lane.b32.xlu0 %v7580, 40
      %v7708 = vpop.permute.xlu0 %7707
      %7773 = vrot.lane.b32.xlu0 %v6389, 48
      %v7774 = vpop.permute.xlu0 %7773
      %7775 = vrot.lane.b32.xlu0 %v6137, 48
      %v7776 = vpop.permute.xlu0 %7775
      %7777 = vrot.lane.b32.xlu0 %v6391, 48
      %v7778 = vpop.permute.xlu0 %7777
      %7779 = vrot.lane.b32.xlu0 %v6143, 48
      %v7780 = vpop.permute.xlu0 %7779
      %7781 = vrot.lane.b32.xlu0 %v6392, 48
      %v7782 = vpop.permute.xlu0 %7781
      %7783 = vrot.lane.b32.xlu0 %v6146, 48
      %v7784 = vpop.permute.xlu0 %7783
      %7785 = vrot.lane.b32.xlu0 %v6393, 48
      %v7786 = vpop.permute.xlu0 %7785
      %7787 = vrot.lane.b32.xlu0 %v6149, 48
      %v7788 = vpop.permute.xlu0 %7787
      %7789 = vrot.lane.b32.xlu0 %v6394, 48
      %v7790 = vpop.permute.xlu0 %7789
      %7791 = vrot.lane.b32.xlu0 %v6152, 48
      %v7792 = vpop.permute.xlu0 %7791
      %7793 = vrot.lane.b32.xlu0 %v6395, 48
      %v7794 = vpop.permute.xlu0 %7793
      %7795 = vrot.lane.b32.xlu0 %v6155, 48
      %v7796 = vpop.permute.xlu0 %7795
      %7797 = vrot.lane.b32.xlu0 %v6396, 48
      %v7798 = vpop.permute.xlu0 %7797
      %7799 = vrot.lane.b32.xlu0 %v6158, 48
      %v7800 = vpop.permute.xlu0 %7799
      %7801 = vrot.lane.b32.xlu0 %v6397, 48
      %v7802 = vpop.permute.xlu0 %7801
      %7803 = vrot.lane.b32.xlu0 %v6161, 48
      %v7804 = vpop.permute.xlu0 %7803
      %7805 = vrot.lane.b32.xlu0 %v6398, 48
      %v7806 = vpop.permute.xlu0 %7805
      %7807 = vrot.lane.b32.xlu0 %v6164, 48
      %v7808 = vpop.permute.xlu0 %7807
      %7809 = vrot.lane.b32.xlu0 %v6399, 48
      %v7810 = vpop.permute.xlu0 %7809
      %7811 = vrot.lane.b32.xlu0 %v6167, 48
      %v7812 = vpop.permute.xlu0 %7811
      %7813 = vrot.lane.b32.xlu0 %v6400, 48
      %v7814 = vpop.permute.xlu0 %7813
      %7815 = vrot.lane.b32.xlu0 %v6170, 48
      %v7816 = vpop.permute.xlu0 %7815
      %7817 = vrot.lane.b32.xlu0 %v6401, 48
      %v7818 = vpop.permute.xlu0 %7817
      %7819 = vrot.lane.b32.xlu0 %v6173, 48
      %v7820 = vpop.permute.xlu0 %7819
      %7821 = vrot.lane.b32.xlu0 %v6402, 48
      %v7822 = vpop.permute.xlu0 %7821
      %7823 = vrot.lane.b32.xlu0 %v6176, 48
      %v7824 = vpop.permute.xlu0 %7823
      %7825 = vrot.lane.b32.xlu0 %v6403, 48
      %v7826 = vpop.permute.xlu0 %7825
      %7827 = vrot.lane.b32.xlu0 %v6179, 48
      %v7828 = vpop.permute.xlu0 %7827
      %7829 = vrot.lane.b32.xlu0 %v6404, 48
      %v7830 = vpop.permute.xlu0 %7829
      %7831 = vrot.lane.b32.xlu0 %v6182, 48
      %v7832 = vpop.permute.xlu0 %7831
      %7833 = vrot.lane.b32.xlu0 %v6405, 48
      %v7834 = vpop.permute.xlu0 %7833
      %7835 = vrot.lane.b32.xlu0 %v6185, 48
      %v7836 = vpop.permute.xlu0 %7835
      %7837 = vrot.lane.b32.xlu0 %v6407, 48
      %v7838 = vpop.permute.xlu0 %7837
      %7839 = vrot.lane.b32.xlu0 %v6191, 48
      %v7840 = vpop.permute.xlu0 %7839
      %7841 = vrot.lane.b32.xlu0 %v6408, 48
      %v7842 = vpop.permute.xlu0 %7841
      %7843 = vrot.lane.b32.xlu0 %v6194, 48
      %v7844 = vpop.permute.xlu0 %7843
      %7845 = vrot.lane.b32.xlu0 %v6409, 48
      %v7846 = vpop.permute.xlu0 %7845
      %7847 = vrot.lane.b32.xlu0 %v6197, 48
      %v7848 = vpop.permute.xlu0 %7847
      %7849 = vrot.lane.b32.xlu0 %v6410, 48
      %v7850 = vpop.permute.xlu0 %7849
      %7851 = vrot.lane.b32.xlu0 %v6200, 48
      %v7852 = vpop.permute.xlu0 %7851
      %7853 = vrot.lane.b32.xlu0 %v6411, 48
      %v7854 = vpop.permute.xlu0 %7853
      %7855 = vrot.lane.b32.xlu0 %v6203, 48
      %v7856 = vpop.permute.xlu0 %7855
      %7857 = vrot.lane.b32.xlu0 %v6412, 48
      %v7858 = vpop.permute.xlu0 %7857
      %7859 = vrot.lane.b32.xlu0 %v6206, 48
      %v7860 = vpop.permute.xlu0 %7859
      %7861 = vrot.lane.b32.xlu0 %v6413, 48
      %v7862 = vpop.permute.xlu0 %7861
      %7863 = vrot.lane.b32.xlu0 %v6209, 48
      %v7864 = vpop.permute.xlu0 %7863
      %7865 = vrot.lane.b32.xlu0 %v6414, 48
      %v7866 = vpop.permute.xlu0 %7865
      %7867 = vrot.lane.b32.xlu0 %v6212, 48
      %v7868 = vpop.permute.xlu0 %7867
      %7869 = vrot.lane.b32.xlu0 %v6415, 48
      %v7870 = vpop.permute.xlu0 %7869
      %7871 = vrot.lane.b32.xlu0 %v6215, 48
      %v7872 = vpop.permute.xlu0 %7871
      %7873 = vrot.lane.b32.xlu0 %v6416, 48
      %v7874 = vpop.permute.xlu0 %7873
      %7875 = vrot.lane.b32.xlu0 %v6218, 48
      %v7876 = vpop.permute.xlu0 %7875
      %7877 = vrot.lane.b32.xlu0 %v6417, 48
      %v7878 = vpop.permute.xlu0 %7877
      %7879 = vrot.lane.b32.xlu0 %v6221, 48
      %v7880 = vpop.permute.xlu0 %7879
      %7881 = vrot.lane.b32.xlu0 %v6418, 48
      %v7882 = vpop.permute.xlu0 %7881
      %7883 = vrot.lane.b32.xlu0 %v6224, 48
      %v7884 = vpop.permute.xlu0 %7883
      %7885 = vrot.lane.b32.xlu0 %v6419, 48
      %v7886 = vpop.permute.xlu0 %7885
      %7887 = vrot.lane.b32.xlu0 %v6227, 48
      %v7888 = vpop.permute.xlu0 %7887
      %7889 = vrot.lane.b32.xlu0 %v6420, 48
      %v7890 = vpop.permute.xlu0 %7889
      %7891 = vrot.lane.b32.xlu0 %v6230, 48
      %v7892 = vpop.permute.xlu0 %7891
      %7953 = vrot.lane.b32.xlu0 %v6515, 56
      %v7954 = vpop.permute.xlu0 %7953
      %7955 = vrot.lane.b32.xlu0 %v6517, 56
      %v7956 = vpop.permute.xlu0 %7955
      %7957 = vrot.lane.b32.xlu0 %v6525, 56
      %v7958 = vpop.permute.xlu0 %7957
      %7959 = vrot.lane.b32.xlu0 %v6527, 56
      %v7960 = vpop.permute.xlu0 %7959
      %7961 = vrot.lane.b32.xlu0 %v6530, 56
      %v7962 = vpop.permute.xlu0 %7961
      %7963 = vrot.lane.b32.xlu0 %v6532, 56
      %v7964 = vpop.permute.xlu0 %7963
      %7965 = vrot.lane.b32.xlu0 %v6535, 56
      %v7966 = vpop.permute.xlu0 %7965
      %7967 = vrot.lane.b32.xlu0 %v6537, 56
      %v7968 = vpop.permute.xlu0 %7967
      %7969 = vrot.lane.b32.xlu0 %v6540, 56
      %v7970 = vpop.permute.xlu0 %7969
      %7971 = vrot.lane.b32.xlu0 %v6542, 56
      %v7972 = vpop.permute.xlu0 %7971
      %7973 = vrot.lane.b32.xlu0 %v6545, 56
      %v7974 = vpop.permute.xlu0 %7973
      %7975 = vrot.lane.b32.xlu0 %v6547, 56
      %v7976 = vpop.permute.xlu0 %7975
      %7977 = vrot.lane.b32.xlu0 %v6550, 56
      %v7978 = vpop.permute.xlu0 %7977
      %7979 = vrot.lane.b32.xlu0 %v6552, 56
      %v7980 = vpop.permute.xlu0 %7979
      %7981 = vrot.lane.b32.xlu0 %v6555, 56
      %v7982 = vpop.permute.xlu0 %7981
      %7983 = vrot.lane.b32.xlu0 %v6557, 56
      %v7984 = vpop.permute.xlu0 %7983
      %7985 = vrot.lane.b32.xlu0 %v6560, 56
      %v7986 = vpop.permute.xlu0 %7985
      %7987 = vrot.lane.b32.xlu0 %v6562, 56
      %v7988 = vpop.permute.xlu0 %7987
      %7989 = vrot.lane.b32.xlu0 %v6565, 56
      %v7990 = vpop.permute.xlu0 %7989
      %7991 = vrot.lane.b32.xlu0 %v6567, 56
      %v7992 = vpop.permute.xlu0 %7991
      %7993 = vrot.lane.b32.xlu0 %v6570, 56
      %v7994 = vpop.permute.xlu0 %7993
      %7995 = vrot.lane.b32.xlu0 %v6572, 56
      %v7996 = vpop.permute.xlu0 %7995
      %7997 = vrot.lane.b32.xlu0 %v6575, 56
      %v7998 = vpop.permute.xlu0 %7997
      %7999 = vrot.lane.b32.xlu0 %v6577, 56
      %v8000 = vpop.permute.xlu0 %7999
      %8001 = vrot.lane.b32.xlu0 %v6580, 56
      %v8002 = vpop.permute.xlu0 %8001
      %8003 = vrot.lane.b32.xlu0 %v6582, 56
      %v8004 = vpop.permute.xlu0 %8003
      %8005 = vrot.lane.b32.xlu0 %v6585, 56
      %v8006 = vpop.permute.xlu0 %8005
      %8007 = vrot.lane.b32.xlu0 %v6587, 56
      %v8008 = vpop.permute.xlu0 %8007
      %8009 = vrot.lane.b32.xlu0 %v7371, 56
      %v8010 = vpop.permute.xlu0 %8009
      %8011 = vrot.lane.b32.xlu0 %v7373, 56
      %v8012 = vpop.permute.xlu0 %8011
      %8013 = vrot.lane.b32.xlu0 %v6590, 56
      %v8014 = vpop.permute.xlu0 %8013
      %8015 = vrot.lane.b32.xlu0 %v6592, 56
      %v8016 = vpop.permute.xlu0 %8015
      %8017 = vrot.lane.b32.xlu0 %v6600, 56
      %v8018 = vpop.permute.xlu0 %8017
      %8019 = vrot.lane.b32.xlu0 %v6602, 56
      %v8020 = vpop.permute.xlu0 %8019
      %8021 = vrot.lane.b32.xlu0 %v6605, 56
      %v8022 = vpop.permute.xlu0 %8021
      %8023 = vrot.lane.b32.xlu0 %v6607, 56
      %v8024 = vpop.permute.xlu0 %8023
      %8025 = vrot.lane.b32.xlu0 %v6610, 56
      %v8026 = vpop.permute.xlu0 %8025
      %8027 = vrot.lane.b32.xlu0 %v6612, 56
      %v8028 = vpop.permute.xlu0 %8027
      %8029 = vrot.lane.b32.xlu0 %v6615, 56
      %v8030 = vpop.permute.xlu0 %8029
      %8031 = vrot.lane.b32.xlu0 %v6617, 56
      %v8032 = vpop.permute.xlu0 %8031
      %8033 = vrot.lane.b32.xlu0 %v6620, 56
      %v8034 = vpop.permute.xlu0 %8033
      %8035 = vrot.lane.b32.xlu0 %v6622, 56
      %v8036 = vpop.permute.xlu0 %8035
      %8037 = vrot.lane.b32.xlu0 %v6625, 56
      %v8038 = vpop.permute.xlu0 %8037
      %8039 = vrot.lane.b32.xlu0 %v6627, 56
      %v8040 = vpop.permute.xlu0 %8039
      %8041 = vrot.lane.b32.xlu0 %v6630, 56
      %v8042 = vpop.permute.xlu0 %8041
      %8043 = vrot.lane.b32.xlu0 %v6632, 56
      %v8044 = vpop.permute.xlu0 %8043
      %8045 = vrot.lane.b32.xlu0 %v6635, 56
      %v8046 = vpop.permute.xlu0 %8045
      %8047 = vrot.lane.b32.xlu0 %v6637, 56
      %v8048 = vpop.permute.xlu0 %8047
      %8049 = vrot.lane.b32.xlu0 %v6640, 56
      %v8050 = vpop.permute.xlu0 %8049
      %8051 = vrot.lane.b32.xlu0 %v6642, 56
      %v8052 = vpop.permute.xlu0 %8051
      %8053 = vrot.lane.b32.xlu0 %v6645, 56
      %v8054 = vpop.permute.xlu0 %8053
      %8055 = vrot.lane.b32.xlu0 %v6647, 56
      %v8056 = vpop.permute.xlu0 %8055
      %8057 = vrot.lane.b32.xlu0 %v6650, 56
      %v8058 = vpop.permute.xlu0 %8057
      %8059 = vrot.lane.b32.xlu0 %v6652, 56
      %v8060 = vpop.permute.xlu0 %8059
      %8061 = vrot.lane.b32.xlu0 %v6655, 56
      %v8062 = vpop.permute.xlu0 %8061
      %8063 = vrot.lane.b32.xlu0 %v6657, 56
      %v8064 = vpop.permute.xlu0 %8063
      %8065 = vrot.lane.b32.xlu0 %v6660, 56
      %v8066 = vpop.permute.xlu0 %8065
      %8067 = vrot.lane.b32.xlu0 %v6662, 56
      %v8068 = vpop.permute.xlu0 %8067
      %8069 = vrot.lane.b32.xlu0 %v7376, 56
      %v8070 = vpop.permute.xlu0 %8069
      %8071 = vrot.lane.b32.xlu0 %v7378, 56
      %v8072 = vpop.permute.xlu0 %8071
      %8133 = vrot.lane.b32.xlu0 %v6845, 64
      %v8134 = vpop.permute.xlu0 %8133
      %8135 = vrot.lane.b32.xlu0 %v6847, 64
      %v8136 = vpop.permute.xlu0 %8135
      %8137 = vrot.lane.b32.xlu0 %v6855, 64
      %v8138 = vpop.permute.xlu0 %8137
      %8139 = vrot.lane.b32.xlu0 %v6857, 64
      %v8140 = vpop.permute.xlu0 %8139
      %8141 = vrot.lane.b32.xlu0 %v6860, 64
      %v8142 = vpop.permute.xlu0 %8141
      %8143 = vrot.lane.b32.xlu0 %v6862, 64
      %v8144 = vpop.permute.xlu0 %8143
      %8145 = vrot.lane.b32.xlu0 %v6865, 64
      %v8146 = vpop.permute.xlu0 %8145
      %8147 = vrot.lane.b32.xlu0 %v6867, 64
      %v8148 = vpop.permute.xlu0 %8147
      %8149 = vrot.lane.b32.xlu0 %v6870, 64
      %v8150 = vpop.permute.xlu0 %8149
      %8151 = vrot.lane.b32.xlu0 %v6872, 64
      %v8152 = vpop.permute.xlu0 %8151
      %8153 = vrot.lane.b32.xlu0 %v6875, 64
      %v8154 = vpop.permute.xlu0 %8153
      %8155 = vrot.lane.b32.xlu0 %v6877, 64
      %v8156 = vpop.permute.xlu0 %8155
      %8157 = vrot.lane.b32.xlu0 %v6880, 64
      %v8158 = vpop.permute.xlu0 %8157
      %8159 = vrot.lane.b32.xlu0 %v6882, 64
      %v8160 = vpop.permute.xlu0 %8159
      %8161 = vrot.lane.b32.xlu0 %v6885, 64
      %v8162 = vpop.permute.xlu0 %8161
      %8163 = vrot.lane.b32.xlu0 %v6887, 64
      %v8164 = vpop.permute.xlu0 %8163
      %8165 = vrot.lane.b32.xlu0 %v6890, 64
      %v8166 = vpop.permute.xlu0 %8165
      %8167 = vrot.lane.b32.xlu0 %v6892, 64
      %v8168 = vpop.permute.xlu0 %8167
      %8169 = vrot.lane.b32.xlu0 %v6895, 64
      %v8170 = vpop.permute.xlu0 %8169
      %8171 = vrot.lane.b32.xlu0 %v6897, 64
      %v8172 = vpop.permute.xlu0 %8171
      %8173 = vrot.lane.b32.xlu0 %v6900, 64
      %v8174 = vpop.permute.xlu0 %8173
      %8175 = vrot.lane.b32.xlu0 %v6902, 64
      %v8176 = vpop.permute.xlu0 %8175
      %8177 = vrot.lane.b32.xlu0 %v6905, 64
      %v8178 = vpop.permute.xlu0 %8177
      %8179 = vrot.lane.b32.xlu0 %v6907, 64
      %v8180 = vpop.permute.xlu0 %8179
      %8181 = vrot.lane.b32.xlu0 %v6910, 64
      %v8182 = vpop.permute.xlu0 %8181
      %8183 = vrot.lane.b32.xlu0 %v6912, 64
      %v8184 = vpop.permute.xlu0 %8183
      %8185 = vrot.lane.b32.xlu0 %v6915, 64
      %v8186 = vpop.permute.xlu0 %8185
      %8187 = vrot.lane.b32.xlu0 %v6917, 64
      %v8188 = vpop.permute.xlu0 %8187
      %8189 = vrot.lane.b32.xlu0 %v7573, 64
      %v8190 = vpop.permute.xlu0 %8189
      %8191 = vrot.lane.b32.xlu0 %v7575, 64
      %v8192 = vpop.permute.xlu0 %8191
      %8193 = vrot.lane.b32.xlu0 %v6920, 64
      %v8194 = vpop.permute.xlu0 %8193
      %8195 = vrot.lane.b32.xlu0 %v6922, 64
      %v8196 = vpop.permute.xlu0 %8195
      %8197 = vrot.lane.b32.xlu0 %v6930, 64
      %v8198 = vpop.permute.xlu0 %8197
      %8199 = vrot.lane.b32.xlu0 %v6932, 64
      %v8200 = vpop.permute.xlu0 %8199
      %8201 = vrot.lane.b32.xlu0 %v6935, 64
      %v8202 = vpop.permute.xlu0 %8201
      %8203 = vrot.lane.b32.xlu0 %v6937, 64
      %v8204 = vpop.permute.xlu0 %8203
      %8205 = vrot.lane.b32.xlu0 %v6940, 64
      %v8206 = vpop.permute.xlu0 %8205
      %8207 = vrot.lane.b32.xlu0 %v6942, 64
      %v8208 = vpop.permute.xlu0 %8207
      %8209 = vrot.lane.b32.xlu0 %v6945, 64
      %v8210 = vpop.permute.xlu0 %8209
      %8211 = vrot.lane.b32.xlu0 %v6947, 64
      %v8212 = vpop.permute.xlu0 %8211
      %8213 = vrot.lane.b32.xlu0 %v6950, 64
      %v8214 = vpop.permute.xlu0 %8213
      %8215 = vrot.lane.b32.xlu0 %v6952, 64
      %v8216 = vpop.permute.xlu0 %8215
      %8217 = vrot.lane.b32.xlu0 %v6955, 64
      %v8218 = vpop.permute.xlu0 %8217
      %8219 = vrot.lane.b32.xlu0 %v6957, 64
      %v8220 = vpop.permute.xlu0 %8219
      %8221 = vrot.lane.b32.xlu0 %v6960, 64
      %v8222 = vpop.permute.xlu0 %8221
      %8223 = vrot.lane.b32.xlu0 %v6962, 64
      %v8224 = vpop.permute.xlu0 %8223
      %8225 = vrot.lane.b32.xlu0 %v6965, 64
      %v8226 = vpop.permute.xlu0 %8225
      %8227 = vrot.lane.b32.xlu0 %v6967, 64
      %v8228 = vpop.permute.xlu0 %8227
      %8229 = vrot.lane.b32.xlu0 %v6970, 64
      %v8230 = vpop.permute.xlu0 %8229
      %8231 = vrot.lane.b32.xlu0 %v6972, 64
      %v8232 = vpop.permute.xlu0 %8231
      %8233 = vrot.lane.b32.xlu0 %v6975, 64
      %v8234 = vpop.permute.xlu0 %8233
      %8235 = vrot.lane.b32.xlu0 %v6977, 64
      %v8236 = vpop.permute.xlu0 %8235
      %8237 = vrot.lane.b32.xlu0 %v6980, 64
      %v8238 = vpop.permute.xlu0 %8237
      %8239 = vrot.lane.b32.xlu0 %v6982, 64
      %v8240 = vpop.permute.xlu0 %8239
      %8241 = vrot.lane.b32.xlu0 %v6985, 64
      %v8242 = vpop.permute.xlu0 %8241
      %8243 = vrot.lane.b32.xlu0 %v6987, 64
      %v8244 = vpop.permute.xlu0 %8243
      %8245 = vrot.lane.b32.xlu0 %v6990, 64
      %v8246 = vpop.permute.xlu0 %8245
      %8247 = vrot.lane.b32.xlu0 %v6992, 64
      %v8248 = vpop.permute.xlu0 %8247
      %8249 = vrot.lane.b32.xlu0 %v7578, 64
      %v8250 = vpop.permute.xlu0 %8249
      %8251 = vrot.lane.b32.xlu0 %v7580, 64
      %v8252 = vpop.permute.xlu0 %8251
      %v8313 = vsel %vm4294, %v6389, %v6664
      %v8314 = vsel %vm4294, %v6137, %v6666
      %v8315 = vsel %vm4294, %v6390, %v6668
      %v8316 = vsel %vm4294, %v6140, %v6670
      %v8317 = vsel %vm4294, %v6391, %v6672
      %v8318 = vsel %vm4294, %v6143, %v6674
      %v8319 = vsel %vm4294, %v6392, %v6676
      %v8320 = vsel %vm4294, %v6146, %v6678
      %v8321 = vsel %vm4294, %v6393, %v6680
      %v8322 = vsel %vm4294, %v6149, %v6682
      %v8323 = vsel %vm4294, %v6394, %v6684
      %v8324 = vsel %vm4294, %v6152, %v6686
      %v8325 = vsel %vm4294, %v6395, %v6688
      %v8326 = vsel %vm4294, %v6155, %v6690
      %v8327 = vsel %vm4294, %v6396, %v6692
      %v8328 = vsel %vm4294, %v6158, %v6694
      %v8329 = vsel %vm4294, %v6397, %v6696
      %v8330 = vsel %vm4294, %v6161, %v6698
      %v8331 = vsel %vm4294, %v6398, %v6700
      %v8332 = vsel %vm4294, %v6164, %v6702
      %v8333 = vsel %vm4294, %v6399, %v6704
      %v8334 = vsel %vm4294, %v6167, %v6706
      %v8335 = vsel %vm4294, %v6400, %v6708
      %v8336 = vsel %vm4294, %v6170, %v6710
      %v8337 = vsel %vm4294, %v6401, %v6712
      %v8338 = vsel %vm4294, %v6173, %v6714
      %v8339 = vsel %vm4294, %v6402, %v6716
      %v8340 = vsel %vm4294, %v6176, %v6718
      %v8341 = vsel %vm4294, %v6403, %v6720
      %v8342 = vsel %vm4294, %v6179, %v6722
      %v8343 = vsel %vm4294, %v6405, %v6724
      %v8344 = vsel %vm4294, %v6185, %v6726
      %v8345 = vsel %vm4294, %v6406, %v6728
      %v8346 = vsel %vm4294, %v6188, %v6730
      %v8347 = vsel %vm4294, %v6407, %v6732
      %v8348 = vsel %vm4294, %v6191, %v6734
      %v8349 = vsel %vm4294, %v6408, %v6736
      %v8350 = vsel %vm4294, %v6194, %v6738
      %v8351 = vsel %vm4294, %v6409, %v6740
      %v8352 = vsel %vm4294, %v6197, %v6742
      %v8353 = vsel %vm4294, %v6410, %v6744
      %v8354 = vsel %vm4294, %v6200, %v6746
      %v8355 = vsel %vm4294, %v6411, %v6748
      %v8356 = vsel %vm4294, %v6203, %v6750
      %v8357 = vsel %vm4294, %v6412, %v6752
      %v8358 = vsel %vm4294, %v6206, %v6754
      %v8359 = vsel %vm4294, %v6413, %v6756
      %v8360 = vsel %vm4294, %v6209, %v6758
      %v8361 = vsel %vm4294, %v6414, %v6760
      %v8362 = vsel %vm4294, %v6212, %v6762
      %v8363 = vsel %vm4294, %v6415, %v6764
      %v8364 = vsel %vm4294, %v6215, %v6766
      %v8365 = vsel %vm4294, %v6416, %v6768
      %v8366 = vsel %vm4294, %v6218, %v6770
      %v8367 = vsel %vm4294, %v6417, %v6772
      %v8368 = vsel %vm4294, %v6221, %v6774
      %v8369 = vsel %vm4294, %v6418, %v6776
      %v8370 = vsel %vm4294, %v6224, %v6778
      %v8371 = vsel %vm4294, %v6419, %v6780
      %v8372 = vsel %vm4294, %v6227, %v6782
      %v8373 = vsel %vm4420, %v8313, %v6994
      %v8374 = vsel %vm4420, %v8314, %v6996
      %v8375 = vsel %vm4420, %v8315, %v6998
      %v8376 = vsel %vm4420, %v8316, %v7000
      %v8377 = vsel %vm4420, %v8317, %v7002
      %v8378 = vsel %vm4420, %v8318, %v7004
      %v8379 = vsel %vm4420, %v8319, %v7006
      %v8380 = vsel %vm4420, %v8320, %v7008
      %v8381 = vsel %vm4420, %v8321, %v7010
      %v8382 = vsel %vm4420, %v8322, %v7012
      %v8383 = vsel %vm4420, %v8323, %v7014
      %v8384 = vsel %vm4420, %v8324, %v7016
      %v8385 = vsel %vm4420, %v8325, %v7018
      %v8386 = vsel %vm4420, %v8326, %v7020
      %v8387 = vsel %vm4420, %v8327, %v7022
      %v8388 = vsel %vm4420, %v8328, %v7024
      %v8389 = vsel %vm4420, %v8329, %v7026
      %v8390 = vsel %vm4420, %v8330, %v7028
      %v8391 = vsel %vm4420, %v8331, %v7030
      %v8392 = vsel %vm4420, %v8332, %v7032
      %v8393 = vsel %vm4420, %v8333, %v7034
      %v8394 = vsel %vm4420, %v8334, %v7036
      %v8395 = vsel %vm4420, %v8335, %v7038
      %v8396 = vsel %vm4420, %v8336, %v7040
      %v8397 = vsel %vm4420, %v8337, %v7042
      %v8398 = vsel %vm4420, %v8338, %v7044
      %v8399 = vsel %vm4420, %v8339, %v7046
      %v8400 = vsel %vm4420, %v8340, %v7048
      %v8401 = vsel %vm4420, %v8341, %v7050
      %v8402 = vsel %vm4420, %v8342, %v7052
      %v8403 = vsel %vm4420, %v8343, %v7054
      %v8404 = vsel %vm4420, %v8344, %v7056
      %v8405 = vsel %vm4420, %v8345, %v7058
      %v8406 = vsel %vm4420, %v8346, %v7060
      %v8407 = vsel %vm4420, %v8347, %v7062
      %v8408 = vsel %vm4420, %v8348, %v7064
      %v8409 = vsel %vm4420, %v8349, %v7066
      %v8410 = vsel %vm4420, %v8350, %v7068
      %v8411 = vsel %vm4420, %v8351, %v7070
      %v8412 = vsel %vm4420, %v8352, %v7072
      %v8413 = vsel %vm4420, %v8353, %v7074
      %v8414 = vsel %vm4420, %v8354, %v7076
      %v8415 = vsel %vm4420, %v8355, %v7078
      %v8416 = vsel %vm4420, %v8356, %v7080
      %v8417 = vsel %vm4420, %v8357, %v7082
      %v8418 = vsel %vm4420, %v8358, %v7084
      %v8419 = vsel %vm4420, %v8359, %v7086
      %v8420 = vsel %vm4420, %v8360, %v7088
      %v8421 = vsel %vm4420, %v8361, %v7090
      %v8422 = vsel %vm4420, %v8362, %v7092
      %v8423 = vsel %vm4420, %v8363, %v7094
      %v8424 = vsel %vm4420, %v8364, %v7096
      %v8425 = vsel %vm4420, %v8365, %v7098
      %v8426 = vsel %vm4420, %v8366, %v7100
      %v8427 = vsel %vm4420, %v8367, %v7102
      %v8428 = vsel %vm4420, %v8368, %v7104
      %v8429 = vsel %vm4420, %v8369, %v7106
      %v8430 = vsel %vm4420, %v8370, %v7108
      %v8431 = vsel %vm4420, %v8371, %v7110
      %v8432 = vsel %vm4420, %v8372, %v7112
      %v8433 = vsel %vm4550, %v8373, %v7176
      %v8434 = vsel %vm4550, %v8374, %v7178
      %v8435 = vsel %vm4550, %v8375, %v7180
      %v8436 = vsel %vm4550, %v8376, %v7182
      %v8437 = vsel %vm4550, %v8373, %v7184
      %v8438 = vsel %vm4550, %v8374, %v7186
      %v8439 = vsel %vm4550, %v8377, %v7188
      %v8440 = vsel %vm4550, %v8378, %v7190
      %v8441 = vsel %vm4550, %v8379, %v7192
      %v8442 = vsel %vm4550, %v8380, %v7194
      %v8443 = vsel %vm4550, %v8381, %v7196
      %v8444 = vsel %vm4550, %v8382, %v7198
      %v8445 = vsel %vm4550, %v8383, %v7200
      %v8446 = vsel %vm4550, %v8384, %v7202
      %v8447 = vsel %vm4550, %v8385, %v7204
      %v8448 = vsel %vm4550, %v8386, %v7206
      %v8449 = vsel %vm4550, %v8387, %v7208
      %v8450 = vsel %vm4550, %v8388, %v7210
      %v8451 = vsel %vm4550, %v8389, %v7212
      %v8452 = vsel %vm4550, %v8390, %v7214
      %v8453 = vsel %vm4550, %v8391, %v7216
      %v8454 = vsel %vm4550, %v8392, %v7218
      %v8455 = vsel %vm4550, %v8393, %v7220
      %v8456 = vsel %vm4550, %v8394, %v7222
      %v8457 = vsel %vm4550, %v8395, %v7224
      %v8458 = vsel %vm4550, %v8396, %v7226
      %v8459 = vsel %vm4550, %v8397, %v7228
      %v8460 = vsel %vm4550, %v8398, %v7230
      %v8461 = vsel %vm4550, %v8399, %v7232
      %v8462 = vsel %vm4550, %v8400, %v7234
      %v8463 = vsel %vm4550, %v8401, %v7236
      %v8464 = vsel %vm4550, %v8402, %v7238
      %v8465 = vsel %vm4550, %v8403, %v7240
      %v8466 = vsel %vm4550, %v8404, %v7242
      %v8467 = vsel %vm4550, %v8405, %v7244
      %v8468 = vsel %vm4550, %v8406, %v7246
      %v8469 = vsel %vm4550, %v8403, %v7248
      %v8470 = vsel %vm4550, %v8404, %v7250
      %v8471 = vsel %vm4550, %v8407, %v7252
      %v8472 = vsel %vm4550, %v8408, %v7254
      %v8473 = vsel %vm4550, %v8409, %v7256
      %v8474 = vsel %vm4550, %v8410, %v7258
      %v8475 = vsel %vm4550, %v8411, %v7260
      %v8476 = vsel %vm4550, %v8412, %v7262
      %v8477 = vsel %vm4550, %v8413, %v7264
      %v8478 = vsel %vm4550, %v8414, %v7266
      %v8479 = vsel %vm4550, %v8415, %v7268
      %v8480 = vsel %vm4550, %v8416, %v7270
      %v8481 = vsel %vm4550, %v8417, %v7272
      %v8482 = vsel %vm4550, %v8418, %v7274
      %v8483 = vsel %vm4550, %v8419, %v7276
      %v8484 = vsel %vm4550, %v8420, %v7278
      %v8485 = vsel %vm4550, %v8421, %v7280
      %v8486 = vsel %vm4550, %v8422, %v7282
      %v8487 = vsel %vm4550, %v8423, %v7284
      %v8488 = vsel %vm4550, %v8424, %v7286
      %v8489 = vsel %vm4550, %v8425, %v7288
      %v8490 = vsel %vm4550, %v8426, %v7290
      %v8491 = vsel %vm4550, %v8427, %v7292
      %v8492 = vsel %vm4550, %v8428, %v7294
      %v8493 = vsel %vm4550, %v8429, %v7296
      %v8494 = vsel %vm4550, %v8430, %v7298
      %v8495 = vsel %vm4550, %v8431, %v7300
      %v8496 = vsel %vm4550, %v8432, %v7302
      %v8497 = vsel %vm4680, %v8433, %v7380
      %v8498 = vsel %vm4680, %v8434, %v7382
      %v8499 = vsel %vm4680, %v8435, %v7384
      %v8500 = vsel %vm4680, %v8436, %v7386
      %v8501 = vsel %vm4680, %v8437, %v7388
      %v8502 = vsel %vm4680, %v8438, %v7390
      %v8503 = vsel %vm4680, %v8439, %v7392
      %v8504 = vsel %vm4680, %v8440, %v7394
      %v8505 = vsel %vm4680, %v8441, %v7396
      %v8506 = vsel %vm4680, %v8442, %v7398
      %v8507 = vsel %vm4680, %v8443, %v7400
      %v8508 = vsel %vm4680, %v8444, %v7402
      %v8509 = vsel %vm4680, %v8445, %v7404
      %v8510 = vsel %vm4680, %v8446, %v7406
      %v8511 = vsel %vm4680, %v8447, %v7408
      %v8512 = vsel %vm4680, %v8448, %v7410
      %v8513 = vsel %vm4680, %v8449, %v7412
      %v8514 = vsel %vm4680, %v8450, %v7414
      %v8515 = vsel %vm4680, %v8451, %v7416
      %v8516 = vsel %vm4680, %v8452, %v7418
      %v8517 = vsel %vm4680, %v8453, %v7420
      %v8518 = vsel %vm4680, %v8454, %v7422
      %v8519 = vsel %vm4680, %v8455, %v7424
      %v8520 = vsel %vm4680, %v8456, %v7426
      %v8521 = vsel %vm4680, %v8457, %v7428
      %v8522 = vsel %vm4680, %v8458, %v7430
      %v8523 = vsel %vm4680, %v8459, %v7432
      %v8524 = vsel %vm4680, %v8460, %v7434
      %v8525 = vsel %vm4680, %v8461, %v7436
      %v8526 = vsel %vm4680, %v8462, %v7438
      %v8527 = vsel %vm4680, %v8463, %v7440
      %v8528 = vsel %vm4680, %v8464, %v7442
      %v8529 = vsel %vm4680, %v8465, %v7444
      %v8530 = vsel %vm4680, %v8466, %v7446
      %v8531 = vsel %vm4680, %v8467, %v7448
      %v8532 = vsel %vm4680, %v8468, %v7450
      %v8533 = vsel %vm4680, %v8469, %v7452
      %v8534 = vsel %vm4680, %v8470, %v7454
      %v8535 = vsel %vm4680, %v8471, %v7456
      %v8536 = vsel %vm4680, %v8472, %v7458
      %v8537 = vsel %vm4680, %v8473, %v7460
      %v8538 = vsel %vm4680, %v8474, %v7462
      %v8539 = vsel %vm4680, %v8475, %v7464
      %v8540 = vsel %vm4680, %v8476, %v7466
      %v8541 = vsel %vm4680, %v8477, %v7468
      %v8542 = vsel %vm4680, %v8478, %v7470
      %v8543 = vsel %vm4680, %v8479, %v7472
      %v8544 = vsel %vm4680, %v8480, %v7474
      %v8545 = vsel %vm4680, %v8481, %v7476
      %v8546 = vsel %vm4680, %v8482, %v7478
      %v8547 = vsel %vm4680, %v8483, %v7480
      %v8548 = vsel %vm4680, %v8484, %v7482
      %v8549 = vsel %vm4680, %v8485, %v7484
      %v8550 = vsel %vm4680, %v8486, %v7486
      %v8551 = vsel %vm4680, %v8487, %v7488
      %v8552 = vsel %vm4680, %v8488, %v7490
      %v8553 = vsel %vm4680, %v8489, %v7492
      %v8554 = vsel %vm4680, %v8490, %v7494
      %v8555 = vsel %vm4680, %v8491, %v7496
      %v8556 = vsel %vm4680, %v8492, %v7498
      %v8557 = vsel %vm4680, %v8493, %v7500
      %v8558 = vsel %vm4680, %v8494, %v7502
      %v8559 = vsel %vm4680, %v8495, %v7504
      %v8560 = vsel %vm4680, %v8496, %v7506
      %vm8561 = vcmask 326656
      %v8562 = vsel %vm8561, %v8497, %v7582
      %v8563 = vsel %vm8561, %v8498, %v7584
      %v8564 = vsel %vm8561, %v8499, %v7586
      %v8565 = vsel %vm8561, %v8500, %v7588
      %v8566 = vsel %vm8561, %v8501, %v7590
      %v8567 = vsel %vm8561, %v8502, %v7592
      %v8568 = vsel %vm8561, %v8503, %v7594
      %v8569 = vsel %vm8561, %v8504, %v7596
      %v8570 = vsel %vm8561, %v8505, %v7598
      %v8571 = vsel %vm8561, %v8506, %v7600
      %v8572 = vsel %vm8561, %v8507, %v7602
      %v8573 = vsel %vm8561, %v8508, %v7604
      %v8574 = vsel %vm8561, %v8509, %v7606
      %v8575 = vsel %vm8561, %v8510, %v7608
      %v8576 = vsel %vm8561, %v8511, %v7610
      %v8577 = vsel %vm8561, %v8512, %v7612
      %v8578 = vsel %vm8561, %v8513, %v7614
      %v8579 = vsel %vm8561, %v8514, %v7616
      %v8580 = vsel %vm8561, %v8515, %v7618
      %v8581 = vsel %vm8561, %v8516, %v7620
      %v8582 = vsel %vm8561, %v8517, %v7622
      %v8583 = vsel %vm8561, %v8518, %v7624
      %v8584 = vsel %vm8561, %v8519, %v7626
      %v8585 = vsel %vm8561, %v8520, %v7628
      %v8586 = vsel %vm8561, %v8521, %v7630
      %v8587 = vsel %vm8561, %v8522, %v7632
      %v8588 = vsel %vm8561, %v8523, %v7634
      %v8589 = vsel %vm8561, %v8524, %v7636
      %v8590 = vsel %vm8561, %v8525, %v7638
      %v8591 = vsel %vm8561, %v8526, %v7640
      %v8592 = vsel %vm8561, %v8527, %v7642
      %v8593 = vsel %vm8561, %v8528, %v7644
      %v8594 = vsel %vm8561, %v8529, %v7646
      %v8595 = vsel %vm8561, %v8530, %v7648
      %v8596 = vsel %vm8561, %v8531, %v7650
      %v8597 = vsel %vm8561, %v8532, %v7652
      %v8598 = vsel %vm8561, %v8533, %v7654
      %v8599 = vsel %vm8561, %v8534, %v7656
      %v8600 = vsel %vm8561, %v8535, %v7658
      %v8601 = vsel %vm8561, %v8536, %v7660
      %v8602 = vsel %vm8561, %v8537, %v7662
      %v8603 = vsel %vm8561, %v8538, %v7664
      %v8604 = vsel %vm8561, %v8539, %v7666
      %v8605 = vsel %vm8561, %v8540, %v7668
      %v8606 = vsel %vm8561, %v8541, %v7670
      %v8607 = vsel %vm8561, %v8542, %v7672
      %v8608 = vsel %vm8561, %v8543, %v7674
      %v8609 = vsel %vm8561, %v8544, %v7676
      %v8610 = vsel %vm8561, %v8545, %v7678
      %v8611 = vsel %vm8561, %v8546, %v7680
      %v8612 = vsel %vm8561, %v8547, %v7682
      %v8613 = vsel %vm8561, %v8548, %v7684
      %v8614 = vsel %vm8561, %v8549, %v7686
      %v8615 = vsel %vm8561, %v8550, %v7688
      %v8616 = vsel %vm8561, %v8551, %v7690
      %v8617 = vsel %vm8561, %v8552, %v7692
      %v8618 = vsel %vm8561, %v8553, %v7694
      %v8619 = vsel %vm8561, %v8554, %v7696
      %v8620 = vsel %vm8561, %v8555, %v7698
      %v8621 = vsel %vm8561, %v8556, %v7700
      %v8622 = vsel %vm8561, %v8557, %v7702
      %v8623 = vsel %vm8561, %v8558, %v7704
      %v8624 = vsel %vm8561, %v8559, %v7706
      %v8625 = vsel %vm8561, %v8560, %v7708
      %vm8626 = vcmask 392192
      %v8627 = vsel %vm8626, %v8562, %v7774
      %v8628 = vsel %vm8626, %v8563, %v7776
      %v8629 = vsel %vm8626, %v8564, %v7778
      %v8630 = vsel %vm8626, %v8565, %v7780
      %v8631 = vsel %vm8626, %v8566, %v7782
      %v8632 = vsel %vm8626, %v8567, %v7784
      %v8633 = vsel %vm8626, %v8568, %v7786
      %v8634 = vsel %vm8626, %v8569, %v7788
      %v8635 = vsel %vm8626, %v8570, %v7790
      %v8636 = vsel %vm8626, %v8571, %v7792
      %v8637 = vsel %vm8626, %v8572, %v7794
      %v8638 = vsel %vm8626, %v8573, %v7796
      %v8639 = vsel %vm8626, %v8574, %v7798
      %v8640 = vsel %vm8626, %v8575, %v7800
      %v8641 = vsel %vm8626, %v8576, %v7802
      %v8642 = vsel %vm8626, %v8577, %v7804
      %v8643 = vsel %vm8626, %v8578, %v7806
      %v8644 = vsel %vm8626, %v8579, %v7808
      %v8645 = vsel %vm8626, %v8580, %v7810
      %v8646 = vsel %vm8626, %v8581, %v7812
      %v8647 = vsel %vm8626, %v8582, %v7814
      %v8648 = vsel %vm8626, %v8583, %v7816
      %v8649 = vsel %vm8626, %v8584, %v7818
      %v8650 = vsel %vm8626, %v8585, %v7820
      %v8651 = vsel %vm8626, %v8586, %v7822
      %v8652 = vsel %vm8626, %v8587, %v7824
      %v8653 = vsel %vm8626, %v8588, %v7826
      %v8654 = vsel %vm8626, %v8589, %v7828
      %v8655 = vsel %vm8626, %v8590, %v7830
      %v8656 = vsel %vm8626, %v8591, %v7832
      %v8657 = vsel %vm8626, %v8592, %v7826
      %v8658 = vsel %vm8626, %v8593, %v7828
      %v8659 = vsel %vm8626, %v8594, %v7834
      %v8660 = vsel %vm8626, %v8595, %v7836
      %v8661 = vsel %vm8626, %v8596, %v7838
      %v8662 = vsel %vm8626, %v8597, %v7840
      %v8663 = vsel %vm8626, %v8598, %v7842
      %v8664 = vsel %vm8626, %v8599, %v7844
      %v8665 = vsel %vm8626, %v8600, %v7846
      %v8666 = vsel %vm8626, %v8601, %v7848
      %v8667 = vsel %vm8626, %v8602, %v7850
      %v8668 = vsel %vm8626, %v8603, %v7852
      %v8669 = vsel %vm8626, %v8604, %v7854
      %v8670 = vsel %vm8626, %v8605, %v7856
      %v8671 = vsel %vm8626, %v8606, %v7858
      %v8672 = vsel %vm8626, %v8607, %v7860
      %v8673 = vsel %vm8626, %v8608, %v7862
      %v8674 = vsel %vm8626, %v8609, %v7864
      %v8675 = vsel %vm8626, %v8610, %v7866
      %v8676 = vsel %vm8626, %v8611, %v7868
      %v8677 = vsel %vm8626, %v8612, %v7870
      %v8678 = vsel %vm8626, %v8613, %v7872
      %v8679 = vsel %vm8626, %v8614, %v7874
      %v8680 = vsel %vm8626, %v8615, %v7876
      %v8681 = vsel %vm8626, %v8616, %v7878
      %v8682 = vsel %vm8626, %v8617, %v7880
      %v8683 = vsel %vm8626, %v8618, %v7882
      %v8684 = vsel %vm8626, %v8619, %v7884
      %v8685 = vsel %vm8626, %v8620, %v7886
      %v8686 = vsel %vm8626, %v8621, %v7888
      %v8687 = vsel %vm8626, %v8622, %v7890
      %v8688 = vsel %vm8626, %v8623, %v7892
      %v8689 = vsel %vm8626, %v8624, %v7886
      %v8690 = vsel %vm8626, %v8625, %v7888
      %vm8691 = vcmask 457728
      %v8692 = vsel %vm8691, %v8627, %v7954
      %v8693 = vsel %vm8691, %v8628, %v7956
      %v8694 = vsel %vm8691, %v8629, %v7958
      %v8695 = vsel %vm8691, %v8630, %v7960
      %v8696 = vsel %vm8691, %v8631, %v7962
      %v8697 = vsel %vm8691, %v8632, %v7964
      %v8698 = vsel %vm8691, %v8633, %v7966
      %v8699 = vsel %vm8691, %v8634, %v7968
      %v8700 = vsel %vm8691, %v8635, %v7970
      %v8701 = vsel %vm8691, %v8636, %v7972
      %v8702 = vsel %vm8691, %v8637, %v7974
      %v8703 = vsel %vm8691, %v8638, %v7976
      %v8704 = vsel %vm8691, %v8639, %v7978
      %v8705 = vsel %vm8691, %v8640, %v7980
      %v8706 = vsel %vm8691, %v8641, %v7982
      %v8707 = vsel %vm8691, %v8642, %v7984
      %v8708 = vsel %vm8691, %v8643, %v7986
      %v8709 = vsel %vm8691, %v8644, %v7988
      %v8710 = vsel %vm8691, %v8645, %v7990
      %v8711 = vsel %vm8691, %v8646, %v7992
      %v8712 = vsel %vm8691, %v8647, %v7994
      %v8713 = vsel %vm8691, %v8648, %v7996
      %v8714 = vsel %vm8691, %v8649, %v7998
      %v8715 = vsel %vm8691, %v8650, %v8000
      %v8716 = vsel %vm8691, %v8651, %v8002
      %v8717 = vsel %vm8691, %v8652, %v8004
      %v8718 = vsel %vm8691, %v8653, %v8006
      %v8719 = vsel %vm8691, %v8654, %v8008
      %v8720 = vsel %vm8691, %v8655, %v8010
      %v8721 = vsel %vm8691, %v8656, %v8012
      %v8722 = vsel %vm8691, %v8657, %v8006
      %v8723 = vsel %vm8691, %v8658, %v8008
      %v8724 = vsel %vm8691, %v8659, %v8014
      %v8725 = vsel %vm8691, %v8660, %v8016
      %v8726 = vsel %vm8691, %v8661, %v8018
      %v8727 = vsel %vm8691, %v8662, %v8020
      %v8728 = vsel %vm8691, %v8663, %v8022
      %v8729 = vsel %vm8691, %v8664, %v8024
      %v8730 = vsel %vm8691, %v8665, %v8026
      %v8731 = vsel %vm8691, %v8666, %v8028
      %v8732 = vsel %vm8691, %v8667, %v8030
      %v8733 = vsel %vm8691, %v8668, %v8032
      %v8734 = vsel %vm8691, %v8669, %v8034
      %v8735 = vsel %vm8691, %v8670, %v8036
      %v8736 = vsel %vm8691, %v8671, %v8038
      %v8737 = vsel %vm8691, %v8672, %v8040
      %v8738 = vsel %vm8691, %v8673, %v8042
      %v8739 = vsel %vm8691, %v8674, %v8044
      %v8740 = vsel %vm8691, %v8675, %v8046
      %v8741 = vsel %vm8691, %v8676, %v8048
      %v8742 = vsel %vm8691, %v8677, %v8050
      %v8743 = vsel %vm8691, %v8678, %v8052
      %v8744 = vsel %vm8691, %v8679, %v8054
      %v8745 = vsel %vm8691, %v8680, %v8056
      %v8746 = vsel %vm8691, %v8681, %v8058
      %v8747 = vsel %vm8691, %v8682, %v8060
      %v8748 = vsel %vm8691, %v8683, %v8062
      %v8749 = vsel %vm8691, %v8684, %v8064
      %v8750 = vsel %vm8691, %v8685, %v8066
      %v8751 = vsel %vm8691, %v8686, %v8068
      %v8752 = vsel %vm8691, %v8687, %v8070
      %v8753 = vsel %vm8691, %v8688, %v8072
      %v8754 = vsel %vm8691, %v8689, %v8066
      %v8755 = vsel %vm8691, %v8690, %v8068
      %vm8756 = vcmask 523264
      %v8757 = vsel %vm8756, %v8692, %v8134
      %v8758 = vsel %vm8756, %v8693, %v8136
      %v8759 = vsel %vm8756, %v8694, %v8138
      %v8760 = vsel %vm8756, %v8695, %v8140
      %v8761 = vsel %vm8756, %v8696, %v8142
      %v8762 = vsel %vm8756, %v8697, %v8144
      %v8763 = vsel %vm8756, %v8698, %v8146
      %v8764 = vsel %vm8756, %v8699, %v8148
      %v8765 = vsel %vm8756, %v8700, %v8150
      %v8766 = vsel %vm8756, %v8701, %v8152
      %v8767 = vsel %vm8756, %v8702, %v8154
      %v8768 = vsel %vm8756, %v8703, %v8156
      %v8769 = vsel %vm8756, %v8704, %v8158
      %v8770 = vsel %vm8756, %v8705, %v8160
      %v8771 = vsel %vm8756, %v8706, %v8162
      %v8772 = vsel %vm8756, %v8707, %v8164
      %v8773 = vsel %vm8756, %v8708, %v8166
      %v8774 = vsel %vm8756, %v8709, %v8168
      %v8775 = vsel %vm8756, %v8710, %v8170
      %v8776 = vsel %vm8756, %v8711, %v8172
      %v8777 = vsel %vm8756, %v8712, %v8174
      %v8778 = vsel %vm8756, %v8713, %v8176
      %v8779 = vsel %vm8756, %v8714, %v8178
      %v8780 = vsel %vm8756, %v8715, %v8180
      %v8781 = vsel %vm8756, %v8716, %v8182
      %v8782 = vsel %vm8756, %v8717, %v8184
      %v8783 = vsel %vm8756, %v8718, %v8186
      %v8784 = vsel %vm8756, %v8719, %v8188
      %v8785 = vsel %vm8756, %v8720, %v8190
      %v8786 = vsel %vm8756, %v8721, %v8192
      %v8787 = vsel %vm8756, %v8722, %v8186
      %v8788 = vsel %vm8756, %v8723, %v8188
      %v8789 = vsel %vm8756, %v8724, %v8194
      %v8790 = vsel %vm8756, %v8725, %v8196
      %v8791 = vsel %vm8756, %v8726, %v8198
      %v8792 = vsel %vm8756, %v8727, %v8200
      %v8793 = vsel %vm8756, %v8728, %v8202
      %v8794 = vsel %vm8756, %v8729, %v8204
      %v8795 = vsel %vm8756, %v8730, %v8206
      %v8796 = vsel %vm8756, %v8731, %v8208
      %v8797 = vsel %vm8756, %v8732, %v8210
      %v8798 = vsel %vm8756, %v8733, %v8212
      %v8799 = vsel %vm8756, %v8734, %v8214
      %v8800 = vsel %vm8756, %v8735, %v8216
      %v8801 = vsel %vm8756, %v8736, %v8218
      %v8802 = vsel %vm8756, %v8737, %v8220
      %v8803 = vsel %vm8756, %v8738, %v8222
      %v8804 = vsel %vm8756, %v8739, %v8224
      %v8805 = vsel %vm8756, %v8740, %v8226
      %v8806 = vsel %vm8756, %v8741, %v8228
      %v8807 = vsel %vm8756, %v8742, %v8230
      %v8808 = vsel %vm8756, %v8743, %v8232
      %v8809 = vsel %vm8756, %v8744, %v8234
      %v8810 = vsel %vm8756, %v8745, %v8236
      %v8811 = vsel %vm8756, %v8746, %v8238
      %v8812 = vsel %vm8756, %v8747, %v8240
      %v8813 = vsel %vm8756, %v8748, %v8242
      %v8814 = vsel %vm8756, %v8749, %v8244
      %v8815 = vsel %vm8756, %v8750, %v8246
      %v8816 = vsel %vm8756, %v8751, %v8248
      %v8817 = vsel %vm8756, %v8752, %v8250
      %v8818 = vsel %vm8756, %v8753, %v8252
      %v8819 = vsel %vm8756, %v8754, %v8246
      %v8820 = vsel %vm8756, %v8755, %v8248
      %v8821 = vld [vmem:[%s9] sm:$0xff]
      %v8822 = vld [vmem:[%s9 + $0x8] sm:$0xff]
      %v8823 = vld [vmem:[%s9 + $0x10] sm:$0xff]
      %v8824 = vld [vmem:[%s9 + $0x18] sm:$0xff]
      %v8825 = vld [vmem:[%s9 + $0x20] sm:$0xff]
      %v8826 = vld [vmem:[%s9 + $0x28] sm:$0xff]
      %v8827 = vld [vmem:[%s9 + $0x30] sm:$0xff]
      %v8828 = vld [vmem:[%s9 + $0x38] sm:$0xff]
      %v8829 = vld [vmem:[%s9 + $0x40] sm:$0xff]
      %v8830 = vld [vmem:[%s10] sm:$0x1]
      %v8831 = vld [vmem:[%s11] sm:$0x1]
      %v8832 = vld [vmem:[%s12] sm:$0x1]
      %v8834 = vlaneseq
      %v8835 = vshrl.u32 %v8834, 7
      %v8836 = vsub.s32 0, %v8835
      %v8837 = vrot.slane %v8830, %v8836
      %vm8839 = vcmask 588800
      %v8841 = vsel %vm8839, %v8757, 0
      %v8844 = vsel %vm8839, %v8758, 0
      %v8847 = vsel %vm8839, %v8759, 0
      %v8850 = vsel %vm8839, %v8760, 0
      %v8853 = vsel %vm8839, %v8761, 0
      %v8856 = vsel %vm8839, %v8762, 0
      %v8859 = vsel %vm8839, %v8763, 0
      %v8862 = vsel %vm8839, %v8764, 0
      %v8865 = vsel %vm8839, %v8765, 0
      %v8868 = vsel %vm8839, %v8766, 0
      %v8871 = vsel %vm8839, %v8767, 0
      %v8874 = vsel %vm8839, %v8768, 0
      %v8877 = vsel %vm8839, %v8769, 0
      %v8880 = vsel %vm8839, %v8770, 0
      %v8883 = vsel %vm8839, %v8771, 0
      %v8886 = vsel %vm8839, %v8772, 0
      %v8889 = vsel %vm8839, %v8773, 0
      %v8892 = vsel %vm8839, %v8774, 0
      %v8895 = vsel %vm8839, %v8775, 0
      %v8898 = vsel %vm8839, %v8776, 0
      %v8901 = vsel %vm8839, %v8777, 0
      %v8904 = vsel %vm8839, %v8778, 0
      %v8907 = vsel %vm8839, %v8779, 0
      %v8910 = vsel %vm8839, %v8780, 0
      %v8913 = vsel %vm8839, %v8781, 0
      %v8916 = vsel %vm8839, %v8782, 0
      %v8919 = vsel %vm8839, %v8783, 0
      %v8922 = vsel %vm8839, %v8784, 0
      %v8925 = vsel %vm8839, %v8785, 0
      %v8928 = vsel %vm8839, %v8786, 0
      %v8931 = vsel %vm8839, %v8787, 0
      %v8934 = vsel %vm8839, %v8788, 0
      %v8937 = vsel %vm8839, %v8789, 0
      %v8940 = vsel %vm8839, %v8790, 0
      %v8943 = vsel %vm8839, %v8791, 0
      %v8946 = vsel %vm8839, %v8792, 0
      %v8949 = vsel %vm8839, %v8793, 0
      %v8952 = vsel %vm8839, %v8794, 0
      %v8955 = vsel %vm8839, %v8795, 0
      %v8958 = vsel %vm8839, %v8796, 0
      %v8961 = vsel %vm8839, %v8797, 0
      %v8964 = vsel %vm8839, %v8798, 0
      %v8967 = vsel %vm8839, %v8799, 0
      %v8970 = vsel %vm8839, %v8800, 0
      %v8973 = vsel %vm8839, %v8801, 0
      %v8976 = vsel %vm8839, %v8802, 0
      %v8979 = vsel %vm8839, %v8803, 0
      %v8982 = vsel %vm8839, %v8804, 0
      %v8985 = vsel %vm8839, %v8805, 0
      %v8988 = vsel %vm8839, %v8806, 0
      %v8991 = vsel %vm8839, %v8807, 0
      %v8994 = vsel %vm8839, %v8808, 0
      %v8997 = vsel %vm8839, %v8809, 0
      %v9000 = vsel %vm8839, %v8810, 0
      %v9003 = vsel %vm8839, %v8811, 0
      %v9006 = vsel %vm8839, %v8812, 0
      %v9009 = vsel %vm8839, %v8813, 0
      %v9012 = vsel %vm8839, %v8814, 0
      %v9015 = vsel %vm8839, %v8815, 0
      %v9018 = vsel %vm8839, %v8816, 0
      %v9021 = vsel %vm8839, %v8817, 0
      %v9024 = vsel %vm8839, %v8818, 0
      %v9027 = vsel %vm8839, %v8819, 0
      %v9030 = vsel %vm8839, %v8820, 0
      %9032 = vmatprep.subr.mxu0 0.0
      %9033 = vmatpush1.msra.mxu0 %v8821
      %9034 = vmatprep.subr.mxu0 0.0
      %9035 = vmatpush1.msra.mxu0 %v8822
      %9036 = vmatprep.subr.mxu0 0.0
      %9037 = vmatpush1.msra.mxu0 %v8823
      %9038 = vmatprep.subr.mxu0 0.0
      %9039 = vmatpush1.msra.mxu0 %v8824
      %9040 = vmatprep.subr.mxu0 0.0
      %9041 = vmatpush1.msra.mxu0 %v8825
      %9042 = vmatprep.subr.mxu0 0.0
      %9043 = vmatpush1.msra.mxu0 %v8826
      %9044 = vmatprep.subr.mxu0 0.0
      %9045 = vmatpush1.msra.mxu0 %v8827
      %9046 = vmatprep.subr.mxu0 0.0
      %9047 = vmatpush1.msra.mxu0 %v8828
      %9048 = vmatprep.subr.mxu0 0.0
      %9049 = vmatpush1.msra.mxu0 %v8829
      %9050 = vmatprep.subr.mxu0 0.0
      %9051 = vmatpush1.msra.mxu0 0.0
      %9052 = vmatprep.subr.mxu0 0.0
      %9053 = vmatpush1.msra.mxu0 0.0
      %9054 = vmatprep.subr.mxu0 0.0
      %9055 = vmatpush1.msra.mxu0 0.0
      %9056 = vmatprep.subr.mxu0 0.0
      %9057 = vmatpush1.msra.mxu0 0.0
      %9058 = vmatprep.subr.mxu0 0.0
      %9059 = vmatpush1.msra.mxu0 0.0
      %9060 = vmatprep.subr.mxu0 0.0
      %9061 = vmatpush1.msra.mxu0 0.0
      %9062 = vmatprep.subr.mxu0 0.0
      %9063 = vmatpush1.msra.mxu0 0.0
      %9064 = vmatprep.subr.mxu0 0.0
      %9065 = vmatpush1.msra.mxu0 0.0
      %9066 = vmatprep.subr.mxu0 0.0
      %9067 = vmatpush1.msra.mxu0 0.0
      %9068 = vmatprep.subr.mxu0 0.0
      %9069 = vmatpush1.msra.mxu0 0.0
      %9070 = vmatprep.subr.mxu0 0.0
      %9071 = vmatpush1.msra.mxu0 0.0
      %9072 = vmatprep.subr.mxu0 0.0
      %9073 = vmatpush1.msra.mxu0 0.0
      %9074 = vmatprep.subr.mxu0 0.0
      %9075 = vmatpush1.msra.mxu0 0.0
      %9076 = vmatprep.subr.mxu0 0.0
      %9077 = vmatpush1.msra.mxu0 0.0
      %9078 = vmatprep.subr.mxu0 0.0
      %9079 = vmatpush1.msra.mxu0 0.0
      %9080 = vmatprep.subr.mxu0 0.0
      %9081 = vmatpush1.msra.mxu0 0.0
      %9082 = vmatprep.subr.mxu0 0.0
      %9083 = vmatpush1.msra.mxu0 0.0
      %9084 = vmatprep.subr.mxu0 0.0
      %9085 = vmatpush1.msra.mxu0 0.0
      %9086 = vmatprep.subr.mxu0 0.0
      %9087 = vmatpush1.msra.mxu0 0.0
      %9088 = vmatprep.subr.mxu0 0.0
      %9089 = vmatpush1.msra.mxu0 0.0
      %9090 = vmatprep.subr.mxu0 0.0
      %9091 = vmatpush1.msra.mxu0 0.0
      %9092 = vmatprep.subr.mxu0 0.0
      %9093 = vmatpush1.msra.mxu0 0.0
      %9094 = vmatprep.subr.mxu0 0.0
      %9095 = vmatpush1.msra.mxu0 0.0
      %9096 = vmatprep.mubr.f32.mxu0 0.0
      %9097 = vmatmul.mubr.f32.gmra.mrb[0].mxu0 %v8841
      %v9098 = vpop.f32.mrb[0].mxu0
      %v9099 = vadd.f32 %v8837, %v9098
      %v9100 = vpop.f32.mrb[0].mxu0
      %9101 = vmatprep.mubr.f32.mxu0 0.0
      %9102 = vmatmul.mubr.f32.gmra.mrb[0].mxu0 %v8844
      %v9103 = vpop.f32.mrb[0].mxu0
      %v9104 = vadd.f32 %v8837, %v9103
      %v9105 = vpop.f32.mrb[0].mxu0
      %9106 = vmatprep.mubr.f32.mxu0 0.0
      %9107 = vmatmul.mubr.f32.gmra.mrb[0].mxu0 %v8847
      %v9108 = vpop.f32.mrb[0].mxu0
      %v9109 = vadd.f32 %v8837, %v9108
      %v9110 = vpop.f32.mrb[0].mxu0
      %9111 = vmatprep.mubr.f32.mxu0 0.0
      %9112 = vmatmul.mubr.f32.gmra.mrb[0].mxu0 %v8850
      %v9113 = vpop.f32.mrb[0].mxu0
      %v9114 = vadd.f32 %v8837, %v9113
      %v9115 = vpop.f32.mrb[0].mxu0
      %9116 = vmatprep.mubr.f32.mxu0 0.0
      %9117 = vmatmul.mubr.f32.gmra.mrb[0].mxu0 %v8853
      %v9118 = vpop.f32.mrb[0].mxu0
      %v9119 = vadd.f32 %v8837, %v9118
      %v9120 = vpop.f32.mrb[0].mxu0
      %9121 = vmatprep.mubr.f32.mxu0 0.0
      %9122 = vmatmul.mubr.f32.gmra.mrb[0].mxu0 %v8856
      %v9123 = vpop.f32.mrb[0].mxu0
      %v9124 = vadd.f32 %v8837, %v9123
      %v9125 = vpop.f32.mrb[0].mxu0
      %9126 = vmatprep.mubr.f32.mxu0 0.0
      %9127 = vmatmul.mubr.f32.gmra.mrb[0].mxu0 %v8859
      %v9128 = vpop.f32.mrb[0].mxu0
      %v9129 = vadd.f32 %v8837, %v9128
      %v9130 = vpop.f32.mrb[0].mxu0
      %9131 = vmatprep.mubr.f32.mxu0 0.0
      %9132 = vmatmul.mubr.f32.gmra.mrb[0].mxu0 %v8862
      %v9133 = vpop.f32.mrb[0].mxu0
      %v9134 = vadd.f32 %v8837, %v9133
      %v9135 = vpop.f32.mrb[0].mxu0
      %9136 = vmatprep.mubr.f32.mxu0 0.0
      %9137 = vmatmul.mubr.f32.gmra.mrb[0].mxu0 %v8865
      %v9138 = vpop.f32.mrb[0].mxu0
      %v9139 = vadd.f32 %v8837, %v9138
      %v9140 = vpop.f32.mrb[0].mxu0
      %9141 = vmatprep.mubr.f32.mxu0 0.0
      %9142 = vmatmul.mubr.f32.gmra.mrb[0].mxu0 %v8868
      %v9143 = vpop.f32.mrb[0].mxu0
      %v9144 = vadd.f32 %v8837, %v9143
      %v9145 = vpop.f32.mrb[0].mxu0
      %9146 = vmatprep.mubr.f32.mxu0 0.0
      %9147 = vmatmul.mubr.f32.gmra.mrb[0].mxu0 %v8871
      %v9148 = vpop.f32.mrb[0].mxu0
      %v9149 = vadd.f32 %v8837, %v9148
      %v9150 = vpop.f32.mrb[0].mxu0
      %9151 = vmatprep.mubr.f32.mxu0 0.0
      %9152 = vmatmul.mubr.f32.gmra.mrb[0].mxu0 %v8874
      %v9153 = vpop.f32.mrb[0].mxu0
      %v9154 = vadd.f32 %v8837, %v9153
      %v9155 = vpop.f32.mrb[0].mxu0
      %9156 = vmatprep.mubr.f32.mxu0 0.0
      %9157 = vmatmul.mubr.f32.gmra.mrb[0].mxu0 %v8877
      %v9158 = vpop.f32.mrb[0].mxu0
      %v9159 = vadd.f32 %v8837, %v9158
      %v9160 = vpop.f32.mrb[0].mxu0
      %9161 = vmatprep.mubr.f32.mxu0 0.0
      %9162 = vmatmul.mubr.f32.gmra.mrb[0].mxu0 %v8880
      %v9163 = vpop.f32.mrb[0].mxu0
      %v9164 = vadd.f32 %v8837, %v9163
      %v9165 = vpop.f32.mrb[0].mxu0
      %9166 = vmatprep.mubr.f32.mxu0 0.0
      %9167 = vmatmul.mubr.f32.gmra.mrb[0].mxu0 %v8883
      %v9168 = vpop.f32.mrb[0].mxu0
      %v9169 = vadd.f32 %v8837, %v9168
      %v9170 = vpop.f32.mrb[0].mxu0
      %9171 = vmatprep.mubr.f32.mxu0 0.0
      %9172 = vmatmul.mubr.f32.gmra.mrb[0].mxu0 %v8886
      %v9173 = vpop.f32.mrb[0].mxu0
      %v9174 = vadd.f32 %v8837, %v9173
      %v9175 = vpop.f32.mrb[0].mxu0
      %9176 = vmatprep.mubr.f32.mxu0 0.0
      %9177 = vmatmul.mubr.f32.gmra.mrb[0].mxu0 %v8889
      %v9178 = vpop.f32.mrb[0].mxu0
      %v9179 = vadd.f32 %v8837, %v9178
      %v9180 = vpop.f32.mrb[0].mxu0
      %9181 = vmatprep.mubr.f32.mxu0 0.0
      %9182 = vmatmul.mubr.f32.gmra.mrb[0].mxu0 %v8892
      %v9183 = vpop.f32.mrb[0].mxu0
      %v9184 = vadd.f32 %v8837, %v9183
      %v9185 = vpop.f32.mrb[0].mxu0
      %9186 = vmatprep.mubr.f32.mxu0 0.0
      %9187 = vmatmul.mubr.f32.gmra.mrb[0].mxu0 %v8895
      %v9188 = vpop.f32.mrb[0].mxu0
      %v9189 = vadd.f32 %v8837, %v9188
      %v9190 = vpop.f32.mrb[0].mxu0
      %9191 = vmatprep.mubr.f32.mxu0 0.0
      %9192 = vmatmul.mubr.f32.gmra.mrb[0].mxu0 %v8898
      %v9193 = vpop.f32.mrb[0].mxu0
      %v9194 = vadd.f32 %v8837, %v9193
      %v9195 = vpop.f32.mrb[0].mxu0
      %9196 = vmatprep.mubr.f32.mxu0 0.0
      %9197 = vmatmul.mubr.f32.gmra.mrb[0].mxu0 %v8901
      %v9198 = vpop.f32.mrb[0].mxu0
      %v9199 = vadd.f32 %v8837, %v9198
      %v9200 = vpop.f32.mrb[0].mxu0
      %9201 = vmatprep.mubr.f32.mxu0 0.0
      %9202 = vmatmul.mubr.f32.gmra.mrb[0].mxu0 %v8904
      %v9203 = vpop.f32.mrb[0].mxu0
      %v9204 = vadd.f32 %v8837, %v9203
      %v9205 = vpop.f32.mrb[0].mxu0
      %9206 = vmatprep.mubr.f32.mxu0 0.0
      %9207 = vmatmul.mubr.f32.gmra.mrb[0].mxu0 %v8907
      %v9208 = vpop.f32.mrb[0].mxu0
      %v9209 = vadd.f32 %v8837, %v9208
      %v9210 = vpop.f32.mrb[0].mxu0
      %9211 = vmatprep.mubr.f32.mxu0 0.0
      %9212 = vmatmul.mubr.f32.gmra.mrb[0].mxu0 %v8910
      %v9213 = vpop.f32.mrb[0].mxu0
      %v9214 = vadd.f32 %v8837, %v9213
      %v9215 = vpop.f32.mrb[0].mxu0
      %9216 = vmatprep.mubr.f32.mxu0 0.0
      %9217 = vmatmul.mubr.f32.gmra.mrb[0].mxu0 %v8913
      %v9218 = vpop.f32.mrb[0].mxu0
      %v9219 = vadd.f32 %v8837, %v9218
      %v9220 = vpop.f32.mrb[0].mxu0
      %9221 = vmatprep.mubr.f32.mxu0 0.0
      %9222 = vmatmul.mubr.f32.gmra.mrb[0].mxu0 %v8916
      %v9223 = vpop.f32.mrb[0].mxu0
      %v9224 = vadd.f32 %v8837, %v9223
      %v9225 = vpop.f32.mrb[0].mxu0
      %9226 = vmatprep.mubr.f32.mxu0 0.0
      %9227 = vmatmul.mubr.f32.gmra.mrb[0].mxu0 %v8919
      %v9228 = vpop.f32.mrb[0].mxu0
      %v9229 = vadd.f32 %v8837, %v9228
      %v9230 = vpop.f32.mrb[0].mxu0
      %9231 = vmatprep.mubr.f32.mxu0 0.0
      %9232 = vmatmul.mubr.f32.gmra.mrb[0].mxu0 %v8922
      %v9233 = vpop.f32.mrb[0].mxu0
      %v9234 = vadd.f32 %v8837, %v9233
      %v9235 = vpop.f32.mrb[0].mxu0
      %9236 = vmatprep.mubr.f32.mxu0 0.0
      %9237 = vmatmul.mubr.f32.gmra.mrb[0].mxu0 %v8925
      %v9238 = vpop.f32.mrb[0].mxu0
      %v9239 = vadd.f32 %v8837, %v9238
      %v9240 = vpop.f32.mrb[0].mxu0
      %9241 = vmatprep.mubr.f32.mxu0 0.0
      %9242 = vmatmul.mubr.f32.gmra.mrb[0].mxu0 %v8928
      %v9243 = vpop.f32.mrb[0].mxu0
      %v9244 = vadd.f32 %v8837, %v9243
      %v9245 = vpop.f32.mrb[0].mxu0
      %9246 = vmatprep.mubr.f32.mxu0 0.0
      %9247 = vmatmul.mubr.f32.gmra.mrb[0].mxu0 %v8931
      %v9248 = vpop.f32.mrb[0].mxu0
      %v9249 = vadd.f32 %v8837, %v9248
      %v9250 = vpop.f32.mrb[0].mxu0
      %9251 = vmatprep.mubr.f32.mxu0 0.0
      %9252 = vmatmul.mubr.f32.gmra.mrb[0].mxu0 %v8934
      %v9253 = vpop.f32.mrb[0].mxu0
      %v9254 = vadd.f32 %v8837, %v9253
      %v9255 = vpop.f32.mrb[0].mxu0
      %9256 = vmatprep.mubr.f32.mxu0 0.0
      %9257 = vmatmul.mubr.f32.gmra.mrb[0].mxu0 %v8937
      %v9258 = vpop.f32.mrb[0].mxu0
      %v9259 = vadd.f32 %v8837, %v9258
      %v9260 = vpop.f32.mrb[0].mxu0
      %9261 = vmatprep.mubr.f32.mxu0 0.0
      %9262 = vmatmul.mubr.f32.gmra.mrb[0].mxu0 %v8940
      %v9263 = vpop.f32.mrb[0].mxu0
      %v9264 = vadd.f32 %v8837, %v9263
      %v9265 = vpop.f32.mrb[0].mxu0
      %9266 = vmatprep.mubr.f32.mxu0 0.0
      %9267 = vmatmul.mubr.f32.gmra.mrb[0].mxu0 %v8943
      %v9268 = vpop.f32.mrb[0].mxu0
      %v9269 = vadd.f32 %v8837, %v9268
      %v9270 = vpop.f32.mrb[0].mxu0
      %9271 = vmatprep.mubr.f32.mxu0 0.0
      %9272 = vmatmul.mubr.f32.gmra.mrb[0].mxu0 %v8946
      %v9273 = vpop.f32.mrb[0].mxu0
      %v9274 = vadd.f32 %v8837, %v9273
      %v9275 = vpop.f32.mrb[0].mxu0
      %9276 = vmatprep.mubr.f32.mxu0 0.0
      %9277 = vmatmul.mubr.f32.gmra.mrb[0].mxu0 %v8949
      %v9278 = vpop.f32.mrb[0].mxu0
      %v9279 = vadd.f32 %v8837, %v9278
      %v9280 = vpop.f32.mrb[0].mxu0
      %9281 = vmatprep.mubr.f32.mxu0 0.0
      %9282 = vmatmul.mubr.f32.gmra.mrb[0].mxu0 %v8952
      %v9283 = vpop.f32.mrb[0].mxu0
      %v9284 = vadd.f32 %v8837, %v9283
      %v9285 = vpop.f32.mrb[0].mxu0
      %9286 = vmatprep.mubr.f32.mxu0 0.0
      %9287 = vmatmul.mubr.f32.gmra.mrb[0].mxu0 %v8955
      %v9288 = vpop.f32.mrb[0].mxu0
      %v9289 = vadd.f32 %v8837, %v9288
      %v9290 = vpop.f32.mrb[0].mxu0
      %9291 = vmatprep.mubr.f32.mxu0 0.0
      %9292 = vmatmul.mubr.f32.gmra.mrb[0].mxu0 %v8958
      %v9293 = vpop.f32.mrb[0].mxu0
      %v9294 = vadd.f32 %v8837, %v9293
      %v9295 = vpop.f32.mrb[0].mxu0
      %9296 = vmatprep.mubr.f32.mxu0 0.0
      %9297 = vmatmul.mubr.f32.gmra.mrb[0].mxu0 %v8961
      %v9298 = vpop.f32.mrb[0].mxu0
      %v9299 = vadd.f32 %v8837, %v9298
      %v9300 = vpop.f32.mrb[0].mxu0
      %9301 = vmatprep.mubr.f32.mxu0 0.0
      %9302 = vmatmul.mubr.f32.gmra.mrb[0].mxu0 %v8964
      %v9303 = vpop.f32.mrb[0].mxu0
      %v9304 = vadd.f32 %v8837, %v9303
      %v9305 = vpop.f32.mrb[0].mxu0
      %9306 = vmatprep.mubr.f32.mxu0 0.0
      %9307 = vmatmul.mubr.f32.gmra.mrb[0].mxu0 %v8967
      %v9308 = vpop.f32.mrb[0].mxu0
      %v9309 = vadd.f32 %v8837, %v9308
      %v9310 = vpop.f32.mrb[0].mxu0
      %9311 = vmatprep.mubr.f32.mxu0 0.0
      %9312 = vmatmul.mubr.f32.gmra.mrb[0].mxu0 %v8970
      %v9313 = vpop.f32.mrb[0].mxu0
      %v9314 = vadd.f32 %v8837, %v9313
      %v9315 = vpop.f32.mrb[0].mxu0
      %9316 = vmatprep.mubr.f32.mxu0 0.0
      %9317 = vmatmul.mubr.f32.gmra.mrb[0].mxu0 %v8973
      %v9318 = vpop.f32.mrb[0].mxu0
      %v9319 = vadd.f32 %v8837, %v9318
      %v9320 = vpop.f32.mrb[0].mxu0
      %9321 = vmatprep.mubr.f32.mxu0 0.0
      %9322 = vmatmul.mubr.f32.gmra.mrb[0].mxu0 %v8976
      %v9323 = vpop.f32.mrb[0].mxu0
      %v9324 = vadd.f32 %v8837, %v9323
      %v9325 = vpop.f32.mrb[0].mxu0
      %9326 = vmatprep.mubr.f32.mxu0 0.0
      %9327 = vmatmul.mubr.f32.gmra.mrb[0].mxu0 %v8979
      %v9328 = vpop.f32.mrb[0].mxu0
      %v9329 = vadd.f32 %v8837, %v9328
      %v9330 = vpop.f32.mrb[0].mxu0
      %9331 = vmatprep.mubr.f32.mxu0 0.0
      %9332 = vmatmul.mubr.f32.gmra.mrb[0].mxu0 %v8982
      %v9333 = vpop.f32.mrb[0].mxu0
      %v9334 = vadd.f32 %v8837, %v9333
      %v9335 = vpop.f32.mrb[0].mxu0
      %9336 = vmatprep.mubr.f32.mxu0 0.0
      %9337 = vmatmul.mubr.f32.gmra.mrb[0].mxu0 %v8985
      %v9338 = vpop.f32.mrb[0].mxu0
      %v9339 = vadd.f32 %v8837, %v9338
      %v9340 = vpop.f32.mrb[0].mxu0
      %9341 = vmatprep.mubr.f32.mxu0 0.0
      %9342 = vmatmul.mubr.f32.gmra.mrb[0].mxu0 %v8988
      %v9343 = vpop.f32.mrb[0].mxu0
      %v9344 = vadd.f32 %v8837, %v9343
      %v9345 = vpop.f32.mrb[0].mxu0
      %9346 = vmatprep.mubr.f32.mxu0 0.0
      %9347 = vmatmul.mubr.f32.gmra.mrb[0].mxu0 %v8991
      %v9348 = vpop.f32.mrb[0].mxu0
      %v9349 = vadd.f32 %v8837, %v9348
      %v9350 = vpop.f32.mrb[0].mxu0
      %9351 = vmatprep.mubr.f32.mxu0 0.0
      %9352 = vmatmul.mubr.f32.gmra.mrb[0].mxu0 %v8994
      %v9353 = vpop.f32.mrb[0].mxu0
      %v9354 = vadd.f32 %v8837, %v9353
      %v9355 = vpop.f32.mrb[0].mxu0
      %9356 = vmatprep.mubr.f32.mxu0 0.0
      %9357 = vmatmul.mubr.f32.gmra.mrb[0].mxu0 %v8997
      %v9358 = vpop.f32.mrb[0].mxu0
      %v9359 = vadd.f32 %v8837, %v9358
      %v9360 = vpop.f32.mrb[0].mxu0
      %9361 = vmatprep.mubr.f32.mxu0 0.0
      %9362 = vmatmul.mubr.f32.gmra.mrb[0].mxu0 %v9000
      %v9363 = vpop.f32.mrb[0].mxu0
      %v9364 = vadd.f32 %v8837, %v9363
      %v9365 = vpop.f32.mrb[0].mxu0
      %9366 = vmatprep.mubr.f32.mxu0 0.0
      %9367 = vmatmul.mubr.f32.gmra.mrb[0].mxu0 %v9003
      %v9368 = vpop.f32.mrb[0].mxu0
      %v9369 = vadd.f32 %v8837, %v9368
      %v9370 = vpop.f32.mrb[0].mxu0
      %9371 = vmatprep.mubr.f32.mxu0 0.0
      %9372 = vmatmul.mubr.f32.gmra.mrb[0].mxu0 %v9006
      %v9373 = vpop.f32.mrb[0].mxu0
      %v9374 = vadd.f32 %v8837, %v9373
      %v9375 = vpop.f32.mrb[0].mxu0
      %9376 = vmatprep.mubr.f32.mxu0 0.0
      %9377 = vmatmul.mubr.f32.gmra.mrb[0].mxu0 %v9009
      %v9378 = vpop.f32.mrb[0].mxu0
      %v9379 = vadd.f32 %v8837, %v9378
      %v9380 = vpop.f32.mrb[0].mxu0
      %9381 = vmatprep.mubr.f32.mxu0 0.0
      %9382 = vmatmul.mubr.f32.gmra.mrb[0].mxu0 %v9012
      %v9383 = vpop.f32.mrb[0].mxu0
      %v9384 = vadd.f32 %v8837, %v9383
      %v9385 = vpop.f32.mrb[0].mxu0
      %9386 = vmatprep.mubr.f32.mxu0 0.0
      %9387 = vmatmul.mubr.f32.gmra.mrb[0].mxu0 %v9015
      %v9388 = vpop.f32.mrb[0].mxu0
      %v9389 = vadd.f32 %v8837, %v9388
      %v9390 = vpop.f32.mrb[0].mxu0
      %9391 = vmatprep.mubr.f32.mxu0 0.0
      %9392 = vmatmul.mubr.f32.gmra.mrb[0].mxu0 %v9018
      %v9393 = vpop.f32.mrb[0].mxu0
      %v9394 = vadd.f32 %v8837, %v9393
      %v9395 = vpop.f32.mrb[0].mxu0
      %9396 = vmatprep.mubr.f32.mxu0 0.0
      %9397 = vmatmul.mubr.f32.gmra.mrb[0].mxu0 %v9021
      %v9398 = vpop.f32.mrb[0].mxu0
      %v9399 = vadd.f32 %v8837, %v9398
      %v9400 = vpop.f32.mrb[0].mxu0
      %9401 = vmatprep.mubr.f32.mxu0 0.0
      %9402 = vmatmul.mubr.f32.gmra.mrb[0].mxu0 %v9024
      %v9403 = vpop.f32.mrb[0].mxu0
      %v9404 = vadd.f32 %v8837, %v9403
      %v9405 = vpop.f32.mrb[0].mxu0
      %9406 = vmatprep.mubr.f32.mxu0 0.0
      %9407 = vmatmul.mubr.f32.gmra.mrb[0].mxu0 %v9027
      %v9408 = vpop.f32.mrb[0].mxu0
      %v9409 = vadd.f32 %v8837, %v9408
      %v9410 = vpop.f32.mrb[0].mxu0
      %9411 = vmatprep.mubr.f32.mxu0 0.0
      %9412 = vmatmul.mubr.f32.gmra.mrb[0].mxu0 %v9030
      %v9413 = vpop.f32.mrb[0].mxu0
      %v9414 = vadd.f32 %v8837, %v9413
      %v9415 = vpop.f32.mrb[0].mxu0
      %9416 = vdwg.mxu0
      %v9417 = vmax.f32 %v9099, 0.0
      %v9418 = vmax.f32 %v9104, 0.0
      %v9419 = vmax.f32 %v9109, 0.0
      %v9420 = vmax.f32 %v9114, 0.0
      %v9421 = vmax.f32 %v9119, 0.0
      %v9422 = vmax.f32 %v9124, 0.0
      %v9423 = vmax.f32 %v9129, 0.0
      %v9424 = vmax.f32 %v9134, 0.0
      %v9425 = vmax.f32 %v9139, 0.0
      %v9426 = vmax.f32 %v9144, 0.0
      %v9427 = vmax.f32 %v9149, 0.0
      %v9428 = vmax.f32 %v9154, 0.0
      %v9429 = vmax.f32 %v9159, 0.0
      %v9430 = vmax.f32 %v9164, 0.0
      %v9431 = vmax.f32 %v9169, 0.0
      %v9432 = vmax.f32 %v9174, 0.0
      %v9433 = vmax.f32 %v9179, 0.0
      %v9434 = vmax.f32 %v9184, 0.0
      %v9435 = vmax.f32 %v9189, 0.0
      %v9436 = vmax.f32 %v9194, 0.0
      %v9437 = vmax.f32 %v9199, 0.0
      %v9438 = vmax.f32 %v9204, 0.0
      %v9439 = vmax.f32 %v9209, 0.0
      %v9440 = vmax.f32 %v9214, 0.0
      %v9441 = vmax.f32 %v9219, 0.0
      %v9442 = vmax.f32 %v9224, 0.0
      %v9443 = vmax.f32 %v9229, 0.0
      %v9444 = vmax.f32 %v9234, 0.0
      %v9445 = vmax.f32 %v9239, 0.0
      %v9446 = vmax.f32 %v9244, 0.0
      %v9447 = vmax.f32 %v9249, 0.0
      %v9448 = vmax.f32 %v9254, 0.0
      %v9449 = vmax.f32 %v9259, 0.0
      %v9450 = vmax.f32 %v9264, 0.0
      %v9451 = vmax.f32 %v9269, 0.0
      %v9452 = vmax.f32 %v9274, 0.0
      %v9453 = vmax.f32 %v9279, 0.0
      %v9454 = vmax.f32 %v9284, 0.0
      %v9455 = vmax.f32 %v9289, 0.0
      %v9456 = vmax.f32 %v9294, 0.0
      %v9457 = vmax.f32 %v9299, 0.0
      %v9458 = vmax.f32 %v9304, 0.0
      %v9459 = vmax.f32 %v9309, 0.0
      %v9460 = vmax.f32 %v9314, 0.0
      %v9461 = vmax.f32 %v9319, 0.0
      %v9462 = vmax.f32 %v9324, 0.0
      %v9463 = vmax.f32 %v9329, 0.0
      %v9464 = vmax.f32 %v9334, 0.0
      %v9465 = vmax.f32 %v9339, 0.0
      %v9466 = vmax.f32 %v9344, 0.0
      %v9467 = vmax.f32 %v9349, 0.0
      %v9468 = vmax.f32 %v9354, 0.0
      %v9469 = vmax.f32 %v9359, 0.0
      %v9470 = vmax.f32 %v9364, 0.0
      %v9471 = vmax.f32 %v9369, 0.0
      %v9472 = vmax.f32 %v9374, 0.0
      %v9473 = vmax.f32 %v9379, 0.0
      %v9474 = vmax.f32 %v9384, 0.0
      %v9475 = vmax.f32 %v9389, 0.0
      %v9476 = vmax.f32 %v9394, 0.0
      %v9477 = vmax.f32 %v9399, 0.0
      %v9478 = vmax.f32 %v9404, 0.0
      %v9479 = vmax.f32 %v9409, 0.0
      %v9480 = vmax.f32 %v9414, 0.0
      %v9481 = vsel %vm4294, %v9417, 0.0
      %v9482 = vsel %vm4294, %v9418, 0.0
      %v9483 = vadd.f32 %v9481, %v9482
      %v9484 = vsel %vm4294, %v9419, 0.0
      %v9485 = vadd.f32 %v9483, %v9484
      %v9486 = vsel %vm4294, %v9420, 0.0
      %v9487 = vadd.f32 %v9485, %v9486
      %v9488 = vsel %vm4294, %v9421, 0.0
      %v9489 = vadd.f32 %v9487, %v9488
      %v9490 = vsel %vm4294, %v9422, 0.0
      %v9491 = vadd.f32 %v9489, %v9490
      %v9492 = vsel %vm4294, %v9423, 0.0
      %v9493 = vadd.f32 %v9491, %v9492
      %v9494 = vsel %vm4294, %v9424, 0.0
      %v9495 = vadd.f32 %v9493, %v9494
      %v9496 = vsel %vm4294, %v9425, 0.0
      %v9497 = vadd.f32 %v9495, %v9496
      %v9498 = vsel %vm4294, %v9426, 0.0
      %v9499 = vadd.f32 %v9497, %v9498
      %v9500 = vsel %vm4294, %v9427, 0.0
      %v9501 = vadd.f32 %v9499, %v9500
      %v9502 = vsel %vm4294, %v9428, 0.0
      %v9503 = vadd.f32 %v9501, %v9502
      %v9504 = vsel %vm4294, %v9429, 0.0
      %v9505 = vadd.f32 %v9503, %v9504
      %v9506 = vsel %vm4294, %v9430, 0.0
      %v9507 = vadd.f32 %v9505, %v9506
      %v9508 = vsel %vm4294, %v9431, 0.0
      %v9509 = vadd.f32 %v9507, %v9508
      %v9510 = vsel %vm4294, %v9432, 0.0
      %v9511 = vadd.f32 %v9509, %v9510
      %v9512 = vsel %vm4294, %v9433, 0.0
      %v9513 = vadd.f32 %v9511, %v9512
      %v9514 = vsel %vm4294, %v9434, 0.0
      %v9515 = vadd.f32 %v9513, %v9514
      %v9516 = vsel %vm4294, %v9435, 0.0
      %v9517 = vadd.f32 %v9515, %v9516
      %v9518 = vsel %vm4294, %v9436, 0.0
      %v9519 = vadd.f32 %v9517, %v9518
      %v9520 = vsel %vm4294, %v9437, 0.0
      %v9521 = vadd.f32 %v9519, %v9520
      %v9522 = vsel %vm4294, %v9438, 0.0
      %v9523 = vadd.f32 %v9521, %v9522
      %v9524 = vsel %vm4294, %v9439, 0.0
      %v9525 = vadd.f32 %v9523, %v9524
      %v9526 = vsel %vm4294, %v9440, 0.0
      %v9527 = vadd.f32 %v9525, %v9526
      %v9528 = vsel %vm4294, %v9441, 0.0
      %v9529 = vadd.f32 %v9527, %v9528
      %v9530 = vsel %vm4294, %v9442, 0.0
      %v9531 = vadd.f32 %v9529, %v9530
      %v9532 = vsel %vm4294, %v9443, 0.0
      %v9533 = vadd.f32 %v9531, %v9532
      %v9534 = vsel %vm4294, %v9444, 0.0
      %v9535 = vadd.f32 %v9533, %v9534
      %v9536 = vsel %vm4294, %v9445, 0.0
      %v9537 = vadd.f32 %v9535, %v9536
      %v9538 = vsel %vm4294, %v9446, 0.0
      %v9539 = vadd.f32 %v9537, %v9538
      %v9540 = vsel %vm4294, %v9447, 0.0
      %v9541 = vadd.f32 %v9539, %v9540
      %v9542 = vsel %vm4294, %v9448, 0.0
      %v9543 = vadd.f32 %v9541, %v9542
      %v9544 = vsel %vm4294, %v9449, 0.0
      %v9545 = vadd.f32 %v9543, %v9544
      %v9546 = vsel %vm4294, %v9450, 0.0
      %v9547 = vadd.f32 %v9545, %v9546
      %v9548 = vsel %vm4294, %v9451, 0.0
      %v9549 = vadd.f32 %v9547, %v9548
      %v9550 = vsel %vm4294, %v9452, 0.0
      %v9551 = vadd.f32 %v9549, %v9550
      %v9552 = vsel %vm4294, %v9453, 0.0
      %v9553 = vadd.f32 %v9551, %v9552
      %v9554 = vsel %vm4294, %v9454, 0.0
      %v9555 = vadd.f32 %v9553, %v9554
      %v9556 = vsel %vm4294, %v9455, 0.0
      %v9557 = vadd.f32 %v9555, %v9556
      %v9558 = vsel %vm4294, %v9456, 0.0
      %v9559 = vadd.f32 %v9557, %v9558
      %v9560 = vsel %vm4294, %v9457, 0.0
      %v9561 = vadd.f32 %v9559, %v9560
      %v9562 = vsel %vm4294, %v9458, 0.0
      %v9563 = vadd.f32 %v9561, %v9562
      %v9564 = vsel %vm4294, %v9459, 0.0
      %v9565 = vadd.f32 %v9563, %v9564
      %v9566 = vsel %vm4294, %v9460, 0.0
      %v9567 = vadd.f32 %v9565, %v9566
      %v9568 = vsel %vm4294, %v9461, 0.0
      %v9569 = vadd.f32 %v9567, %v9568
      %v9570 = vsel %vm4294, %v9462, 0.0
      %v9571 = vadd.f32 %v9569, %v9570
      %v9572 = vsel %vm4294, %v9463, 0.0
      %v9573 = vadd.f32 %v9571, %v9572
      %v9574 = vsel %vm4294, %v9464, 0.0
      %v9575 = vadd.f32 %v9573, %v9574
      %v9576 = vsel %vm4294, %v9465, 0.0
      %v9577 = vadd.f32 %v9575, %v9576
      %v9578 = vsel %vm4294, %v9466, 0.0
      %v9579 = vadd.f32 %v9577, %v9578
      %v9580 = vsel %vm4294, %v9467, 0.0
      %v9581 = vadd.f32 %v9579, %v9580
      %v9582 = vsel %vm4294, %v9468, 0.0
      %v9583 = vadd.f32 %v9581, %v9582
      %v9584 = vsel %vm4294, %v9469, 0.0
      %v9585 = vadd.f32 %v9583, %v9584
      %v9586 = vsel %vm4294, %v9470, 0.0
      %v9587 = vadd.f32 %v9585, %v9586
      %v9588 = vsel %vm4294, %v9471, 0.0
      %v9589 = vadd.f32 %v9587, %v9588
      %v9590 = vsel %vm4294, %v9472, 0.0
      %v9591 = vadd.f32 %v9589, %v9590
      %v9592 = vsel %vm4294, %v9473, 0.0
      %v9593 = vadd.f32 %v9591, %v9592
      %v9594 = vsel %vm4294, %v9474, 0.0
      %v9595 = vadd.f32 %v9593, %v9594
      %v9596 = vsel %vm4294, %v9475, 0.0
      %v9597 = vadd.f32 %v9595, %v9596
      %v9598 = vsel %vm4294, %v9476, 0.0
      %v9599 = vadd.f32 %v9597, %v9598
      %v9600 = vsel %vm4294, %v9477, 0.0
      %v9601 = vadd.f32 %v9599, %v9600
      %v9602 = vsel %vm4294, %v9478, 0.0
      %v9603 = vadd.f32 %v9601, %v9602
      %v9604 = vsel %vm4294, %v9479, 0.0
      %v9605 = vadd.f32 %v9603, %v9604
      %v9606 = vsel %vm4294, %v9480, 0.0
      %v9607 = vadd.f32 %v9605, %v9606
      %v9608 = vrot.slane %v9607, 4
      %v9609 = vadd.f32 %v9607, %v9608
      %v9610 = vrot.slane %v9609, 2
      %v9611 = vadd.f32 %v9609, %v9610
      %v9612 = vrot.slane %v9611, 1
      %v9613 = vadd.f32 %v9611, %v9612
      %v9614 = vmul.f32 %v9613, %v1456
      %v9615 = vsub.f32 %v9417, %v9614
      %v9616 = vsub.f32 %v9418, %v9614
      %v9617 = vsub.f32 %v9419, %v9614
      %v9618 = vsub.f32 %v9420, %v9614
      %v9619 = vsub.f32 %v9421, %v9614
      %v9620 = vsub.f32 %v9422, %v9614
      %v9621 = vsub.f32 %v9423, %v9614
      %v9622 = vsub.f32 %v9424, %v9614
      %v9623 = vsub.f32 %v9425, %v9614
      %v9624 = vsub.f32 %v9426, %v9614
      %v9625 = vsub.f32 %v9427, %v9614
      %v9626 = vsub.f32 %v9428, %v9614
      %v9627 = vsub.f32 %v9429, %v9614
      %v9628 = vsub.f32 %v9430, %v9614
      %v9629 = vsub.f32 %v9431, %v9614
      %v9630 = vsub.f32 %v9432, %v9614
      %v9631 = vsub.f32 %v9433, %v9614
      %v9632 = vsub.f32 %v9434, %v9614
      %v9633 = vsub.f32 %v9435, %v9614
      %v9634 = vsub.f32 %v9436, %v9614
      %v9635 = vsub.f32 %v9437, %v9614
      %v9636 = vsub.f32 %v9438, %v9614
      %v9637 = vsub.f32 %v9439, %v9614
      %v9638 = vsub.f32 %v9440, %v9614
      %v9639 = vsub.f32 %v9441, %v9614
      %v9640 = vsub.f32 %v9442, %v9614
      %v9641 = vsub.f32 %v9443, %v9614
      %v9642 = vsub.f32 %v9444, %v9614
      %v9643 = vsub.f32 %v9445, %v9614
      %v9644 = vsub.f32 %v9446, %v9614
      %v9645 = vsub.f32 %v9447, %v9614
      %v9646 = vsub.f32 %v9448, %v9614
      %v9647 = vsub.f32 %v9449, %v9614
      %v9648 = vsub.f32 %v9450, %v9614
      %v9649 = vsub.f32 %v9451, %v9614
      %v9650 = vsub.f32 %v9452, %v9614
      %v9651 = vsub.f32 %v9453, %v9614
      %v9652 = vsub.f32 %v9454, %v9614
      %v9653 = vsub.f32 %v9455, %v9614
      %v9654 = vsub.f32 %v9456, %v9614
      %v9655 = vsub.f32 %v9457, %v9614
      %v9656 = vsub.f32 %v9458, %v9614
      %v9657 = vsub.f32 %v9459, %v9614
      %v9658 = vsub.f32 %v9460, %v9614
      %v9659 = vsub.f32 %v9461, %v9614
      %v9660 = vsub.f32 %v9462, %v9614
      %v9661 = vsub.f32 %v9463, %v9614
      %v9662 = vsub.f32 %v9464, %v9614
      %v9663 = vsub.f32 %v9465, %v9614
      %v9664 = vsub.f32 %v9466, %v9614
      %v9665 = vsub.f32 %v9467, %v9614
      %v9666 = vsub.f32 %v9468, %v9614
      %v9667 = vsub.f32 %v9469, %v9614
      %v9668 = vsub.f32 %v9470, %v9614
      %v9669 = vsub.f32 %v9471, %v9614
      %v9670 = vsub.f32 %v9472, %v9614
      %v9671 = vsub.f32 %v9473, %v9614
      %v9672 = vsub.f32 %v9474, %v9614
      %v9673 = vsub.f32 %v9475, %v9614
      %v9674 = vsub.f32 %v9476, %v9614
      %v9675 = vsub.f32 %v9477, %v9614
      %v9676 = vsub.f32 %v9478, %v9614
      %v9677 = vsub.f32 %v9479, %v9614
      %v9678 = vsub.f32 %v9480, %v9614
      %v9679 = vmul.f32 %v9615, %v9615
      %v9680 = vmul.f32 %v9616, %v9616
      %v9681 = vmul.f32 %v9617, %v9617
      %v9682 = vmul.f32 %v9618, %v9618
      %v9683 = vmul.f32 %v9619, %v9619
      %v9684 = vmul.f32 %v9620, %v9620
      %v9685 = vmul.f32 %v9621, %v9621
      %v9686 = vmul.f32 %v9622, %v9622
      %v9687 = vmul.f32 %v9623, %v9623
      %v9688 = vmul.f32 %v9624, %v9624
      %v9689 = vmul.f32 %v9625, %v9625
      %v9690 = vmul.f32 %v9626, %v9626
      %v9691 = vmul.f32 %v9627, %v9627
      %v9692 = vmul.f32 %v9628, %v9628
      %v9693 = vmul.f32 %v9629, %v9629
      %v9694 = vmul.f32 %v9630, %v9630
      %v9695 = vmul.f32 %v9631, %v9631
      %v9696 = vmul.f32 %v9632, %v9632
      %v9697 = vmul.f32 %v9633, %v9633
      %v9698 = vmul.f32 %v9634, %v9634
      %v9699 = vmul.f32 %v9635, %v9635
      %v9700 = vmul.f32 %v9636, %v9636
      %v9701 = vmul.f32 %v9637, %v9637
      %v9702 = vmul.f32 %v9638, %v9638
      %v9703 = vmul.f32 %v9639, %v9639
      %v9704 = vmul.f32 %v9640, %v9640
      %v9705 = vmul.f32 %v9641, %v9641
      %v9706 = vmul.f32 %v9642, %v9642
      %v9707 = vmul.f32 %v9643, %v9643
      %v9708 = vmul.f32 %v9644, %v9644
      %v9709 = vmul.f32 %v9645, %v9645
      %v9710 = vmul.f32 %v9646, %v9646
      %v9711 = vmul.f32 %v9647, %v9647
      %v9712 = vmul.f32 %v9648, %v9648
      %v9713 = vmul.f32 %v9649, %v9649
      %v9714 = vmul.f32 %v9650, %v9650
      %v9715 = vmul.f32 %v9651, %v9651
      %v9716 = vmul.f32 %v9652, %v9652
      %v9717 = vmul.f32 %v9653, %v9653
      %v9718 = vmul.f32 %v9654, %v9654
      %v9719 = vmul.f32 %v9655, %v9655
      %v9720 = vmul.f32 %v9656, %v9656
      %v9721 = vmul.f32 %v9657, %v9657
      %v9722 = vmul.f32 %v9658, %v9658
      %v9723 = vmul.f32 %v9659, %v9659
      %v9724 = vmul.f32 %v9660, %v9660
      %v9725 = vmul.f32 %v9661, %v9661
      %v9726 = vmul.f32 %v9662, %v9662
      %v9727 = vmul.f32 %v9663, %v9663
      %v9728 = vmul.f32 %v9664, %v9664
      %v9729 = vmul.f32 %v9665, %v9665
      %v9730 = vmul.f32 %v9666, %v9666
      %v9731 = vmul.f32 %v9667, %v9667
      %v9732 = vmul.f32 %v9668, %v9668
      %v9733 = vmul.f32 %v9669, %v9669
      %v9734 = vmul.f32 %v9670, %v9670
      %v9735 = vmul.f32 %v9671, %v9671
      %v9736 = vmul.f32 %v9672, %v9672
      %v9737 = vmul.f32 %v9673, %v9673
      %v9738 = vmul.f32 %v9674, %v9674
      %v9739 = vmul.f32 %v9675, %v9675
      %v9740 = vmul.f32 %v9676, %v9676
      %v9741 = vmul.f32 %v9677, %v9677
      %v9742 = vmul.f32 %v9678, %v9678
      %v9743 = vsel %vm4294, %v9679, 0.0
      %v9744 = vsel %vm4294, %v9680, 0.0
      %v9745 = vadd.f32 %v9743, %v9744
      %v9746 = vsel %vm4294, %v9681, 0.0
      %v9747 = vadd.f32 %v9745, %v9746
      %v9748 = vsel %vm4294, %v9682, 0.0
      %v9749 = vadd.f32 %v9747, %v9748
      %v9750 = vsel %vm4294, %v9683, 0.0
      %v9751 = vadd.f32 %v9749, %v9750
      %v9752 = vsel %vm4294, %v9684, 0.0
      %v9753 = vadd.f32 %v9751, %v9752
      %v9754 = vsel %vm4294, %v9685, 0.0
      %v9755 = vadd.f32 %v9753, %v9754
      %v9756 = vsel %vm4294, %v9686, 0.0
      %v9757 = vadd.f32 %v9755, %v9756
      %v9758 = vsel %vm4294, %v9687, 0.0
      %v9759 = vadd.f32 %v9757, %v9758
      %v9760 = vsel %vm4294, %v9688, 0.0
      %v9761 = vadd.f32 %v9759, %v9760
      %v9762 = vsel %vm4294, %v9689, 0.0
      %v9763 = vadd.f32 %v9761, %v9762
      %v9764 = vsel %vm4294, %v9690, 0.0
      %v9765 = vadd.f32 %v9763, %v9764
      %v9766 = vsel %vm4294, %v9691, 0.0
      %v9767 = vadd.f32 %v9765, %v9766
      %v9768 = vsel %vm4294, %v9692, 0.0
      %v9769 = vadd.f32 %v9767, %v9768
      %v9770 = vsel %vm4294, %v9693, 0.0
      %v9771 = vadd.f32 %v9769, %v9770
      %v9772 = vsel %vm4294, %v9694, 0.0
      %v9773 = vadd.f32 %v9771, %v9772
      %v9774 = vsel %vm4294, %v9695, 0.0
      %v9775 = vadd.f32 %v9773, %v9774
      %v9776 = vsel %vm4294, %v9696, 0.0
      %v9777 = vadd.f32 %v9775, %v9776
      %v9778 = vsel %vm4294, %v9697, 0.0
      %v9779 = vadd.f32 %v9777, %v9778
      %v9780 = vsel %vm4294, %v9698, 0.0
      %v9781 = vadd.f32 %v9779, %v9780
      %v9782 = vsel %vm4294, %v9699, 0.0
      %v9783 = vadd.f32 %v9781, %v9782
      %v9784 = vsel %vm4294, %v9700, 0.0
      %v9785 = vadd.f32 %v9783, %v9784
      %v9786 = vsel %vm4294, %v9701, 0.0
      %v9787 = vadd.f32 %v9785, %v9786
      %v9788 = vsel %vm4294, %v9702, 0.0
      %v9789 = vadd.f32 %v9787, %v9788
      %v9790 = vsel %vm4294, %v9703, 0.0
      %v9791 = vadd.f32 %v9789, %v9790
      %v9792 = vsel %vm4294, %v9704, 0.0
      %v9793 = vadd.f32 %v9791, %v9792
      %v9794 = vsel %vm4294, %v9705, 0.0
      %v9795 = vadd.f32 %v9793, %v9794
      %v9796 = vsel %vm4294, %v9706, 0.0
      %v9797 = vadd.f32 %v9795, %v9796
      %v9798 = vsel %vm4294, %v9707, 0.0
      %v9799 = vadd.f32 %v9797, %v9798
      %v9800 = vsel %vm4294, %v9708, 0.0
      %v9801 = vadd.f32 %v9799, %v9800
      %v9802 = vsel %vm4294, %v9709, 0.0
      %v9803 = vadd.f32 %v9801, %v9802
      %v9804 = vsel %vm4294, %v9710, 0.0
      %v9805 = vadd.f32 %v9803, %v9804
      %v9806 = vsel %vm4294, %v9711, 0.0
      %v9807 = vadd.f32 %v9805, %v9806
      %v9808 = vsel %vm4294, %v9712, 0.0
      %v9809 = vadd.f32 %v9807, %v9808
      %v9810 = vsel %vm4294, %v9713, 0.0
      %v9811 = vadd.f32 %v9809, %v9810
      %v9812 = vsel %vm4294, %v9714, 0.0
      %v9813 = vadd.f32 %v9811, %v9812
      %v9814 = vsel %vm4294, %v9715, 0.0
      %v9815 = vadd.f32 %v9813, %v9814
      %v9816 = vsel %vm4294, %v9716, 0.0
      %v9817 = vadd.f32 %v9815, %v9816
      %v9818 = vsel %vm4294, %v9717, 0.0
      %v9819 = vadd.f32 %v9817, %v9818
      %v9820 = vsel %vm4294, %v9718, 0.0
      %v9821 = vadd.f32 %v9819, %v9820
      %v9822 = vsel %vm4294, %v9719, 0.0
      %v9823 = vadd.f32 %v9821, %v9822
      %v9824 = vsel %vm4294, %v9720, 0.0
      %v9825 = vadd.f32 %v9823, %v9824
      %v9826 = vsel %vm4294, %v9721, 0.0
      %v9827 = vadd.f32 %v9825, %v9826
      %v9828 = vsel %vm4294, %v9722, 0.0
      %v9829 = vadd.f32 %v9827, %v9828
      %v9830 = vsel %vm4294, %v9723, 0.0
      %v9831 = vadd.f32 %v9829, %v9830
      %v9832 = vsel %vm4294, %v9724, 0.0
      %v9833 = vadd.f32 %v9831, %v9832
      %v9834 = vsel %vm4294, %v9725, 0.0
      %v9835 = vadd.f32 %v9833, %v9834
      %v9836 = vsel %vm4294, %v9726, 0.0
      %v9837 = vadd.f32 %v9835, %v9836
      %v9838 = vsel %vm4294, %v9727, 0.0
      %v9839 = vadd.f32 %v9837, %v9838
      %v9840 = vsel %vm4294, %v9728, 0.0
      %v9841 = vadd.f32 %v9839, %v9840
      %v9842 = vsel %vm4294, %v9729, 0.0
      %v9843 = vadd.f32 %v9841, %v9842
      %v9844 = vsel %vm4294, %v9730, 0.0
      %v9845 = vadd.f32 %v9843, %v9844
      %v9846 = vsel %vm4294, %v9731, 0.0
      %v9847 = vadd.f32 %v9845, %v9846
      %v9848 = vsel %vm4294, %v9732, 0.0
      %v9849 = vadd.f32 %v9847, %v9848
      %v9850 = vsel %vm4294, %v9733, 0.0
      %v9851 = vadd.f32 %v9849, %v9850
      %v9852 = vsel %vm4294, %v9734, 0.0
      %v9853 = vadd.f32 %v9851, %v9852
      %v9854 = vsel %vm4294, %v9735, 0.0
      %v9855 = vadd.f32 %v9853, %v9854
      %v9856 = vsel %vm4294, %v9736, 0.0
      %v9857 = vadd.f32 %v9855, %v9856
      %v9858 = vsel %vm4294, %v9737, 0.0
      %v9859 = vadd.f32 %v9857, %v9858
      %v9860 = vsel %vm4294, %v9738, 0.0
      %v9861 = vadd.f32 %v9859, %v9860
      %v9862 = vsel %vm4294, %v9739, 0.0
      %v9863 = vadd.f32 %v9861, %v9862
      %v9864 = vsel %vm4294, %v9740, 0.0
      %v9865 = vadd.f32 %v9863, %v9864
      %v9866 = vsel %vm4294, %v9741, 0.0
      %v9867 = vadd.f32 %v9865, %v9866
      %v9868 = vsel %vm4294, %v9742, 0.0
      %v9869 = vadd.f32 %v9867, %v9868
      %v9870 = vrot.slane %v9869, 4
      %v9871 = vadd.f32 %v9869, %v9870
      %v9872 = vrot.slane %v9871, 2
      %v9873 = vadd.f32 %v9871, %v9872
      %v9874 = vrot.slane %v9873, 1
      %v9875 = vadd.f32 %v9873, %v9874
      %v9876 = vmul.f32 %v9875, %v1456
      %v9878 = vlaneseq
      %v9879 = vshrl.u32 %v9878, 7
      %v9880 = vsub.s32 0, %v9879
      %v9881 = vrot.slane %v8831, %v9880
      %v9883 = vmul.f32 %v9881, %v9615
      %v9884 = vmul.f32 %v9881, %v9616
      %v9885 = vmul.f32 %v9881, %v9617
      %v9886 = vmul.f32 %v9881, %v9618
      %v9887 = vmul.f32 %v9881, %v9619
      %v9888 = vmul.f32 %v9881, %v9620
      %v9889 = vmul.f32 %v9881, %v9621
      %v9890 = vmul.f32 %v9881, %v9622
      %v9891 = vmul.f32 %v9881, %v9623
      %v9892 = vmul.f32 %v9881, %v9624
      %v9893 = vmul.f32 %v9881, %v9625
      %v9894 = vmul.f32 %v9881, %v9626
      %v9895 = vmul.f32 %v9881, %v9627
      %v9896 = vmul.f32 %v9881, %v9628
      %v9897 = vmul.f32 %v9881, %v9629
      %v9898 = vmul.f32 %v9881, %v9630
      %v9899 = vmul.f32 %v9881, %v9631
      %v9900 = vmul.f32 %v9881, %v9632
      %v9901 = vmul.f32 %v9881, %v9633
      %v9902 = vmul.f32 %v9881, %v9634
      %v9903 = vmul.f32 %v9881, %v9635
      %v9904 = vmul.f32 %v9881, %v9636
      %v9905 = vmul.f32 %v9881, %v9637
      %v9906 = vmul.f32 %v9881, %v9638
      %v9907 = vmul.f32 %v9881, %v9639
      %v9908 = vmul.f32 %v9881, %v9640
      %v9909 = vmul.f32 %v9881, %v9641
      %v9910 = vmul.f32 %v9881, %v9642
      %v9911 = vmul.f32 %v9881, %v9643
      %v9912 = vmul.f32 %v9881, %v9644
      %v9913 = vmul.f32 %v9881, %v9645
      %v9914 = vmul.f32 %v9881, %v9646
      %v9915 = vmul.f32 %v9881, %v9647
      %v9916 = vmul.f32 %v9881, %v9648
      %v9917 = vmul.f32 %v9881, %v9649
      %v9918 = vmul.f32 %v9881, %v9650
      %v9919 = vmul.f32 %v9881, %v9651
      %v9920 = vmul.f32 %v9881, %v9652
      %v9921 = vmul.f32 %v9881, %v9653
      %v9922 = vmul.f32 %v9881, %v9654
      %v9923 = vmul.f32 %v9881, %v9655
      %v9924 = vmul.f32 %v9881, %v9656
      %v9925 = vmul.f32 %v9881, %v9657
      %v9926 = vmul.f32 %v9881, %v9658
      %v9927 = vmul.f32 %v9881, %v9659
      %v9928 = vmul.f32 %v9881, %v9660
      %v9929 = vmul.f32 %v9881, %v9661
      %v9930 = vmul.f32 %v9881, %v9662
      %v9931 = vmul.f32 %v9881, %v9663
      %v9932 = vmul.f32 %v9881, %v9664
      %v9933 = vmul.f32 %v9881, %v9665
      %v9934 = vmul.f32 %v9881, %v9666
      %v9935 = vmul.f32 %v9881, %v9667
      %v9936 = vmul.f32 %v9881, %v9668
      %v9937 = vmul.f32 %v9881, %v9669
      %v9938 = vmul.f32 %v9881, %v9670
      %v9939 = vmul.f32 %v9881, %v9671
      %v9940 = vmul.f32 %v9881, %v9672
      %v9941 = vmul.f32 %v9881, %v9673
      %v9942 = vmul.f32 %v9881, %v9674
      %v9943 = vmul.f32 %v9881, %v9675
      %v9944 = vmul.f32 %v9881, %v9676
      %v9945 = vmul.f32 %v9881, %v9677
      %v9946 = vmul.f32 %v9881, %v9678
      %v9947 = vadd.f32 %v9876, 1e-05
      %v9948 = vrsqrt.pop %v9947
      %v9949 = vmul.f32 %v9883, %v9948
      %v9950 = vmul.f32 %v9884, %v9948
      %v9951 = vmul.f32 %v9885, %v9948
      %v9952 = vmul.f32 %v9886, %v9948
      %v9953 = vmul.f32 %v9887, %v9948
      %v9954 = vmul.f32 %v9888, %v9948
      %v9955 = vmul.f32 %v9889, %v9948
      %v9956 = vmul.f32 %v9890, %v9948
      %v9957 = vmul.f32 %v9891, %v9948
      %v9958 = vmul.f32 %v9892, %v9948
      %v9959 = vmul.f32 %v9893, %v9948
      %v9960 = vmul.f32 %v9894, %v9948
      %v9961 = vmul.f32 %v9895, %v9948
      %v9962 = vmul.f32 %v9896, %v9948
      %v9963 = vmul.f32 %v9897, %v9948
      %v9964 = vmul.f32 %v9898, %v9948
      %v9965 = vmul.f32 %v9899, %v9948
      %v9966 = vmul.f32 %v9900, %v9948
      %v9967 = vmul.f32 %v9901, %v9948
      %v9968 = vmul.f32 %v9902, %v9948
      %v9969 = vmul.f32 %v9903, %v9948
      %v9970 = vmul.f32 %v9904, %v9948
      %v9971 = vmul.f32 %v9905, %v9948
      %v9972 = vmul.f32 %v9906, %v9948
      %v9973 = vmul.f32 %v9907, %v9948
      %v9974 = vmul.f32 %v9908, %v9948
      %v9975 = vmul.f32 %v9909, %v9948
      %v9976 = vmul.f32 %v9910, %v9948
      %v9977 = vmul.f32 %v9911, %v9948
      %v9978 = vmul.f32 %v9912, %v9948
      %v9979 = vmul.f32 %v9913, %v9948
      %v9980 = vmul.f32 %v9914, %v9948
      %v9981 = vmul.f32 %v9915, %v9948
      %v9982 = vmul.f32 %v9916, %v9948
      %v9983 = vmul.f32 %v9917, %v9948
      %v9984 = vmul.f32 %v9918, %v9948
      %v9985 = vmul.f32 %v9919, %v9948
      %v9986 = vmul.f32 %v9920, %v9948
      %v9987 = vmul.f32 %v9921, %v9948
      %v9988 = vmul.f32 %v9922, %v9948
      %v9989 = vmul.f32 %v9923, %v9948
      %v9990 = vmul.f32 %v9924, %v9948
      %v9991 = vmul.f32 %v9925, %v9948
      %v9992 = vmul.f32 %v9926, %v9948
      %v9993 = vmul.f32 %v9927, %v9948
      %v9994 = vmul.f32 %v9928, %v9948
      %v9995 = vmul.f32 %v9929, %v9948
      %v9996 = vmul.f32 %v9930, %v9948
      %v9997 = vmul.f32 %v9931, %v9948
      %v9998 = vmul.f32 %v9932, %v9948
      %v9999 = vmul.f32 %v9933, %v9948
      %v10000 = vmul.f32 %v9934, %v9948
      %v10001 = vmul.f32 %v9935, %v9948
      %v10002 = vmul.f32 %v9936, %v9948
      %v10003 = vmul.f32 %v9937, %v9948
      %v10004 = vmul.f32 %v9938, %v9948
      %v10005 = vmul.f32 %v9939, %v9948
      %v10006 = vmul.f32 %v9940, %v9948
      %v10007 = vmul.f32 %v9941, %v9948
      %v10008 = vmul.f32 %v9942, %v9948
      %v10009 = vmul.f32 %v9943, %v9948
      %v10010 = vmul.f32 %v9944, %v9948
      %v10011 = vmul.f32 %v9945, %v9948
      %v10012 = vmul.f32 %v9946, %v9948
      %v10014 = vlaneseq
      %v10015 = vshrl.u32 %v10014, 7
      %v10016 = vsub.s32 0, %v10015
      %v10017 = vrot.slane %v8832, %v10016
      %v10019 = vadd.f32 %v9949, %v10017
      %v10020 = vadd.f32 %v9950, %v10017
      %v10021 = vadd.f32 %v9951, %v10017
      %v10022 = vadd.f32 %v9952, %v10017
      %v10023 = vadd.f32 %v9953, %v10017
      %v10024 = vadd.f32 %v9954, %v10017
      %v10025 = vadd.f32 %v9955, %v10017
      %v10026 = vadd.f32 %v9956, %v10017
      %v10027 = vadd.f32 %v9957, %v10017
      %v10028 = vadd.f32 %v9958, %v10017
      %v10029 = vadd.f32 %v9959, %v10017
      %v10030 = vadd.f32 %v9960, %v10017
      %v10031 = vadd.f32 %v9961, %v10017
      %v10032 = vadd.f32 %v9962, %v10017
      %v10033 = vadd.f32 %v9963, %v10017
      %v10034 = vadd.f32 %v9964, %v10017
      %v10035 = vadd.f32 %v9965, %v10017
      %v10036 = vadd.f32 %v9966, %v10017
      %v10037 = vadd.f32 %v9967, %v10017
      %v10038 = vadd.f32 %v9968, %v10017
      %v10039 = vadd.f32 %v9969, %v10017
      %v10040 = vadd.f32 %v9970, %v10017
      %v10041 = vadd.f32 %v9971, %v10017
      %v10042 = vadd.f32 %v9972, %v10017
      %v10043 = vadd.f32 %v9973, %v10017
      %v10044 = vadd.f32 %v9974, %v10017
      %v10045 = vadd.f32 %v9975, %v10017
      %v10046 = vadd.f32 %v9976, %v10017
      %v10047 = vadd.f32 %v9977, %v10017
      %v10048 = vadd.f32 %v9978, %v10017
      %v10049 = vadd.f32 %v9979, %v10017
      %v10050 = vadd.f32 %v9980, %v10017
      %v10051 = vadd.f32 %v9981, %v10017
      %v10052 = vadd.f32 %v9982, %v10017
      %v10053 = vadd.f32 %v9983, %v10017
      %v10054 = vadd.f32 %v9984, %v10017
      %v10055 = vadd.f32 %v9985, %v10017
      %v10056 = vadd.f32 %v9986, %v10017
      %v10057 = vadd.f32 %v9987, %v10017
      %v10058 = vadd.f32 %v9988, %v10017
      %v10059 = vadd.f32 %v9989, %v10017
      %v10060 = vadd.f32 %v9990, %v10017
      %v10061 = vadd.f32 %v9991, %v10017
      %v10062 = vadd.f32 %v9992, %v10017
      %v10063 = vadd.f32 %v9993, %v10017
      %v10064 = vadd.f32 %v9994, %v10017
      %v10065 = vadd.f32 %v9995, %v10017
      %v10066 = vadd.f32 %v9996, %v10017
      %v10067 = vadd.f32 %v9997, %v10017
      %v10068 = vadd.f32 %v9998, %v10017
      %v10069 = vadd.f32 %v9999, %v10017
      %v10070 = vadd.f32 %v10000, %v10017
      %v10071 = vadd.f32 %v10001, %v10017
      %v10072 = vadd.f32 %v10002, %v10017
      %v10073 = vadd.f32 %v10003, %v10017
      %v10074 = vadd.f32 %v10004, %v10017
      %v10075 = vadd.f32 %v10005, %v10017
      %v10076 = vadd.f32 %v10006, %v10017
      %v10077 = vadd.f32 %v10007, %v10017
      %v10078 = vadd.f32 %v10008, %v10017
      %v10079 = vadd.f32 %v10009, %v10017
      %v10080 = vadd.f32 %v10010, %v10017
      %v10081 = vadd.f32 %v10011, %v10017
      %v10082 = vadd.f32 %v10012, %v10017
      %10083 = vxpose.xlu0.b32.start [1/16] %v10019, 128
      %10084 = vxpose.xlu0.b32.cont [2/16] %v10020, 128
      %10085 = vxpose.xlu0.b32.cont [3/16] %v10021, 128
      %10086 = vxpose.xlu0.b32.cont [4/16] %v10022, 128
      %10087 = vxpose.xlu0.b32.cont [5/16] %v10023, 128
      %10088 = vxpose.xlu0.b32.cont [6/16] %v10024, 128
      %10089 = vxpose.xlu0.b32.cont [7/16] %v10025, 128
      %10090 = vxpose.xlu0.b32.cont [8/16] %v10026, 128
      %10091 = vxpose.xlu0.b32.cont [9/16] %v10027, 128
      %10092 = vxpose.xlu0.b32.cont [10/16] %v10028, 128
      %10093 = vxpose.xlu0.b32.cont [11/16] %v10029, 128
      %10094 = vxpose.xlu0.b32.cont [12/16] %v10030, 128
      %10095 = vxpose.xlu0.b32.cont [13/16] %v10031, 128
      %10096 = vxpose.xlu0.b32.cont [14/16] %v10032, 128
      %10097 = vxpose.xlu0.b32.cont [15/16] %v10033, 128
      %10098 = vxpose.xlu0.b32.end [16/16] %v10034, 128
      %v10099 = vpop.trf.xlu0
      %v10100 = vpop.trf.xlu0
      %v10101 = vpop.trf.xlu0
      %v10102 = vpop.trf.xlu0
      %v10103 = vpop.trf.xlu0
      %v10104 = vpop.trf.xlu0
      %v10105 = vpop.trf.xlu0
      %v10106 = vpop.trf.xlu0
      %v10107 = vpop.trf.xlu0
      %v10108 = vpop.trf.xlu0
      %v10109 = vpop.trf.xlu0
      %v10110 = vpop.trf.xlu0
      %v10111 = vpop.trf.xlu0
      %v10112 = vpop.trf.xlu0
      %v10113 = vpop.trf.xlu0
      %v10114 = vpop.trf.xlu0
      %10115 = vxpose.xlu0.b32.start [1/16] %v10035, 128
      %10116 = vxpose.xlu0.b32.cont [2/16] %v10036, 128
      %10117 = vxpose.xlu0.b32.cont [3/16] %v10037, 128
      %10118 = vxpose.xlu0.b32.cont [4/16] %v10038, 128
      %10119 = vxpose.xlu0.b32.cont [5/16] %v10039, 128
      %10120 = vxpose.xlu0.b32.cont [6/16] %v10040, 128
      %10121 = vxpose.xlu0.b32.cont [7/16] %v10041, 128
      %10122 = vxpose.xlu0.b32.cont [8/16] %v10042, 128
      %10123 = vxpose.xlu0.b32.cont [9/16] %v10043, 128
      %10124 = vxpose.xlu0.b32.cont [10/16] %v10044, 128
      %10125 = vxpose.xlu0.b32.cont [11/16] %v10045, 128
      %10126 = vxpose.xlu0.b32.cont [12/16] %v10046, 128
      %10127 = vxpose.xlu0.b32.cont [13/16] %v10047, 128
      %10128 = vxpose.xlu0.b32.cont [14/16] %v10048, 128
      %10129 = vxpose.xlu0.b32.cont [15/16] %v10049, 128
      %10130 = vxpose.xlu0.b32.end [16/16] %v10050, 128
      %v10131 = vpop.trf.xlu0
      %v10132 = vpop.trf.xlu0
      %v10133 = vpop.trf.xlu0
      %v10134 = vpop.trf.xlu0
      %v10135 = vpop.trf.xlu0
      %v10136 = vpop.trf.xlu0
      %v10137 = vpop.trf.xlu0
      %v10138 = vpop.trf.xlu0
      %v10139 = vpop.trf.xlu0
      %v10140 = vpop.trf.xlu0
      %v10141 = vpop.trf.xlu0
      %v10142 = vpop.trf.xlu0
      %v10143 = vpop.trf.xlu0
      %v10144 = vpop.trf.xlu0
      %v10145 = vpop.trf.xlu0
      %v10146 = vpop.trf.xlu0
      %10147 = vxpose.xlu0.b32.start [1/16] %v10051, 128
      %10148 = vxpose.xlu0.b32.cont [2/16] %v10052, 128
      %10149 = vxpose.xlu0.b32.cont [3/16] %v10053, 128
      %10150 = vxpose.xlu0.b32.cont [4/16] %v10054, 128
      %10151 = vxpose.xlu0.b32.cont [5/16] %v10055, 128
      %10152 = vxpose.xlu0.b32.cont [6/16] %v10056, 128
      %10153 = vxpose.xlu0.b32.cont [7/16] %v10057, 128
      %10154 = vxpose.xlu0.b32.cont [8/16] %v10058, 128
      %10155 = vxpose.xlu0.b32.cont [9/16] %v10059, 128
      %10156 = vxpose.xlu0.b32.cont [10/16] %v10060, 128
      %10157 = vxpose.xlu0.b32.cont [11/16] %v10061, 128
      %10158 = vxpose.xlu0.b32.cont [12/16] %v10062, 128
      %10159 = vxpose.xlu0.b32.cont [13/16] %v10063, 128
      %10160 = vxpose.xlu0.b32.cont [14/16] %v10064, 128
      %10161 = vxpose.xlu0.b32.cont [15/16] %v10065, 128
      %10162 = vxpose.xlu0.b32.end [16/16] %v10066, 128
      %v10163 = vpop.trf.xlu0
      %v10164 = vpop.trf.xlu0
      %v10165 = vpop.trf.xlu0
      %v10166 = vpop.trf.xlu0
      %v10167 = vpop.trf.xlu0
      %v10168 = vpop.trf.xlu0
      %v10169 = vpop.trf.xlu0
      %v10170 = vpop.trf.xlu0
      %v10171 = vpop.trf.xlu0
      %v10172 = vpop.trf.xlu0
      %v10173 = vpop.trf.xlu0
      %v10174 = vpop.trf.xlu0
      %v10175 = vpop.trf.xlu0
      %v10176 = vpop.trf.xlu0
      %v10177 = vpop.trf.xlu0
      %v10178 = vpop.trf.xlu0
      %10179 = vxpose.xlu0.b32.start [1/16] %v10067, 128
      %10180 = vxpose.xlu0.b32.cont [2/16] %v10068, 128
      %10181 = vxpose.xlu0.b32.cont [3/16] %v10069, 128
      %10182 = vxpose.xlu0.b32.cont [4/16] %v10070, 128
      %10183 = vxpose.xlu0.b32.cont [5/16] %v10071, 128
      %10184 = vxpose.xlu0.b32.cont [6/16] %v10072, 128
      %10185 = vxpose.xlu0.b32.cont [7/16] %v10073, 128
      %10186 = vxpose.xlu0.b32.cont [8/16] %v10074, 128
      %10187 = vxpose.xlu0.b32.cont [9/16] %v10075, 128
      %10188 = vxpose.xlu0.b32.cont [10/16] %v10076, 128
      %10189 = vxpose.xlu0.b32.cont [11/16] %v10077, 128
      %10190 = vxpose.xlu0.b32.cont [12/16] %v10078, 128
      %10191 = vxpose.xlu0.b32.cont [13/16] %v10079, 128
      %10192 = vxpose.xlu0.b32.cont [14/16] %v10080, 128
      %10193 = vxpose.xlu0.b32.cont [15/16] %v10081, 128
      %10194 = vxpose.xlu0.b32.end [16/16] %v10082, 128
      %v10195 = vpop.trf.xlu0
      %v10196 = vpop.trf.xlu0
      %v10197 = vpop.trf.xlu0
      %v10198 = vpop.trf.xlu0
      %v10199 = vpop.trf.xlu0
      %v10200 = vpop.trf.xlu0
      %v10201 = vpop.trf.xlu0
      %v10202 = vpop.trf.xlu0
      %v10203 = vpop.trf.xlu0
      %v10204 = vpop.trf.xlu0
      %v10205 = vpop.trf.xlu0
      %v10206 = vpop.trf.xlu0
      %v10207 = vpop.trf.xlu0
      %v10208 = vpop.trf.xlu0
      %v10209 = vpop.trf.xlu0
      %v10210 = vpop.trf.xlu0
      %v10213 = vrot.slane %v10163, 7
      %v10214 = vrot.slane %v10195, 7
      %v10217 = vsel %vm869, %v10099, %v10213
      %v10218 = vsel %vm869, %v10131, %v10214
      %v10219 = vld [vmem:[%s13] sm:$0xff]
      %v10220 = vld [vmem:[%s13 + $0x8] sm:$0xff]
      %v10221 = vld [vmem:[%s13 + $0x10] sm:$0xff]
      %v10222 = vld [vmem:[%s13 + $0x18] sm:$0xff]
      %v10223 = vld [vmem:[%s13 + $0x20] sm:$0xff]
      %v10224 = vld [vmem:[%s13 + $0x28] sm:$0xff]
      %v10225 = vld [vmem:[%s13 + $0x30] sm:$0xff]
      %v10226 = vld [vmem:[%s13 + $0x38] sm:$0xff]
      %v10227 = vld [vmem:[%s13 + $0x40] sm:$0xff]
      %v10228 = vld [vmem:[%s13 + $0x48] sm:$0xff]
      %v10229 = vld [vmem:[%s13 + $0x50] sm:$0xff]
      %v10230 = vld [vmem:[%s13 + $0x58] sm:$0xff]
      %v10231 = vld [vmem:[%s13 + $0x60] sm:$0xff]
      %v10232 = vld [vmem:[%s13 + $0x68] sm:$0xff]
      %v10233 = vld [vmem:[%s13 + $0x70] sm:$0xff]
      %v10234 = vld [vmem:[%s13 + $0x78] sm:$0xff]
      %v10235 = vld [vmem:[%s13 + $0x80] sm:$0xff]
      %v10236 = vld [vmem:[%s13 + $0x88] sm:$0xff]
      %v10237 = vld [vmem:[%s13 + $0x90] sm:$0xff]
      %v10238 = vld [vmem:[%s13 + $0x98] sm:$0xff]
      %v10239 = vld [vmem:[%s13 + $0xa0] sm:$0xff]
      %v10240 = vld [vmem:[%s13 + $0xa8] sm:$0xff]
      %v10241 = vld [vmem:[%s13 + $0xb0] sm:$0xff]
      %v10242 = vld [vmem:[%s13 + $0xb8] sm:$0xff]
      %v10243 = vld [vmem:[%s13 + $0xc0] sm:$0xff]
      %v10244 = vld [vmem:[%s13 + $0xc8] sm:$0xff]
      %v10245 = vld [vmem:[%s13 + $0xd0] sm:$0xff]
      %v10246 = vld [vmem:[%s13 + $0xd8] sm:$0xff]
      %v10247 = vld [vmem:[%s13 + $0xe0] sm:$0xff]
      %v10248 = vld [vmem:[%s13 + $0xe8] sm:$0xff]
      %v10249 = vld [vmem:[%s13 + $0xf0] sm:$0xff]
      %v10250 = vld [vmem:[%s13 + $0xf8] sm:$0xff]
      %v10253 = vrot.slane %v10099, 1
      %v10254 = vrot.slane %v10131, 1
      %v10257 = vsel %vm869, %v10253, %v10163
      %v10258 = vsel %vm869, %v10254, %v10195
      %v10259 = vld [vmem:[%s13 + $0x100] sm:$0xff]
      %v10260 = vld [vmem:[%s13 + $0x108] sm:$0xff]
      %v10261 = vld [vmem:[%s13 + $0x110] sm:$0xff]
      %v10262 = vld [vmem:[%s13 + $0x118] sm:$0xff]
      %v10263 = vld [vmem:[%s13 + $0x120] sm:$0xff]
      %v10264 = vld [vmem:[%s13 + $0x128] sm:$0xff]
      %v10265 = vld [vmem:[%s13 + $0x130] sm:$0xff]
      %v10266 = vld [vmem:[%s13 + $0x138] sm:$0xff]
      %v10267 = vld [vmem:[%s13 + $0x140] sm:$0xff]
      %v10268 = vld [vmem:[%s13 + $0x148] sm:$0xff]
      %v10269 = vld [vmem:[%s13 + $0x150] sm:$0xff]
      %v10270 = vld [vmem:[%s13 + $0x158] sm:$0xff]
      %v10271 = vld [vmem:[%s13 + $0x160] sm:$0xff]
      %v10272 = vld [vmem:[%s13 + $0x168] sm:$0xff]
      %v10273 = vld [vmem:[%s13 + $0x170] sm:$0xff]
      %v10274 = vld [vmem:[%s13 + $0x178] sm:$0xff]
      %v10275 = vld [vmem:[%s13 + $0x180] sm:$0xff]
      %v10276 = vld [vmem:[%s13 + $0x188] sm:$0xff]
      %v10277 = vld [vmem:[%s13 + $0x190] sm:$0xff]
      %v10278 = vld [vmem:[%s13 + $0x198] sm:$0xff]
      %v10279 = vld [vmem:[%s13 + $0x1a0] sm:$0xff]
      %v10280 = vld [vmem:[%s13 + $0x1a8] sm:$0xff]
      %v10281 = vld [vmem:[%s13 + $0x1b0] sm:$0xff]
      %v10282 = vld [vmem:[%s13 + $0x1b8] sm:$0xff]
      %v10283 = vld [vmem:[%s13 + $0x1c0] sm:$0xff]
      %v10284 = vld [vmem:[%s13 + $0x1c8] sm:$0xff]
      %v10285 = vld [vmem:[%s13 + $0x1d0] sm:$0xff]
      %v10286 = vld [vmem:[%s13 + $0x1d8] sm:$0xff]
      %v10287 = vld [vmem:[%s13 + $0x1e0] sm:$0xff]
      %v10288 = vld [vmem:[%s13 + $0x1e8] sm:$0xff]
      %v10289 = vld [vmem:[%s13 + $0x1f0] sm:$0xff]
      %v10290 = vld [vmem:[%s13 + $0x1f8] sm:$0xff]
      %10291 = vmatprep.subr.mxu0 0.0
      %10292 = vmatpush1.msra.mxu0 %v10259
      %10293 = vmatprep.subr.mxu0 0.0
      %10294 = vmatpush1.msra.mxu0 %v10260
      %10295 = vmatprep.subr.mxu0 0.0
      %10296 = vmatpush1.msra.mxu0 %v10261
      %10297 = vmatprep.subr.mxu0 0.0
      %10298 = vmatpush1.msra.mxu0 %v10262
      %10299 = vmatprep.subr.mxu0 0.0
      %10300 = vmatpush1.msra.mxu0 %v10263
      %10301 = vmatprep.subr.mxu0 0.0
      %10302 = vmatpush1.msra.mxu0 %v10264
      %10303 = vmatprep.subr.mxu0 0.0
      %10304 = vmatpush1.msra.mxu0 %v10265
      %10305 = vmatprep.subr.mxu0 0.0
      %10306 = vmatpush1.msra.mxu0 %v10266
      %10307 = vmatprep.subr.mxu0 0.0
      %10308 = vmatpush1.msra.mxu0 %v10267
      %10309 = vmatprep.subr.mxu0 0.0
      %10310 = vmatpush1.msra.mxu0 %v10268
      %10311 = vmatprep.subr.mxu0 0.0
      %10312 = vmatpush1.msra.mxu0 %v10269
      %10313 = vmatprep.subr.mxu0 0.0
      %10314 = vmatpush1.msra.mxu0 %v10270
      %10315 = vmatprep.subr.mxu0 0.0
      %10316 = vmatpush1.msra.mxu0 %v10271
      %10317 = vmatprep.subr.mxu0 0.0
      %10318 = vmatpush1.msra.mxu0 %v10272
      %10319 = vmatprep.subr.mxu0 0.0
      %10320 = vmatpush1.msra.mxu0 %v10273
      %10321 = vmatprep.subr.mxu0 0.0
      %10322 = vmatpush1.msra.mxu0 %v10274
      %10323 = vmatprep.subr.mxu0 0.0
      %10324 = vmatpush1.msra.mxu0 %v10275
      %10325 = vmatprep.subr.mxu0 0.0
      %10326 = vmatpush1.msra.mxu0 %v10276
      %10327 = vmatprep.subr.mxu0 0.0
      %10328 = vmatpush1.msra.mxu0 %v10277
      %10329 = vmatprep.subr.mxu0 0.0
      %10330 = vmatpush1.msra.mxu0 %v10278
      %10331 = vmatprep.subr.mxu0 0.0
      %10332 = vmatpush1.msra.mxu0 %v10279
      %10333 = vmatprep.subr.mxu0 0.0
      %10334 = vmatpush1.msra.mxu0 %v10280
      %10335 = vmatprep.subr.mxu0 0.0
      %10336 = vmatpush1.msra.mxu0 %v10281
      %10337 = vmatprep.subr.mxu0 0.0
      %10338 = vmatpush1.msra.mxu0 %v10282
      %10339 = vmatprep.subr.mxu0 0.0
      %10340 = vmatpush1.msra.mxu0 %v10283
      %10341 = vmatprep.subr.mxu0 0.0
      %10342 = vmatpush1.msra.mxu0 %v10284
      %10343 = vmatprep.subr.mxu0 0.0
      %10344 = vmatpush1.msra.mxu0 %v10285
      %10345 = vmatprep.subr.mxu0 0.0
      %10346 = vmatpush1.msra.mxu0 %v10286
      %10347 = vmatprep.subr.mxu0 0.0
      %10348 = vmatpush1.msra.mxu0 %v10287
      %10349 = vmatprep.subr.mxu0 0.0
      %10350 = vmatpush1.msra.mxu0 %v10288
      %10351 = vmatprep.subr.mxu0 0.0
      %10352 = vmatpush1.msra.mxu0 %v10289
      %10353 = vmatprep.subr.mxu0 0.0
      %10354 = vmatpush1.msra.mxu0 %v10290
      %10355 = vmatprep.mubr.f32.mxu0 %v10258
      %10356 = vmatmul.mubr.f32.gmra.mrb[0].mxu0 %v10257
      %v10357 = vpop.f32.mrb[0].mxu0
      %v10358 = vadd.f32 0.0, %v10357
      %v10359 = vpop.f32.mrb[0].mxu0
      %10360 = vdwg.mxu0
      %10361 = vmatprep.subr.mxu0 0.0
      %10362 = vmatpush1.msra.mxu0 %v10219
      %10363 = vmatprep.subr.mxu0 0.0
      %10364 = vmatpush1.msra.mxu0 %v10220
      %10365 = vmatprep.subr.mxu0 0.0
      %10366 = vmatpush1.msra.mxu0 %v10221
      %10367 = vmatprep.subr.mxu0 0.0
      %10368 = vmatpush1.msra.mxu0 %v10222
      %10369 = vmatprep.subr.mxu0 0.0
      %10370 = vmatpush1.msra.mxu0 %v10223
      %10371 = vmatprep.subr.mxu0 0.0
      %10372 = vmatpush1.msra.mxu0 %v10224
      %10373 = vmatprep.subr.mxu0 0.0
      %10374 = vmatpush1.msra.mxu0 %v10225
      %10375 = vmatprep.subr.mxu0 0.0
      %10376 = vmatpush1.msra.mxu0 %v10226
      %10377 = vmatprep.subr.mxu0 0.0
      %10378 = vmatpush1.msra.mxu0 %v10227
      %10379 = vmatprep.subr.mxu0 0.0
      %10380 = vmatpush1.msra.mxu0 %v10228
      %10381 = vmatprep.subr.mxu0 0.0
      %10382 = vmatpush1.msra.mxu0 %v10229
      %10383 = vmatprep.subr.mxu0 0.0
      %10384 = vmatpush1.msra.mxu0 %v10230
      %10385 = vmatprep.subr.mxu0 0.0
      %10386 = vmatpush1.msra.mxu0 %v10231
      %10387 = vmatprep.subr.mxu0 0.0
      %10388 = vmatpush1.msra.mxu0 %v10232
      %10389 = vmatprep.subr.mxu0 0.0
      %10390 = vmatpush1.msra.mxu0 %v10233
      %10391 = vmatprep.subr.mxu0 0.0
      %10392 = vmatpush1.msra.mxu0 %v10234
      %10393 = vmatprep.subr.mxu0 0.0
      %10394 = vmatpush1.msra.mxu0 %v10235
      %10395 = vmatprep.subr.mxu0 0.0
      %10396 = vmatpush1.msra.mxu0 %v10236
      %10397 = vmatprep.subr.mxu0 0.0
      %10398 = vmatpush1.msra.mxu0 %v10237
      %10399 = vmatprep.subr.mxu0 0.0
      %10400 = vmatpush1.msra.mxu0 %v10238
      %10401 = vmatprep.subr.mxu0 0.0
      %10402 = vmatpush1.msra.mxu0 %v10239
      %10403 = vmatprep.subr.mxu0 0.0
      %10404 = vmatpush1.msra.mxu0 %v10240
      %10405 = vmatprep.subr.mxu0 0.0
      %10406 = vmatpush1.msra.mxu0 %v10241
      %10407 = vmatprep.subr.mxu0 0.0
      %10408 = vmatpush1.msra.mxu0 %v10242
      %10409 = vmatprep.subr.mxu0 0.0
      %10410 = vmatpush1.msra.mxu0 %v10243
      %10411 = vmatprep.subr.mxu0 0.0
      %10412 = vmatpush1.msra.mxu0 %v10244
      %10413 = vmatprep.subr.mxu0 0.0
      %10414 = vmatpush1.msra.mxu0 %v10245
      %10415 = vmatprep.subr.mxu0 0.0
      %10416 = vmatpush1.msra.mxu0 %v10246
      %10417 = vmatprep.subr.mxu0 0.0
      %10418 = vmatpush1.msra.mxu0 %v10247
      %10419 = vmatprep.subr.mxu0 0.0
      %10420 = vmatpush1.msra.mxu0 %v10248
      %10421 = vmatprep.subr.mxu0 0.0
      %10422 = vmatpush1.msra.mxu0 %v10249
      %10423 = vmatprep.subr.mxu0 0.0
      %10424 = vmatpush1.msra.mxu0 %v10250
      %10425 = vmatprep.mubr.f32.mxu0 %v10218
      %10426 = vmatmul.mubr.f32.gmra.mrb[0].mxu0 %v10217
      %v10427 = vpop.f32.mrb[0].mxu0
      %v10428 = vadd.f32 %v10358, %v10427
      %v10429 = vpop.f32.mrb[0].mxu0
      %10430 = vdwg.mxu0
      %v10431 = vrot.slane %v10099, 2
      %v10432 = vrot.slane %v10131, 2
      %v10435 = vrot.slane %v10163, 1
      %v10436 = vrot.slane %v10195, 1
      %v10439 = vsel %vm869, %v10431, %v10435
      %v10440 = vsel %vm869, %v10432, %v10436
      %v10441 = vld [vmem:[%s13 + $0x200] sm:$0xff]
      %v10442 = vld [vmem:[%s13 + $0x208] sm:$0xff]
      %v10443 = vld [vmem:[%s13 + $0x210] sm:$0xff]
      %v10444 = vld [vmem:[%s13 + $0x218] sm:$0xff]
      %v10445 = vld [vmem:[%s13 + $0x220] sm:$0xff]
      %v10446 = vld [vmem:[%s13 + $0x228] sm:$0xff]
      %v10447 = vld [vmem:[%s13 + $0x230] sm:$0xff]
      %v10448 = vld [vmem:[%s13 + $0x238] sm:$0xff]
      %v10449 = vld [vmem:[%s13 + $0x240] sm:$0xff]
      %v10450 = vld [vmem:[%s13 + $0x248] sm:$0xff]
      %v10451 = vld [vmem:[%s13 + $0x250] sm:$0xff]
      %v10452 = vld [vmem:[%s13 + $0x258] sm:$0xff]
      %v10453 = vld [vmem:[%s13 + $0x260] sm:$0xff]
      %v10454 = vld [vmem:[%s13 + $0x268] sm:$0xff]
      %v10455 = vld [vmem:[%s13 + $0x270] sm:$0xff]
      %v10456 = vld [vmem:[%s13 + $0x278] sm:$0xff]
      %v10457 = vld [vmem:[%s13 + $0x280] sm:$0xff]
      %v10458 = vld [vmem:[%s13 + $0x288] sm:$0xff]
      %v10459 = vld [vmem:[%s13 + $0x290] sm:$0xff]
      %v10460 = vld [vmem:[%s13 + $0x298] sm:$0xff]
      %v10461 = vld [vmem:[%s13 + $0x2a0] sm:$0xff]
      %v10462 = vld [vmem:[%s13 + $0x2a8] sm:$0xff]
      %v10463 = vld [vmem:[%s13 + $0x2b0] sm:$0xff]
      %v10464 = vld [vmem:[%s13 + $0x2b8] sm:$0xff]
      %v10465 = vld [vmem:[%s13 + $0x2c0] sm:$0xff]
      %v10466 = vld [vmem:[%s13 + $0x2c8] sm:$0xff]
      %v10467 = vld [vmem:[%s13 + $0x2d0] sm:$0xff]
      %v10468 = vld [vmem:[%s13 + $0x2d8] sm:$0xff]
      %v10469 = vld [vmem:[%s13 + $0x2e0] sm:$0xff]
      %v10470 = vld [vmem:[%s13 + $0x2e8] sm:$0xff]
      %v10471 = vld [vmem:[%s13 + $0x2f0] sm:$0xff]
      %v10472 = vld [vmem:[%s13 + $0x2f8] sm:$0xff]
      %10473 = vmatprep.subr.mxu0 0.0
      %10474 = vmatpush1.msra.mxu0 %v10441
      %10475 = vmatprep.subr.mxu0 0.0
      %10476 = vmatpush1.msra.mxu0 %v10442
      %10477 = vmatprep.subr.mxu0 0.0
      %10478 = vmatpush1.msra.mxu0 %v10443
      %10479 = vmatprep.subr.mxu0 0.0
      %10480 = vmatpush1.msra.mxu0 %v10444
      %10481 = vmatprep.subr.mxu0 0.0
      %10482 = vmatpush1.msra.mxu0 %v10445
      %10483 = vmatprep.subr.mxu0 0.0
      %10484 = vmatpush1.msra.mxu0 %v10446
      %10485 = vmatprep.subr.mxu0 0.0
      %10486 = vmatpush1.msra.mxu0 %v10447
      %10487 = vmatprep.subr.mxu0 0.0
      %10488 = vmatpush1.msra.mxu0 %v10448
      %10489 = vmatprep.subr.mxu0 0.0
      %10490 = vmatpush1.msra.mxu0 %v10449
      %10491 = vmatprep.subr.mxu0 0.0
      %10492 = vmatpush1.msra.mxu0 %v10450
      %10493 = vmatprep.subr.mxu0 0.0
      %10494 = vmatpush1.msra.mxu0 %v10451
      %10495 = vmatprep.subr.mxu0 0.0
      %10496 = vmatpush1.msra.mxu0 %v10452
      %10497 = vmatprep.subr.mxu0 0.0
      %10498 = vmatpush1.msra.mxu0 %v10453
      %10499 = vmatprep.subr.mxu0 0.0
      %10500 = vmatpush1.msra.mxu0 %v10454
      %10501 = vmatprep.subr.mxu0 0.0
      %10502 = vmatpush1.msra.mxu0 %v10455
      %10503 = vmatprep.subr.mxu0 0.0
      %10504 = vmatpush1.msra.mxu0 %v10456
      %10505 = vmatprep.subr.mxu0 0.0
      %10506 = vmatpush1.msra.mxu0 %v10457
      %10507 = vmatprep.subr.mxu0 0.0
      %10508 = vmatpush1.msra.mxu0 %v10458
      %10509 = vmatprep.subr.mxu0 0.0
      %10510 = vmatpush1.msra.mxu0 %v10459
      %10511 = vmatprep.subr.mxu0 0.0
      %10512 = vmatpush1.msra.mxu0 %v10460
      %10513 = vmatprep.subr.mxu0 0.0
      %10514 = vmatpush1.msra.mxu0 %v10461
      %10515 = vmatprep.subr.mxu0 0.0
      %10516 = vmatpush1.msra.mxu0 %v10462
      %10517 = vmatprep.subr.mxu0 0.0
      %10518 = vmatpush1.msra.mxu0 %v10463
      %10519 = vmatprep.subr.mxu0 0.0
      %10520 = vmatpush1.msra.mxu0 %v10464
      %10521 = vmatprep.subr.mxu0 0.0
      %10522 = vmatpush1.msra.mxu0 %v10465
      %10523 = vmatprep.subr.mxu0 0.0
      %10524 = vmatpush1.msra.mxu0 %v10466
      %10525 = vmatprep.subr.mxu0 0.0
      %10526 = vmatpush1.msra.mxu0 %v10467
      %10527 = vmatprep.subr.mxu0 0.0
      %10528 = vmatpush1.msra.mxu0 %v10468
      %10529 = vmatprep.subr.mxu0 0.0
      %10530 = vmatpush1.msra.mxu0 %v10469
      %10531 = vmatprep.subr.mxu0 0.0
      %10532 = vmatpush1.msra.mxu0 %v10470
      %10533 = vmatprep.subr.mxu0 0.0
      %10534 = vmatpush1.msra.mxu0 %v10471
      %10535 = vmatprep.subr.mxu0 0.0
      %10536 = vmatpush1.msra.mxu0 %v10472
      %10537 = vmatprep.mubr.f32.mxu0 %v10440
      %10538 = vmatmul.mubr.f32.gmra.mrb[0].mxu0 %v10439
      %v10539 = vpop.f32.mrb[0].mxu0
      %v10540 = vadd.f32 0.0, %v10539
      %v10541 = vpop.f32.mrb[0].mxu0
      %10542 = vdwg.mxu0
      %v10543 = vadd.f32 %v10428, %v10540
      %v10544 = vrot.slane %v10099, 3
      %v10545 = vrot.slane %v10131, 3
      %v10548 = vrot.slane %v10163, 2
      %v10549 = vrot.slane %v10195, 2
      %v10552 = vsel %vm869, %v10544, %v10548
      %v10553 = vsel %vm869, %v10545, %v10549
      %v10554 = vld [vmem:[%s13 + $0x300] sm:$0xff]
      %v10555 = vld [vmem:[%s13 + $0x308] sm:$0xff]
      %v10556 = vld [vmem:[%s13 + $0x310] sm:$0xff]
      %v10557 = vld [vmem:[%s13 + $0x318] sm:$0xff]
      %v10558 = vld [vmem:[%s13 + $0x320] sm:$0xff]
      %v10559 = vld [vmem:[%s13 + $0x328] sm:$0xff]
      %v10560 = vld [vmem:[%s13 + $0x330] sm:$0xff]
      %v10561 = vld [vmem:[%s13 + $0x338] sm:$0xff]
      %v10562 = vld [vmem:[%s13 + $0x340] sm:$0xff]
      %v10563 = vld [vmem:[%s13 + $0x348] sm:$0xff]
      %v10564 = vld [vmem:[%s13 + $0x350] sm:$0xff]
      %v10565 = vld [vmem:[%s13 + $0x358] sm:$0xff]
      %v10566 = vld [vmem:[%s13 + $0x360] sm:$0xff]
      %v10567 = vld [vmem:[%s13 + $0x368] sm:$0xff]
      %v10568 = vld [vmem:[%s13 + $0x370] sm:$0xff]
      %v10569 = vld [vmem:[%s13 + $0x378] sm:$0xff]
      %v10570 = vld [vmem:[%s13 + $0x380] sm:$0xff]
      %v10571 = vld [vmem:[%s13 + $0x388] sm:$0xff]
      %v10572 = vld [vmem:[%s13 + $0x390] sm:$0xff]
      %v10573 = vld [vmem:[%s13 + $0x398] sm:$0xff]
      %v10574 = vld [vmem:[%s13 + $0x3a0] sm:$0xff]
      %v10575 = vld [vmem:[%s13 + $0x3a8] sm:$0xff]
      %v10576 = vld [vmem:[%s13 + $0x3b0] sm:$0xff]
      %v10577 = vld [vmem:[%s13 + $0x3b8] sm:$0xff]
      %v10578 = vld [vmem:[%s13 + $0x3c0] sm:$0xff]
      %v10579 = vld [vmem:[%s13 + $0x3c8] sm:$0xff]
      %v10580 = vld [vmem:[%s13 + $0x3d0] sm:$0xff]
      %v10581 = vld [vmem:[%s13 + $0x3d8] sm:$0xff]
      %v10582 = vld [vmem:[%s13 + $0x3e0] sm:$0xff]
      %v10583 = vld [vmem:[%s13 + $0x3e8] sm:$0xff]
      %v10584 = vld [vmem:[%s13 + $0x3f0] sm:$0xff]
      %v10585 = vld [vmem:[%s13 + $0x3f8] sm:$0xff]
      %10586 = vmatprep.subr.mxu0 0.0
      %10587 = vmatpush1.msra.mxu0 %v10554
      %10588 = vmatprep.subr.mxu0 0.0
      %10589 = vmatpush1.msra.mxu0 %v10555
      %10590 = vmatprep.subr.mxu0 0.0
      %10591 = vmatpush1.msra.mxu0 %v10556
      %10592 = vmatprep.subr.mxu0 0.0
      %10593 = vmatpush1.msra.mxu0 %v10557
      %10594 = vmatprep.subr.mxu0 0.0
      %10595 = vmatpush1.msra.mxu0 %v10558
      %10596 = vmatprep.subr.mxu0 0.0
      %10597 = vmatpush1.msra.mxu0 %v10559
      %10598 = vmatprep.subr.mxu0 0.0
      %10599 = vmatpush1.msra.mxu0 %v10560
      %10600 = vmatprep.subr.mxu0 0.0
      %10601 = vmatpush1.msra.mxu0 %v10561
      %10602 = vmatprep.subr.mxu0 0.0
      %10603 = vmatpush1.msra.mxu0 %v10562
      %10604 = vmatprep.subr.mxu0 0.0
      %10605 = vmatpush1.msra.mxu0 %v10563
      %10606 = vmatprep.subr.mxu0 0.0
      %10607 = vmatpush1.msra.mxu0 %v10564
      %10608 = vmatprep.subr.mxu0 0.0
      %10609 = vmatpush1.msra.mxu0 %v10565
      %10610 = vmatprep.subr.mxu0 0.0
      %10611 = vmatpush1.msra.mxu0 %v10566
      %10612 = vmatprep.subr.mxu0 0.0
      %10613 = vmatpush1.msra.mxu0 %v10567
      %10614 = vmatprep.subr.mxu0 0.0
      %10615 = vmatpush1.msra.mxu0 %v10568
      %10616 = vmatprep.subr.mxu0 0.0
      %10617 = vmatpush1.msra.mxu0 %v10569
      %10618 = vmatprep.subr.mxu0 0.0
      %10619 = vmatpush1.msra.mxu0 %v10570
      %10620 = vmatprep.subr.mxu0 0.0
      %10621 = vmatpush1.msra.mxu0 %v10571
      %10622 = vmatprep.subr.mxu0 0.0
      %10623 = vmatpush1.msra.mxu0 %v10572
      %10624 = vmatprep.subr.mxu0 0.0
      %10625 = vmatpush1.msra.mxu0 %v10573
      %10626 = vmatprep.subr.mxu0 0.0
      %10627 = vmatpush1.msra.mxu0 %v10574
      %10628 = vmatprep.subr.mxu0 0.0
      %10629 = vmatpush1.msra.mxu0 %v10575
      %10630 = vmatprep.subr.mxu0 0.0
      %10631 = vmatpush1.msra.mxu0 %v10576
      %10632 = vmatprep.subr.mxu0 0.0
      %10633 = vmatpush1.msra.mxu0 %v10577
      %10634 = vmatprep.subr.mxu0 0.0
      %10635 = vmatpush1.msra.mxu0 %v10578
      %10636 = vmatprep.subr.mxu0 0.0
      %10637 = vmatpush1.msra.mxu0 %v10579
      %10638 = vmatprep.subr.mxu0 0.0
      %10639 = vmatpush1.msra.mxu0 %v10580
      %10640 = vmatprep.subr.mxu0 0.0
      %10641 = vmatpush1.msra.mxu0 %v10581
      %10642 = vmatprep.subr.mxu0 0.0
      %10643 = vmatpush1.msra.mxu0 %v10582
      %10644 = vmatprep.subr.mxu0 0.0
      %10645 = vmatpush1.msra.mxu0 %v10583
      %10646 = vmatprep.subr.mxu0 0.0
      %10647 = vmatpush1.msra.mxu0 %v10584
      %10648 = vmatprep.subr.mxu0 0.0
      %10649 = vmatpush1.msra.mxu0 %v10585
      %10650 = vmatprep.mubr.f32.mxu0 %v10553
      %10651 = vmatmul.mubr.f32.gmra.mrb[0].mxu0 %v10552
      %v10652 = vpop.f32.mrb[0].mxu0
      %v10653 = vadd.f32 0.0, %v10652
      %v10654 = vpop.f32.mrb[0].mxu0
      %10655 = vdwg.mxu0
      %v10656 = vadd.f32 %v10543, %v10653
      %v10657 = vrot.slane %v10099, 4
      %v10658 = vrot.slane %v10131, 4
      %v10661 = vrot.slane %v10163, 3
      %v10662 = vrot.slane %v10195, 3
      %v10665 = vsel %vm869, %v10657, %v10661
      %v10666 = vsel %vm869, %v10658, %v10662
      %v10667 = vld [vmem:[%s13 + $0x400] sm:$0xff]
      %v10668 = vld [vmem:[%s13 + $0x408] sm:$0xff]
      %v10669 = vld [vmem:[%s13 + $0x410] sm:$0xff]
      %v10670 = vld [vmem:[%s13 + $0x418] sm:$0xff]
      %v10671 = vld [vmem:[%s13 + $0x420] sm:$0xff]
      %v10672 = vld [vmem:[%s13 + $0x428] sm:$0xff]
      %v10673 = vld [vmem:[%s13 + $0x430] sm:$0xff]
      %v10674 = vld [vmem:[%s13 + $0x438] sm:$0xff]
      %v10675 = vld [vmem:[%s13 + $0x440] sm:$0xff]
      %v10676 = vld [vmem:[%s13 + $0x448] sm:$0xff]
      %v10677 = vld [vmem:[%s13 + $0x450] sm:$0xff]
      %v10678 = vld [vmem:[%s13 + $0x458] sm:$0xff]
      %v10679 = vld [vmem:[%s13 + $0x460] sm:$0xff]
      %v10680 = vld [vmem:[%s13 + $0x468] sm:$0xff]
      %v10681 = vld [vmem:[%s13 + $0x470] sm:$0xff]
      %v10682 = vld [vmem:[%s13 + $0x478] sm:$0xff]
      %v10683 = vld [vmem:[%s13 + $0x480] sm:$0xff]
      %v10684 = vld [vmem:[%s13 + $0x488] sm:$0xff]
      %v10685 = vld [vmem:[%s13 + $0x490] sm:$0xff]
      %v10686 = vld [vmem:[%s13 + $0x498] sm:$0xff]
      %v10687 = vld [vmem:[%s13 + $0x4a0] sm:$0xff]
      %v10688 = vld [vmem:[%s13 + $0x4a8] sm:$0xff]
      %v10689 = vld [vmem:[%s13 + $0x4b0] sm:$0xff]
      %v10690 = vld [vmem:[%s13 + $0x4b8] sm:$0xff]
      %v10691 = vld [vmem:[%s13 + $0x4c0] sm:$0xff]
      %v10692 = vld [vmem:[%s13 + $0x4c8] sm:$0xff]
      %v10693 = vld [vmem:[%s13 + $0x4d0] sm:$0xff]
      %v10694 = vld [vmem:[%s13 + $0x4d8] sm:$0xff]
      %v10695 = vld [vmem:[%s13 + $0x4e0] sm:$0xff]
      %v10696 = vld [vmem:[%s13 + $0x4e8] sm:$0xff]
      %v10697 = vld [vmem:[%s13 + $0x4f0] sm:$0xff]
      %v10698 = vld [vmem:[%s13 + $0x4f8] sm:$0xff]
      %10699 = vmatprep.subr.mxu0 0.0
      %10700 = vmatpush1.msra.mxu0 %v10667
      %10701 = vmatprep.subr.mxu0 0.0
      %10702 = vmatpush1.msra.mxu0 %v10668
      %10703 = vmatprep.subr.mxu0 0.0
      %10704 = vmatpush1.msra.mxu0 %v10669
      %10705 = vmatprep.subr.mxu0 0.0
      %10706 = vmatpush1.msra.mxu0 %v10670
      %10707 = vmatprep.subr.mxu0 0.0
      %10708 = vmatpush1.msra.mxu0 %v10671
      %10709 = vmatprep.subr.mxu0 0.0
      %10710 = vmatpush1.msra.mxu0 %v10672
      %10711 = vmatprep.subr.mxu0 0.0
      %10712 = vmatpush1.msra.mxu0 %v10673
      %10713 = vmatprep.subr.mxu0 0.0
      %10714 = vmatpush1.msra.mxu0 %v10674
      %10715 = vmatprep.subr.mxu0 0.0
      %10716 = vmatpush1.msra.mxu0 %v10675
      %10717 = vmatprep.subr.mxu0 0.0
      %10718 = vmatpush1.msra.mxu0 %v10676
      %10719 = vmatprep.subr.mxu0 0.0
      %10720 = vmatpush1.msra.mxu0 %v10677
      %10721 = vmatprep.subr.mxu0 0.0
      %10722 = vmatpush1.msra.mxu0 %v10678
      %10723 = vmatprep.subr.mxu0 0.0
      %10724 = vmatpush1.msra.mxu0 %v10679
      %10725 = vmatprep.subr.mxu0 0.0
      %10726 = vmatpush1.msra.mxu0 %v10680
      %10727 = vmatprep.subr.mxu0 0.0
      %10728 = vmatpush1.msra.mxu0 %v10681
      %10729 = vmatprep.subr.mxu0 0.0
      %10730 = vmatpush1.msra.mxu0 %v10682
      %10731 = vmatprep.subr.mxu0 0.0
      %10732 = vmatpush1.msra.mxu0 %v10683
      %10733 = vmatprep.subr.mxu0 0.0
      %10734 = vmatpush1.msra.mxu0 %v10684
      %10735 = vmatprep.subr.mxu0 0.0
      %10736 = vmatpush1.msra.mxu0 %v10685
      %10737 = vmatprep.subr.mxu0 0.0
      %10738 = vmatpush1.msra.mxu0 %v10686
      %10739 = vmatprep.subr.mxu0 0.0
      %10740 = vmatpush1.msra.mxu0 %v10687
      %10741 = vmatprep.subr.mxu0 0.0
      %10742 = vmatpush1.msra.mxu0 %v10688
      %10743 = vmatprep.subr.mxu0 0.0
      %10744 = vmatpush1.msra.mxu0 %v10689
      %10745 = vmatprep.subr.mxu0 0.0
      %10746 = vmatpush1.msra.mxu0 %v10690
      %10747 = vmatprep.subr.mxu0 0.0
      %10748 = vmatpush1.msra.mxu0 %v10691
      %10749 = vmatprep.subr.mxu0 0.0
      %10750 = vmatpush1.msra.mxu0 %v10692
      %10751 = vmatprep.subr.mxu0 0.0
      %10752 = vmatpush1.msra.mxu0 %v10693
      %10753 = vmatprep.subr.mxu0 0.0
      %10754 = vmatpush1.msra.mxu0 %v10694
      %10755 = vmatprep.subr.mxu0 0.0
      %10756 = vmatpush1.msra.mxu0 %v10695
      %10757 = vmatprep.subr.mxu0 0.0
      %10758 = vmatpush1.msra.mxu0 %v10696
      %10759 = vmatprep.subr.mxu0 0.0
      %10760 = vmatpush1.msra.mxu0 %v10697
      %10761 = vmatprep.subr.mxu0 0.0
      %10762 = vmatpush1.msra.mxu0 %v10698
      %10763 = vmatprep.mubr.f32.mxu0 %v10666
      %10764 = vmatmul.mubr.f32.gmra.mrb[0].mxu0 %v10665
      %v10765 = vpop.f32.mrb[0].mxu0
      %v10766 = vadd.f32 0.0, %v10765
      %v10767 = vpop.f32.mrb[0].mxu0
      %10768 = vdwg.mxu0
      %v10769 = vadd.f32 %v10656, %v10766
      %v10770 = vrot.slane %v10099, 5
      %v10771 = vrot.slane %v10131, 5
      %v10774 = vrot.slane %v10163, 4
      %v10775 = vrot.slane %v10195, 4
      %v10778 = vsel %vm869, %v10770, %v10774
      %v10779 = vsel %vm869, %v10771, %v10775
      %v10780 = vld [vmem:[%s13 + $0x500] sm:$0xff]
      %v10781 = vld [vmem:[%s13 + $0x508] sm:$0xff]
      %v10782 = vld [vmem:[%s13 + $0x510] sm:$0xff]
      %v10783 = vld [vmem:[%s13 + $0x518] sm:$0xff]
      %v10784 = vld [vmem:[%s13 + $0x520] sm:$0xff]
      %v10785 = vld [vmem:[%s13 + $0x528] sm:$0xff]
      %v10786 = vld [vmem:[%s13 + $0x530] sm:$0xff]
      %v10787 = vld [vmem:[%s13 + $0x538] sm:$0xff]
      %v10788 = vld [vmem:[%s13 + $0x540] sm:$0xff]
      %v10789 = vld [vmem:[%s13 + $0x548] sm:$0xff]
      %v10790 = vld [vmem:[%s13 + $0x550] sm:$0xff]
      %v10791 = vld [vmem:[%s13 + $0x558] sm:$0xff]
      %v10792 = vld [vmem:[%s13 + $0x560] sm:$0xff]
      %v10793 = vld [vmem:[%s13 + $0x568] sm:$0xff]
      %v10794 = vld [vmem:[%s13 + $0x570] sm:$0xff]
      %v10795 = vld [vmem:[%s13 + $0x578] sm:$0xff]
      %v10796 = vld [vmem:[%s13 + $0x580] sm:$0xff]
      %v10797 = vld [vmem:[%s13 + $0x588] sm:$0xff]
      %v10798 = vld [vmem:[%s13 + $0x590] sm:$0xff]
      %v10799 = vld [vmem:[%s13 + $0x598] sm:$0xff]
      %v10800 = vld [vmem:[%s13 + $0x5a0] sm:$0xff]
      %v10801 = vld [vmem:[%s13 + $0x5a8] sm:$0xff]
      %v10802 = vld [vmem:[%s13 + $0x5b0] sm:$0xff]
      %v10803 = vld [vmem:[%s13 + $0x5b8] sm:$0xff]
      %v10804 = vld [vmem:[%s13 + $0x5c0] sm:$0xff]
      %v10805 = vld [vmem:[%s13 + $0x5c8] sm:$0xff]
      %v10806 = vld [vmem:[%s13 + $0x5d0] sm:$0xff]
      %v10807 = vld [vmem:[%s13 + $0x5d8] sm:$0xff]
      %v10808 = vld [vmem:[%s13 + $0x5e0] sm:$0xff]
      %v10809 = vld [vmem:[%s13 + $0x5e8] sm:$0xff]
      %v10810 = vld [vmem:[%s13 + $0x5f0] sm:$0xff]
      %v10811 = vld [vmem:[%s13 + $0x5f8] sm:$0xff]
      %10812 = vmatprep.subr.mxu0 0.0
      %10813 = vmatpush1.msra.mxu0 %v10780
      %10814 = vmatprep.subr.mxu0 0.0
      %10815 = vmatpush1.msra.mxu0 %v10781
      %10816 = vmatprep.subr.mxu0 0.0
      %10817 = vmatpush1.msra.mxu0 %v10782
      %10818 = vmatprep.subr.mxu0 0.0
      %10819 = vmatpush1.msra.mxu0 %v10783
      %10820 = vmatprep.subr.mxu0 0.0
      %10821 = vmatpush1.msra.mxu0 %v10784
      %10822 = vmatprep.subr.mxu0 0.0
      %10823 = vmatpush1.msra.mxu0 %v10785
      %10824 = vmatprep.subr.mxu0 0.0
      %10825 = vmatpush1.msra.mxu0 %v10786
      %10826 = vmatprep.subr.mxu0 0.0
      %10827 = vmatpush1.msra.mxu0 %v10787
      %10828 = vmatprep.subr.mxu0 0.0
      %10829 = vmatpush1.msra.mxu0 %v10788
      %10830 = vmatprep.subr.mxu0 0.0
      %10831 = vmatpush1.msra.mxu0 %v10789
      %10832 = vmatprep.subr.mxu0 0.0
      %10833 = vmatpush1.msra.mxu0 %v10790
      %10834 = vmatprep.subr.mxu0 0.0
      %10835 = vmatpush1.msra.mxu0 %v10791
      %10836 = vmatprep.subr.mxu0 0.0
      %10837 = vmatpush1.msra.mxu0 %v10792
      %10838 = vmatprep.subr.mxu0 0.0
      %10839 = vmatpush1.msra.mxu0 %v10793
      %10840 = vmatprep.subr.mxu0 0.0
      %10841 = vmatpush1.msra.mxu0 %v10794
      %10842 = vmatprep.subr.mxu0 0.0
      %10843 = vmatpush1.msra.mxu0 %v10795
      %10844 = vmatprep.subr.mxu0 0.0
      %10845 = vmatpush1.msra.mxu0 %v10796
      %10846 = vmatprep.subr.mxu0 0.0
      %10847 = vmatpush1.msra.mxu0 %v10797
      %10848 = vmatprep.subr.mxu0 0.0
      %10849 = vmatpush1.msra.mxu0 %v10798
      %10850 = vmatprep.subr.mxu0 0.0
      %10851 = vmatpush1.msra.mxu0 %v10799
      %10852 = vmatprep.subr.mxu0 0.0
      %10853 = vmatpush1.msra.mxu0 %v10800
      %10854 = vmatprep.subr.mxu0 0.0
      %10855 = vmatpush1.msra.mxu0 %v10801
      %10856 = vmatprep.subr.mxu0 0.0
      %10857 = vmatpush1.msra.mxu0 %v10802
      %10858 = vmatprep.subr.mxu0 0.0
      %10859 = vmatpush1.msra.mxu0 %v10803
      %10860 = vmatprep.subr.mxu0 0.0
      %10861 = vmatpush1.msra.mxu0 %v10804
      %10862 = vmatprep.subr.mxu0 0.0
      %10863 = vmatpush1.msra.mxu0 %v10805
      %10864 = vmatprep.subr.mxu0 0.0
      %10865 = vmatpush1.msra.mxu0 %v10806
      %10866 = vmatprep.subr.mxu0 0.0
      %10867 = vmatpush1.msra.mxu0 %v10807
      %10868 = vmatprep.subr.mxu0 0.0
      %10869 = vmatpush1.msra.mxu0 %v10808
      %10870 = vmatprep.subr.mxu0 0.0
      %10871 = vmatpush1.msra.mxu0 %v10809
      %10872 = vmatprep.subr.mxu0 0.0
      %10873 = vmatpush1.msra.mxu0 %v10810
      %10874 = vmatprep.subr.mxu0 0.0
      %10875 = vmatpush1.msra.mxu0 %v10811
      %10876 = vmatprep.mubr.f32.mxu0 %v10779
      %10877 = vmatmul.mubr.f32.gmra.mrb[0].mxu0 %v10778
      %v10878 = vpop.f32.mrb[0].mxu0
      %v10879 = vadd.f32 0.0, %v10878
      %v10880 = vpop.f32.mrb[0].mxu0
      %10881 = vdwg.mxu0
      %v10882 = vadd.f32 %v10769, %v10879
      %v10883 = vrot.slane %v10099, 6
      %v10884 = vrot.slane %v10131, 6
      %v10887 = vrot.slane %v10163, 5
      %v10888 = vrot.slane %v10195, 5
      %v10891 = vsel %vm869, %v10883, %v10887
      %v10892 = vsel %vm869, %v10884, %v10888
      %v10893 = vld [vmem:[%s13 + $0x600] sm:$0xff]
      %v10894 = vld [vmem:[%s13 + $0x608] sm:$0xff]
      %v10895 = vld [vmem:[%s13 + $0x610] sm:$0xff]
      %v10896 = vld [vmem:[%s13 + $0x618] sm:$0xff]
      %v10897 = vld [vmem:[%s13 + $0x620] sm:$0xff]
      %v10898 = vld [vmem:[%s13 + $0x628] sm:$0xff]
      %v10899 = vld [vmem:[%s13 + $0x630] sm:$0xff]
      %v10900 = vld [vmem:[%s13 + $0x638] sm:$0xff]
      %v10901 = vld [vmem:[%s13 + $0x640] sm:$0xff]
      %v10902 = vld [vmem:[%s13 + $0x648] sm:$0xff]
      %v10903 = vld [vmem:[%s13 + $0x650] sm:$0xff]
      %v10904 = vld [vmem:[%s13 + $0x658] sm:$0xff]
      %v10905 = vld [vmem:[%s13 + $0x660] sm:$0xff]
      %v10906 = vld [vmem:[%s13 + $0x668] sm:$0xff]
      %v10907 = vld [vmem:[%s13 + $0x670] sm:$0xff]
      %v10908 = vld [vmem:[%s13 + $0x678] sm:$0xff]
      %v10909 = vld [vmem:[%s13 + $0x680] sm:$0xff]
      %v10910 = vld [vmem:[%s13 + $0x688] sm:$0xff]
      %v10911 = vld [vmem:[%s13 + $0x690] sm:$0xff]
      %v10912 = vld [vmem:[%s13 + $0x698] sm:$0xff]
      %v10913 = vld [vmem:[%s13 + $0x6a0] sm:$0xff]
      %v10914 = vld [vmem:[%s13 + $0x6a8] sm:$0xff]
      %v10915 = vld [vmem:[%s13 + $0x6b0] sm:$0xff]
      %v10916 = vld [vmem:[%s13 + $0x6b8] sm:$0xff]
      %v10917 = vld [vmem:[%s13 + $0x6c0] sm:$0xff]
      %v10918 = vld [vmem:[%s13 + $0x6c8] sm:$0xff]
      %v10919 = vld [vmem:[%s13 + $0x6d0] sm:$0xff]
      %v10920 = vld [vmem:[%s13 + $0x6d8] sm:$0xff]
      %v10921 = vld [vmem:[%s13 + $0x6e0] sm:$0xff]
      %v10922 = vld [vmem:[%s13 + $0x6e8] sm:$0xff]
      %v10923 = vld [vmem:[%s13 + $0x6f0] sm:$0xff]
      %v10924 = vld [vmem:[%s13 + $0x6f8] sm:$0xff]
      %10925 = vmatprep.subr.mxu0 0.0
      %10926 = vmatpush1.msra.mxu0 %v10893
      %10927 = vmatprep.subr.mxu0 0.0
      %10928 = vmatpush1.msra.mxu0 %v10894
      %10929 = vmatprep.subr.mxu0 0.0
      %10930 = vmatpush1.msra.mxu0 %v10895
      %10931 = vmatprep.subr.mxu0 0.0
      %10932 = vmatpush1.msra.mxu0 %v10896
      %10933 = vmatprep.subr.mxu0 0.0
      %10934 = vmatpush1.msra.mxu0 %v10897
      %10935 = vmatprep.subr.mxu0 0.0
      %10936 = vmatpush1.msra.mxu0 %v10898
      %10937 = vmatprep.subr.mxu0 0.0
      %10938 = vmatpush1.msra.mxu0 %v10899
      %10939 = vmatprep.subr.mxu0 0.0
      %10940 = vmatpush1.msra.mxu0 %v10900
      %10941 = vmatprep.subr.mxu0 0.0
      %10942 = vmatpush1.msra.mxu0 %v10901
      %10943 = vmatprep.subr.mxu0 0.0
      %10944 = vmatpush1.msra.mxu0 %v10902
      %10945 = vmatprep.subr.mxu0 0.0
      %10946 = vmatpush1.msra.mxu0 %v10903
      %10947 = vmatprep.subr.mxu0 0.0
      %10948 = vmatpush1.msra.mxu0 %v10904
      %10949 = vmatprep.subr.mxu0 0.0
      %10950 = vmatpush1.msra.mxu0 %v10905
      %10951 = vmatprep.subr.mxu0 0.0
      %10952 = vmatpush1.msra.mxu0 %v10906
      %10953 = vmatprep.subr.mxu0 0.0
      %10954 = vmatpush1.msra.mxu0 %v10907
      %10955 = vmatprep.subr.mxu0 0.0
      %10956 = vmatpush1.msra.mxu0 %v10908
      %10957 = vmatprep.subr.mxu0 0.0
      %10958 = vmatpush1.msra.mxu0 %v10909
      %10959 = vmatprep.subr.mxu0 0.0
      %10960 = vmatpush1.msra.mxu0 %v10910
      %10961 = vmatprep.subr.mxu0 0.0
      %10962 = vmatpush1.msra.mxu0 %v10911
      %10963 = vmatprep.subr.mxu0 0.0
      %10964 = vmatpush1.msra.mxu0 %v10912
      %10965 = vmatprep.subr.mxu0 0.0
      %10966 = vmatpush1.msra.mxu0 %v10913
      %10967 = vmatprep.subr.mxu0 0.0
      %10968 = vmatpush1.msra.mxu0 %v10914
      %10969 = vmatprep.subr.mxu0 0.0
      %10970 = vmatpush1.msra.mxu0 %v10915
      %10971 = vmatprep.subr.mxu0 0.0
      %10972 = vmatpush1.msra.mxu0 %v10916
      %10973 = vmatprep.subr.mxu0 0.0
      %10974 = vmatpush1.msra.mxu0 %v10917
      %10975 = vmatprep.subr.mxu0 0.0
      %10976 = vmatpush1.msra.mxu0 %v10918
      %10977 = vmatprep.subr.mxu0 0.0
      %10978 = vmatpush1.msra.mxu0 %v10919
      %10979 = vmatprep.subr.mxu0 0.0
      %10980 = vmatpush1.msra.mxu0 %v10920
      %10981 = vmatprep.subr.mxu0 0.0
      %10982 = vmatpush1.msra.mxu0 %v10921
      %10983 = vmatprep.subr.mxu0 0.0
      %10984 = vmatpush1.msra.mxu0 %v10922
      %10985 = vmatprep.subr.mxu0 0.0
      %10986 = vmatpush1.msra.mxu0 %v10923
      %10987 = vmatprep.subr.mxu0 0.0
      %10988 = vmatpush1.msra.mxu0 %v10924
      %10989 = vmatprep.mubr.f32.mxu0 %v10892
      %10990 = vmatmul.mubr.f32.gmra.mrb[0].mxu0 %v10891
      %v10991 = vpop.f32.mrb[0].mxu0
      %v10992 = vadd.f32 0.0, %v10991
      %v10993 = vpop.f32.mrb[0].mxu0
      %10994 = vdwg.mxu0
      %v10995 = vadd.f32 %v10882, %v10992
      %v10996 = vrot.slane %v10099, 7
      %v10997 = vrot.slane %v10131, 7
      %v11000 = vrot.slane %v10163, 6
      %v11001 = vrot.slane %v10195, 6
      %v11004 = vsel %vm869, %v10996, %v11000
      %v11005 = vsel %vm869, %v10997, %v11001
      %v11006 = vld [vmem:[%s13 + $0x700] sm:$0xff]
      %v11007 = vld [vmem:[%s13 + $0x708] sm:$0xff]
      %v11008 = vld [vmem:[%s13 + $0x710] sm:$0xff]
      %v11009 = vld [vmem:[%s13 + $0x718] sm:$0xff]
      %v11010 = vld [vmem:[%s13 + $0x720] sm:$0xff]
      %v11011 = vld [vmem:[%s13 + $0x728] sm:$0xff]
      %v11012 = vld [vmem:[%s13 + $0x730] sm:$0xff]
      %v11013 = vld [vmem:[%s13 + $0x738] sm:$0xff]
      %v11014 = vld [vmem:[%s13 + $0x740] sm:$0xff]
      %v11015 = vld [vmem:[%s13 + $0x748] sm:$0xff]
      %v11016 = vld [vmem:[%s13 + $0x750] sm:$0xff]
      %v11017 = vld [vmem:[%s13 + $0x758] sm:$0xff]
      %v11018 = vld [vmem:[%s13 + $0x760] sm:$0xff]
      %v11019 = vld [vmem:[%s13 + $0x768] sm:$0xff]
      %v11020 = vld [vmem:[%s13 + $0x770] sm:$0xff]
      %v11021 = vld [vmem:[%s13 + $0x778] sm:$0xff]
      %v11022 = vld [vmem:[%s13 + $0x780] sm:$0xff]
      %v11023 = vld [vmem:[%s13 + $0x788] sm:$0xff]
      %v11024 = vld [vmem:[%s13 + $0x790] sm:$0xff]
      %v11025 = vld [vmem:[%s13 + $0x798] sm:$0xff]
      %v11026 = vld [vmem:[%s13 + $0x7a0] sm:$0xff]
      %v11027 = vld [vmem:[%s13 + $0x7a8] sm:$0xff]
      %v11028 = vld [vmem:[%s13 + $0x7b0] sm:$0xff]
      %v11029 = vld [vmem:[%s13 + $0x7b8] sm:$0xff]
      %v11030 = vld [vmem:[%s13 + $0x7c0] sm:$0xff]
      %v11031 = vld [vmem:[%s13 + $0x7c8] sm:$0xff]
      %v11032 = vld [vmem:[%s13 + $0x7d0] sm:$0xff]
      %v11033 = vld [vmem:[%s13 + $0x7d8] sm:$0xff]
      %v11034 = vld [vmem:[%s13 + $0x7e0] sm:$0xff]
      %v11035 = vld [vmem:[%s13 + $0x7e8] sm:$0xff]
      %v11036 = vld [vmem:[%s13 + $0x7f0] sm:$0xff]
      %v11037 = vld [vmem:[%s13 + $0x7f8] sm:$0xff]
      %11038 = vmatprep.subr.mxu0 0.0
      %11039 = vmatpush1.msra.mxu0 %v11006
      %11040 = vmatprep.subr.mxu0 0.0
      %11041 = vmatpush1.msra.mxu0 %v11007
      %11042 = vmatprep.subr.mxu0 0.0
      %11043 = vmatpush1.msra.mxu0 %v11008
      %11044 = vmatprep.subr.mxu0 0.0
      %11045 = vmatpush1.msra.mxu0 %v11009
      %11046 = vmatprep.subr.mxu0 0.0
      %11047 = vmatpush1.msra.mxu0 %v11010
      %11048 = vmatprep.subr.mxu0 0.0
      %11049 = vmatpush1.msra.mxu0 %v11011
      %11050 = vmatprep.subr.mxu0 0.0
      %11051 = vmatpush1.msra.mxu0 %v11012
      %11052 = vmatprep.subr.mxu0 0.0
      %11053 = vmatpush1.msra.mxu0 %v11013
      %11054 = vmatprep.subr.mxu0 0.0
      %11055 = vmatpush1.msra.mxu0 %v11014
      %11056 = vmatprep.subr.mxu0 0.0
      %11057 = vmatpush1.msra.mxu0 %v11015
      %11058 = vmatprep.subr.mxu0 0.0
      %11059 = vmatpush1.msra.mxu0 %v11016
      %11060 = vmatprep.subr.mxu0 0.0
      %11061 = vmatpush1.msra.mxu0 %v11017
      %11062 = vmatprep.subr.mxu0 0.0
      %11063 = vmatpush1.msra.mxu0 %v11018
      %11064 = vmatprep.subr.mxu0 0.0
      %11065 = vmatpush1.msra.mxu0 %v11019
      %11066 = vmatprep.subr.mxu0 0.0
      %11067 = vmatpush1.msra.mxu0 %v11020
      %11068 = vmatprep.subr.mxu0 0.0
      %11069 = vmatpush1.msra.mxu0 %v11021
      %11070 = vmatprep.subr.mxu0 0.0
      %11071 = vmatpush1.msra.mxu0 %v11022
      %11072 = vmatprep.subr.mxu0 0.0
      %11073 = vmatpush1.msra.mxu0 %v11023
      %11074 = vmatprep.subr.mxu0 0.0
      %11075 = vmatpush1.msra.mxu0 %v11024
      %11076 = vmatprep.subr.mxu0 0.0
      %11077 = vmatpush1.msra.mxu0 %v11025
      %11078 = vmatprep.subr.mxu0 0.0
      %11079 = vmatpush1.msra.mxu0 %v11026
      %11080 = vmatprep.subr.mxu0 0.0
      %11081 = vmatpush1.msra.mxu0 %v11027
      %11082 = vmatprep.subr.mxu0 0.0
      %11083 = vmatpush1.msra.mxu0 %v11028
      %11084 = vmatprep.subr.mxu0 0.0
      %11085 = vmatpush1.msra.mxu0 %v11029
      %11086 = vmatprep.subr.mxu0 0.0
      %11087 = vmatpush1.msra.mxu0 %v11030
      %11088 = vmatprep.subr.mxu0 0.0
      %11089 = vmatpush1.msra.mxu0 %v11031
      %11090 = vmatprep.subr.mxu0 0.0
      %11091 = vmatpush1.msra.mxu0 %v11032
      %11092 = vmatprep.subr.mxu0 0.0
      %11093 = vmatpush1.msra.mxu0 %v11033
      %11094 = vmatprep.subr.mxu0 0.0
      %11095 = vmatpush1.msra.mxu0 %v11034
      %11096 = vmatprep.subr.mxu0 0.0
      %11097 = vmatpush1.msra.mxu0 %v11035
      %11098 = vmatprep.subr.mxu0 0.0
      %11099 = vmatpush1.msra.mxu0 %v11036
      %11100 = vmatprep.subr.mxu0 0.0
      %11101 = vmatpush1.msra.mxu0 %v11037
      %11102 = vmatprep.mubr.f32.mxu0 %v11005
      %11103 = vmatmul.mubr.f32.gmra.mrb[0].mxu0 %v11004
      %v11104 = vpop.f32.mrb[0].mxu0
      %v11105 = vadd.f32 0.0, %v11104
      %v11106 = vpop.f32.mrb[0].mxu0
      %11107 = vdwg.mxu0
      %v11108 = vadd.f32 %v10995, %v11105
      %v11109 = vld [vmem:[%s14] sm:$0x1]
      %v11111 = vlaneseq
      %v11112 = vshrl.u32 %v11111, 7
      %v11113 = vsub.s32 0, %v11112
      %v11114 = vrot.slane %v11109, %v11113
      %v11116 = vadd.f32 %v11108, %v11114
      %v11117 = vmax.f32 %v11116, 0.0
      %v11118 = vld [vmem:[%s15] sm:$0xff]
      %v11119 = vld [vmem:[%s15 + $0x8] sm:$0xff]
      %v11120 = vld [vmem:[%s15 + $0x10] sm:$0xff]
      %v11121 = vld [vmem:[%s15 + $0x18] sm:$0xff]
      %v11122 = vld [vmem:[%s15 + $0x20] sm:$0xff]
      %v11123 = vld [vmem:[%s15 + $0x28] sm:$0xff]
      %v11124 = vld [vmem:[%s15 + $0x30] sm:$0xff]
      %v11125 = vld [vmem:[%s15 + $0x38] sm:$0xff]
      %v11126 = vld [vmem:[%s15 + $0x40] sm:$0xff]
      %v11127 = vld [vmem:[%s15 + $0x48] sm:$0xff]
      %v11128 = vld [vmem:[%s15 + $0x50] sm:$0xff]
      %v11129 = vld [vmem:[%s15 + $0x58] sm:$0xff]
      %v11130 = vld [vmem:[%s15 + $0x60] sm:$0xff]
      %v11131 = vld [vmem:[%s15 + $0x68] sm:$0xff]
      %v11132 = vld [vmem:[%s15 + $0x70] sm:$0xff]
      %v11133 = vld [vmem:[%s15 + $0x78] sm:$0xff]
      %v11134 = vld [vmem:[%s16] sm:$0x1]
      %v11136 = vlaneseq
      %v11137 = vshrl.u32 %v11136, 7
      %v11138 = vsub.s32 0, %v11137
      %v11139 = vrot.slane %v11134, %v11138
      %11141 = vmatprep.subr.mxu0 0.0
      %11142 = vmatpush1.msra.mxu0 %v11118
      %11143 = vmatprep.subr.mxu0 0.0
      %11144 = vmatpush1.msra.mxu0 %v11119
      %11145 = vmatprep.subr.mxu0 0.0
      %11146 = vmatpush1.msra.mxu0 %v11120
      %11147 = vmatprep.subr.mxu0 0.0
      %11148 = vmatpush1.msra.mxu0 %v11121
      %11149 = vmatprep.subr.mxu0 0.0
      %11150 = vmatpush1.msra.mxu0 %v11122
      %11151 = vmatprep.subr.mxu0 0.0
      %11152 = vmatpush1.msra.mxu0 %v11123
      %11153 = vmatprep.subr.mxu0 0.0
      %11154 = vmatpush1.msra.mxu0 %v11124
      %11155 = vmatprep.subr.mxu0 0.0
      %11156 = vmatpush1.msra.mxu0 %v11125
      %11157 = vmatprep.subr.mxu0 0.0
      %11158 = vmatpush1.msra.mxu0 %v11126
      %11159 = vmatprep.subr.mxu0 0.0
      %11160 = vmatpush1.msra.mxu0 %v11127
      %11161 = vmatprep.subr.mxu0 0.0
      %11162 = vmatpush1.msra.mxu0 %v11128
      %11163 = vmatprep.subr.mxu0 0.0
      %11164 = vmatpush1.msra.mxu0 %v11129
      %11165 = vmatprep.subr.mxu0 0.0
      %11166 = vmatpush1.msra.mxu0 %v11130
      %11167 = vmatprep.subr.mxu0 0.0
      %11168 = vmatpush1.msra.mxu0 %v11131
      %11169 = vmatprep.subr.mxu0 0.0
      %11170 = vmatpush1.msra.mxu0 %v11132
      %11171 = vmatprep.subr.mxu0 0.0
      %11172 = vmatpush1.msra.mxu0 %v11133
      %11173 = vmatprep.subr.mxu0 0.0
      %11174 = vmatpush1.msra.mxu0 0.0
      %11175 = vmatprep.subr.mxu0 0.0
      %11176 = vmatpush1.msra.mxu0 0.0
      %11177 = vmatprep.subr.mxu0 0.0
      %11178 = vmatpush1.msra.mxu0 0.0
      %11179 = vmatprep.subr.mxu0 0.0
      %11180 = vmatpush1.msra.mxu0 0.0
      %11181 = vmatprep.subr.mxu0 0.0
      %11182 = vmatpush1.msra.mxu0 0.0
      %11183 = vmatprep.subr.mxu0 0.0
      %11184 = vmatpush1.msra.mxu0 0.0
      %11185 = vmatprep.subr.mxu0 0.0
      %11186 = vmatpush1.msra.mxu0 0.0
      %11187 = vmatprep.subr.mxu0 0.0
      %11188 = vmatpush1.msra.mxu0 0.0
      %11189 = vmatprep.subr.mxu0 0.0
      %11190 = vmatpush1.msra.mxu0 0.0
      %11191 = vmatprep.subr.mxu0 0.0
      %11192 = vmatpush1.msra.mxu0 0.0
      %11193 = vmatprep.subr.mxu0 0.0
      %11194 = vmatpush1.msra.mxu0 0.0
      %11195 = vmatprep.subr.mxu0 0.0
      %11196 = vmatpush1.msra.mxu0 0.0
      %11197 = vmatprep.subr.mxu0 0.0
      %11198 = vmatpush1.msra.mxu0 0.0
      %11199 = vmatprep.subr.mxu0 0.0
      %11200 = vmatpush1.msra.mxu0 0.0
      %11201 = vmatprep.subr.mxu0 0.0
      %11202 = vmatpush1.msra.mxu0 0.0
      %11203 = vmatprep.subr.mxu0 0.0
      %11204 = vmatpush1.msra.mxu0 0.0
      %11205 = vmatprep.mubr.f32.mxu0 0.0
      %11206 = vmatmul.mubr.f32.gmra.mrb[0].mxu0 %v11117
      %v11207 = vpop.f32.mrb[0].mxu0
      %v11208 = vadd.f32 %v11139, %v11207
      %v11209 = vpop.f32.mrb[0].mxu0
      %11210 = vdwg.mxu0
      %v11211 = vmax.f32 %v11208, 0.0
      %v11212 = vld [vmem:[%s17] sm:$0xff]
      %v11213 = vld [vmem:[%s17 + $0x8] sm:$0xff]
      %v11214 = vld [vmem:[%s17 + $0x10] sm:$0xff]
      %v11215 = vld [vmem:[%s17 + $0x18] sm:$0xff]
      %v11216 = vld [vmem:[%s17 + $0x20] sm:$0xff]
      %v11217 = vld [vmem:[%s17 + $0x28] sm:$0xff]
      %v11218 = vld [vmem:[%s17 + $0x30] sm:$0xff]
      %v11219 = vld [vmem:[%s17 + $0x38] sm:$0xff]
      %v11220 = vld [vmem:[%s17 + $0x40] sm:$0xff]
      %v11221 = vld [vmem:[%s17 + $0x48] sm:$0xff]
      %v11222 = vld [vmem:[%s17 + $0x50] sm:$0xff]
      %v11223 = vld [vmem:[%s17 + $0x58] sm:$0xff]
      %v11224 = vld [vmem:[%s17 + $0x60] sm:$0xff]
      %v11225 = vld [vmem:[%s17 + $0x68] sm:$0xff]
      %v11226 = vld [vmem:[%s17 + $0x70] sm:$0xff]
      %v11227 = vld [vmem:[%s17 + $0x78] sm:$0xff]
      %v11228 = vld [vmem:[%s18] sm:$0x1]
      %v11230 = vlaneseq
      %v11231 = vshrl.u32 %v11230, 7
      %v11232 = vsub.s32 0, %v11231
      %v11233 = vrot.slane %v11228, %v11232
      %11235 = vmatprep.subr.mxu0 0.0
      %11236 = vmatpush1.msra.mxu0 %v11212
      %11237 = vmatprep.subr.mxu0 0.0
      %11238 = vmatpush1.msra.mxu0 %v11213
      %11239 = vmatprep.subr.mxu0 0.0
      %11240 = vmatpush1.msra.mxu0 %v11214
      %11241 = vmatprep.subr.mxu0 0.0
      %11242 = vmatpush1.msra.mxu0 %v11215
      %11243 = vmatprep.subr.mxu0 0.0
      %11244 = vmatpush1.msra.mxu0 %v11216
      %11245 = vmatprep.subr.mxu0 0.0
      %11246 = vmatpush1.msra.mxu0 %v11217
      %11247 = vmatprep.subr.mxu0 0.0
      %11248 = vmatpush1.msra.mxu0 %v11218
      %11249 = vmatprep.subr.mxu0 0.0
      %11250 = vmatpush1.msra.mxu0 %v11219
      %11251 = vmatprep.subr.mxu0 0.0
      %11252 = vmatpush1.msra.mxu0 %v11220
      %11253 = vmatprep.subr.mxu0 0.0
      %11254 = vmatpush1.msra.mxu0 %v11221
      %11255 = vmatprep.subr.mxu0 0.0
      %11256 = vmatpush1.msra.mxu0 %v11222
      %11257 = vmatprep.subr.mxu0 0.0
      %11258 = vmatpush1.msra.mxu0 %v11223
      %11259 = vmatprep.subr.mxu0 0.0
      %11260 = vmatpush1.msra.mxu0 %v11224
      %11261 = vmatprep.subr.mxu0 0.0
      %11262 = vmatpush1.msra.mxu0 %v11225
      %11263 = vmatprep.subr.mxu0 0.0
      %11264 = vmatpush1.msra.mxu0 %v11226
      %11265 = vmatprep.subr.mxu0 0.0
      %11266 = vmatpush1.msra.mxu0 %v11227
      %11267 = vmatprep.subr.mxu0 0.0
      %11268 = vmatpush1.msra.mxu0 0.0
      %11269 = vmatprep.subr.mxu0 0.0
      %11270 = vmatpush1.msra.mxu0 0.0
      %11271 = vmatprep.subr.mxu0 0.0
      %11272 = vmatpush1.msra.mxu0 0.0
      %11273 = vmatprep.subr.mxu0 0.0
      %11274 = vmatpush1.msra.mxu0 0.0
      %11275 = vmatprep.subr.mxu0 0.0
      %11276 = vmatpush1.msra.mxu0 0.0
      %11277 = vmatprep.subr.mxu0 0.0
      %11278 = vmatpush1.msra.mxu0 0.0
      %11279 = vmatprep.subr.mxu0 0.0
      %11280 = vmatpush1.msra.mxu0 0.0
      %11281 = vmatprep.subr.mxu0 0.0
      %11282 = vmatpush1.msra.mxu0 0.0
      %11283 = vmatprep.subr.mxu0 0.0
      %11284 = vmatpush1.msra.mxu0 0.0
      %11285 = vmatprep.subr.mxu0 0.0
      %11286 = vmatpush1.msra.mxu0 0.0
      %11287 = vmatprep.subr.mxu0 0.0
      %11288 = vmatpush1.msra.mxu0 0.0
      %11289 = vmatprep.subr.mxu0 0.0
      %11290 = vmatpush1.msra.mxu0 0.0
      %11291 = vmatprep.subr.mxu0 0.0
      %11292 = vmatpush1.msra.mxu0 0.0
      %11293 = vmatprep.subr.mxu0 0.0
      %11294 = vmatpush1.msra.mxu0 0.0
      %11295 = vmatprep.subr.mxu0 0.0
      %11296 = vmatpush1.msra.mxu0 0.0
      %11297 = vmatprep.subr.mxu0 0.0
      %11298 = vmatpush1.msra.mxu0 0.0
      %11299 = vmatprep.mubr.f32.mxu0 0.0
      %11300 = vmatmul.mubr.f32.gmra.mrb[0].mxu0 %v11211
      %v11301 = vpop.f32.mrb[0].mxu0
      %v11302 = vadd.f32 %v11233, %v11301
      %v11303 = vpop.f32.mrb[0].mxu0
      %11304 = vdwg.mxu0
      %11305 = vst [vmem:[%s600] sm:$0x3] %v11302
      %p11306 = scmp.lt.s32.totalorder %s30, 1
      %s11307 = scalar_select %p11306, %s30, 1
      %s11308 = smul.addr %s11307, 2
      %s11309 = scalar_lea.vmem %s19, %s11308
      // Predicated region
      $region97: #{siamese_forward.1} parent=95 // pred_check
        %p11310 = pneg %p452
      $region98: #{siamese_forward.1} parent=95 // pred_check_branch
        %11312 = sbr.rel (%p11310) target = $region100
      $region99: #{siamese_forward.1} parent=95 // pred_region
        _
      $region100: #{siamese_forward.1} parent=95 // pred_fallthru
        _
    $region96: #{siamese_forward.1} parent=5 // pred_fallthru
      _
    %p11313 = scmp.le.s32.totalorder 2, %s25
    // Predicated region
    $region101: #{siamese_forward.1} parent=5 // pred_check
      %p11314 = pneg %p11313
    $region102: #{siamese_forward.1} parent=5 // pred_check_branch
      %11316 = sbr.rel (%p11314) target = $region104
    $region103: #{siamese_forward.1} parent=5 // pred_region
      %s11317 = ssub.s32 %s25, 2
      // Predicated region
      $region105: #{siamese_forward.1} parent=103 // pred_check
        %p11318 = pneg %p458
      $region106: #{siamese_forward.1} parent=103 // pred_check_branch
        %11320 = sbr.rel (%p11318) target = $region108
      $region107: #{siamese_forward.1} parent=103 // pred_region
        %p11321 = scmp.lt.s32.totalorder %s31, 1
        %s11322 = scalar_select %p11321, %s31, 1
        %s11323 = smul.addr %s11322, 2
        %s11324 = scalar_lea.vmem %s19, %s11323
      $region108: #{siamese_forward.1} parent=103 // pred_fallthru
        _
    $region104: #{siamese_forward.1} parent=5 // pred_fallthru
      _
  $region6: #{siamese_forward.1} parent=0 // loop_footer
    %s29 = sadd.s32 1, %s25
  $region7: #{siamese_forward.1} parent=0 // loop_footer_branch
    %24 = sbr.rel target = $region3
  $region8: #{siamese_forward.1} parent=0 // loop_exit
    _

</llo_original>
